<compile_context>
chip_gen: v7x
topology: tpu7x:2x2x1
jax: 0.10.0
libtpu: 0.0.40
codegen_flags: <defaults>
</compile_context>

<pallas_src>
import functools

import jax
import jax.numpy as jnp
from jax.experimental import pallas as pl
from jax.experimental.pallas import tpu as pltpu


# ---------------------------------------------------------------------------
# Fused conv(5x5, same) + bias + ReLU + maxpool(2x2, stride 2) kernel
# ---------------------------------------------------------------------------
def _conv_relu_pool_kernel(xe_ref, xo_ref, w_ref, b_ref, sel_ref, o_ref, m_ref,
                           *, K, Cin, Cout, Wp, R):
    """One image per grid step, CHW layout.

    xe_ref / xo_ref : (1, Cin, SR*Wp) bf16 -- even / odd padded rows, W-flattened
    w_ref           : (K*K, Cout, Cin) bf16 -- tap-major weights
    b_ref           : (Cout, 1) f32
    sel_ref         : (R-1, Ho*Wo) bf16 -- 0/1 column-selection matrix
    o_ref           : (1, Cout, Ho*Wo) bf16 -- pooled output
    m_ref           : (Cout, R) f32 VMEM scratch
    """
    f32 = jnp.float32
    acc_e = jnp.zeros((Cout, R), f32)   # conv rows 2*ho   (even), at padded width
    acc_o = jnp.zeros((Cout, R), f32)   # conv rows 2*ho+1 (odd)

    for kh in range(K):
        for kw in range(K):
            wk = w_ref[kh * K + kw]                              # (Cout, Cin) bf16
            # even output rows read padded row 2*ho + kh
            s_e = (kh // 2) * Wp + kw
            win_e = (xe_ref if kh % 2 == 0 else xo_ref)[0, :, pl.ds(s_e, R)]
            # odd output rows read padded row 2*ho + 1 + kh
            s_o = ((kh + 1) // 2) * Wp + kw
            win_o = (xo_ref if kh % 2 == 0 else xe_ref)[0, :, pl.ds(s_o, R)]
            if Cin == 1:
                # outer product on the VPU is cheaper than a K=1 MXU matmul
                wkf = wk.astype(f32)                             # (Cout, 1)
                acc_e = acc_e + wkf * win_e.astype(f32)          # -> (Cout, R)
                acc_o = acc_o + wkf * win_o.astype(f32)
            else:
                acc_e = acc_e + jnp.dot(wk, win_e, preferred_element_type=f32)
                acc_o = acc_o + jnp.dot(wk, win_o, preferred_element_type=f32)

    b = b_ref[...]                                               # (Cout, 1) f32
    # bias + ReLU, then the H-half of the 2x2 pool (even vs odd conv rows)
    m_ref[...] = jnp.maximum(jnp.maximum(acc_e + b, 0.0),
                             jnp.maximum(acc_o + b, 0.0))        # (Cout, R)
    # W-half of the pool: max of adjacent columns, then pick columns
    # ho*Wp + 2*wp with a 0/1 selection matmul (keeps everything 2D, lane-dense).
    mx = jnp.maximum(m_ref[:, pl.ds(0, R - 1)], m_ref[:, pl.ds(1, R - 1)])
    pooled = jnp.dot(mx.astype(jnp.bfloat16), sel_ref[...],
                     preferred_element_type=f32)                 # (Cout, Ho*Wo)
    o_ref[0] = pooled.astype(o_ref.dtype)


def conv5x5_relu_pool2(x_nchw, w_taps, bias_col):
    """Fused 'same' 5x5 conv + bias + ReLU + 2x2/2 maxpool.

    x_nchw   : (B, Cin, H, W)  (H, W even)
    w_taps   : (25, Cout, Cin) bf16 (tap-major, from prepare_params)
    bias_col : (Cout, 1) f32
    returns  : (B, Cout, H//2, W//2) bf16
    """
    B, Cin, H, W = x_nchw.shape
    KK, Cout, Cin2 = w_taps.shape
    K = 5
    assert KK == K * K and Cin2 == Cin and H % 2 == 0 and W % 2 == 0
    pad = K // 2
    Ho, Wo = H // 2, W // 2
    Wp = W + 2 * pad                 # padded width
    Hp = H + 2 * pad + 2             # extra bottom rows keep every tap slice in range
    SR = Hp // 2                     # rows per row-parity slab
    R = Ho * Wp                      # accumulator width (conv rows at padded width)

    # --- cheap XLA layout glue (only ~1.3x the raw input, never 25x) ---------
    xp = jnp.pad(x_nchw.astype(jnp.bfloat16),
                 ((0, 0), (0, 0), (pad, pad + 2), (pad, pad)))
    xe = xp[:, :, 0::2, :].reshape(B, Cin, SR * Wp)   # even padded rows, W-flat
    xo = xp[:, :, 1::2, :].reshape(B, Cin, SR * Wp)   # odd  padded rows, W-flat

    # 0/1 matrix selecting column ho*Wp + 2*wp for pooled output column ho*Wo+wp
    ocols = jnp.arange(Ho * Wo)
    src_cols = (ocols // Wo) * Wp + 2 * (ocols % Wo)
    selT = (jnp.arange(R - 1)[:, None] == src_cols[None, :]).astype(jnp.bfloat16)

    kern = functools.partial(_conv_relu_pool_kernel,
                             K=K, Cin=Cin, Cout=Cout, Wp=Wp, R=R)
    flops = 2 * B * (2 * K * K * Cin * Cout * R + Cout * (R - 1) * Ho * Wo)
    bytes_accessed = (2 * xe.size + w_taps.size + selT.size
                      + B * Cout * Ho * Wo) * 2 + bias_col.size * 4

    out = pl.pallas_call(
        kern,
        out_shape=jax.ShapeDtypeStruct((B, Cout, Ho * Wo), jnp.bfloat16),
        grid_spec=pltpu.PrefetchScalarGridSpec(
            num_scalar_prefetch=0,
            grid=(B,),
            in_specs=[
                pl.BlockSpec((1, Cin, SR * Wp), lambda b: (b, 0, 0)),
                pl.BlockSpec((1, Cin, SR * Wp), lambda b: (b, 0, 0)),
                pl.BlockSpec((KK, Cout, Cin), lambda b: (0, 0, 0)),
                pl.BlockSpec((Cout, 1), lambda b: (0, 0)),
                pl.BlockSpec((R - 1, Ho * Wo), lambda b: (0, 0)),
            ],
            out_specs=pl.BlockSpec((1, Cout, Ho * Wo), lambda b: (b, 0, 0)),
            scratch_shapes=[pltpu.VMEM((Cout, R), jnp.float32)],
        ),
        compiler_params=pltpu.CompilerParams(
            dimension_semantics=("parallel",),
            vmem_limit_bytes=32 * 1024 * 1024,
        ),
        cost_estimate=pl.CostEstimate(flops=flops, transcendentals=0,
                                      bytes_accessed=bytes_accessed),
    )(xe, xo, w_taps, bias_col, selT)
    return out.reshape(B, Cout, Ho, Wo)


# ---------------------------------------------------------------------------
# Linear layer (M-tiled matmul + bias)
# ---------------------------------------------------------------------------
def _linear_kernel(x_ref, w_ref, b_ref, o_ref):
    y = jnp.dot(x_ref[...], w_ref[...], preferred_element_type=jnp.float32)
    o_ref[...] = (y + b_ref[...]).astype(o_ref.dtype)


def linear(x, w_kn, bias_row, *, block_m=256):
    """x: (M, K) -> (M, N) f32 logits; bf16 operands, f32 accumulate."""
    M, Kd = x.shape
    Kd2, N = w_kn.shape
    assert Kd == Kd2
    tm = block_m if M % block_m == 0 else M       # whole-M block for small batches
    return pl.pallas_call(
        _linear_kernel,
        out_shape=jax.ShapeDtypeStruct((M, N), jnp.float32),
        grid_spec=pltpu.PrefetchScalarGridSpec(
            num_scalar_prefetch=0,
            grid=(M // tm,),
            in_specs=[
                pl.BlockSpec((tm, Kd), lambda i: (i, 0)),
                pl.BlockSpec((Kd, N), lambda i: (0, 0)),
                pl.BlockSpec((1, N), lambda i: (0, 0)),
            ],
            out_specs=pl.BlockSpec((tm, N), lambda i: (i, 0)),
        ),
        compiler_params=pltpu.CompilerParams(
            dimension_semantics=("parallel",),
            vmem_limit_bytes=32 * 1024 * 1024,
        ),
    )(x.astype(jnp.bfloat16), w_kn, bias_row)


# ---------------------------------------------------------------------------
# Parameters (PyTorch layouts) + one-time kernel-ready repack + forward
# ---------------------------------------------------------------------------
def init_params(key):
    """Parameters in PyTorch layouts (Conv2d OIHW, Linear (out,in))."""
    k1, k2, k3, k4, k5, k6 = jax.random.split(key, 6)
    return {
        "conv1_w": jax.random.normal(k1, (16, 1, 5, 5), jnp.float32) * 0.1,
        "conv1_b": jax.random.normal(k2, (16,), jnp.float32) * 0.1,
        "conv2_w": jax.random.normal(k3, (32, 16, 5, 5), jnp.float32) * 0.05,
        "conv2_b": jax.random.normal(k4, (32,), jnp.float32) * 0.05,
        "out_w": jax.random.normal(k5, (10, 32 * 7 * 7), jnp.float32) * 0.02,
        "out_b": jax.random.normal(k6, (10,), jnp.float32) * 0.02,
    }


def prepare_params(params):
    """One-time repack into kernel-ready layouts (tap-major bf16 conv weights,
    column biases, (K,N) bf16 linear weight). Activations stay NCHW, so
    PyTorch's flatten order is preserved and no weight permutation is needed."""
    def conv_prep(w_oihw, b):
        Cout, Cin, K, _ = w_oihw.shape
        w_taps = jnp.transpose(w_oihw, (2, 3, 0, 1)).reshape(K * K, Cout, Cin)
        return w_taps.astype(jnp.bfloat16), b.reshape(Cout, 1).astype(jnp.float32)

    c1w, c1b = conv_prep(params["conv1_w"], params["conv1_b"])
    c2w, c2b = conv_prep(params["conv2_w"], params["conv2_b"])
    return {
        "conv1_w": c1w, "conv1_b": c1b,
        "conv2_w": c2w, "conv2_b": c2b,
        "out_w": jnp.transpose(params["out_w"]).astype(jnp.bfloat16),   # (1568, 10)
        "out_b": params["out_b"].reshape(1, -1).astype(jnp.float32),    # (1, 10)
    }


@jax.jit
def cnn_forward(kparams, x_nchw):
    """x_nchw: (B, 1, 28, 28) float32 (PyTorch NCHW). Returns (B, 10) float32."""
    x = conv5x5_relu_pool2(x_nchw, kparams["conv1_w"], kparams["conv1_b"])  # (B,16,14,14)
    x = conv5x5_relu_pool2(x, kparams["conv2_w"], kparams["conv2_b"])       # (B,32,7,7)
    x = x.reshape(x.shape[0], -1)            # (B, 1568) — PyTorch NCHW flatten order
    return linear(x, kparams["out_w"], kparams["out_b"])                    # (B, 10)


if __name__ == "__main__":
    key = jax.random.PRNGKey(0)
    pkey, xkey = jax.random.split(key)
    params = init_params(pkey)
    kparams = prepare_params(params)
    # Linear(32*7*7, 10) implies 28x28 single-channel input.
    x = jax.random.normal(xkey, (2, 1, 28, 28), jnp.float32)
    out = cnn_forward(kparams, x)
    out = jax.block_until_ready(out)
    assert out.shape == (2, 10), out.shape
    assert out.dtype == jnp.float32
    print("KERNEL_OK")
</pallas_src>

<mosaic_0001>
module attributes {stable_mosaic.version = 11 : i64} {
  func.func @_conv_relu_pool_kernel(%arg0: i32, %arg1: memref<1x1x544xbf16, #tpu.memory_space<vmem>>, %arg2: memref<1x1x544xbf16, #tpu.memory_space<vmem>>, %arg3: memref<25x16x1xbf16, #tpu.memory_space<vmem>>, %arg4: memref<16x1xf32, #tpu.memory_space<vmem>>, %arg5: memref<447x196xbf16, #tpu.memory_space<vmem>>, %arg6: memref<1x16x196xbf16, #tpu.memory_space<vmem>>, %arg7: memref<16x448xf32, #tpu.memory_space<vmem>>) attributes {dimension_semantics = [#tpu.dimension_semantics<parallel>], iteration_bounds = array<i64: 2>, scalar_prefetch = 0 : i64, scratch_operands = 1 : i64, tpu.core_type = #tpu.core_type<tc>, window_params = [{transform_indices = @transform_0, window_bounds = array<i64: 1, 1, 544>}, {transform_indices = @transform_1, window_bounds = array<i64: 1, 1, 544>}, {pipeline_mode = #tpu.pipeline_mode<synchronous>, transform_indices = @transform_2, window_bounds = array<i64: 25, 16, 1>}, {pipeline_mode = #tpu.pipeline_mode<synchronous>, transform_indices = @transform_3, window_bounds = array<i64: 16, 1>}, {pipeline_mode = #tpu.pipeline_mode<synchronous>, transform_indices = @transform_4, window_bounds = array<i64: 447, 196>}, {transform_indices = @transform_5, window_bounds = array<i64: 1, 16, 196>}]} {
    %cst = arith.constant 0.000000e+00 : f32
    %0 = vector.broadcast %cst : f32 to vector<16x448xf32>
    %cst_0 = arith.constant 0.000000e+00 : f32
    %1 = vector.broadcast %cst_0 : f32 to vector<16x448xf32>
    %c0 = arith.constant 0 : index
    %c0_1 = arith.constant 0 : index
    %c0_2 = arith.constant 0 : index
    %2 = vector.load %arg3[%c0, %c0_1, %c0_2] : memref<25x16x1xbf16, #tpu.memory_space<vmem>>, vector<1x16x1xbf16>
    %3 = vector.shape_cast %2 : vector<1x16x1xbf16> to vector<16x1xbf16>
    %c0_3 = arith.constant 0 : index
    %c0_4 = arith.constant 0 : index
    %c0_5 = arith.constant 0 : index
    %4 = vector.load %arg1[%c0_3, %c0_4, %c0_5] : memref<1x1x544xbf16, #tpu.memory_space<vmem>>, vector<1x1x448xbf16>
    %5 = vector.shape_cast %4 : vector<1x1x448xbf16> to vector<1x448xbf16>
    %c0_6 = arith.constant 0 : index
    %c0_7 = arith.constant 0 : index
    %c0_8 = arith.constant 0 : index
    %6 = vector.load %arg2[%c0_6, %c0_7, %c0_8] : memref<1x1x544xbf16, #tpu.memory_space<vmem>>, vector<1x1x448xbf16>
    %7 = vector.shape_cast %6 : vector<1x1x448xbf16> to vector<1x448xbf16>
    %8 = arith.extf %3 : vector<16x1xbf16> to vector<16x1xf32>
    %9 = arith.extf %5 : vector<1x448xbf16> to vector<1x448xf32>
    %10 = vector.broadcast %8 : vector<16x1xf32> to vector<16x448xf32>
    %11 = vector.broadcast %9 : vector<1x448xf32> to vector<16x448xf32>
    %12 = arith.mulf %10, %11 : vector<16x448xf32>
    %13 = arith.addf %0, %12 : vector<16x448xf32>
    %14 = arith.extf %7 : vector<1x448xbf16> to vector<1x448xf32>
    %15 = vector.broadcast %8 : vector<16x1xf32> to vector<16x448xf32>
    %16 = vector.broadcast %14 : vector<1x448xf32> to vector<16x448xf32>
    %17 = arith.mulf %15, %16 : vector<16x448xf32>
    %18 = arith.addf %1, %17 : vector<16x448xf32>
    %c1 = arith.constant 1 : index
    %c0_9 = arith.constant 0 : index
    %c0_10 = arith.constant 0 : index
    %19 = vector.load %arg3[%c1, %c0_9, %c0_10] : memref<25x16x1xbf16, #tpu.memory_space<vmem>>, vector<1x16x1xbf16>
    %20 = vector.shape_cast %19 : vector<1x16x1xbf16> to vector<16x1xbf16>
    %c0_11 = arith.constant 0 : index
    %c0_12 = arith.constant 0 : index
    %c1_13 = arith.constant 1 : index
    %21 = vector.load %arg1[%c0_11, %c0_12, %c1_13] : memref<1x1x544xbf16, #tpu.memory_space<vmem>>, vector<1x1x448xbf16>
    %22 = vector.shape_cast %21 : vector<1x1x448xbf16> to vector<1x448xbf16>
    %c0_14 = arith.constant 0 : index
    %c0_15 = arith.constant 0 : index
    %c1_16 = arith.constant 1 : index
    %23 = vector.load %arg2[%c0_14, %c0_15, %c1_16] : memref<1x1x544xbf16, #tpu.memory_space<vmem>>, vector<1x1x448xbf16>
    %24 = vector.shape_cast %23 : vector<1x1x448xbf16> to vector<1x448xbf16>
    %25 = arith.extf %20 : vector<16x1xbf16> to vector<16x1xf32>
    %26 = arith.extf %22 : vector<1x448xbf16> to vector<1x448xf32>
    %27 = vector.broadcast %25 : vector<16x1xf32> to vector<16x448xf32>
    %28 = vector.broadcast %26 : vector<1x448xf32> to vector<16x448xf32>
    %29 = arith.mulf %27, %28 : vector<16x448xf32>
    %30 = arith.addf %13, %29 : vector<16x448xf32>
    %31 = arith.extf %24 : vector<1x448xbf16> to vector<1x448xf32>
    %32 = vector.broadcast %25 : vector<16x1xf32> to vector<16x448xf32>
    %33 = vector.broadcast %31 : vector<1x448xf32> to vector<16x448xf32>
    %34 = arith.mulf %32, %33 : vector<16x448xf32>
    %35 = arith.addf %18, %34 : vector<16x448xf32>
    %c2 = arith.constant 2 : index
    %c0_17 = arith.constant 0 : index
    %c0_18 = arith.constant 0 : index
    %36 = vector.load %arg3[%c2, %c0_17, %c0_18] : memref<25x16x1xbf16, #tpu.memory_space<vmem>>, vector<1x16x1xbf16>
    %37 = vector.shape_cast %36 : vector<1x16x1xbf16> to vector<16x1xbf16>
    %c0_19 = arith.constant 0 : index
    %c0_20 = arith.constant 0 : index
    %c2_21 = arith.constant 2 : index
    %38 = vector.load %arg1[%c0_19, %c0_20, %c2_21] : memref<1x1x544xbf16, #tpu.memory_space<vmem>>, vector<1x1x448xbf16>
    %39 = vector.shape_cast %38 : vector<1x1x448xbf16> to vector<1x448xbf16>
    %c0_22 = arith.constant 0 : index
    %c0_23 = arith.constant 0 : index
    %c2_24 = arith.constant 2 : index
    %40 = vector.load %arg2[%c0_22, %c0_23, %c2_24] : memref<1x1x544xbf16, #tpu.memory_space<vmem>>, vector<1x1x448xbf16>
    %41 = vector.shape_cast %40 : vector<1x1x448xbf16> to vector<1x448xbf16>
    %42 = arith.extf %37 : vector<16x1xbf16> to vector<16x1xf32>
    %43 = arith.extf %39 : vector<1x448xbf16> to vector<1x448xf32>
    %44 = vector.broadcast %42 : vector<16x1xf32> to vector<16x448xf32>
    %45 = vector.broadcast %43 : vector<1x448xf32> to vector<16x448xf32>
    %46 = arith.mulf %44, %45 : vector<16x448xf32>
    %47 = arith.addf %30, %46 : vector<16x448xf32>
    %48 = arith.extf %41 : vector<1x448xbf16> to vector<1x448xf32>
    %49 = vector.broadcast %42 : vector<16x1xf32> to vector<16x448xf32>
    %50 = vector.broadcast %48 : vector<1x448xf32> to vector<16x448xf32>
    %51 = arith.mulf %49, %50 : vector<16x448xf32>
    %52 = arith.addf %35, %51 : vector<16x448xf32>
    %c3 = arith.constant 3 : index
    %c0_25 = arith.constant 0 : index
    %c0_26 = arith.constant 0 : index
    %53 = vector.load %arg3[%c3, %c0_25, %c0_26] : memref<25x16x1xbf16, #tpu.memory_space<vmem>>, vector<1x16x1xbf16>
    %54 = vector.shape_cast %53 : vector<1x16x1xbf16> to vector<16x1xbf16>
    %c0_27 = arith.constant 0 : index
    %c0_28 = arith.constant 0 : index
    %c3_29 = arith.constant 3 : index
    %55 = vector.load %arg1[%c0_27, %c0_28, %c3_29] : memref<1x1x544xbf16, #tpu.memory_space<vmem>>, vector<1x1x448xbf16>
    %56 = vector.shape_cast %55 : vector<1x1x448xbf16> to vector<1x448xbf16>
    %c0_30 = arith.constant 0 : index
    %c0_31 = arith.constant 0 : index
    %c3_32 = arith.constant 3 : index
    %57 = vector.load %arg2[%c0_30, %c0_31, %c3_32] : memref<1x1x544xbf16, #tpu.memory_space<vmem>>, vector<1x1x448xbf16>
    %58 = vector.shape_cast %57 : vector<1x1x448xbf16> to vector<1x448xbf16>
    %59 = arith.extf %54 : vector<16x1xbf16> to vector<16x1xf32>
    %60 = arith.extf %56 : vector<1x448xbf16> to vector<1x448xf32>
    %61 = vector.broadcast %59 : vector<16x1xf32> to vector<16x448xf32>
    %62 = vector.broadcast %60 : vector<1x448xf32> to vector<16x448xf32>
    %63 = arith.mulf %61, %62 : vector<16x448xf32>
    %64 = arith.addf %47, %63 : vector<16x448xf32>
    %65 = arith.extf %58 : vector<1x448xbf16> to vector<1x448xf32>
    %66 = vector.broadcast %59 : vector<16x1xf32> to vector<16x448xf32>
    %67 = vector.broadcast %65 : vector<1x448xf32> to vector<16x448xf32>
    %68 = arith.mulf %66, %67 : vector<16x448xf32>
    %69 = arith.addf %52, %68 : vector<16x448xf32>
    %c4 = arith.constant 4 : index
    %c0_33 = arith.constant 0 : index
    %c0_34 = arith.constant 0 : index
    %70 = vector.load %arg3[%c4, %c0_33, %c0_34] : memref<25x16x1xbf16, #tpu.memory_space<vmem>>, vector<1x16x1xbf16>
    %71 = vector.shape_cast %70 : vector<1x16x1xbf16> to vector<16x1xbf16>
    %c0_35 = arith.constant 0 : index
    %c0_36 = arith.constant 0 : index
    %c4_37 = arith.constant 4 : index
    %72 = vector.load %arg1[%c0_35, %c0_36, %c4_37] : memref<1x1x544xbf16, #tpu.memory_space<vmem>>, vector<1x1x448xbf16>
    %73 = vector.shape_cast %72 : vector<1x1x448xbf16> to vector<1x448xbf16>
    %c0_38 = arith.constant 0 : index
    %c0_39 = arith.constant 0 : index
    %c4_40 = arith.constant 4 : index
    %74 = vector.load %arg2[%c0_38, %c0_39, %c4_40] : memref<1x1x544xbf16, #tpu.memory_space<vmem>>, vector<1x1x448xbf16>
    %75 = vector.shape_cast %74 : vector<1x1x448xbf16> to vector<1x448xbf16>
    %76 = arith.extf %71 : vector<16x1xbf16> to vector<16x1xf32>
    %77 = arith.extf %73 : vector<1x448xbf16> to vector<1x448xf32>
    %78 = vector.broadcast %76 : vector<16x1xf32> to vector<16x448xf32>
    %79 = vector.broadcast %77 : vector<1x448xf32> to vector<16x448xf32>
    %80 = arith.mulf %78, %79 : vector<16x448xf32>
    %81 = arith.addf %64, %80 : vector<16x448xf32>
    %82 = arith.extf %75 : vector<1x448xbf16> to vector<1x448xf32>
    %83 = vector.broadcast %76 : vector<16x1xf32> to vector<16x448xf32>
    %84 = vector.broadcast %82 : vector<1x448xf32> to vector<16x448xf32>
    %85 = arith.mulf %83, %84 : vector<16x448xf32>
    %86 = arith.addf %69, %85 : vector<16x448xf32>
    %c5 = arith.constant 5 : index
    %c0_41 = arith.constant 0 : index
    %c0_42 = arith.constant 0 : index
    %87 = vector.load %arg3[%c5, %c0_41, %c0_42] : memref<25x16x1xbf16, #tpu.memory_space<vmem>>, vector<1x16x1xbf16>
    %88 = vector.shape_cast %87 : vector<1x16x1xbf16> to vector<16x1xbf16>
    %c0_43 = arith.constant 0 : index
    %c0_44 = arith.constant 0 : index
    %c0_45 = arith.constant 0 : index
    %89 = vector.load %arg2[%c0_43, %c0_44, %c0_45] : memref<1x1x544xbf16, #tpu.memory_space<vmem>>, vector<1x1x448xbf16>
    %90 = vector.shape_cast %89 : vector<1x1x448xbf16> to vector<1x448xbf16>
    %c0_46 = arith.constant 0 : index
    %c0_47 = arith.constant 0 : index
    %c32 = arith.constant 32 : index
    %91 = vector.load %arg1[%c0_46, %c0_47, %c32] : memref<1x1x544xbf16, #tpu.memory_space<vmem>>, vector<1x1x448xbf16>
    %92 = vector.shape_cast %91 : vector<1x1x448xbf16> to vector<1x448xbf16>
    %93 = arith.extf %88 : vector<16x1xbf16> to vector<16x1xf32>
    %94 = arith.extf %90 : vector<1x448xbf16> to vector<1x448xf32>
    %95 = vector.broadcast %93 : vector<16x1xf32> to vector<16x448xf32>
    %96 = vector.broadcast %94 : vector<1x448xf32> to vector<16x448xf32>
    %97 = arith.mulf %95, %96 : vector<16x448xf32>
    %98 = arith.addf %81, %97 : vector<16x448xf32>
    %99 = arith.extf %92 : vector<1x448xbf16> to vector<1x448xf32>
    %100 = vector.broadcast %93 : vector<16x1xf32> to vector<16x448xf32>
    %101 = vector.broadcast %99 : vector<1x448xf32> to vector<16x448xf32>
    %102 = arith.mulf %100, %101 : vector<16x448xf32>
    %103 = arith.addf %86, %102 : vector<16x448xf32>
    %c6 = arith.constant 6 : index
    %c0_48 = arith.constant 0 : index
    %c0_49 = arith.constant 0 : index
    %104 = vector.load %arg3[%c6, %c0_48, %c0_49] : memref<25x16x1xbf16, #tpu.memory_space<vmem>>, vector<1x16x1xbf16>
    %105 = vector.shape_cast %104 : vector<1x16x1xbf16> to vector<16x1xbf16>
    %c0_50 = arith.constant 0 : index
    %c0_51 = arith.constant 0 : index
    %c1_52 = arith.constant 1 : index
    %106 = vector.load %arg2[%c0_50, %c0_51, %c1_52] : memref<1x1x544xbf16, #tpu.memory_space<vmem>>, vector<1x1x448xbf16>
    %107 = vector.shape_cast %106 : vector<1x1x448xbf16> to vector<1x448xbf16>
    %c0_53 = arith.constant 0 : index
    %c0_54 = arith.constant 0 : index
    %c33 = arith.constant 33 : index
    %108 = vector.load %arg1[%c0_53, %c0_54, %c33] : memref<1x1x544xbf16, #tpu.memory_space<vmem>>, vector<1x1x448xbf16>
    %109 = vector.shape_cast %108 : vector<1x1x448xbf16> to vector<1x448xbf16>
    %110 = arith.extf %105 : vector<16x1xbf16> to vector<16x1xf32>
    %111 = arith.extf %107 : vector<1x448xbf16> to vector<1x448xf32>
    %112 = vector.broadcast %110 : vector<16x1xf32> to vector<16x448xf32>
    %113 = vector.broadcast %111 : vector<1x448xf32> to vector<16x448xf32>
    %114 = arith.mulf %112, %113 : vector<16x448xf32>
    %115 = arith.addf %98, %114 : vector<16x448xf32>
    %116 = arith.extf %109 : vector<1x448xbf16> to vector<1x448xf32>
    %117 = vector.broadcast %110 : vector<16x1xf32> to vector<16x448xf32>
    %118 = vector.broadcast %116 : vector<1x448xf32> to vector<16x448xf32>
    %119 = arith.mulf %117, %118 : vector<16x448xf32>
    %120 = arith.addf %103, %119 : vector<16x448xf32>
    %c7 = arith.constant 7 : index
    %c0_55 = arith.constant 0 : index
    %c0_56 = arith.constant 0 : index
    %121 = vector.load %arg3[%c7, %c0_55, %c0_56] : memref<25x16x1xbf16, #tpu.memory_space<vmem>>, vector<1x16x1xbf16>
    %122 = vector.shape_cast %121 : vector<1x16x1xbf16> to vector<16x1xbf16>
    %c0_57 = arith.constant 0 : index
    %c0_58 = arith.constant 0 : index
    %c2_59 = arith.constant 2 : index
    %123 = vector.load %arg2[%c0_57, %c0_58, %c2_59] : memref<1x1x544xbf16, #tpu.memory_space<vmem>>, vector<1x1x448xbf16>
    %124 = vector.shape_cast %123 : vector<1x1x448xbf16> to vector<1x448xbf16>
    %c0_60 = arith.constant 0 : index
    %c0_61 = arith.constant 0 : index
    %c34 = arith.constant 34 : index
    %125 = vector.load %arg1[%c0_60, %c0_61, %c34] : memref<1x1x544xbf16, #tpu.memory_space<vmem>>, vector<1x1x448xbf16>
    %126 = vector.shape_cast %125 : vector<1x1x448xbf16> to vector<1x448xbf16>
    %127 = arith.extf %122 : vector<16x1xbf16> to vector<16x1xf32>
    %128 = arith.extf %124 : vector<1x448xbf16> to vector<1x448xf32>
    %129 = vector.broadcast %127 : vector<16x1xf32> to vector<16x448xf32>
    %130 = vector.broadcast %128 : vector<1x448xf32> to vector<16x448xf32>
    %131 = arith.mulf %129, %130 : vector<16x448xf32>
    %132 = arith.addf %115, %131 : vector<16x448xf32>
    %133 = arith.extf %126 : vector<1x448xbf16> to vector<1x448xf32>
    %134 = vector.broadcast %127 : vector<16x1xf32> to vector<16x448xf32>
    %135 = vector.broadcast %133 : vector<1x448xf32> to vector<16x448xf32>
    %136 = arith.mulf %134, %135 : vector<16x448xf32>
    %137 = arith.addf %120, %136 : vector<16x448xf32>
    %c8 = arith.constant 8 : index
    %c0_62 = arith.constant 0 : index
    %c0_63 = arith.constant 0 : index
    %138 = vector.load %arg3[%c8, %c0_62, %c0_63] : memref<25x16x1xbf16, #tpu.memory_space<vmem>>, vector<1x16x1xbf16>
    %139 = vector.shape_cast %138 : vector<1x16x1xbf16> to vector<16x1xbf16>
    %c0_64 = arith.constant 0 : index
    %c0_65 = arith.constant 0 : index
    %c3_66 = arith.constant 3 : index
    %140 = vector.load %arg2[%c0_64, %c0_65, %c3_66] : memref<1x1x544xbf16, #tpu.memory_space<vmem>>, vector<1x1x448xbf16>
    %141 = vector.shape_cast %140 : vector<1x1x448xbf16> to vector<1x448xbf16>
    %c0_67 = arith.constant 0 : index
    %c0_68 = arith.constant 0 : index
    %c35 = arith.constant 35 : index
    %142 = vector.load %arg1[%c0_67, %c0_68, %c35] : memref<1x1x544xbf16, #tpu.memory_space<vmem>>, vector<1x1x448xbf16>
    %143 = vector.shape_cast %142 : vector<1x1x448xbf16> to vector<1x448xbf16>
    %144 = arith.extf %139 : vector<16x1xbf16> to vector<16x1xf32>
    %145 = arith.extf %141 : vector<1x448xbf16> to vector<1x448xf32>
    %146 = vector.broadcast %144 : vector<16x1xf32> to vector<16x448xf32>
    %147 = vector.broadcast %145 : vector<1x448xf32> to vector<16x448xf32>
    %148 = arith.mulf %146, %147 : vector<16x448xf32>
    %149 = arith.addf %132, %148 : vector<16x448xf32>
    %150 = arith.extf %143 : vector<1x448xbf16> to vector<1x448xf32>
    %151 = vector.broadcast %144 : vector<16x1xf32> to vector<16x448xf32>
    %152 = vector.broadcast %150 : vector<1x448xf32> to vector<16x448xf32>
    %153 = arith.mulf %151, %152 : vector<16x448xf32>
    %154 = arith.addf %137, %153 : vector<16x448xf32>
    %c9 = arith.constant 9 : index
    %c0_69 = arith.constant 0 : index
    %c0_70 = arith.constant 0 : index
    %155 = vector.load %arg3[%c9, %c0_69, %c0_70] : memref<25x16x1xbf16, #tpu.memory_space<vmem>>, vector<1x16x1xbf16>
    %156 = vector.shape_cast %155 : vector<1x16x1xbf16> to vector<16x1xbf16>
    %c0_71 = arith.constant 0 : index
    %c0_72 = arith.constant 0 : index
    %c4_73 = arith.constant 4 : index
    %157 = vector.load %arg2[%c0_71, %c0_72, %c4_73] : memref<1x1x544xbf16, #tpu.memory_space<vmem>>, vector<1x1x448xbf16>
    %158 = vector.shape_cast %157 : vector<1x1x448xbf16> to vector<1x448xbf16>
    %c0_74 = arith.constant 0 : index
    %c0_75 = arith.constant 0 : index
    %c36 = arith.constant 36 : index
    %159 = vector.load %arg1[%c0_74, %c0_75, %c36] : memref<1x1x544xbf16, #tpu.memory_space<vmem>>, vector<1x1x448xbf16>
    %160 = vector.shape_cast %159 : vector<1x1x448xbf16> to vector<1x448xbf16>
    %161 = arith.extf %156 : vector<16x1xbf16> to vector<16x1xf32>
    %162 = arith.extf %158 : vector<1x448xbf16> to vector<1x448xf32>
    %163 = vector.broadcast %161 : vector<16x1xf32> to vector<16x448xf32>
    %164 = vector.broadcast %162 : vector<1x448xf32> to vector<16x448xf32>
    %165 = arith.mulf %163, %164 : vector<16x448xf32>
    %166 = arith.addf %149, %165 : vector<16x448xf32>
    %167 = arith.extf %160 : vector<1x448xbf16> to vector<1x448xf32>
    %168 = vector.broadcast %161 : vector<16x1xf32> to vector<16x448xf32>
    %169 = vector.broadcast %167 : vector<1x448xf32> to vector<16x448xf32>
    %170 = arith.mulf %168, %169 : vector<16x448xf32>
    %171 = arith.addf %154, %170 : vector<16x448xf32>
    %c10 = arith.constant 10 : index
    %c0_76 = arith.constant 0 : index
    %c0_77 = arith.constant 0 : index
    %172 = vector.load %arg3[%c10, %c0_76, %c0_77] : memref<25x16x1xbf16, #tpu.memory_space<vmem>>, vector<1x16x1xbf16>
    %173 = vector.shape_cast %172 : vector<1x16x1xbf16> to vector<16x1xbf16>
    %c0_78 = arith.constant 0 : index
    %c0_79 = arith.constant 0 : index
    %c32_80 = arith.constant 32 : index
    %174 = vector.load %arg1[%c0_78, %c0_79, %c32_80] : memref<1x1x544xbf16, #tpu.memory_space<vmem>>, vector<1x1x448xbf16>
    %175 = vector.shape_cast %174 : vector<1x1x448xbf16> to vector<1x448xbf16>
    %c0_81 = arith.constant 0 : index
    %c0_82 = arith.constant 0 : index
    %c32_83 = arith.constant 32 : index
    %176 = vector.load %arg2[%c0_81, %c0_82, %c32_83] : memref<1x1x544xbf16, #tpu.memory_space<vmem>>, vector<1x1x448xbf16>
    %177 = vector.shape_cast %176 : vector<1x1x448xbf16> to vector<1x448xbf16>
    %178 = arith.extf %173 : vector<16x1xbf16> to vector<16x1xf32>
    %179 = arith.extf %175 : vector<1x448xbf16> to vector<1x448xf32>
    %180 = vector.broadcast %178 : vector<16x1xf32> to vector<16x448xf32>
    %181 = vector.broadcast %179 : vector<1x448xf32> to vector<16x448xf32>
    %182 = arith.mulf %180, %181 : vector<16x448xf32>
    %183 = arith.addf %166, %182 : vector<16x448xf32>
    %184 = arith.extf %177 : vector<1x448xbf16> to vector<1x448xf32>
    %185 = vector.broadcast %178 : vector<16x1xf32> to vector<16x448xf32>
    %186 = vector.broadcast %184 : vector<1x448xf32> to vector<16x448xf32>
    %187 = arith.mulf %185, %186 : vector<16x448xf32>
    %188 = arith.addf %171, %187 : vector<16x448xf32>
    %c11 = arith.constant 11 : index
    %c0_84 = arith.constant 0 : index
    %c0_85 = arith.constant 0 : index
    %189 = vector.load %arg3[%c11, %c0_84, %c0_85] : memref<25x16x1xbf16, #tpu.memory_space<vmem>>, vector<1x16x1xbf16>
    %190 = vector.shape_cast %189 : vector<1x16x1xbf16> to vector<16x1xbf16>
    %c0_86 = arith.constant 0 : index
    %c0_87 = arith.constant 0 : index
    %c33_88 = arith.constant 33 : index
    %191 = vector.load %arg1[%c0_86, %c0_87, %c33_88] : memref<1x1x544xbf16, #tpu.memory_space<vmem>>, vector<1x1x448xbf16>
    %192 = vector.shape_cast %191 : vector<1x1x448xbf16> to vector<1x448xbf16>
    %c0_89 = arith.constant 0 : index
    %c0_90 = arith.constant 0 : index
    %c33_91 = arith.constant 33 : index
    %193 = vector.load %arg2[%c0_89, %c0_90, %c33_91] : memref<1x1x544xbf16, #tpu.memory_space<vmem>>, vector<1x1x448xbf16>
    %194 = vector.shape_cast %193 : vector<1x1x448xbf16> to vector<1x448xbf16>
    %195 = arith.extf %190 : vector<16x1xbf16> to vector<16x1xf32>
    %196 = arith.extf %192 : vector<1x448xbf16> to vector<1x448xf32>
    %197 = vector.broadcast %195 : vector<16x1xf32> to vector<16x448xf32>
    %198 = vector.broadcast %196 : vector<1x448xf32> to vector<16x448xf32>
    %199 = arith.mulf %197, %198 : vector<16x448xf32>
    %200 = arith.addf %183, %199 : vector<16x448xf32>
    %201 = arith.extf %194 : vector<1x448xbf16> to vector<1x448xf32>
    %202 = vector.broadcast %195 : vector<16x1xf32> to vector<16x448xf32>
    %203 = vector.broadcast %201 : vector<1x448xf32> to vector<16x448xf32>
    %204 = arith.mulf %202, %203 : vector<16x448xf32>
    %205 = arith.addf %188, %204 : vector<16x448xf32>
    %c12 = arith.constant 12 : index
    %c0_92 = arith.constant 0 : index
    %c0_93 = arith.constant 0 : index
    %206 = vector.load %arg3[%c12, %c0_92, %c0_93] : memref<25x16x1xbf16, #tpu.memory_space<vmem>>, vector<1x16x1xbf16>
    %207 = vector.shape_cast %206 : vector<1x16x1xbf16> to vector<16x1xbf16>
    %c0_94 = arith.constant 0 : index
    %c0_95 = arith.constant 0 : index
    %c34_96 = arith.constant 34 : index
    %208 = vector.load %arg1[%c0_94, %c0_95, %c34_96] : memref<1x1x544xbf16, #tpu.memory_space<vmem>>, vector<1x1x448xbf16>
    %209 = vector.shape_cast %208 : vector<1x1x448xbf16> to vector<1x448xbf16>
    %c0_97 = arith.constant 0 : index
    %c0_98 = arith.constant 0 : index
    %c34_99 = arith.constant 34 : index
    %210 = vector.load %arg2[%c0_97, %c0_98, %c34_99] : memref<1x1x544xbf16, #tpu.memory_space<vmem>>, vector<1x1x448xbf16>
    %211 = vector.shape_cast %210 : vector<1x1x448xbf16> to vector<1x448xbf16>
    %212 = arith.extf %207 : vector<16x1xbf16> to vector<16x1xf32>
    %213 = arith.extf %209 : vector<1x448xbf16> to vector<1x448xf32>
    %214 = vector.broadcast %212 : vector<16x1xf32> to vector<16x448xf32>
    %215 = vector.broadcast %213 : vector<1x448xf32> to vector<16x448xf32>
    %216 = arith.mulf %214, %215 : vector<16x448xf32>
    %217 = arith.addf %200, %216 : vector<16x448xf32>
    %218 = arith.extf %211 : vector<1x448xbf16> to vector<1x448xf32>
    %219 = vector.broadcast %212 : vector<16x1xf32> to vector<16x448xf32>
    %220 = vector.broadcast %218 : vector<1x448xf32> to vector<16x448xf32>
    %221 = arith.mulf %219, %220 : vector<16x448xf32>
    %222 = arith.addf %205, %221 : vector<16x448xf32>
    %c13 = arith.constant 13 : index
    %c0_100 = arith.constant 0 : index
    %c0_101 = arith.constant 0 : index
    %223 = vector.load %arg3[%c13, %c0_100, %c0_101] : memref<25x16x1xbf16, #tpu.memory_space<vmem>>, vector<1x16x1xbf16>
    %224 = vector.shape_cast %223 : vector<1x16x1xbf16> to vector<16x1xbf16>
    %c0_102 = arith.constant 0 : index
    %c0_103 = arith.constant 0 : index
    %c35_104 = arith.constant 35 : index
    %225 = vector.load %arg1[%c0_102, %c0_103, %c35_104] : memref<1x1x544xbf16, #tpu.memory_space<vmem>>, vector<1x1x448xbf16>
    %226 = vector.shape_cast %225 : vector<1x1x448xbf16> to vector<1x448xbf16>
    %c0_105 = arith.constant 0 : index
    %c0_106 = arith.constant 0 : index
    %c35_107 = arith.constant 35 : index
    %227 = vector.load %arg2[%c0_105, %c0_106, %c35_107] : memref<1x1x544xbf16, #tpu.memory_space<vmem>>, vector<1x1x448xbf16>
    %228 = vector.shape_cast %227 : vector<1x1x448xbf16> to vector<1x448xbf16>
    %229 = arith.extf %224 : vector<16x1xbf16> to vector<16x1xf32>
    %230 = arith.extf %226 : vector<1x448xbf16> to vector<1x448xf32>
    %231 = vector.broadcast %229 : vector<16x1xf32> to vector<16x448xf32>
    %232 = vector.broadcast %230 : vector<1x448xf32> to vector<16x448xf32>
    %233 = arith.mulf %231, %232 : vector<16x448xf32>
    %234 = arith.addf %217, %233 : vector<16x448xf32>
    %235 = arith.extf %228 : vector<1x448xbf16> to vector<1x448xf32>
    %236 = vector.broadcast %229 : vector<16x1xf32> to vector<16x448xf32>
    %237 = vector.broadcast %235 : vector<1x448xf32> to vector<16x448xf32>
    %238 = arith.mulf %236, %237 : vector<16x448xf32>
    %239 = arith.addf %222, %238 : vector<16x448xf32>
    %c14 = arith.constant 14 : index
    %c0_108 = arith.constant 0 : index
    %c0_109 = arith.constant 0 : index
    %240 = vector.load %arg3[%c14, %c0_108, %c0_109] : memref<25x16x1xbf16, #tpu.memory_space<vmem>>, vector<1x16x1xbf16>
    %241 = vector.shape_cast %240 : vector<1x16x1xbf16> to vector<16x1xbf16>
    %c0_110 = arith.constant 0 : index
    %c0_111 = arith.constant 0 : index
    %c36_112 = arith.constant 36 : index
    %242 = vector.load %arg1[%c0_110, %c0_111, %c36_112] : memref<1x1x544xbf16, #tpu.memory_space<vmem>>, vector<1x1x448xbf16>
    %243 = vector.shape_cast %242 : vector<1x1x448xbf16> to vector<1x448xbf16>
    %c0_113 = arith.constant 0 : index
    %c0_114 = arith.constant 0 : index
    %c36_115 = arith.constant 36 : index
    %244 = vector.load %arg2[%c0_113, %c0_114, %c36_115] : memref<1x1x544xbf16, #tpu.memory_space<vmem>>, vector<1x1x448xbf16>
    %245 = vector.shape_cast %244 : vector<1x1x448xbf16> to vector<1x448xbf16>
    %246 = arith.extf %241 : vector<16x1xbf16> to vector<16x1xf32>
    %247 = arith.extf %243 : vector<1x448xbf16> to vector<1x448xf32>
    %248 = vector.broadcast %246 : vector<16x1xf32> to vector<16x448xf32>
    %249 = vector.broadcast %247 : vector<1x448xf32> to vector<16x448xf32>
    %250 = arith.mulf %248, %249 : vector<16x448xf32>
    %251 = arith.addf %234, %250 : vector<16x448xf32>
    %252 = arith.extf %245 : vector<1x448xbf16> to vector<1x448xf32>
    %253 = vector.broadcast %246 : vector<16x1xf32> to vector<16x448xf32>
    %254 = vector.broadcast %252 : vector<1x448xf32> to vector<16x448xf32>
    %255 = arith.mulf %253, %254 : vector<16x448xf32>
    %256 = arith.addf %239, %255 : vector<16x448xf32>
    %c15 = arith.constant 15 : index
    %c0_116 = arith.constant 0 : index
    %c0_117 = arith.constant 0 : index
    %257 = vector.load %arg3[%c15, %c0_116, %c0_117] : memref<25x16x1xbf16, #tpu.memory_space<vmem>>, vector<1x16x1xbf16>
    %258 = vector.shape_cast %257 : vector<1x16x1xbf16> to vector<16x1xbf16>
    %c0_118 = arith.constant 0 : index
    %c0_119 = arith.constant 0 : index
    %c32_120 = arith.constant 32 : index
    %259 = vector.load %arg2[%c0_118, %c0_119, %c32_120] : memref<1x1x544xbf16, #tpu.memory_space<vmem>>, vector<1x1x448xbf16>
    %260 = vector.shape_cast %259 : vector<1x1x448xbf16> to vector<1x448xbf16>
    %c0_121 = arith.constant 0 : index
    %c0_122 = arith.constant 0 : index
    %c64 = arith.constant 64 : index
    %261 = vector.load %arg1[%c0_121, %c0_122, %c64] : memref<1x1x544xbf16, #tpu.memory_space<vmem>>, vector<1x1x448xbf16>
    %262 = vector.shape_cast %261 : vector<1x1x448xbf16> to vector<1x448xbf16>
    %263 = arith.extf %258 : vector<16x1xbf16> to vector<16x1xf32>
    %264 = arith.extf %260 : vector<1x448xbf16> to vector<1x448xf32>
    %265 = vector.broadcast %263 : vector<16x1xf32> to vector<16x448xf32>
    %266 = vector.broadcast %264 : vector<1x448xf32> to vector<16x448xf32>
    %267 = arith.mulf %265, %266 : vector<16x448xf32>
    %268 = arith.addf %251, %267 : vector<16x448xf32>
    %269 = arith.extf %262 : vector<1x448xbf16> to vector<1x448xf32>
    %270 = vector.broadcast %263 : vector<16x1xf32> to vector<16x448xf32>
    %271 = vector.broadcast %269 : vector<1x448xf32> to vector<16x448xf32>
    %272 = arith.mulf %270, %271 : vector<16x448xf32>
    %273 = arith.addf %256, %272 : vector<16x448xf32>
    %c16 = arith.constant 16 : index
    %c0_123 = arith.constant 0 : index
    %c0_124 = arith.constant 0 : index
    %274 = vector.load %arg3[%c16, %c0_123, %c0_124] : memref<25x16x1xbf16, #tpu.memory_space<vmem>>, vector<1x16x1xbf16>
    %275 = vector.shape_cast %274 : vector<1x16x1xbf16> to vector<16x1xbf16>
    %c0_125 = arith.constant 0 : index
    %c0_126 = arith.constant 0 : index
    %c33_127 = arith.constant 33 : index
    %276 = vector.load %arg2[%c0_125, %c0_126, %c33_127] : memref<1x1x544xbf16, #tpu.memory_space<vmem>>, vector<1x1x448xbf16>
    %277 = vector.shape_cast %276 : vector<1x1x448xbf16> to vector<1x448xbf16>
    %c0_128 = arith.constant 0 : index
    %c0_129 = arith.constant 0 : index
    %c65 = arith.constant 65 : index
    %278 = vector.load %arg1[%c0_128, %c0_129, %c65] : memref<1x1x544xbf16, #tpu.memory_space<vmem>>, vector<1x1x448xbf16>
    %279 = vector.shape_cast %278 : vector<1x1x448xbf16> to vector<1x448xbf16>
    %280 = arith.extf %275 : vector<16x1xbf16> to vector<16x1xf32>
    %281 = arith.extf %277 : vector<1x448xbf16> to vector<1x448xf32>
    %282 = vector.broadcast %280 : vector<16x1xf32> to vector<16x448xf32>
    %283 = vector.broadcast %281 : vector<1x448xf32> to vector<16x448xf32>
    %284 = arith.mulf %282, %283 : vector<16x448xf32>
    %285 = arith.addf %268, %284 : vector<16x448xf32>
    %286 = arith.extf %279 : vector<1x448xbf16> to vector<1x448xf32>
    %287 = vector.broadcast %280 : vector<16x1xf32> to vector<16x448xf32>
    %288 = vector.broadcast %286 : vector<1x448xf32> to vector<16x448xf32>
    %289 = arith.mulf %287, %288 : vector<16x448xf32>
    %290 = arith.addf %273, %289 : vector<16x448xf32>
    %c17 = arith.constant 17 : index
    %c0_130 = arith.constant 0 : index
    %c0_131 = arith.constant 0 : index
    %291 = vector.load %arg3[%c17, %c0_130, %c0_131] : memref<25x16x1xbf16, #tpu.memory_space<vmem>>, vector<1x16x1xbf16>
    %292 = vector.shape_cast %291 : vector<1x16x1xbf16> to vector<16x1xbf16>
    %c0_132 = arith.constant 0 : index
    %c0_133 = arith.constant 0 : index
    %c34_134 = arith.constant 34 : index
    %293 = vector.load %arg2[%c0_132, %c0_133, %c34_134] : memref<1x1x544xbf16, #tpu.memory_space<vmem>>, vector<1x1x448xbf16>
    %294 = vector.shape_cast %293 : vector<1x1x448xbf16> to vector<1x448xbf16>
    %c0_135 = arith.constant 0 : index
    %c0_136 = arith.constant 0 : index
    %c66 = arith.constant 66 : index
    %295 = vector.load %arg1[%c0_135, %c0_136, %c66] : memref<1x1x544xbf16, #tpu.memory_space<vmem>>, vector<1x1x448xbf16>
    %296 = vector.shape_cast %295 : vector<1x1x448xbf16> to vector<1x448xbf16>
    %297 = arith.extf %292 : vector<16x1xbf16> to vector<16x1xf32>
    %298 = arith.extf %294 : vector<1x448xbf16> to vector<1x448xf32>
    %299 = vector.broadcast %297 : vector<16x1xf32> to vector<16x448xf32>
    %300 = vector.broadcast %298 : vector<1x448xf32> to vector<16x448xf32>
    %301 = arith.mulf %299, %300 : vector<16x448xf32>
    %302 = arith.addf %285, %301 : vector<16x448xf32>
    %303 = arith.extf %296 : vector<1x448xbf16> to vector<1x448xf32>
    %304 = vector.broadcast %297 : vector<16x1xf32> to vector<16x448xf32>
    %305 = vector.broadcast %303 : vector<1x448xf32> to vector<16x448xf32>
    %306 = arith.mulf %304, %305 : vector<16x448xf32>
    %307 = arith.addf %290, %306 : vector<16x448xf32>
    %c18 = arith.constant 18 : index
    %c0_137 = arith.constant 0 : index
    %c0_138 = arith.constant 0 : index
    %308 = vector.load %arg3[%c18, %c0_137, %c0_138] : memref<25x16x1xbf16, #tpu.memory_space<vmem>>, vector<1x16x1xbf16>
    %309 = vector.shape_cast %308 : vector<1x16x1xbf16> to vector<16x1xbf16>
    %c0_139 = arith.constant 0 : index
    %c0_140 = arith.constant 0 : index
    %c35_141 = arith.constant 35 : index
    %310 = vector.load %arg2[%c0_139, %c0_140, %c35_141] : memref<1x1x544xbf16, #tpu.memory_space<vmem>>, vector<1x1x448xbf16>
    %311 = vector.shape_cast %310 : vector<1x1x448xbf16> to vector<1x448xbf16>
    %c0_142 = arith.constant 0 : index
    %c0_143 = arith.constant 0 : index
    %c67 = arith.constant 67 : index
    %312 = vector.load %arg1[%c0_142, %c0_143, %c67] : memref<1x1x544xbf16, #tpu.memory_space<vmem>>, vector<1x1x448xbf16>
    %313 = vector.shape_cast %312 : vector<1x1x448xbf16> to vector<1x448xbf16>
    %314 = arith.extf %309 : vector<16x1xbf16> to vector<16x1xf32>
    %315 = arith.extf %311 : vector<1x448xbf16> to vector<1x448xf32>
    %316 = vector.broadcast %314 : vector<16x1xf32> to vector<16x448xf32>
    %317 = vector.broadcast %315 : vector<1x448xf32> to vector<16x448xf32>
    %318 = arith.mulf %316, %317 : vector<16x448xf32>
    %319 = arith.addf %302, %318 : vector<16x448xf32>
    %320 = arith.extf %313 : vector<1x448xbf16> to vector<1x448xf32>
    %321 = vector.broadcast %314 : vector<16x1xf32> to vector<16x448xf32>
    %322 = vector.broadcast %320 : vector<1x448xf32> to vector<16x448xf32>
    %323 = arith.mulf %321, %322 : vector<16x448xf32>
    %324 = arith.addf %307, %323 : vector<16x448xf32>
    %c19 = arith.constant 19 : index
    %c0_144 = arith.constant 0 : index
    %c0_145 = arith.constant 0 : index
    %325 = vector.load %arg3[%c19, %c0_144, %c0_145] : memref<25x16x1xbf16, #tpu.memory_space<vmem>>, vector<1x16x1xbf16>
    %326 = vector.shape_cast %325 : vector<1x16x1xbf16> to vector<16x1xbf16>
    %c0_146 = arith.constant 0 : index
    %c0_147 = arith.constant 0 : index
    %c36_148 = arith.constant 36 : index
    %327 = vector.load %arg2[%c0_146, %c0_147, %c36_148] : memref<1x1x544xbf16, #tpu.memory_space<vmem>>, vector<1x1x448xbf16>
    %328 = vector.shape_cast %327 : vector<1x1x448xbf16> to vector<1x448xbf16>
    %c0_149 = arith.constant 0 : index
    %c0_150 = arith.constant 0 : index
    %c68 = arith.constant 68 : index
    %329 = vector.load %arg1[%c0_149, %c0_150, %c68] : memref<1x1x544xbf16, #tpu.memory_space<vmem>>, vector<1x1x448xbf16>
    %330 = vector.shape_cast %329 : vector<1x1x448xbf16> to vector<1x448xbf16>
    %331 = arith.extf %326 : vector<16x1xbf16> to vector<16x1xf32>
    %332 = arith.extf %328 : vector<1x448xbf16> to vector<1x448xf32>
    %333 = vector.broadcast %331 : vector<16x1xf32> to vector<16x448xf32>
    %334 = vector.broadcast %332 : vector<1x448xf32> to vector<16x448xf32>
    %335 = arith.mulf %333, %334 : vector<16x448xf32>
    %336 = arith.addf %319, %335 : vector<16x448xf32>
    %337 = arith.extf %330 : vector<1x448xbf16> to vector<1x448xf32>
    %338 = vector.broadcast %331 : vector<16x1xf32> to vector<16x448xf32>
    %339 = vector.broadcast %337 : vector<1x448xf32> to vector<16x448xf32>
    %340 = arith.mulf %338, %339 : vector<16x448xf32>
    %341 = arith.addf %324, %340 : vector<16x448xf32>
    %c20 = arith.constant 20 : index
    %c0_151 = arith.constant 0 : index
    %c0_152 = arith.constant 0 : index
    %342 = vector.load %arg3[%c20, %c0_151, %c0_152] : memref<25x16x1xbf16, #tpu.memory_space<vmem>>, vector<1x16x1xbf16>
    %343 = vector.shape_cast %342 : vector<1x16x1xbf16> to vector<16x1xbf16>
    %c0_153 = arith.constant 0 : index
    %c0_154 = arith.constant 0 : index
    %c64_155 = arith.constant 64 : index
    %344 = vector.load %arg1[%c0_153, %c0_154, %c64_155] : memref<1x1x544xbf16, #tpu.memory_space<vmem>>, vector<1x1x448xbf16>
    %345 = vector.shape_cast %344 : vector<1x1x448xbf16> to vector<1x448xbf16>
    %c0_156 = arith.constant 0 : index
    %c0_157 = arith.constant 0 : index
    %c64_158 = arith.constant 64 : index
    %346 = vector.load %arg2[%c0_156, %c0_157, %c64_158] : memref<1x1x544xbf16, #tpu.memory_space<vmem>>, vector<1x1x448xbf16>
    %347 = vector.shape_cast %346 : vector<1x1x448xbf16> to vector<1x448xbf16>
    %348 = arith.extf %343 : vector<16x1xbf16> to vector<16x1xf32>
    %349 = arith.extf %345 : vector<1x448xbf16> to vector<1x448xf32>
    %350 = vector.broadcast %348 : vector<16x1xf32> to vector<16x448xf32>
    %351 = vector.broadcast %349 : vector<1x448xf32> to vector<16x448xf32>
    %352 = arith.mulf %350, %351 : vector<16x448xf32>
    %353 = arith.addf %336, %352 : vector<16x448xf32>
    %354 = arith.extf %347 : vector<1x448xbf16> to vector<1x448xf32>
    %355 = vector.broadcast %348 : vector<16x1xf32> to vector<16x448xf32>
    %356 = vector.broadcast %354 : vector<1x448xf32> to vector<16x448xf32>
    %357 = arith.mulf %355, %356 : vector<16x448xf32>
    %358 = arith.addf %341, %357 : vector<16x448xf32>
    %c21 = arith.constant 21 : index
    %c0_159 = arith.constant 0 : index
    %c0_160 = arith.constant 0 : index
    %359 = vector.load %arg3[%c21, %c0_159, %c0_160] : memref<25x16x1xbf16, #tpu.memory_space<vmem>>, vector<1x16x1xbf16>
    %360 = vector.shape_cast %359 : vector<1x16x1xbf16> to vector<16x1xbf16>
    %c0_161 = arith.constant 0 : index
    %c0_162 = arith.constant 0 : index
    %c65_163 = arith.constant 65 : index
    %361 = vector.load %arg1[%c0_161, %c0_162, %c65_163] : memref<1x1x544xbf16, #tpu.memory_space<vmem>>, vector<1x1x448xbf16>
    %362 = vector.shape_cast %361 : vector<1x1x448xbf16> to vector<1x448xbf16>
    %c0_164 = arith.constant 0 : index
    %c0_165 = arith.constant 0 : index
    %c65_166 = arith.constant 65 : index
    %363 = vector.load %arg2[%c0_164, %c0_165, %c65_166] : memref<1x1x544xbf16, #tpu.memory_space<vmem>>, vector<1x1x448xbf16>
    %364 = vector.shape_cast %363 : vector<1x1x448xbf16> to vector<1x448xbf16>
    %365 = arith.extf %360 : vector<16x1xbf16> to vector<16x1xf32>
    %366 = arith.extf %362 : vector<1x448xbf16> to vector<1x448xf32>
    %367 = vector.broadcast %365 : vector<16x1xf32> to vector<16x448xf32>
    %368 = vector.broadcast %366 : vector<1x448xf32> to vector<16x448xf32>
    %369 = arith.mulf %367, %368 : vector<16x448xf32>
    %370 = arith.addf %353, %369 : vector<16x448xf32>
    %371 = arith.extf %364 : vector<1x448xbf16> to vector<1x448xf32>
    %372 = vector.broadcast %365 : vector<16x1xf32> to vector<16x448xf32>
    %373 = vector.broadcast %371 : vector<1x448xf32> to vector<16x448xf32>
    %374 = arith.mulf %372, %373 : vector<16x448xf32>
    %375 = arith.addf %358, %374 : vector<16x448xf32>
    %c22 = arith.constant 22 : index
    %c0_167 = arith.constant 0 : index
    %c0_168 = arith.constant 0 : index
    %376 = vector.load %arg3[%c22, %c0_167, %c0_168] : memref<25x16x1xbf16, #tpu.memory_space<vmem>>, vector<1x16x1xbf16>
    %377 = vector.shape_cast %376 : vector<1x16x1xbf16> to vector<16x1xbf16>
    %c0_169 = arith.constant 0 : index
    %c0_170 = arith.constant 0 : index
    %c66_171 = arith.constant 66 : index
    %378 = vector.load %arg1[%c0_169, %c0_170, %c66_171] : memref<1x1x544xbf16, #tpu.memory_space<vmem>>, vector<1x1x448xbf16>
    %379 = vector.shape_cast %378 : vector<1x1x448xbf16> to vector<1x448xbf16>
    %c0_172 = arith.constant 0 : index
    %c0_173 = arith.constant 0 : index
    %c66_174 = arith.constant 66 : index
    %380 = vector.load %arg2[%c0_172, %c0_173, %c66_174] : memref<1x1x544xbf16, #tpu.memory_space<vmem>>, vector<1x1x448xbf16>
    %381 = vector.shape_cast %380 : vector<1x1x448xbf16> to vector<1x448xbf16>
    %382 = arith.extf %377 : vector<16x1xbf16> to vector<16x1xf32>
    %383 = arith.extf %379 : vector<1x448xbf16> to vector<1x448xf32>
    %384 = vector.broadcast %382 : vector<16x1xf32> to vector<16x448xf32>
    %385 = vector.broadcast %383 : vector<1x448xf32> to vector<16x448xf32>
    %386 = arith.mulf %384, %385 : vector<16x448xf32>
    %387 = arith.addf %370, %386 : vector<16x448xf32>
    %388 = arith.extf %381 : vector<1x448xbf16> to vector<1x448xf32>
    %389 = vector.broadcast %382 : vector<16x1xf32> to vector<16x448xf32>
    %390 = vector.broadcast %388 : vector<1x448xf32> to vector<16x448xf32>
    %391 = arith.mulf %389, %390 : vector<16x448xf32>
    %392 = arith.addf %375, %391 : vector<16x448xf32>
    %c23 = arith.constant 23 : index
    %c0_175 = arith.constant 0 : index
    %c0_176 = arith.constant 0 : index
    %393 = vector.load %arg3[%c23, %c0_175, %c0_176] : memref<25x16x1xbf16, #tpu.memory_space<vmem>>, vector<1x16x1xbf16>
    %394 = vector.shape_cast %393 : vector<1x16x1xbf16> to vector<16x1xbf16>
    %c0_177 = arith.constant 0 : index
    %c0_178 = arith.constant 0 : index
    %c67_179 = arith.constant 67 : index
    %395 = vector.load %arg1[%c0_177, %c0_178, %c67_179] : memref<1x1x544xbf16, #tpu.memory_space<vmem>>, vector<1x1x448xbf16>
    %396 = vector.shape_cast %395 : vector<1x1x448xbf16> to vector<1x448xbf16>
    %c0_180 = arith.constant 0 : index
    %c0_181 = arith.constant 0 : index
    %c67_182 = arith.constant 67 : index
    %397 = vector.load %arg2[%c0_180, %c0_181, %c67_182] : memref<1x1x544xbf16, #tpu.memory_space<vmem>>, vector<1x1x448xbf16>
    %398 = vector.shape_cast %397 : vector<1x1x448xbf16> to vector<1x448xbf16>
    %399 = arith.extf %394 : vector<16x1xbf16> to vector<16x1xf32>
    %400 = arith.extf %396 : vector<1x448xbf16> to vector<1x448xf32>
    %401 = vector.broadcast %399 : vector<16x1xf32> to vector<16x448xf32>
    %402 = vector.broadcast %400 : vector<1x448xf32> to vector<16x448xf32>
    %403 = arith.mulf %401, %402 : vector<16x448xf32>
    %404 = arith.addf %387, %403 : vector<16x448xf32>
    %405 = arith.extf %398 : vector<1x448xbf16> to vector<1x448xf32>
    %406 = vector.broadcast %399 : vector<16x1xf32> to vector<16x448xf32>
    %407 = vector.broadcast %405 : vector<1x448xf32> to vector<16x448xf32>
    %408 = arith.mulf %406, %407 : vector<16x448xf32>
    %409 = arith.addf %392, %408 : vector<16x448xf32>
    %c24 = arith.constant 24 : index
    %c0_183 = arith.constant 0 : index
    %c0_184 = arith.constant 0 : index
    %410 = vector.load %arg3[%c24, %c0_183, %c0_184] : memref<25x16x1xbf16, #tpu.memory_space<vmem>>, vector<1x16x1xbf16>
    %411 = vector.shape_cast %410 : vector<1x16x1xbf16> to vector<16x1xbf16>
    %c0_185 = arith.constant 0 : index
    %c0_186 = arith.constant 0 : index
    %c68_187 = arith.constant 68 : index
    %412 = vector.load %arg1[%c0_185, %c0_186, %c68_187] : memref<1x1x544xbf16, #tpu.memory_space<vmem>>, vector<1x1x448xbf16>
    %413 = vector.shape_cast %412 : vector<1x1x448xbf16> to vector<1x448xbf16>
    %c0_188 = arith.constant 0 : index
    %c0_189 = arith.constant 0 : index
    %c68_190 = arith.constant 68 : index
    %414 = vector.load %arg2[%c0_188, %c0_189, %c68_190] : memref<1x1x544xbf16, #tpu.memory_space<vmem>>, vector<1x1x448xbf16>
    %415 = vector.shape_cast %414 : vector<1x1x448xbf16> to vector<1x448xbf16>
    %416 = arith.extf %411 : vector<16x1xbf16> to vector<16x1xf32>
    %417 = arith.extf %413 : vector<1x448xbf16> to vector<1x448xf32>
    %418 = vector.broadcast %416 : vector<16x1xf32> to vector<16x448xf32>
    %419 = vector.broadcast %417 : vector<1x448xf32> to vector<16x448xf32>
    %420 = arith.mulf %418, %419 : vector<16x448xf32>
    %421 = arith.addf %404, %420 : vector<16x448xf32>
    %422 = arith.extf %415 : vector<1x448xbf16> to vector<1x448xf32>
    %423 = vector.broadcast %416 : vector<16x1xf32> to vector<16x448xf32>
    %424 = vector.broadcast %422 : vector<1x448xf32> to vector<16x448xf32>
    %425 = arith.mulf %423, %424 : vector<16x448xf32>
    %426 = arith.addf %409, %425 : vector<16x448xf32>
    %c0_191 = arith.constant 0 : index
    %c0_192 = arith.constant 0 : index
    %427 = vector.load %arg4[%c0_191, %c0_192] : memref<16x1xf32, #tpu.memory_space<vmem>>, vector<16x1xf32>
    %428 = vector.broadcast %427 : vector<16x1xf32> to vector<16x448xf32>
    %429 = arith.addf %421, %428 : vector<16x448xf32>
    %cst_193 = arith.constant 0.000000e+00 : f32
    %430 = vector.broadcast %cst_193 : f32 to vector<16x448xf32>
    %431 = arith.maximumf %429, %430 : vector<16x448xf32>
    %432 = vector.broadcast %427 : vector<16x1xf32> to vector<16x448xf32>
    %433 = arith.addf %426, %432 : vector<16x448xf32>
    %cst_194 = arith.constant 0.000000e+00 : f32
    %434 = vector.broadcast %cst_194 : f32 to vector<16x448xf32>
    %435 = arith.maximumf %433, %434 : vector<16x448xf32>
    %436 = arith.maximumf %431, %435 : vector<16x448xf32>
    %c0_195 = arith.constant 0 : index
    %c0_196 = arith.constant 0 : index
    %437 = vector.load %arg7[%c0_195, %c0_196] : memref<16x448xf32, #tpu.memory_space<vmem>>, vector<16x448xf32>
    tpu.vector_store %arg7[%c0_195, %c0_196], %436 {strides = array<i32>} : memref<16x448xf32, #tpu.memory_space<vmem>>, vector<16x448xf32>,
    %c0_197 = arith.constant 0 : index
    %c0_198 = arith.constant 0 : index
    %438 = vector.load %arg7[%c0_197, %c0_198] : memref<16x448xf32, #tpu.memory_space<vmem>>, vector<16x447xf32>
    %c0_199 = arith.constant 0 : index
    %c1_200 = arith.constant 1 : index
    %439 = vector.load %arg7[%c0_199, %c1_200] : memref<16x448xf32, #tpu.memory_space<vmem>>, vector<16x447xf32>
    %440 = arith.maximumf %438, %439 : vector<16x447xf32>
    %441 = arith.truncf %440 : vector<16x447xf32> to vector<16x447xbf16>
    %c0_201 = arith.constant 0 : index
    %c0_202 = arith.constant 0 : index
    %442 = vector.load %arg5[%c0_201, %c0_202] : memref<447x196xbf16, #tpu.memory_space<vmem>>, vector<447x196xbf16>
    %cst_203 = arith.constant dense<0.000000e+00> : vector<16x196xf32>
    %443 = tpu.matmul %441, %442, %cst_203 {dimension_numbers = #tpu.dot_dimension_numbers<[1], [0], [0], [1], [0, 0, 1, 1], [], []>} : vector<16x447xbf16>, vector<447x196xbf16>, vector<16x196xf32> -> vector<16x196xf32>
    %444 = arith.truncf %443 : vector<16x196xf32> to vector<16x196xbf16>
    %c0_204 = arith.constant 0 : index
    %c0_205 = arith.constant 0 : index
    %c0_206 = arith.constant 0 : index
    %445 = vector.load %arg6[%c0_204, %c0_205, %c0_206] : memref<1x16x196xbf16, #tpu.memory_space<vmem>>, vector<1x16x196xbf16>
    %446 = vector.shape_cast %445 : vector<1x16x196xbf16> to vector<16x196xbf16>
    %447 = vector.shape_cast %444 : vector<16x196xbf16> to vector<1x16x196xbf16>
    tpu.vector_store %arg6[%c0_204, %c0_205, %c0_206], %447 {strides = array<i32>} : memref<1x16x196xbf16, #tpu.memory_space<vmem>>, vector<1x16x196xbf16>,
    return
  }
  func.func @transform_0(%arg0: i32) -> (i32, i32, i32) {
    %c0_i32 = arith.constant 0 : i32
    %c0_i32_0 = arith.constant 0 : i32
    %c0_i32_1 = arith.constant 0 : i32
    return %arg0, %c0_i32, %c0_i32_0 : i32, i32, i32
  }
  func.func @transform_1(%arg0: i32) -> (i32, i32, i32) {
    %c0_i32 = arith.constant 0 : i32
    %c0_i32_0 = arith.constant 0 : i32
    %c0_i32_1 = arith.constant 0 : i32
    return %arg0, %c0_i32, %c0_i32_0 : i32, i32, i32
  }
  func.func @transform_2(%arg0: i32) -> (i32, i32, i32) {
    %c0_i32 = arith.constant 0 : i32
    %c0_i32_0 = arith.constant 0 : i32
    %c0_i32_1 = arith.constant 0 : i32
    %c0_i32_2 = arith.constant 0 : i32
    return %c0_i32, %c0_i32_0, %c0_i32_1 : i32, i32, i32
  }
  func.func @transform_3(%arg0: i32) -> (i32, i32) {
    %c0_i32 = arith.constant 0 : i32
    %c0_i32_0 = arith.constant 0 : i32
    %c0_i32_1 = arith.constant 0 : i32
    return %c0_i32, %c0_i32_0 : i32, i32
  }
  func.func @transform_4(%arg0: i32) -> (i32, i32) {
    %c0_i32 = arith.constant 0 : i32
    %c0_i32_0 = arith.constant 0 : i32
    %c0_i32_1 = arith.constant 0 : i32
    return %c0_i32, %c0_i32_0 : i32, i32
  }
  func.func @transform_5(%arg0: i32) -> (i32, i32, i32) {
    %c0_i32 = arith.constant 0 : i32
    %c0_i32_0 = arith.constant 0 : i32
    %c0_i32_1 = arith.constant 0 : i32
    return %arg0, %c0_i32, %c0_i32_0 : i32, i32, i32
  }
}

module attributes {stable_mosaic.version = 11 : i64} {
  func.func @_conv_relu_pool_kernel(%arg0: i32, %arg1: memref<1x16x180xbf16, #tpu.memory_space<vmem>>, %arg2: memref<1x16x180xbf16, #tpu.memory_space<vmem>>, %arg3: memref<25x32x16xbf16, #tpu.memory_space<vmem>>, %arg4: memref<32x1xf32, #tpu.memory_space<vmem>>, %arg5: memref<125x49xbf16, #tpu.memory_space<vmem>>, %arg6: memref<1x32x49xbf16, #tpu.memory_space<vmem>>, %arg7: memref<32x126xf32, #tpu.memory_space<vmem>>) attributes {dimension_semantics = [#tpu.dimension_semantics<parallel>], iteration_bounds = array<i64: 2>, scalar_prefetch = 0 : i64, scratch_operands = 1 : i64, tpu.core_type = #tpu.core_type<tc>, window_params = [{transform_indices = @transform_0, window_bounds = array<i64: 1, 16, 180>}, {transform_indices = @transform_1, window_bounds = array<i64: 1, 16, 180>}, {pipeline_mode = #tpu.pipeline_mode<synchronous>, transform_indices = @transform_2, window_bounds = array<i64: 25, 32, 16>}, {pipeline_mode = #tpu.pipeline_mode<synchronous>, transform_indices = @transform_3, window_bounds = array<i64: 32, 1>}, {pipeline_mode = #tpu.pipeline_mode<synchronous>, transform_indices = @transform_4, window_bounds = array<i64: 125, 49>}, {transform_indices = @transform_5, window_bounds = array<i64: 1, 32, 49>}]} {
    %cst = arith.constant 0.000000e+00 : f32
    %0 = vector.broadcast %cst : f32 to vector<32x126xf32>
    %cst_0 = arith.constant 0.000000e+00 : f32
    %1 = vector.broadcast %cst_0 : f32 to vector<32x126xf32>
    %c0 = arith.constant 0 : index
    %c0_1 = arith.constant 0 : index
    %c0_2 = arith.constant 0 : index
    %2 = vector.load %arg3[%c0, %c0_1, %c0_2] : memref<25x32x16xbf16, #tpu.memory_space<vmem>>, vector<1x32x16xbf16>
    %3 = vector.shape_cast %2 : vector<1x32x16xbf16> to vector<32x16xbf16>
    %c0_3 = arith.constant 0 : index
    %c0_4 = arith.constant 0 : index
    %c0_5 = arith.constant 0 : index
    %4 = vector.load %arg1[%c0_3, %c0_4, %c0_5] : memref<1x16x180xbf16, #tpu.memory_space<vmem>>, vector<1x16x126xbf16>
    %5 = vector.shape_cast %4 : vector<1x16x126xbf16> to vector<16x126xbf16>
    %c0_6 = arith.constant 0 : index
    %c0_7 = arith.constant 0 : index
    %c0_8 = arith.constant 0 : index
    %6 = vector.load %arg2[%c0_6, %c0_7, %c0_8] : memref<1x16x180xbf16, #tpu.memory_space<vmem>>, vector<1x16x126xbf16>
    %7 = vector.shape_cast %6 : vector<1x16x126xbf16> to vector<16x126xbf16>
    %cst_9 = arith.constant dense<0.000000e+00> : vector<32x126xf32>
    %8 = tpu.matmul %3, %5, %cst_9 {dimension_numbers = #tpu.dot_dimension_numbers<[1], [0], [0], [1], [0, 0, 1, 1], [], []>} : vector<32x16xbf16>, vector<16x126xbf16>, vector<32x126xf32> -> vector<32x126xf32>
    %9 = arith.addf %0, %8 : vector<32x126xf32>
    %cst_10 = arith.constant dense<0.000000e+00> : vector<32x126xf32>
    %10 = tpu.matmul %3, %7, %cst_10 {dimension_numbers = #tpu.dot_dimension_numbers<[1], [0], [0], [1], [0, 0, 1, 1], [], []>} : vector<32x16xbf16>, vector<16x126xbf16>, vector<32x126xf32> -> vector<32x126xf32>
    %11 = arith.addf %1, %10 : vector<32x126xf32>
    %c1 = arith.constant 1 : index
    %c0_11 = arith.constant 0 : index
    %c0_12 = arith.constant 0 : index
    %12 = vector.load %arg3[%c1, %c0_11, %c0_12] : memref<25x32x16xbf16, #tpu.memory_space<vmem>>, vector<1x32x16xbf16>
    %13 = vector.shape_cast %12 : vector<1x32x16xbf16> to vector<32x16xbf16>
    %c0_13 = arith.constant 0 : index
    %c0_14 = arith.constant 0 : index
    %c1_15 = arith.constant 1 : index
    %14 = vector.load %arg1[%c0_13, %c0_14, %c1_15] : memref<1x16x180xbf16, #tpu.memory_space<vmem>>, vector<1x16x126xbf16>
    %15 = vector.shape_cast %14 : vector<1x16x126xbf16> to vector<16x126xbf16>
    %c0_16 = arith.constant 0 : index
    %c0_17 = arith.constant 0 : index
    %c1_18 = arith.constant 1 : index
    %16 = vector.load %arg2[%c0_16, %c0_17, %c1_18] : memref<1x16x180xbf16, #tpu.memory_space<vmem>>, vector<1x16x126xbf16>
    %17 = vector.shape_cast %16 : vector<1x16x126xbf16> to vector<16x126xbf16>
    %cst_19 = arith.constant dense<0.000000e+00> : vector<32x126xf32>
    %18 = tpu.matmul %13, %15, %cst_19 {dimension_numbers = #tpu.dot_dimension_numbers<[1], [0], [0], [1], [0, 0, 1, 1], [], []>} : vector<32x16xbf16>, vector<16x126xbf16>, vector<32x126xf32> -> vector<32x126xf32>
    %19 = arith.addf %9, %18 : vector<32x126xf32>
    %cst_20 = arith.constant dense<0.000000e+00> : vector<32x126xf32>
    %20 = tpu.matmul %13, %17, %cst_20 {dimension_numbers = #tpu.dot_dimension_numbers<[1], [0], [0], [1], [0, 0, 1, 1], [], []>} : vector<32x16xbf16>, vector<16x126xbf16>, vector<32x126xf32> -> vector<32x126xf32>
    %21 = arith.addf %11, %20 : vector<32x126xf32>
    %c2 = arith.constant 2 : index
    %c0_21 = arith.constant 0 : index
    %c0_22 = arith.constant 0 : index
    %22 = vector.load %arg3[%c2, %c0_21, %c0_22] : memref<25x32x16xbf16, #tpu.memory_space<vmem>>, vector<1x32x16xbf16>
    %23 = vector.shape_cast %22 : vector<1x32x16xbf16> to vector<32x16xbf16>
    %c0_23 = arith.constant 0 : index
    %c0_24 = arith.constant 0 : index
    %c2_25 = arith.constant 2 : index
    %24 = vector.load %arg1[%c0_23, %c0_24, %c2_25] : memref<1x16x180xbf16, #tpu.memory_space<vmem>>, vector<1x16x126xbf16>
    %25 = vector.shape_cast %24 : vector<1x16x126xbf16> to vector<16x126xbf16>
    %c0_26 = arith.constant 0 : index
    %c0_27 = arith.constant 0 : index
    %c2_28 = arith.constant 2 : index
    %26 = vector.load %arg2[%c0_26, %c0_27, %c2_28] : memref<1x16x180xbf16, #tpu.memory_space<vmem>>, vector<1x16x126xbf16>
    %27 = vector.shape_cast %26 : vector<1x16x126xbf16> to vector<16x126xbf16>
    %cst_29 = arith.constant dense<0.000000e+00> : vector<32x126xf32>
    %28 = tpu.matmul %23, %25, %cst_29 {dimension_numbers = #tpu.dot_dimension_numbers<[1], [0], [0], [1], [0, 0, 1, 1], [], []>} : vector<32x16xbf16>, vector<16x126xbf16>, vector<32x126xf32> -> vector<32x126xf32>
    %29 = arith.addf %19, %28 : vector<32x126xf32>
    %cst_30 = arith.constant dense<0.000000e+00> : vector<32x126xf32>
    %30 = tpu.matmul %23, %27, %cst_30 {dimension_numbers = #tpu.dot_dimension_numbers<[1], [0], [0], [1], [0, 0, 1, 1], [], []>} : vector<32x16xbf16>, vector<16x126xbf16>, vector<32x126xf32> -> vector<32x126xf32>
    %31 = arith.addf %21, %30 : vector<32x126xf32>
    %c3 = arith.constant 3 : index
    %c0_31 = arith.constant 0 : index
    %c0_32 = arith.constant 0 : index
    %32 = vector.load %arg3[%c3, %c0_31, %c0_32] : memref<25x32x16xbf16, #tpu.memory_space<vmem>>, vector<1x32x16xbf16>
    %33 = vector.shape_cast %32 : vector<1x32x16xbf16> to vector<32x16xbf16>
    %c0_33 = arith.constant 0 : index
    %c0_34 = arith.constant 0 : index
    %c3_35 = arith.constant 3 : index
    %34 = vector.load %arg1[%c0_33, %c0_34, %c3_35] : memref<1x16x180xbf16, #tpu.memory_space<vmem>>, vector<1x16x126xbf16>
    %35 = vector.shape_cast %34 : vector<1x16x126xbf16> to vector<16x126xbf16>
    %c0_36 = arith.constant 0 : index
    %c0_37 = arith.constant 0 : index
    %c3_38 = arith.constant 3 : index
    %36 = vector.load %arg2[%c0_36, %c0_37, %c3_38] : memref<1x16x180xbf16, #tpu.memory_space<vmem>>, vector<1x16x126xbf16>
    %37 = vector.shape_cast %36 : vector<1x16x126xbf16> to vector<16x126xbf16>
    %cst_39 = arith.constant dense<0.000000e+00> : vector<32x126xf32>
    %38 = tpu.matmul %33, %35, %cst_39 {dimension_numbers = #tpu.dot_dimension_numbers<[1], [0], [0], [1], [0, 0, 1, 1], [], []>} : vector<32x16xbf16>, vector<16x126xbf16>, vector<32x126xf32> -> vector<32x126xf32>
    %39 = arith.addf %29, %38 : vector<32x126xf32>
    %cst_40 = arith.constant dense<0.000000e+00> : vector<32x126xf32>
    %40 = tpu.matmul %33, %37, %cst_40 {dimension_numbers = #tpu.dot_dimension_numbers<[1], [0], [0], [1], [0, 0, 1, 1], [], []>} : vector<32x16xbf16>, vector<16x126xbf16>, vector<32x126xf32> -> vector<32x126xf32>
    %41 = arith.addf %31, %40 : vector<32x126xf32>
    %c4 = arith.constant 4 : index
    %c0_41 = arith.constant 0 : index
    %c0_42 = arith.constant 0 : index
    %42 = vector.load %arg3[%c4, %c0_41, %c0_42] : memref<25x32x16xbf16, #tpu.memory_space<vmem>>, vector<1x32x16xbf16>
    %43 = vector.shape_cast %42 : vector<1x32x16xbf16> to vector<32x16xbf16>
    %c0_43 = arith.constant 0 : index
    %c0_44 = arith.constant 0 : index
    %c4_45 = arith.constant 4 : index
    %44 = vector.load %arg1[%c0_43, %c0_44, %c4_45] : memref<1x16x180xbf16, #tpu.memory_space<vmem>>, vector<1x16x126xbf16>
    %45 = vector.shape_cast %44 : vector<1x16x126xbf16> to vector<16x126xbf16>
    %c0_46 = arith.constant 0 : index
    %c0_47 = arith.constant 0 : index
    %c4_48 = arith.constant 4 : index
    %46 = vector.load %arg2[%c0_46, %c0_47, %c4_48] : memref<1x16x180xbf16, #tpu.memory_space<vmem>>, vector<1x16x126xbf16>
    %47 = vector.shape_cast %46 : vector<1x16x126xbf16> to vector<16x126xbf16>
    %cst_49 = arith.constant dense<0.000000e+00> : vector<32x126xf32>
    %48 = tpu.matmul %43, %45, %cst_49 {dimension_numbers = #tpu.dot_dimension_numbers<[1], [0], [0], [1], [0, 0, 1, 1], [], []>} : vector<32x16xbf16>, vector<16x126xbf16>, vector<32x126xf32> -> vector<32x126xf32>
    %49 = arith.addf %39, %48 : vector<32x126xf32>
    %cst_50 = arith.constant dense<0.000000e+00> : vector<32x126xf32>
    %50 = tpu.matmul %43, %47, %cst_50 {dimension_numbers = #tpu.dot_dimension_numbers<[1], [0], [0], [1], [0, 0, 1, 1], [], []>} : vector<32x16xbf16>, vector<16x126xbf16>, vector<32x126xf32> -> vector<32x126xf32>
    %51 = arith.addf %41, %50 : vector<32x126xf32>
    %c5 = arith.constant 5 : index
    %c0_51 = arith.constant 0 : index
    %c0_52 = arith.constant 0 : index
    %52 = vector.load %arg3[%c5, %c0_51, %c0_52] : memref<25x32x16xbf16, #tpu.memory_space<vmem>>, vector<1x32x16xbf16>
    %53 = vector.shape_cast %52 : vector<1x32x16xbf16> to vector<32x16xbf16>
    %c0_53 = arith.constant 0 : index
    %c0_54 = arith.constant 0 : index
    %c0_55 = arith.constant 0 : index
    %54 = vector.load %arg2[%c0_53, %c0_54, %c0_55] : memref<1x16x180xbf16, #tpu.memory_space<vmem>>, vector<1x16x126xbf16>
    %55 = vector.shape_cast %54 : vector<1x16x126xbf16> to vector<16x126xbf16>
    %c0_56 = arith.constant 0 : index
    %c0_57 = arith.constant 0 : index
    %c18 = arith.constant 18 : index
    %56 = vector.load %arg1[%c0_56, %c0_57, %c18] : memref<1x16x180xbf16, #tpu.memory_space<vmem>>, vector<1x16x126xbf16>
    %57 = vector.shape_cast %56 : vector<1x16x126xbf16> to vector<16x126xbf16>
    %cst_58 = arith.constant dense<0.000000e+00> : vector<32x126xf32>
    %58 = tpu.matmul %53, %55, %cst_58 {dimension_numbers = #tpu.dot_dimension_numbers<[1], [0], [0], [1], [0, 0, 1, 1], [], []>} : vector<32x16xbf16>, vector<16x126xbf16>, vector<32x126xf32> -> vector<32x126xf32>
    %59 = arith.addf %49, %58 : vector<32x126xf32>
    %cst_59 = arith.constant dense<0.000000e+00> : vector<32x126xf32>
    %60 = tpu.matmul %53, %57, %cst_59 {dimension_numbers = #tpu.dot_dimension_numbers<[1], [0], [0], [1], [0, 0, 1, 1], [], []>} : vector<32x16xbf16>, vector<16x126xbf16>, vector<32x126xf32> -> vector<32x126xf32>
    %61 = arith.addf %51, %60 : vector<32x126xf32>
    %c6 = arith.constant 6 : index
    %c0_60 = arith.constant 0 : index
    %c0_61 = arith.constant 0 : index
    %62 = vector.load %arg3[%c6, %c0_60, %c0_61] : memref<25x32x16xbf16, #tpu.memory_space<vmem>>, vector<1x32x16xbf16>
    %63 = vector.shape_cast %62 : vector<1x32x16xbf16> to vector<32x16xbf16>
    %c0_62 = arith.constant 0 : index
    %c0_63 = arith.constant 0 : index
    %c1_64 = arith.constant 1 : index
    %64 = vector.load %arg2[%c0_62, %c0_63, %c1_64] : memref<1x16x180xbf16, #tpu.memory_space<vmem>>, vector<1x16x126xbf16>
    %65 = vector.shape_cast %64 : vector<1x16x126xbf16> to vector<16x126xbf16>
    %c0_65 = arith.constant 0 : index
    %c0_66 = arith.constant 0 : index
    %c19 = arith.constant 19 : index
    %66 = vector.load %arg1[%c0_65, %c0_66, %c19] : memref<1x16x180xbf16, #tpu.memory_space<vmem>>, vector<1x16x126xbf16>
    %67 = vector.shape_cast %66 : vector<1x16x126xbf16> to vector<16x126xbf16>
    %cst_67 = arith.constant dense<0.000000e+00> : vector<32x126xf32>
    %68 = tpu.matmul %63, %65, %cst_67 {dimension_numbers = #tpu.dot_dimension_numbers<[1], [0], [0], [1], [0, 0, 1, 1], [], []>} : vector<32x16xbf16>, vector<16x126xbf16>, vector<32x126xf32> -> vector<32x126xf32>
    %69 = arith.addf %59, %68 : vector<32x126xf32>
    %cst_68 = arith.constant dense<0.000000e+00> : vector<32x126xf32>
    %70 = tpu.matmul %63, %67, %cst_68 {dimension_numbers = #tpu.dot_dimension_numbers<[1], [0], [0], [1], [0, 0, 1, 1], [], []>} : vector<32x16xbf16>, vector<16x126xbf16>, vector<32x126xf32> -> vector<32x126xf32>
    %71 = arith.addf %61, %70 : vector<32x126xf32>
    %c7 = arith.constant 7 : index
    %c0_69 = arith.constant 0 : index
    %c0_70 = arith.constant 0 : index
    %72 = vector.load %arg3[%c7, %c0_69, %c0_70] : memref<25x32x16xbf16, #tpu.memory_space<vmem>>, vector<1x32x16xbf16>
    %73 = vector.shape_cast %72 : vector<1x32x16xbf16> to vector<32x16xbf16>
    %c0_71 = arith.constant 0 : index
    %c0_72 = arith.constant 0 : index
    %c2_73 = arith.constant 2 : index
    %74 = vector.load %arg2[%c0_71, %c0_72, %c2_73] : memref<1x16x180xbf16, #tpu.memory_space<vmem>>, vector<1x16x126xbf16>
    %75 = vector.shape_cast %74 : vector<1x16x126xbf16> to vector<16x126xbf16>
    %c0_74 = arith.constant 0 : index
    %c0_75 = arith.constant 0 : index
    %c20 = arith.constant 20 : index
    %76 = vector.load %arg1[%c0_74, %c0_75, %c20] : memref<1x16x180xbf16, #tpu.memory_space<vmem>>, vector<1x16x126xbf16>
    %77 = vector.shape_cast %76 : vector<1x16x126xbf16> to vector<16x126xbf16>
    %cst_76 = arith.constant dense<0.000000e+00> : vector<32x126xf32>
    %78 = tpu.matmul %73, %75, %cst_76 {dimension_numbers = #tpu.dot_dimension_numbers<[1], [0], [0], [1], [0, 0, 1, 1], [], []>} : vector<32x16xbf16>, vector<16x126xbf16>, vector<32x126xf32> -> vector<32x126xf32>
    %79 = arith.addf %69, %78 : vector<32x126xf32>
    %cst_77 = arith.constant dense<0.000000e+00> : vector<32x126xf32>
    %80 = tpu.matmul %73, %77, %cst_77 {dimension_numbers = #tpu.dot_dimension_numbers<[1], [0], [0], [1], [0, 0, 1, 1], [], []>} : vector<32x16xbf16>, vector<16x126xbf16>, vector<32x126xf32> -> vector<32x126xf32>
    %81 = arith.addf %71, %80 : vector<32x126xf32>
    %c8 = arith.constant 8 : index
    %c0_78 = arith.constant 0 : index
    %c0_79 = arith.constant 0 : index
    %82 = vector.load %arg3[%c8, %c0_78, %c0_79] : memref<25x32x16xbf16, #tpu.memory_space<vmem>>, vector<1x32x16xbf16>
    %83 = vector.shape_cast %82 : vector<1x32x16xbf16> to vector<32x16xbf16>
    %c0_80 = arith.constant 0 : index
    %c0_81 = arith.constant 0 : index
    %c3_82 = arith.constant 3 : index
    %84 = vector.load %arg2[%c0_80, %c0_81, %c3_82] : memref<1x16x180xbf16, #tpu.memory_space<vmem>>, vector<1x16x126xbf16>
    %85 = vector.shape_cast %84 : vector<1x16x126xbf16> to vector<16x126xbf16>
    %c0_83 = arith.constant 0 : index
    %c0_84 = arith.constant 0 : index
    %c21 = arith.constant 21 : index
    %86 = vector.load %arg1[%c0_83, %c0_84, %c21] : memref<1x16x180xbf16, #tpu.memory_space<vmem>>, vector<1x16x126xbf16>
    %87 = vector.shape_cast %86 : vector<1x16x126xbf16> to vector<16x126xbf16>
    %cst_85 = arith.constant dense<0.000000e+00> : vector<32x126xf32>
    %88 = tpu.matmul %83, %85, %cst_85 {dimension_numbers = #tpu.dot_dimension_numbers<[1], [0], [0], [1], [0, 0, 1, 1], [], []>} : vector<32x16xbf16>, vector<16x126xbf16>, vector<32x126xf32> -> vector<32x126xf32>
    %89 = arith.addf %79, %88 : vector<32x126xf32>
    %cst_86 = arith.constant dense<0.000000e+00> : vector<32x126xf32>
    %90 = tpu.matmul %83, %87, %cst_86 {dimension_numbers = #tpu.dot_dimension_numbers<[1], [0], [0], [1], [0, 0, 1, 1], [], []>} : vector<32x16xbf16>, vector<16x126xbf16>, vector<32x126xf32> -> vector<32x126xf32>
    %91 = arith.addf %81, %90 : vector<32x126xf32>
    %c9 = arith.constant 9 : index
    %c0_87 = arith.constant 0 : index
    %c0_88 = arith.constant 0 : index
    %92 = vector.load %arg3[%c9, %c0_87, %c0_88] : memref<25x32x16xbf16, #tpu.memory_space<vmem>>, vector<1x32x16xbf16>
    %93 = vector.shape_cast %92 : vector<1x32x16xbf16> to vector<32x16xbf16>
    %c0_89 = arith.constant 0 : index
    %c0_90 = arith.constant 0 : index
    %c4_91 = arith.constant 4 : index
    %94 = vector.load %arg2[%c0_89, %c0_90, %c4_91] : memref<1x16x180xbf16, #tpu.memory_space<vmem>>, vector<1x16x126xbf16>
    %95 = vector.shape_cast %94 : vector<1x16x126xbf16> to vector<16x126xbf16>
    %c0_92 = arith.constant 0 : index
    %c0_93 = arith.constant 0 : index
    %c22 = arith.constant 22 : index
    %96 = vector.load %arg1[%c0_92, %c0_93, %c22] : memref<1x16x180xbf16, #tpu.memory_space<vmem>>, vector<1x16x126xbf16>
    %97 = vector.shape_cast %96 : vector<1x16x126xbf16> to vector<16x126xbf16>
    %cst_94 = arith.constant dense<0.000000e+00> : vector<32x126xf32>
    %98 = tpu.matmul %93, %95, %cst_94 {dimension_numbers = #tpu.dot_dimension_numbers<[1], [0], [0], [1], [0, 0, 1, 1], [], []>} : vector<32x16xbf16>, vector<16x126xbf16>, vector<32x126xf32> -> vector<32x126xf32>
    %99 = arith.addf %89, %98 : vector<32x126xf32>
    %cst_95 = arith.constant dense<0.000000e+00> : vector<32x126xf32>
    %100 = tpu.matmul %93, %97, %cst_95 {dimension_numbers = #tpu.dot_dimension_numbers<[1], [0], [0], [1], [0, 0, 1, 1], [], []>} : vector<32x16xbf16>, vector<16x126xbf16>, vector<32x126xf32> -> vector<32x126xf32>
    %101 = arith.addf %91, %100 : vector<32x126xf32>
    %c10 = arith.constant 10 : index
    %c0_96 = arith.constant 0 : index
    %c0_97 = arith.constant 0 : index
    %102 = vector.load %arg3[%c10, %c0_96, %c0_97] : memref<25x32x16xbf16, #tpu.memory_space<vmem>>, vector<1x32x16xbf16>
    %103 = vector.shape_cast %102 : vector<1x32x16xbf16> to vector<32x16xbf16>
    %c0_98 = arith.constant 0 : index
    %c0_99 = arith.constant 0 : index
    %c18_100 = arith.constant 18 : index
    %104 = vector.load %arg1[%c0_98, %c0_99, %c18_100] : memref<1x16x180xbf16, #tpu.memory_space<vmem>>, vector<1x16x126xbf16>
    %105 = vector.shape_cast %104 : vector<1x16x126xbf16> to vector<16x126xbf16>
    %c0_101 = arith.constant 0 : index
    %c0_102 = arith.constant 0 : index
    %c18_103 = arith.constant 18 : index
    %106 = vector.load %arg2[%c0_101, %c0_102, %c18_103] : memref<1x16x180xbf16, #tpu.memory_space<vmem>>, vector<1x16x126xbf16>
    %107 = vector.shape_cast %106 : vector<1x16x126xbf16> to vector<16x126xbf16>
    %cst_104 = arith.constant dense<0.000000e+00> : vector<32x126xf32>
    %108 = tpu.matmul %103, %105, %cst_104 {dimension_numbers = #tpu.dot_dimension_numbers<[1], [0], [0], [1], [0, 0, 1, 1], [], []>} : vector<32x16xbf16>, vector<16x126xbf16>, vector<32x126xf32> -> vector<32x126xf32>
    %109 = arith.addf %99, %108 : vector<32x126xf32>
    %cst_105 = arith.constant dense<0.000000e+00> : vector<32x126xf32>
    %110 = tpu.matmul %103, %107, %cst_105 {dimension_numbers = #tpu.dot_dimension_numbers<[1], [0], [0], [1], [0, 0, 1, 1], [], []>} : vector<32x16xbf16>, vector<16x126xbf16>, vector<32x126xf32> -> vector<32x126xf32>
    %111 = arith.addf %101, %110 : vector<32x126xf32>
    %c11 = arith.constant 11 : index
    %c0_106 = arith.constant 0 : index
    %c0_107 = arith.constant 0 : index
    %112 = vector.load %arg3[%c11, %c0_106, %c0_107] : memref<25x32x16xbf16, #tpu.memory_space<vmem>>, vector<1x32x16xbf16>
    %113 = vector.shape_cast %112 : vector<1x32x16xbf16> to vector<32x16xbf16>
    %c0_108 = arith.constant 0 : index
    %c0_109 = arith.constant 0 : index
    %c19_110 = arith.constant 19 : index
    %114 = vector.load %arg1[%c0_108, %c0_109, %c19_110] : memref<1x16x180xbf16, #tpu.memory_space<vmem>>, vector<1x16x126xbf16>
    %115 = vector.shape_cast %114 : vector<1x16x126xbf16> to vector<16x126xbf16>
    %c0_111 = arith.constant 0 : index
    %c0_112 = arith.constant 0 : index
    %c19_113 = arith.constant 19 : index
    %116 = vector.load %arg2[%c0_111, %c0_112, %c19_113] : memref<1x16x180xbf16, #tpu.memory_space<vmem>>, vector<1x16x126xbf16>
    %117 = vector.shape_cast %116 : vector<1x16x126xbf16> to vector<16x126xbf16>
    %cst_114 = arith.constant dense<0.000000e+00> : vector<32x126xf32>
    %118 = tpu.matmul %113, %115, %cst_114 {dimension_numbers = #tpu.dot_dimension_numbers<[1], [0], [0], [1], [0, 0, 1, 1], [], []>} : vector<32x16xbf16>, vector<16x126xbf16>, vector<32x126xf32> -> vector<32x126xf32>
    %119 = arith.addf %109, %118 : vector<32x126xf32>
    %cst_115 = arith.constant dense<0.000000e+00> : vector<32x126xf32>
    %120 = tpu.matmul %113, %117, %cst_115 {dimension_numbers = #tpu.dot_dimension_numbers<[1], [0], [0], [1], [0, 0, 1, 1], [], []>} : vector<32x16xbf16>, vector<16x126xbf16>, vector<32x126xf32> -> vector<32x126xf32>
    %121 = arith.addf %111, %120 : vector<32x126xf32>
    %c12 = arith.constant 12 : index
    %c0_116 = arith.constant 0 : index
    %c0_117 = arith.constant 0 : index
    %122 = vector.load %arg3[%c12, %c0_116, %c0_117] : memref<25x32x16xbf16, #tpu.memory_space<vmem>>, vector<1x32x16xbf16>
    %123 = vector.shape_cast %122 : vector<1x32x16xbf16> to vector<32x16xbf16>
    %c0_118 = arith.constant 0 : index
    %c0_119 = arith.constant 0 : index
    %c20_120 = arith.constant 20 : index
    %124 = vector.load %arg1[%c0_118, %c0_119, %c20_120] : memref<1x16x180xbf16, #tpu.memory_space<vmem>>, vector<1x16x126xbf16>
    %125 = vector.shape_cast %124 : vector<1x16x126xbf16> to vector<16x126xbf16>
    %c0_121 = arith.constant 0 : index
    %c0_122 = arith.constant 0 : index
    %c20_123 = arith.constant 20 : index
    %126 = vector.load %arg2[%c0_121, %c0_122, %c20_123] : memref<1x16x180xbf16, #tpu.memory_space<vmem>>, vector<1x16x126xbf16>
    %127 = vector.shape_cast %126 : vector<1x16x126xbf16> to vector<16x126xbf16>
    %cst_124 = arith.constant dense<0.000000e+00> : vector<32x126xf32>
    %128 = tpu.matmul %123, %125, %cst_124 {dimension_numbers = #tpu.dot_dimension_numbers<[1], [0], [0], [1], [0, 0, 1, 1], [], []>} : vector<32x16xbf16>, vector<16x126xbf16>, vector<32x126xf32> -> vector<32x126xf32>
    %129 = arith.addf %119, %128 : vector<32x126xf32>
    %cst_125 = arith.constant dense<0.000000e+00> : vector<32x126xf32>
    %130 = tpu.matmul %123, %127, %cst_125 {dimension_numbers = #tpu.dot_dimension_numbers<[1], [0], [0], [1], [0, 0, 1, 1], [], []>} : vector<32x16xbf16>, vector<16x126xbf16>, vector<32x126xf32> -> vector<32x126xf32>
    %131 = arith.addf %121, %130 : vector<32x126xf32>
    %c13 = arith.constant 13 : index
    %c0_126 = arith.constant 0 : index
    %c0_127 = arith.constant 0 : index
    %132 = vector.load %arg3[%c13, %c0_126, %c0_127] : memref<25x32x16xbf16, #tpu.memory_space<vmem>>, vector<1x32x16xbf16>
    %133 = vector.shape_cast %132 : vector<1x32x16xbf16> to vector<32x16xbf16>
    %c0_128 = arith.constant 0 : index
    %c0_129 = arith.constant 0 : index
    %c21_130 = arith.constant 21 : index
    %134 = vector.load %arg1[%c0_128, %c0_129, %c21_130] : memref<1x16x180xbf16, #tpu.memory_space<vmem>>, vector<1x16x126xbf16>
    %135 = vector.shape_cast %134 : vector<1x16x126xbf16> to vector<16x126xbf16>
    %c0_131 = arith.constant 0 : index
    %c0_132 = arith.constant 0 : index
    %c21_133 = arith.constant 21 : index
    %136 = vector.load %arg2[%c0_131, %c0_132, %c21_133] : memref<1x16x180xbf16, #tpu.memory_space<vmem>>, vector<1x16x126xbf16>
    %137 = vector.shape_cast %136 : vector<1x16x126xbf16> to vector<16x126xbf16>
    %cst_134 = arith.constant dense<0.000000e+00> : vector<32x126xf32>
    %138 = tpu.matmul %133, %135, %cst_134 {dimension_numbers = #tpu.dot_dimension_numbers<[1], [0], [0], [1], [0, 0, 1, 1], [], []>} : vector<32x16xbf16>, vector<16x126xbf16>, vector<32x126xf32> -> vector<32x126xf32>
    %139 = arith.addf %129, %138 : vector<32x126xf32>
    %cst_135 = arith.constant dense<0.000000e+00> : vector<32x126xf32>
    %140 = tpu.matmul %133, %137, %cst_135 {dimension_numbers = #tpu.dot_dimension_numbers<[1], [0], [0], [1], [0, 0, 1, 1], [], []>} : vector<32x16xbf16>, vector<16x126xbf16>, vector<32x126xf32> -> vector<32x126xf32>
    %141 = arith.addf %131, %140 : vector<32x126xf32>
    %c14 = arith.constant 14 : index
    %c0_136 = arith.constant 0 : index
    %c0_137 = arith.constant 0 : index
    %142 = vector.load %arg3[%c14, %c0_136, %c0_137] : memref<25x32x16xbf16, #tpu.memory_space<vmem>>, vector<1x32x16xbf16>
    %143 = vector.shape_cast %142 : vector<1x32x16xbf16> to vector<32x16xbf16>
    %c0_138 = arith.constant 0 : index
    %c0_139 = arith.constant 0 : index
    %c22_140 = arith.constant 22 : index
    %144 = vector.load %arg1[%c0_138, %c0_139, %c22_140] : memref<1x16x180xbf16, #tpu.memory_space<vmem>>, vector<1x16x126xbf16>
    %145 = vector.shape_cast %144 : vector<1x16x126xbf16> to vector<16x126xbf16>
    %c0_141 = arith.constant 0 : index
    %c0_142 = arith.constant 0 : index
    %c22_143 = arith.constant 22 : index
    %146 = vector.load %arg2[%c0_141, %c0_142, %c22_143] : memref<1x16x180xbf16, #tpu.memory_space<vmem>>, vector<1x16x126xbf16>
    %147 = vector.shape_cast %146 : vector<1x16x126xbf16> to vector<16x126xbf16>
    %cst_144 = arith.constant dense<0.000000e+00> : vector<32x126xf32>
    %148 = tpu.matmul %143, %145, %cst_144 {dimension_numbers = #tpu.dot_dimension_numbers<[1], [0], [0], [1], [0, 0, 1, 1], [], []>} : vector<32x16xbf16>, vector<16x126xbf16>, vector<32x126xf32> -> vector<32x126xf32>
    %149 = arith.addf %139, %148 : vector<32x126xf32>
    %cst_145 = arith.constant dense<0.000000e+00> : vector<32x126xf32>
    %150 = tpu.matmul %143, %147, %cst_145 {dimension_numbers = #tpu.dot_dimension_numbers<[1], [0], [0], [1], [0, 0, 1, 1], [], []>} : vector<32x16xbf16>, vector<16x126xbf16>, vector<32x126xf32> -> vector<32x126xf32>
    %151 = arith.addf %141, %150 : vector<32x126xf32>
    %c15 = arith.constant 15 : index
    %c0_146 = arith.constant 0 : index
    %c0_147 = arith.constant 0 : index
    %152 = vector.load %arg3[%c15, %c0_146, %c0_147] : memref<25x32x16xbf16, #tpu.memory_space<vmem>>, vector<1x32x16xbf16>
    %153 = vector.shape_cast %152 : vector<1x32x16xbf16> to vector<32x16xbf16>
    %c0_148 = arith.constant 0 : index
    %c0_149 = arith.constant 0 : index
    %c18_150 = arith.constant 18 : index
    %154 = vector.load %arg2[%c0_148, %c0_149, %c18_150] : memref<1x16x180xbf16, #tpu.memory_space<vmem>>, vector<1x16x126xbf16>
    %155 = vector.shape_cast %154 : vector<1x16x126xbf16> to vector<16x126xbf16>
    %c0_151 = arith.constant 0 : index
    %c0_152 = arith.constant 0 : index
    %c36 = arith.constant 36 : index
    %156 = vector.load %arg1[%c0_151, %c0_152, %c36] : memref<1x16x180xbf16, #tpu.memory_space<vmem>>, vector<1x16x126xbf16>
    %157 = vector.shape_cast %156 : vector<1x16x126xbf16> to vector<16x126xbf16>
    %cst_153 = arith.constant dense<0.000000e+00> : vector<32x126xf32>
    %158 = tpu.matmul %153, %155, %cst_153 {dimension_numbers = #tpu.dot_dimension_numbers<[1], [0], [0], [1], [0, 0, 1, 1], [], []>} : vector<32x16xbf16>, vector<16x126xbf16>, vector<32x126xf32> -> vector<32x126xf32>
    %159 = arith.addf %149, %158 : vector<32x126xf32>
    %cst_154 = arith.constant dense<0.000000e+00> : vector<32x126xf32>
    %160 = tpu.matmul %153, %157, %cst_154 {dimension_numbers = #tpu.dot_dimension_numbers<[1], [0], [0], [1], [0, 0, 1, 1], [], []>} : vector<32x16xbf16>, vector<16x126xbf16>, vector<32x126xf32> -> vector<32x126xf32>
    %161 = arith.addf %151, %160 : vector<32x126xf32>
    %c16 = arith.constant 16 : index
    %c0_155 = arith.constant 0 : index
    %c0_156 = arith.constant 0 : index
    %162 = vector.load %arg3[%c16, %c0_155, %c0_156] : memref<25x32x16xbf16, #tpu.memory_space<vmem>>, vector<1x32x16xbf16>
    %163 = vector.shape_cast %162 : vector<1x32x16xbf16> to vector<32x16xbf16>
    %c0_157 = arith.constant 0 : index
    %c0_158 = arith.constant 0 : index
    %c19_159 = arith.constant 19 : index
    %164 = vector.load %arg2[%c0_157, %c0_158, %c19_159] : memref<1x16x180xbf16, #tpu.memory_space<vmem>>, vector<1x16x126xbf16>
    %165 = vector.shape_cast %164 : vector<1x16x126xbf16> to vector<16x126xbf16>
    %c0_160 = arith.constant 0 : index
    %c0_161 = arith.constant 0 : index
    %c37 = arith.constant 37 : index
    %166 = vector.load %arg1[%c0_160, %c0_161, %c37] : memref<1x16x180xbf16, #tpu.memory_space<vmem>>, vector<1x16x126xbf16>
    %167 = vector.shape_cast %166 : vector<1x16x126xbf16> to vector<16x126xbf16>
    %cst_162 = arith.constant dense<0.000000e+00> : vector<32x126xf32>
    %168 = tpu.matmul %163, %165, %cst_162 {dimension_numbers = #tpu.dot_dimension_numbers<[1], [0], [0], [1], [0, 0, 1, 1], [], []>} : vector<32x16xbf16>, vector<16x126xbf16>, vector<32x126xf32> -> vector<32x126xf32>
    %169 = arith.addf %159, %168 : vector<32x126xf32>
    %cst_163 = arith.constant dense<0.000000e+00> : vector<32x126xf32>
    %170 = tpu.matmul %163, %167, %cst_163 {dimension_numbers = #tpu.dot_dimension_numbers<[1], [0], [0], [1], [0, 0, 1, 1], [], []>} : vector<32x16xbf16>, vector<16x126xbf16>, vector<32x126xf32> -> vector<32x126xf32>
    %171 = arith.addf %161, %170 : vector<32x126xf32>
    %c17 = arith.constant 17 : index
    %c0_164 = arith.constant 0 : index
    %c0_165 = arith.constant 0 : index
    %172 = vector.load %arg3[%c17, %c0_164, %c0_165] : memref<25x32x16xbf16, #tpu.memory_space<vmem>>, vector<1x32x16xbf16>
    %173 = vector.shape_cast %172 : vector<1x32x16xbf16> to vector<32x16xbf16>
    %c0_166 = arith.constant 0 : index
    %c0_167 = arith.constant 0 : index
    %c20_168 = arith.constant 20 : index
    %174 = vector.load %arg2[%c0_166, %c0_167, %c20_168] : memref<1x16x180xbf16, #tpu.memory_space<vmem>>, vector<1x16x126xbf16>
    %175 = vector.shape_cast %174 : vector<1x16x126xbf16> to vector<16x126xbf16>
    %c0_169 = arith.constant 0 : index
    %c0_170 = arith.constant 0 : index
    %c38 = arith.constant 38 : index
    %176 = vector.load %arg1[%c0_169, %c0_170, %c38] : memref<1x16x180xbf16, #tpu.memory_space<vmem>>, vector<1x16x126xbf16>
    %177 = vector.shape_cast %176 : vector<1x16x126xbf16> to vector<16x126xbf16>
    %cst_171 = arith.constant dense<0.000000e+00> : vector<32x126xf32>
    %178 = tpu.matmul %173, %175, %cst_171 {dimension_numbers = #tpu.dot_dimension_numbers<[1], [0], [0], [1], [0, 0, 1, 1], [], []>} : vector<32x16xbf16>, vector<16x126xbf16>, vector<32x126xf32> -> vector<32x126xf32>
    %179 = arith.addf %169, %178 : vector<32x126xf32>
    %cst_172 = arith.constant dense<0.000000e+00> : vector<32x126xf32>
    %180 = tpu.matmul %173, %177, %cst_172 {dimension_numbers = #tpu.dot_dimension_numbers<[1], [0], [0], [1], [0, 0, 1, 1], [], []>} : vector<32x16xbf16>, vector<16x126xbf16>, vector<32x126xf32> -> vector<32x126xf32>
    %181 = arith.addf %171, %180 : vector<32x126xf32>
    %c18_173 = arith.constant 18 : index
    %c0_174 = arith.constant 0 : index
    %c0_175 = arith.constant 0 : index
    %182 = vector.load %arg3[%c18_173, %c0_174, %c0_175] : memref<25x32x16xbf16, #tpu.memory_space<vmem>>, vector<1x32x16xbf16>
    %183 = vector.shape_cast %182 : vector<1x32x16xbf16> to vector<32x16xbf16>
    %c0_176 = arith.constant 0 : index
    %c0_177 = arith.constant 0 : index
    %c21_178 = arith.constant 21 : index
    %184 = vector.load %arg2[%c0_176, %c0_177, %c21_178] : memref<1x16x180xbf16, #tpu.memory_space<vmem>>, vector<1x16x126xbf16>
    %185 = vector.shape_cast %184 : vector<1x16x126xbf16> to vector<16x126xbf16>
    %c0_179 = arith.constant 0 : index
    %c0_180 = arith.constant 0 : index
    %c39 = arith.constant 39 : index
    %186 = vector.load %arg1[%c0_179, %c0_180, %c39] : memref<1x16x180xbf16, #tpu.memory_space<vmem>>, vector<1x16x126xbf16>
    %187 = vector.shape_cast %186 : vector<1x16x126xbf16> to vector<16x126xbf16>
    %cst_181 = arith.constant dense<0.000000e+00> : vector<32x126xf32>
    %188 = tpu.matmul %183, %185, %cst_181 {dimension_numbers = #tpu.dot_dimension_numbers<[1], [0], [0], [1], [0, 0, 1, 1], [], []>} : vector<32x16xbf16>, vector<16x126xbf16>, vector<32x126xf32> -> vector<32x126xf32>
    %189 = arith.addf %179, %188 : vector<32x126xf32>
    %cst_182 = arith.constant dense<0.000000e+00> : vector<32x126xf32>
    %190 = tpu.matmul %183, %187, %cst_182 {dimension_numbers = #tpu.dot_dimension_numbers<[1], [0], [0], [1], [0, 0, 1, 1], [], []>} : vector<32x16xbf16>, vector<16x126xbf16>, vector<32x126xf32> -> vector<32x126xf32>
    %191 = arith.addf %181, %190 : vector<32x126xf32>
    %c19_183 = arith.constant 19 : index
    %c0_184 = arith.constant 0 : index
    %c0_185 = arith.constant 0 : index
    %192 = vector.load %arg3[%c19_183, %c0_184, %c0_185] : memref<25x32x16xbf16, #tpu.memory_space<vmem>>, vector<1x32x16xbf16>
    %193 = vector.shape_cast %192 : vector<1x32x16xbf16> to vector<32x16xbf16>
    %c0_186 = arith.constant 0 : index
    %c0_187 = arith.constant 0 : index
    %c22_188 = arith.constant 22 : index
    %194 = vector.load %arg2[%c0_186, %c0_187, %c22_188] : memref<1x16x180xbf16, #tpu.memory_space<vmem>>, vector<1x16x126xbf16>
    %195 = vector.shape_cast %194 : vector<1x16x126xbf16> to vector<16x126xbf16>
    %c0_189 = arith.constant 0 : index
    %c0_190 = arith.constant 0 : index
    %c40 = arith.constant 40 : index
    %196 = vector.load %arg1[%c0_189, %c0_190, %c40] : memref<1x16x180xbf16, #tpu.memory_space<vmem>>, vector<1x16x126xbf16>
    %197 = vector.shape_cast %196 : vector<1x16x126xbf16> to vector<16x126xbf16>
    %cst_191 = arith.constant dense<0.000000e+00> : vector<32x126xf32>
    %198 = tpu.matmul %193, %195, %cst_191 {dimension_numbers = #tpu.dot_dimension_numbers<[1], [0], [0], [1], [0, 0, 1, 1], [], []>} : vector<32x16xbf16>, vector<16x126xbf16>, vector<32x126xf32> -> vector<32x126xf32>
    %199 = arith.addf %189, %198 : vector<32x126xf32>
    %cst_192 = arith.constant dense<0.000000e+00> : vector<32x126xf32>
    %200 = tpu.matmul %193, %197, %cst_192 {dimension_numbers = #tpu.dot_dimension_numbers<[1], [0], [0], [1], [0, 0, 1, 1], [], []>} : vector<32x16xbf16>, vector<16x126xbf16>, vector<32x126xf32> -> vector<32x126xf32>
    %201 = arith.addf %191, %200 : vector<32x126xf32>
    %c20_193 = arith.constant 20 : index
    %c0_194 = arith.constant 0 : index
    %c0_195 = arith.constant 0 : index
    %202 = vector.load %arg3[%c20_193, %c0_194, %c0_195] : memref<25x32x16xbf16, #tpu.memory_space<vmem>>, vector<1x32x16xbf16>
    %203 = vector.shape_cast %202 : vector<1x32x16xbf16> to vector<32x16xbf16>
    %c0_196 = arith.constant 0 : index
    %c0_197 = arith.constant 0 : index
    %c36_198 = arith.constant 36 : index
    %204 = vector.load %arg1[%c0_196, %c0_197, %c36_198] : memref<1x16x180xbf16, #tpu.memory_space<vmem>>, vector<1x16x126xbf16>
    %205 = vector.shape_cast %204 : vector<1x16x126xbf16> to vector<16x126xbf16>
    %c0_199 = arith.constant 0 : index
    %c0_200 = arith.constant 0 : index
    %c36_201 = arith.constant 36 : index
    %206 = vector.load %arg2[%c0_199, %c0_200, %c36_201] : memref<1x16x180xbf16, #tpu.memory_space<vmem>>, vector<1x16x126xbf16>
    %207 = vector.shape_cast %206 : vector<1x16x126xbf16> to vector<16x126xbf16>
    %cst_202 = arith.constant dense<0.000000e+00> : vector<32x126xf32>
    %208 = tpu.matmul %203, %205, %cst_202 {dimension_numbers = #tpu.dot_dimension_numbers<[1], [0], [0], [1], [0, 0, 1, 1], [], []>} : vector<32x16xbf16>, vector<16x126xbf16>, vector<32x126xf32> -> vector<32x126xf32>
    %209 = arith.addf %199, %208 : vector<32x126xf32>
    %cst_203 = arith.constant dense<0.000000e+00> : vector<32x126xf32>
    %210 = tpu.matmul %203, %207, %cst_203 {dimension_numbers = #tpu.dot_dimension_numbers<[1], [0], [0], [1], [0, 0, 1, 1], [], []>} : vector<32x16xbf16>, vector<16x126xbf16>, vector<32x126xf32> -> vector<32x126xf32>
    %211 = arith.addf %201, %210 : vector<32x126xf32>
    %c21_204 = arith.constant 21 : index
    %c0_205 = arith.constant 0 : index
    %c0_206 = arith.constant 0 : index
    %212 = vector.load %arg3[%c21_204, %c0_205, %c0_206] : memref<25x32x16xbf16, #tpu.memory_space<vmem>>, vector<1x32x16xbf16>
    %213 = vector.shape_cast %212 : vector<1x32x16xbf16> to vector<32x16xbf16>
    %c0_207 = arith.constant 0 : index
    %c0_208 = arith.constant 0 : index
    %c37_209 = arith.constant 37 : index
    %214 = vector.load %arg1[%c0_207, %c0_208, %c37_209] : memref<1x16x180xbf16, #tpu.memory_space<vmem>>, vector<1x16x126xbf16>
    %215 = vector.shape_cast %214 : vector<1x16x126xbf16> to vector<16x126xbf16>
    %c0_210 = arith.constant 0 : index
    %c0_211 = arith.constant 0 : index
    %c37_212 = arith.constant 37 : index
    %216 = vector.load %arg2[%c0_210, %c0_211, %c37_212] : memref<1x16x180xbf16, #tpu.memory_space<vmem>>, vector<1x16x126xbf16>
    %217 = vector.shape_cast %216 : vector<1x16x126xbf16> to vector<16x126xbf16>
    %cst_213 = arith.constant dense<0.000000e+00> : vector<32x126xf32>
    %218 = tpu.matmul %213, %215, %cst_213 {dimension_numbers = #tpu.dot_dimension_numbers<[1], [0], [0], [1], [0, 0, 1, 1], [], []>} : vector<32x16xbf16>, vector<16x126xbf16>, vector<32x126xf32> -> vector<32x126xf32>
    %219 = arith.addf %209, %218 : vector<32x126xf32>
    %cst_214 = arith.constant dense<0.000000e+00> : vector<32x126xf32>
    %220 = tpu.matmul %213, %217, %cst_214 {dimension_numbers = #tpu.dot_dimension_numbers<[1], [0], [0], [1], [0, 0, 1, 1], [], []>} : vector<32x16xbf16>, vector<16x126xbf16>, vector<32x126xf32> -> vector<32x126xf32>
    %221 = arith.addf %211, %220 : vector<32x126xf32>
    %c22_215 = arith.constant 22 : index
    %c0_216 = arith.constant 0 : index
    %c0_217 = arith.constant 0 : index
    %222 = vector.load %arg3[%c22_215, %c0_216, %c0_217] : memref<25x32x16xbf16, #tpu.memory_space<vmem>>, vector<1x32x16xbf16>
    %223 = vector.shape_cast %222 : vector<1x32x16xbf16> to vector<32x16xbf16>
    %c0_218 = arith.constant 0 : index
    %c0_219 = arith.constant 0 : index
    %c38_220 = arith.constant 38 : index
    %224 = vector.load %arg1[%c0_218, %c0_219, %c38_220] : memref<1x16x180xbf16, #tpu.memory_space<vmem>>, vector<1x16x126xbf16>
    %225 = vector.shape_cast %224 : vector<1x16x126xbf16> to vector<16x126xbf16>
    %c0_221 = arith.constant 0 : index
    %c0_222 = arith.constant 0 : index
    %c38_223 = arith.constant 38 : index
    %226 = vector.load %arg2[%c0_221, %c0_222, %c38_223] : memref<1x16x180xbf16, #tpu.memory_space<vmem>>, vector<1x16x126xbf16>
    %227 = vector.shape_cast %226 : vector<1x16x126xbf16> to vector<16x126xbf16>
    %cst_224 = arith.constant dense<0.000000e+00> : vector<32x126xf32>
    %228 = tpu.matmul %223, %225, %cst_224 {dimension_numbers = #tpu.dot_dimension_numbers<[1], [0], [0], [1], [0, 0, 1, 1], [], []>} : vector<32x16xbf16>, vector<16x126xbf16>, vector<32x126xf32> -> vector<32x126xf32>
    %229 = arith.addf %219, %228 : vector<32x126xf32>
    %cst_225 = arith.constant dense<0.000000e+00> : vector<32x126xf32>
    %230 = tpu.matmul %223, %227, %cst_225 {dimension_numbers = #tpu.dot_dimension_numbers<[1], [0], [0], [1], [0, 0, 1, 1], [], []>} : vector<32x16xbf16>, vector<16x126xbf16>, vector<32x126xf32> -> vector<32x126xf32>
    %231 = arith.addf %221, %230 : vector<32x126xf32>
    %c23 = arith.constant 23 : index
    %c0_226 = arith.constant 0 : index
    %c0_227 = arith.constant 0 : index
    %232 = vector.load %arg3[%c23, %c0_226, %c0_227] : memref<25x32x16xbf16, #tpu.memory_space<vmem>>, vector<1x32x16xbf16>
    %233 = vector.shape_cast %232 : vector<1x32x16xbf16> to vector<32x16xbf16>
    %c0_228 = arith.constant 0 : index
    %c0_229 = arith.constant 0 : index
    %c39_230 = arith.constant 39 : index
    %234 = vector.load %arg1[%c0_228, %c0_229, %c39_230] : memref<1x16x180xbf16, #tpu.memory_space<vmem>>, vector<1x16x126xbf16>
    %235 = vector.shape_cast %234 : vector<1x16x126xbf16> to vector<16x126xbf16>
    %c0_231 = arith.constant 0 : index
    %c0_232 = arith.constant 0 : index
    %c39_233 = arith.constant 39 : index
    %236 = vector.load %arg2[%c0_231, %c0_232, %c39_233] : memref<1x16x180xbf16, #tpu.memory_space<vmem>>, vector<1x16x126xbf16>
    %237 = vector.shape_cast %236 : vector<1x16x126xbf16> to vector<16x126xbf16>
    %cst_234 = arith.constant dense<0.000000e+00> : vector<32x126xf32>
    %238 = tpu.matmul %233, %235, %cst_234 {dimension_numbers = #tpu.dot_dimension_numbers<[1], [0], [0], [1], [0, 0, 1, 1], [], []>} : vector<32x16xbf16>, vector<16x126xbf16>, vector<32x126xf32> -> vector<32x126xf32>
    %239 = arith.addf %229, %238 : vector<32x126xf32>
    %cst_235 = arith.constant dense<0.000000e+00> : vector<32x126xf32>
    %240 = tpu.matmul %233, %237, %cst_235 {dimension_numbers = #tpu.dot_dimension_numbers<[1], [0], [0], [1], [0, 0, 1, 1], [], []>} : vector<32x16xbf16>, vector<16x126xbf16>, vector<32x126xf32> -> vector<32x126xf32>
    %241 = arith.addf %231, %240 : vector<32x126xf32>
    %c24 = arith.constant 24 : index
    %c0_236 = arith.constant 0 : index
    %c0_237 = arith.constant 0 : index
    %242 = vector.load %arg3[%c24, %c0_236, %c0_237] : memref<25x32x16xbf16, #tpu.memory_space<vmem>>, vector<1x32x16xbf16>
    %243 = vector.shape_cast %242 : vector<1x32x16xbf16> to vector<32x16xbf16>
    %c0_238 = arith.constant 0 : index
    %c0_239 = arith.constant 0 : index
    %c40_240 = arith.constant 40 : index
    %244 = vector.load %arg1[%c0_238, %c0_239, %c40_240] : memref<1x16x180xbf16, #tpu.memory_space<vmem>>, vector<1x16x126xbf16>
    %245 = vector.shape_cast %244 : vector<1x16x126xbf16> to vector<16x126xbf16>
    %c0_241 = arith.constant 0 : index
    %c0_242 = arith.constant 0 : index
    %c40_243 = arith.constant 40 : index
    %246 = vector.load %arg2[%c0_241, %c0_242, %c40_243] : memref<1x16x180xbf16, #tpu.memory_space<vmem>>, vector<1x16x126xbf16>
    %247 = vector.shape_cast %246 : vector<1x16x126xbf16> to vector<16x126xbf16>
    %cst_244 = arith.constant dense<0.000000e+00> : vector<32x126xf32>
    %248 = tpu.matmul %243, %245, %cst_244 {dimension_numbers = #tpu.dot_dimension_numbers<[1], [0], [0], [1], [0, 0, 1, 1], [], []>} : vector<32x16xbf16>, vector<16x126xbf16>, vector<32x126xf32> -> vector<32x126xf32>
    %249 = arith.addf %239, %248 : vector<32x126xf32>
    %cst_245 = arith.constant dense<0.000000e+00> : vector<32x126xf32>
    %250 = tpu.matmul %243, %247, %cst_245 {dimension_numbers = #tpu.dot_dimension_numbers<[1], [0], [0], [1], [0, 0, 1, 1], [], []>} : vector<32x16xbf16>, vector<16x126xbf16>, vector<32x126xf32> -> vector<32x126xf32>
    %251 = arith.addf %241, %250 : vector<32x126xf32>
    %c0_246 = arith.constant 0 : index
    %c0_247 = arith.constant 0 : index
    %252 = vector.load %arg4[%c0_246, %c0_247] : memref<32x1xf32, #tpu.memory_space<vmem>>, vector<32x1xf32>
    %253 = vector.broadcast %252 : vector<32x1xf32> to vector<32x126xf32>
    %254 = arith.addf %249, %253 : vector<32x126xf32>
    %cst_248 = arith.constant 0.000000e+00 : f32
    %255 = vector.broadcast %cst_248 : f32 to vector<32x126xf32>
    %256 = arith.maximumf %254, %255 : vector<32x126xf32>
    %257 = vector.broadcast %252 : vector<32x1xf32> to vector<32x126xf32>
    %258 = arith.addf %251, %257 : vector<32x126xf32>
    %cst_249 = arith.constant 0.000000e+00 : f32
    %259 = vector.broadcast %cst_249 : f32 to vector<32x126xf32>
    %260 = arith.maximumf %258, %259 : vector<32x126xf32>
    %261 = arith.maximumf %256, %260 : vector<32x126xf32>
    %c0_250 = arith.constant 0 : index
    %c0_251 = arith.constant 0 : index
    %262 = vector.load %arg7[%c0_250, %c0_251] : memref<32x126xf32, #tpu.memory_space<vmem>>, vector<32x126xf32>
    tpu.vector_store %arg7[%c0_250, %c0_251], %261 {strides = array<i32>} : memref<32x126xf32, #tpu.memory_space<vmem>>, vector<32x126xf32>,
    %c0_252 = arith.constant 0 : index
    %c0_253 = arith.constant 0 : index
    %263 = vector.load %arg7[%c0_252, %c0_253] : memref<32x126xf32, #tpu.memory_space<vmem>>, vector<32x125xf32>
    %c0_254 = arith.constant 0 : index
    %c1_255 = arith.constant 1 : index
    %264 = vector.load %arg7[%c0_254, %c1_255] : memref<32x126xf32, #tpu.memory_space<vmem>>, vector<32x125xf32>
    %265 = arith.maximumf %263, %264 : vector<32x125xf32>
    %266 = arith.truncf %265 : vector<32x125xf32> to vector<32x125xbf16>
    %c0_256 = arith.constant 0 : index
    %c0_257 = arith.constant 0 : index
    %267 = vector.load %arg5[%c0_256, %c0_257] : memref<125x49xbf16, #tpu.memory_space<vmem>>, vector<125x49xbf16>
    %cst_258 = arith.constant dense<0.000000e+00> : vector<32x49xf32>
    %268 = tpu.matmul %266, %267, %cst_258 {dimension_numbers = #tpu.dot_dimension_numbers<[1], [0], [0], [1], [0, 0, 1, 1], [], []>} : vector<32x125xbf16>, vector<125x49xbf16>, vector<32x49xf32> -> vector<32x49xf32>
    %269 = arith.truncf %268 : vector<32x49xf32> to vector<32x49xbf16>
    %c0_259 = arith.constant 0 : index
    %c0_260 = arith.constant 0 : index
    %c0_261 = arith.constant 0 : index
    %270 = vector.load %arg6[%c0_259, %c0_260, %c0_261] : memref<1x32x49xbf16, #tpu.memory_space<vmem>>, vector<1x32x49xbf16>
    %271 = vector.shape_cast %270 : vector<1x32x49xbf16> to vector<32x49xbf16>
    %272 = vector.shape_cast %269 : vector<32x49xbf16> to vector<1x32x49xbf16>
    tpu.vector_store %arg6[%c0_259, %c0_260, %c0_261], %272 {strides = array<i32>} : memref<1x32x49xbf16, #tpu.memory_space<vmem>>, vector<1x32x49xbf16>,
    return
  }
  func.func @transform_0(%arg0: i32) -> (i32, i32, i32) {
    %c0_i32 = arith.constant 0 : i32
    %c0_i32_0 = arith.constant 0 : i32
    %c0_i32_1 = arith.constant 0 : i32
    return %arg0, %c0_i32, %c0_i32_0 : i32, i32, i32
  }
  func.func @transform_1(%arg0: i32) -> (i32, i32, i32) {
    %c0_i32 = arith.constant 0 : i32
    %c0_i32_0 = arith.constant 0 : i32
    %c0_i32_1 = arith.constant 0 : i32
    return %arg0, %c0_i32, %c0_i32_0 : i32, i32, i32
  }
  func.func @transform_2(%arg0: i32) -> (i32, i32, i32) {
    %c0_i32 = arith.constant 0 : i32
    %c0_i32_0 = arith.constant 0 : i32
    %c0_i32_1 = arith.constant 0 : i32
    %c0_i32_2 = arith.constant 0 : i32
    return %c0_i32, %c0_i32_0, %c0_i32_1 : i32, i32, i32
  }
  func.func @transform_3(%arg0: i32) -> (i32, i32) {
    %c0_i32 = arith.constant 0 : i32
    %c0_i32_0 = arith.constant 0 : i32
    %c0_i32_1 = arith.constant 0 : i32
    return %c0_i32, %c0_i32_0 : i32, i32
  }
  func.func @transform_4(%arg0: i32) -> (i32, i32) {
    %c0_i32 = arith.constant 0 : i32
    %c0_i32_0 = arith.constant 0 : i32
    %c0_i32_1 = arith.constant 0 : i32
    return %c0_i32, %c0_i32_0 : i32, i32
  }
  func.func @transform_5(%arg0: i32) -> (i32, i32, i32) {
    %c0_i32 = arith.constant 0 : i32
    %c0_i32_0 = arith.constant 0 : i32
    %c0_i32_1 = arith.constant 0 : i32
    return %arg0, %c0_i32, %c0_i32_0 : i32, i32, i32
  }
}

module attributes {stable_mosaic.version = 11 : i64} {
  func.func @_linear_kernel(%arg0: i32, %arg1: memref<2x1568xbf16, #tpu.memory_space<vmem>>, %arg2: memref<1568x10xbf16, #tpu.memory_space<vmem>>, %arg3: memref<1x10xf32, #tpu.memory_space<vmem>>, %arg4: memref<2x10xf32, #tpu.memory_space<vmem>>) attributes {dimension_semantics = [#tpu.dimension_semantics<parallel>], iteration_bounds = array<i64: 1>, scalar_prefetch = 0 : i64, scratch_operands = 0 : i64, tpu.core_type = #tpu.core_type<tc>, window_params = [{transform_indices = @transform_0, window_bounds = array<i64: 2, 1568>}, {pipeline_mode = #tpu.pipeline_mode<synchronous>, transform_indices = @transform_1, window_bounds = array<i64: 1568, 10>}, {pipeline_mode = #tpu.pipeline_mode<synchronous>, transform_indices = @transform_2, window_bounds = array<i64: 1, 10>}, {transform_indices = @transform_3, window_bounds = array<i64: 2, 10>}]} {
    %c0 = arith.constant 0 : index
    %c0_0 = arith.constant 0 : index
    %0 = vector.load %arg1[%c0, %c0_0] : memref<2x1568xbf16, #tpu.memory_space<vmem>>, vector<2x1568xbf16>
    %c0_1 = arith.constant 0 : index
    %c0_2 = arith.constant 0 : index
    %1 = vector.load %arg2[%c0_1, %c0_2] : memref<1568x10xbf16, #tpu.memory_space<vmem>>, vector<1568x10xbf16>
    %cst = arith.constant dense<0.000000e+00> : vector<2x10xf32>
    %2 = tpu.matmul %0, %1, %cst {dimension_numbers = #tpu.dot_dimension_numbers<[1], [0], [0], [1], [0, 0, 1, 1], [], []>} : vector<2x1568xbf16>, vector<1568x10xbf16>, vector<2x10xf32> -> vector<2x10xf32>
    %c0_3 = arith.constant 0 : index
    %c0_4 = arith.constant 0 : index
    %3 = vector.load %arg3[%c0_3, %c0_4] : memref<1x10xf32, #tpu.memory_space<vmem>>, vector<1x10xf32>
    %4 = vector.broadcast %3 : vector<1x10xf32> to vector<2x10xf32>
    %5 = arith.addf %2, %4 : vector<2x10xf32>
    %c0_5 = arith.constant 0 : index
    %c0_6 = arith.constant 0 : index
    %6 = vector.load %arg4[%c0_5, %c0_6] : memref<2x10xf32, #tpu.memory_space<vmem>>, vector<2x10xf32>
    tpu.vector_store %arg4[%c0_5, %c0_6], %5 {strides = array<i32>} : memref<2x10xf32, #tpu.memory_space<vmem>>, vector<2x10xf32>,
    return
  }
  func.func @transform_0(%arg0: i32) -> (i32, i32) {
    %c0_i32 = arith.constant 0 : i32
    %c0_i32_0 = arith.constant 0 : i32
    return %arg0, %c0_i32 : i32, i32
  }
  func.func @transform_1(%arg0: i32) -> (i32, i32) {
    %c0_i32 = arith.constant 0 : i32
    %c0_i32_0 = arith.constant 0 : i32
    %c0_i32_1 = arith.constant 0 : i32
    return %c0_i32, %c0_i32_0 : i32, i32
  }
  func.func @transform_2(%arg0: i32) -> (i32, i32) {
    %c0_i32 = arith.constant 0 : i32
    %c0_i32_0 = arith.constant 0 : i32
    %c0_i32_1 = arith.constant 0 : i32
    return %c0_i32, %c0_i32_0 : i32, i32
  }
  func.func @transform_3(%arg0: i32) -> (i32, i32) {
    %c0_i32 = arith.constant 0 : i32
    %c0_i32_0 = arith.constant 0 : i32
    return %arg0, %c0_i32 : i32, i32
  }
}

</mosaic_0001>

<llo_original>
// kernel: cnn_forward.3
$region0: #{cnn_forward.3}
  #allocation0 [shape = 'u32[]', space=smem, size = 0x4, offset = 0x4, fixed_abs, tag = 'smem constant byte address 0x4 - core index']
  #allocation1 [shape = 'u32[144,128]{1,0:T(1,128)}', space=vmem, size = 0x12000, scoped, tag = 'internal scratch']
  #allocation2 [shape = 'f32[16,448]{1,0:T(8,128)}', space=vmem, size = 0x8000, scoped, tag = 'scratch operand']
  %s0 = inlined_call_operand.vmem [shape: bf16[2,1,544], index: 0, kind: input, shape index: {}]
  %s1 = inlined_call_operand.vmem [shape: bf16[2,1,544], index: 1, kind: input, shape index: {}]
  %s2 = inlined_call_operand.vmem [shape: bf16[25,16,1], index: 2, kind: input, shape index: {}]
  %s3 = inlined_call_operand.vmem [shape: f32[16,1], index: 3, kind: input, shape index: {}]
  %s4 = inlined_call_operand.vmem [shape: bf16[447,196], index: 4, kind: input, shape index: {}]
  %s5 = inlined_call_operand.vmem [shape: bf16[2,16,196], index: 5, kind: output, shape index: {}]
  %s6 = sld [smem:[#allocation0]]
  $region53: #{cnn_forward.3} parent=0
    _
  %s8 = ssub.s32 1, %s6
  %s9 = scalar_select 0, %s8, %s6
  loop: start=0, step=1, limit=4
  $region2: #{cnn_forward.3} parent=0 // loop_pre_header
    _
  $region3: #{cnn_forward.3} parent=0 // loop_header
    %s11 = sphi 0, %s15
    %p12 = scmp.ge.s32.totalorder %s11, 4
    %s21 = sphi 0, %s23
    %s24 = sphi 0, %s21
    %s25 = sphi 0, %s24
    %s41 = sphi 0, %s25
    %s47 = sphi 0, %s49
    %s50 = sphi 0, %s47
    %s51 = sphi 0, %s50
    %s67 = sphi 0, %s51
    %s71 = sphi 0, %s71
    %s73 = sphi 0, %s71
    %s74 = sphi 0, %s73
    %s88 = sphi 0, %s74
    %s92 = sphi 0, %s92
    %s94 = sphi 0, %s92
    %s95 = sphi 0, %s94
    %s109 = sphi 0, %s95
    %s113 = sphi 0, %s113
    %s115 = sphi 0, %s113
    %s116 = sphi 0, %s115
    %s130 = sphi 0, %s116
    %s136 = sphi 0, %s138
    %s139 = sphi 0, %s136
    %s140 = sphi 0, %s139
    %s156 = sphi 0, %s140
  $region4: #{cnn_forward.3} parent=0 // loop_header_branch
    %14 = sbr.rel (%p12) target = $region8
  $region5: #{cnn_forward.3} parent=0 // loop_body
    %s16 = ssub.s32 %s11, 1
    %s17 = ssub.s32 %s11, 2
    %s18 = sadd.s32 %s11, 1
    %s19 = ssub.s32 %s11, %s18
    %p20 = scmp.eq.s32.totalorder %s19, 0
    %s22 = sadd.s32 %s21, 1
    %s23 = scalar_select %p20, %s21, %s22
    %p26 = pneg %p20
    %p27 = scmp.eq.s32.totalorder %s11, 1
    %p28 = por %p26, %p27
    %p29 = scmp.ne.s32.totalorder %s21, %s24
    %p30 = scmp.eq.s32.totalorder %s11, 0
    %p31 = por %p29, %p30
    %p32 = scmp.ne.s32.totalorder %s21, %s24
    %p33 = scmp.eq.s32.totalorder %s16, 1
    %p34 = por %p32, %p33
    %p35 = scmp.ne.s32.totalorder %s24, %s25
    %p36 = scmp.eq.s32.totalorder %s16, 0
    %p37 = por %p35, %p36
    %p38 = scmp.ne.s32.totalorder %s24, %s25
    %p39 = scmp.eq.s32.totalorder %s17, 1
    %p40 = por %p38, %p39
    %p42 = scmp.ne.s32.totalorder %s25, %s41
    %p43 = scmp.eq.s32.totalorder %s17, 0
    %p44 = por %p42, %p43
    %s45 = ssub.s32 %s11, %s18
    %p46 = scmp.eq.s32.totalorder %s45, 0
    %s48 = sadd.s32 %s47, 1
    %s49 = scalar_select %p46, %s47, %s48
    %p52 = pneg %p46
    %p53 = scmp.eq.s32.totalorder %s11, 1
    %p54 = por %p52, %p53
    %p55 = scmp.ne.s32.totalorder %s47, %s50
    %p56 = scmp.eq.s32.totalorder %s11, 0
    %p57 = por %p55, %p56
    %p58 = scmp.ne.s32.totalorder %s47, %s50
    %p59 = scmp.eq.s32.totalorder %s16, 1
    %p60 = por %p58, %p59
    %p61 = scmp.ne.s32.totalorder %s50, %s51
    %p62 = scmp.eq.s32.totalorder %s16, 0
    %p63 = por %p61, %p62
    %p64 = scmp.ne.s32.totalorder %s50, %s51
    %p65 = scmp.eq.s32.totalorder %s17, 1
    %p66 = por %p64, %p65
    %p68 = scmp.ne.s32.totalorder %s51, %s67
    %p69 = scmp.eq.s32.totalorder %s17, 0
    %p70 = por %p68, %p69
    %s72 = sadd.s32 %s71, 1
    %p75 = scmp.eq.s32.totalorder %s11, 1
    %p76 = scmp.ne.s32.totalorder %s71, %s73
    %p77 = scmp.eq.s32.totalorder %s11, 0
    %p78 = por %p76, %p77
    %p79 = scmp.ne.s32.totalorder %s71, %s73
    %p80 = scmp.eq.s32.totalorder %s16, 1
    %p81 = por %p79, %p80
    %p82 = scmp.ne.s32.totalorder %s73, %s74
    %p83 = scmp.eq.s32.totalorder %s16, 0
    %p84 = por %p82, %p83
    %p85 = scmp.ne.s32.totalorder %s73, %s74
    %p86 = scmp.eq.s32.totalorder %s17, 1
    %p87 = por %p85, %p86
    %p89 = scmp.ne.s32.totalorder %s74, %s88
    %p90 = scmp.eq.s32.totalorder %s17, 0
    %p91 = por %p89, %p90
    %s93 = sadd.s32 %s92, 1
    %p96 = scmp.eq.s32.totalorder %s11, 1
    %p97 = scmp.ne.s32.totalorder %s92, %s94
    %p98 = scmp.eq.s32.totalorder %s11, 0
    %p99 = por %p97, %p98
    %p100 = scmp.ne.s32.totalorder %s92, %s94
    %p101 = scmp.eq.s32.totalorder %s16, 1
    %p102 = por %p100, %p101
    %p103 = scmp.ne.s32.totalorder %s94, %s95
    %p104 = scmp.eq.s32.totalorder %s16, 0
    %p105 = por %p103, %p104
    %p106 = scmp.ne.s32.totalorder %s94, %s95
    %p107 = scmp.eq.s32.totalorder %s17, 1
    %p108 = por %p106, %p107
    %p110 = scmp.ne.s32.totalorder %s95, %s109
    %p111 = scmp.eq.s32.totalorder %s17, 0
    %p112 = por %p110, %p111
    %s114 = sadd.s32 %s113, 1
    %p117 = scmp.eq.s32.totalorder %s11, 1
    %p118 = scmp.ne.s32.totalorder %s113, %s115
    %p119 = scmp.eq.s32.totalorder %s11, 0
    %p120 = por %p118, %p119
    %p121 = scmp.ne.s32.totalorder %s113, %s115
    %p122 = scmp.eq.s32.totalorder %s16, 1
    %p123 = por %p121, %p122
    %p124 = scmp.ne.s32.totalorder %s115, %s116
    %p125 = scmp.eq.s32.totalorder %s16, 0
    %p126 = por %p124, %p125
    %p127 = scmp.ne.s32.totalorder %s115, %s116
    %p128 = scmp.eq.s32.totalorder %s17, 1
    %p129 = por %p127, %p128
    %p131 = scmp.ne.s32.totalorder %s116, %s130
    %p132 = scmp.eq.s32.totalorder %s17, 0
    %p133 = por %p131, %p132
    %s134 = ssub.s32 %s11, %s18
    %p135 = scmp.eq.s32.totalorder %s134, 0
    %s137 = sadd.s32 %s136, 1
    %s138 = scalar_select %p135, %s136, %s137
    %p141 = pneg %p135
    %p142 = scmp.eq.s32.totalorder %s11, 1
    %p143 = por %p141, %p142
    %p144 = scmp.ne.s32.totalorder %s136, %s139
    %p145 = scmp.eq.s32.totalorder %s11, 0
    %p146 = por %p144, %p145
    %p147 = scmp.ne.s32.totalorder %s136, %s139
    %p148 = scmp.eq.s32.totalorder %s16, 1
    %p149 = por %p147, %p148
    %p150 = scmp.ne.s32.totalorder %s139, %s140
    %p151 = scmp.eq.s32.totalorder %s16, 0
    %p152 = por %p150, %p151
    %p153 = scmp.ne.s32.totalorder %s139, %s140
    %p154 = scmp.eq.s32.totalorder %s17, 1
    %p155 = por %p153, %p154
    %p157 = scmp.ne.s32.totalorder %s140, %s156
    %p158 = scmp.eq.s32.totalorder %s17, 0
    %p159 = por %p157, %p158
    %p160 = scmp.le.s32.totalorder 1, %s11
    %p161 = scmp.lt.s32.totalorder %s11, 3
    %p162 = pnand %p160, %p161
    %p163 = pneg %p162
    // Predicated region
    $region9: #{cnn_forward.3} parent=5 // pred_check
      _
    $region10: #{cnn_forward.3} parent=5 // pred_check_branch
      %165 = sbr.rel (%p162) target = $region12
    $region11: #{cnn_forward.3} parent=5 // pred_region
      %s166 = ssub.s32 %s11, 1
      // Predicated region
      $region13: #{cnn_forward.3} parent=11 // pred_check
        %p167 = pneg %p84
      $region14: #{cnn_forward.3} parent=11 // pred_check_branch
        %169 = sbr.rel (%p167) target = $region16
      $region15: #{cnn_forward.3} parent=11 // pred_region
        _
      $region16: #{cnn_forward.3} parent=11 // pred_fallthru
        _
      // Predicated region
      $region17: #{cnn_forward.3} parent=11 // pred_check
        %p170 = pneg %p105
      $region18: #{cnn_forward.3} parent=11 // pred_check_branch
        %172 = sbr.rel (%p170) target = $region20
      $region19: #{cnn_forward.3} parent=11 // pred_region
        _
      $region20: #{cnn_forward.3} parent=11 // pred_fallthru
        _
      // Predicated region
      $region21: #{cnn_forward.3} parent=11 // pred_check
        %p173 = pneg %p126
      $region22: #{cnn_forward.3} parent=11 // pred_check_branch
        %175 = sbr.rel (%p173) target = $region24
      $region23: #{cnn_forward.3} parent=11 // pred_region
        _
      $region24: #{cnn_forward.3} parent=11 // pred_fallthru
        _
    $region12: #{cnn_forward.3} parent=5 // pred_fallthru
      _
    %p176 = scmp.lt.s32.totalorder %s11, 2
    // Predicated region
    $region25: #{cnn_forward.3} parent=5 // pred_check
      %p177 = pneg %p176
    $region26: #{cnn_forward.3} parent=5 // pred_check_branch
      %179 = sbr.rel (%p177) target = $region28
    $region27: #{cnn_forward.3} parent=5 // pred_region
      // Predicated region
      $region29: #{cnn_forward.3} parent=27 // pred_check
        %p180 = pneg %p31
      $region30: #{cnn_forward.3} parent=27 // pred_check_branch
        %182 = sbr.rel (%p180) target = $region32
      $region31: #{cnn_forward.3} parent=27 // pred_region
        %p183 = scmp.lt.s32.totalorder %s11, 1
        %s184 = scalar_select %p183, %s11, 1
        %s185 = smul.addr %s184, 5
        %s186 = scalar_lea.vmem %s0, %s185
      $region32: #{cnn_forward.3} parent=27 // pred_fallthru
        _
      // Predicated region
      $region33: #{cnn_forward.3} parent=27 // pred_check
        %p187 = pneg %p57
      $region34: #{cnn_forward.3} parent=27 // pred_check_branch
        %189 = sbr.rel (%p187) target = $region36
      $region35: #{cnn_forward.3} parent=27 // pred_region
        %p190 = scmp.lt.s32.totalorder %s11, 1
        %s191 = scalar_select %p190, %s11, 1
        %s192 = smul.addr %s191, 5
        %s193 = scalar_lea.vmem %s1, %s192
      $region36: #{cnn_forward.3} parent=27 // pred_fallthru
        _
    $region28: #{cnn_forward.3} parent=5 // pred_fallthru
      _
    %p194 = scmp.le.s32.totalorder 1, %s11
    %p195 = scmp.lt.s32.totalorder %s11, 3
    %p196 = pnand %p194, %p195
    %p197 = pneg %p196
    // Predicated region
    $region37: #{cnn_forward.3} parent=5 // pred_check
      _
    $region38: #{cnn_forward.3} parent=5 // pred_check_branch
      %199 = sbr.rel (%p196) target = $region40
    $region39: #{cnn_forward.3} parent=5 // pred_region
      %s200 = ssub.s32 %s11, 1
      %p201 = scmp.lt.s32.totalorder %s16, 1
      %s202 = scalar_select %p201, %s16, 1
      %s203 = smul.addr %s202, 5
      %s204 = scalar_lea.vmem %s0, %s203
      %p205 = pneg %p37
      %p206 = pneg %p34
      %p207 = scmp.lt.s32.totalorder %s16, 1
      %s208 = scalar_select %p207, %s16, 1
      %s209 = smul.addr %s208, 5
      %s210 = scalar_lea.vmem %s1, %s209
      %p211 = pneg %p63
      %p212 = pneg %p60
      %p213 = pneg %p84
      %p214 = pneg %p81
      %p215 = pneg %p105
      %p216 = pneg %p102
      %p217 = pneg %p126
      %p218 = pneg %p123
      %p219 = pneg %p152
      %p220 = pneg %p149
      %p221 = scmp.lt.s32.totalorder %s16, 1
      %s222 = scalar_select %p221, %s16, 1
      %s223 = smul.addr %s222, 4
      %s224 = smul.addr %s223, 4
      %s225 = scalar_lea.vmem %s5, %s224
      %p226 = scmp.lt.s32.totalorder %s16, 1
      %s227 = scalar_select %p226, %s16, 1
      %s228 = smul.addr %s227, 5
      %s229 = scalar_lea.vmem %s0, %s228
      %p230 = scmp.lt.s32.totalorder %s16, 1
      %s231 = scalar_select %p230, %s16, 1
      %s232 = smul.addr %s231, 5
      %s233 = scalar_lea.vmem %s1, %s232
      %p234 = scmp.lt.s32.totalorder %s16, 1
      %s235 = scalar_select %p234, %s16, 1
      %s236 = smul.addr %s235, 4
      %s237 = smul.addr %s236, 4
      %s238 = scalar_lea.vmem %s5, %s237
      %v240 = vld [vmem:[%s2] sm:$0xf]
      %v241 = vld [vmem:[%s2 + $0x4] sm:$0xf]
      %v242 = vld [vmem:[%s229] sm:$0xf]
      %v243 = vld [vmem:[%s233] sm:$0xf]
      %v244 = vunpack.c.l.bf16 %v240
      %v245 = vunpack.c.l.bf16 %v241
      %v246 = vunpack.c.l.bf16 %v242
      %248 = vset.pattern.permute.xlu0 0
      %249 = vperm.xlu0 %248, %v244
      %v250 = vpop.permute.xlu0 %249
      %253 = vset.pattern.permute.xlu0 0
      %254 = vperm.xlu0 %253, %v245
      %v255 = vpop.permute.xlu0 %254
      %v258 = vlaneseq
      %v259 = vshrl.u32 %v258, 7
      %v260 = vsub.s32 0, %v259
      %v261 = vrot.slane %v246, %v260
      %v262 = vlaneseq
      %v263 = vshrl.u32 %v262, 7
      %v264 = vsub.s32 2, %v263
      %v265 = vrot.slane %v246, %v264
      %v266 = vlaneseq
      %v267 = vshrl.u32 %v266, 7
      %v268 = vsub.s32 4, %v267
      %v269 = vrot.slane %v246, %v268
      %v270 = vlaneseq
      %v271 = vshrl.u32 %v270, 7
      %v272 = vsub.s32 6, %v271
      %v273 = vrot.slane %v246, %v272
      %v278 = vlaneseq
      %v279 = vshrl.u32 %v278, 7
      %v280 = vsub.s32 0, %v279
      %v281 = vrot.slane %v261, %v280
      %v282 = vlaneseq
      %v283 = vshrl.u32 %v282, 7
      %v284 = vsub.s32 0, %v283
      %v285 = vrot.slane %v265, %v284
      %v286 = vlaneseq
      %v287 = vshrl.u32 %v286, 7
      %v288 = vsub.s32 0, %v287
      %v289 = vrot.slane %v269, %v288
      %v290 = vlaneseq
      %v291 = vshrl.u32 %v290, 7
      %v292 = vsub.s32 0, %v291
      %v293 = vrot.slane %v273, %v292
      %v294 = vmul.f32 %v250, %v281
      %v295 = vmul.f32 %v250, %v285
      %v296 = vmul.f32 %v250, %v289
      %v297 = vmul.f32 %v250, %v293
      %v298 = vmul.f32 %v255, %v281
      %v299 = vmul.f32 %v255, %v285
      %v300 = vmul.f32 %v255, %v289
      %v301 = vmul.f32 %v255, %v293
      %v302 = vadd.f32 %v294, 0.0
      %v303 = vadd.f32 %v295, 0.0
      %v304 = vadd.f32 %v296, 0.0
      %v305 = vadd.f32 %v297, 0.0
      %v306 = vadd.f32 %v298, 0.0
      %v307 = vadd.f32 %v299, 0.0
      %v308 = vadd.f32 %v300, 0.0
      %v309 = vadd.f32 %v301, 0.0
      %v310 = vunpack.c.l.bf16 %v243
      %v312 = vlaneseq
      %v313 = vshrl.u32 %v312, 7
      %v314 = vsub.s32 0, %v313
      %v315 = vrot.slane %v310, %v314
      %v316 = vlaneseq
      %v317 = vshrl.u32 %v316, 7
      %v318 = vsub.s32 2, %v317
      %v319 = vrot.slane %v310, %v318
      %v320 = vlaneseq
      %v321 = vshrl.u32 %v320, 7
      %v322 = vsub.s32 4, %v321
      %v323 = vrot.slane %v310, %v322
      %v324 = vlaneseq
      %v325 = vshrl.u32 %v324, 7
      %v326 = vsub.s32 6, %v325
      %v327 = vrot.slane %v310, %v326
      %v332 = vlaneseq
      %v333 = vshrl.u32 %v332, 7
      %v334 = vsub.s32 0, %v333
      %v335 = vrot.slane %v315, %v334
      %v336 = vlaneseq
      %v337 = vshrl.u32 %v336, 7
      %v338 = vsub.s32 0, %v337
      %v339 = vrot.slane %v319, %v338
      %v340 = vlaneseq
      %v341 = vshrl.u32 %v340, 7
      %v342 = vsub.s32 0, %v341
      %v343 = vrot.slane %v323, %v342
      %v344 = vlaneseq
      %v345 = vshrl.u32 %v344, 7
      %v346 = vsub.s32 0, %v345
      %v347 = vrot.slane %v327, %v346
      %v348 = vmul.f32 %v250, %v335
      %v349 = vmul.f32 %v250, %v339
      %v350 = vmul.f32 %v250, %v343
      %v351 = vmul.f32 %v250, %v347
      %v352 = vmul.f32 %v255, %v335
      %v353 = vmul.f32 %v255, %v339
      %v354 = vmul.f32 %v255, %v343
      %v355 = vmul.f32 %v255, %v347
      %v356 = vadd.f32 %v348, 0.0
      %v357 = vadd.f32 %v349, 0.0
      %v358 = vadd.f32 %v350, 0.0
      %v359 = vadd.f32 %v351, 0.0
      %v360 = vadd.f32 %v352, 0.0
      %v361 = vadd.f32 %v353, 0.0
      %v362 = vadd.f32 %v354, 0.0
      %v363 = vadd.f32 %v355, 0.0
      %s364 = scalar_lea.vmem %s2, 8
      %v365 = vld [vmem:[%s364] sm:$0xf]
      %v366 = vld [vmem:[%s364 + $0x4] sm:$0xf]
      %v367 = vunpack.c.l.bf16 %v365
      %v368 = vunpack.c.l.bf16 %v366
      %370 = vset.pattern.permute.xlu0 0
      %371 = vperm.xlu0 %370, %v367
      %v372 = vpop.permute.xlu0 %371
      %375 = vset.pattern.permute.xlu0 0
      %376 = vperm.xlu0 %375, %v368
      %v377 = vpop.permute.xlu0 %376
      %v379 = vmul.f32 %v372, %v281
      %v380 = vmul.f32 %v372, %v285
      %v381 = vmul.f32 %v372, %v289
      %v382 = vmul.f32 %v372, %v293
      %v383 = vmul.f32 %v377, %v281
      %v384 = vmul.f32 %v377, %v285
      %v385 = vmul.f32 %v377, %v289
      %v386 = vmul.f32 %v377, %v293
      %395 = vrot.lane.b32.xlu0 %v379, 127
      %v396 = vpop.permute.xlu0 %395
      %397 = vrot.lane.b32.xlu0 %v380, 127
      %v398 = vpop.permute.xlu0 %397
      %399 = vrot.lane.b32.xlu0 %v381, 127
      %v400 = vpop.permute.xlu0 %399
      %401 = vrot.lane.b32.xlu0 %v382, 127
      %v402 = vpop.permute.xlu0 %401
      %403 = vrot.lane.b32.xlu0 %v383, 127
      %v404 = vpop.permute.xlu0 %403
      %405 = vrot.lane.b32.xlu0 %v384, 127
      %v406 = vpop.permute.xlu0 %405
      %407 = vrot.lane.b32.xlu0 %v385, 127
      %v408 = vpop.permute.xlu0 %407
      %409 = vrot.lane.b32.xlu0 %v386, 127
      %v410 = vpop.permute.xlu0 %409
      %vm411 = vcmask 1039360
      %v412 = vsel %vm411, %v396, %v398
      %v413 = vsel %vm411, %v398, %v400
      %v414 = vsel %vm411, %v400, %v402
      %v415 = vsel %vm411, %v404, %v406
      %v416 = vsel %vm411, %v406, %v408
      %v417 = vsel %vm411, %v408, %v410
      %v426 = vadd.f32 %v302, %v412
      %v427 = vadd.f32 %v303, %v413
      %v428 = vadd.f32 %v304, %v414
      %v429 = vadd.f32 %v305, %v402
      %v430 = vadd.f32 %v306, %v415
      %v431 = vadd.f32 %v307, %v416
      %v432 = vadd.f32 %v308, %v417
      %v433 = vadd.f32 %v309, %v410
      %v434 = vmul.f32 %v372, %v335
      %v435 = vmul.f32 %v372, %v339
      %v436 = vmul.f32 %v372, %v343
      %v437 = vmul.f32 %v372, %v347
      %v438 = vmul.f32 %v377, %v335
      %v439 = vmul.f32 %v377, %v339
      %v440 = vmul.f32 %v377, %v343
      %v441 = vmul.f32 %v377, %v347
      %450 = vrot.lane.b32.xlu0 %v434, 127
      %v451 = vpop.permute.xlu0 %450
      %452 = vrot.lane.b32.xlu0 %v435, 127
      %v453 = vpop.permute.xlu0 %452
      %454 = vrot.lane.b32.xlu0 %v436, 127
      %v455 = vpop.permute.xlu0 %454
      %456 = vrot.lane.b32.xlu0 %v437, 127
      %v457 = vpop.permute.xlu0 %456
      %458 = vrot.lane.b32.xlu0 %v438, 127
      %v459 = vpop.permute.xlu0 %458
      %460 = vrot.lane.b32.xlu0 %v439, 127
      %v461 = vpop.permute.xlu0 %460
      %462 = vrot.lane.b32.xlu0 %v440, 127
      %v463 = vpop.permute.xlu0 %462
      %464 = vrot.lane.b32.xlu0 %v441, 127
      %v465 = vpop.permute.xlu0 %464
      %v466 = vsel %vm411, %v451, %v453
      %v467 = vsel %vm411, %v453, %v455
      %v468 = vsel %vm411, %v455, %v457
      %v469 = vsel %vm411, %v459, %v461
      %v470 = vsel %vm411, %v461, %v463
      %v471 = vsel %vm411, %v463, %v465
      %v480 = vadd.f32 %v356, %v466
      %v481 = vadd.f32 %v357, %v467
      %v482 = vadd.f32 %v358, %v468
      %v483 = vadd.f32 %v359, %v457
      %v484 = vadd.f32 %v360, %v469
      %v485 = vadd.f32 %v361, %v470
      %v486 = vadd.f32 %v362, %v471
      %v487 = vadd.f32 %v363, %v465
      %s488 = scalar_lea.vmem %s2, 16
      %v489 = vld [vmem:[%s488] sm:$0xf]
      %v490 = vld [vmem:[%s488 + $0x4] sm:$0xf]
      %v491 = vunpack.c.l.bf16 %v489
      %v492 = vunpack.c.l.bf16 %v490
      %494 = vset.pattern.permute.xlu0 0
      %495 = vperm.xlu0 %494, %v491
      %v496 = vpop.permute.xlu0 %495
      %499 = vset.pattern.permute.xlu0 0
      %500 = vperm.xlu0 %499, %v492
      %v501 = vpop.permute.xlu0 %500
      %v503 = vmul.f32 %v496, %v281
      %v504 = vmul.f32 %v496, %v285
      %v505 = vmul.f32 %v496, %v289
      %v506 = vmul.f32 %v496, %v293
      %v507 = vmul.f32 %v501, %v281
      %v508 = vmul.f32 %v501, %v285
      %v509 = vmul.f32 %v501, %v289
      %v510 = vmul.f32 %v501, %v293
      %519 = vrot.lane.b32.xlu0 %v503, 126
      %v520 = vpop.permute.xlu0 %519
      %521 = vrot.lane.b32.xlu0 %v504, 126
      %v522 = vpop.permute.xlu0 %521
      %523 = vrot.lane.b32.xlu0 %v505, 126
      %v524 = vpop.permute.xlu0 %523
      %525 = vrot.lane.b32.xlu0 %v506, 126
      %v526 = vpop.permute.xlu0 %525
      %527 = vrot.lane.b32.xlu0 %v507, 126
      %v528 = vpop.permute.xlu0 %527
      %529 = vrot.lane.b32.xlu0 %v508, 126
      %v530 = vpop.permute.xlu0 %529
      %531 = vrot.lane.b32.xlu0 %v509, 126
      %v532 = vpop.permute.xlu0 %531
      %533 = vrot.lane.b32.xlu0 %v510, 126
      %v534 = vpop.permute.xlu0 %533
      %vm535 = vcmask 1031168
      %v536 = vsel %vm535, %v520, %v522
      %v537 = vsel %vm535, %v522, %v524
      %v538 = vsel %vm535, %v524, %v526
      %v539 = vsel %vm535, %v528, %v530
      %v540 = vsel %vm535, %v530, %v532
      %v541 = vsel %vm535, %v532, %v534
      %v550 = vadd.f32 %v426, %v536
      %v551 = vadd.f32 %v427, %v537
      %v552 = vadd.f32 %v428, %v538
      %v553 = vadd.f32 %v429, %v526
      %v554 = vadd.f32 %v430, %v539
      %v555 = vadd.f32 %v431, %v540
      %v556 = vadd.f32 %v432, %v541
      %v557 = vadd.f32 %v433, %v534
      %v558 = vmul.f32 %v496, %v335
      %v559 = vmul.f32 %v496, %v339
      %v560 = vmul.f32 %v496, %v343
      %v561 = vmul.f32 %v496, %v347
      %v562 = vmul.f32 %v501, %v335
      %v563 = vmul.f32 %v501, %v339
      %v564 = vmul.f32 %v501, %v343
      %v565 = vmul.f32 %v501, %v347
      %574 = vrot.lane.b32.xlu0 %v558, 126
      %v575 = vpop.permute.xlu0 %574
      %576 = vrot.lane.b32.xlu0 %v559, 126
      %v577 = vpop.permute.xlu0 %576
      %578 = vrot.lane.b32.xlu0 %v560, 126
      %v579 = vpop.permute.xlu0 %578
      %580 = vrot.lane.b32.xlu0 %v561, 126
      %v581 = vpop.permute.xlu0 %580
      %582 = vrot.lane.b32.xlu0 %v562, 126
      %v583 = vpop.permute.xlu0 %582
      %584 = vrot.lane.b32.xlu0 %v563, 126
      %v585 = vpop.permute.xlu0 %584
      %586 = vrot.lane.b32.xlu0 %v564, 126
      %v587 = vpop.permute.xlu0 %586
      %588 = vrot.lane.b32.xlu0 %v565, 126
      %v589 = vpop.permute.xlu0 %588
      %v590 = vsel %vm535, %v575, %v577
      %v591 = vsel %vm535, %v577, %v579
      %v592 = vsel %vm535, %v579, %v581
      %v593 = vsel %vm535, %v583, %v585
      %v594 = vsel %vm535, %v585, %v587
      %v595 = vsel %vm535, %v587, %v589
      %v604 = vadd.f32 %v480, %v590
      %v605 = vadd.f32 %v481, %v591
      %v606 = vadd.f32 %v482, %v592
      %v607 = vadd.f32 %v483, %v581
      %v608 = vadd.f32 %v484, %v593
      %v609 = vadd.f32 %v485, %v594
      %v610 = vadd.f32 %v486, %v595
      %v611 = vadd.f32 %v487, %v589
      %s612 = scalar_lea.vmem %s2, 24
      %v613 = vld [vmem:[%s612] sm:$0xf]
      %v614 = vld [vmem:[%s612 + $0x4] sm:$0xf]
      %v615 = vunpack.c.l.bf16 %v613
      %v616 = vunpack.c.l.bf16 %v614
      %618 = vset.pattern.permute.xlu0 0
      %619 = vperm.xlu0 %618, %v615
      %v620 = vpop.permute.xlu0 %619
      %623 = vset.pattern.permute.xlu0 0
      %624 = vperm.xlu0 %623, %v616
      %v625 = vpop.permute.xlu0 %624
      %v627 = vmul.f32 %v620, %v281
      %v628 = vmul.f32 %v620, %v285
      %v629 = vmul.f32 %v620, %v289
      %v630 = vmul.f32 %v620, %v293
      %v631 = vmul.f32 %v625, %v281
      %v632 = vmul.f32 %v625, %v285
      %v633 = vmul.f32 %v625, %v289
      %v634 = vmul.f32 %v625, %v293
      %643 = vrot.lane.b32.xlu0 %v627, 125
      %v644 = vpop.permute.xlu0 %643
      %645 = vrot.lane.b32.xlu0 %v628, 125
      %v646 = vpop.permute.xlu0 %645
      %647 = vrot.lane.b32.xlu0 %v629, 125
      %v648 = vpop.permute.xlu0 %647
      %649 = vrot.lane.b32.xlu0 %v630, 125
      %v650 = vpop.permute.xlu0 %649
      %651 = vrot.lane.b32.xlu0 %v631, 125
      %v652 = vpop.permute.xlu0 %651
      %653 = vrot.lane.b32.xlu0 %v632, 125
      %v654 = vpop.permute.xlu0 %653
      %655 = vrot.lane.b32.xlu0 %v633, 125
      %v656 = vpop.permute.xlu0 %655
      %657 = vrot.lane.b32.xlu0 %v634, 125
      %v658 = vpop.permute.xlu0 %657
      %vm659 = vcmask 1022976
      %v660 = vsel %vm659, %v644, %v646
      %v661 = vsel %vm659, %v646, %v648
      %v662 = vsel %vm659, %v648, %v650
      %v663 = vsel %vm659, %v652, %v654
      %v664 = vsel %vm659, %v654, %v656
      %v665 = vsel %vm659, %v656, %v658
      %v674 = vadd.f32 %v550, %v660
      %v675 = vadd.f32 %v551, %v661
      %v676 = vadd.f32 %v552, %v662
      %v677 = vadd.f32 %v553, %v650
      %v678 = vadd.f32 %v554, %v663
      %v679 = vadd.f32 %v555, %v664
      %v680 = vadd.f32 %v556, %v665
      %v681 = vadd.f32 %v557, %v658
      %v682 = vmul.f32 %v620, %v335
      %v683 = vmul.f32 %v620, %v339
      %v684 = vmul.f32 %v620, %v343
      %v685 = vmul.f32 %v620, %v347
      %v686 = vmul.f32 %v625, %v335
      %v687 = vmul.f32 %v625, %v339
      %v688 = vmul.f32 %v625, %v343
      %v689 = vmul.f32 %v625, %v347
      %698 = vrot.lane.b32.xlu0 %v682, 125
      %v699 = vpop.permute.xlu0 %698
      %700 = vrot.lane.b32.xlu0 %v683, 125
      %v701 = vpop.permute.xlu0 %700
      %702 = vrot.lane.b32.xlu0 %v684, 125
      %v703 = vpop.permute.xlu0 %702
      %704 = vrot.lane.b32.xlu0 %v685, 125
      %v705 = vpop.permute.xlu0 %704
      %706 = vrot.lane.b32.xlu0 %v686, 125
      %v707 = vpop.permute.xlu0 %706
      %708 = vrot.lane.b32.xlu0 %v687, 125
      %v709 = vpop.permute.xlu0 %708
      %710 = vrot.lane.b32.xlu0 %v688, 125
      %v711 = vpop.permute.xlu0 %710
      %712 = vrot.lane.b32.xlu0 %v689, 125
      %v713 = vpop.permute.xlu0 %712
      %v714 = vsel %vm659, %v699, %v701
      %v715 = vsel %vm659, %v701, %v703
      %v716 = vsel %vm659, %v703, %v705
      %v717 = vsel %vm659, %v707, %v709
      %v718 = vsel %vm659, %v709, %v711
      %v719 = vsel %vm659, %v711, %v713
      %v728 = vadd.f32 %v604, %v714
      %v729 = vadd.f32 %v605, %v715
      %v730 = vadd.f32 %v606, %v716
      %v731 = vadd.f32 %v607, %v705
      %v732 = vadd.f32 %v608, %v717
      %v733 = vadd.f32 %v609, %v718
      %v734 = vadd.f32 %v610, %v719
      %v735 = vadd.f32 %v611, %v713
      %s736 = scalar_lea.vmem %s2, 32
      %v737 = vld [vmem:[%s736] sm:$0xf]
      %v738 = vld [vmem:[%s736 + $0x4] sm:$0xf]
      %v739 = vunpack.c.l.bf16 %v737
      %v740 = vunpack.c.l.bf16 %v738
      %742 = vset.pattern.permute.xlu0 0
      %743 = vperm.xlu0 %742, %v739
      %v744 = vpop.permute.xlu0 %743
      %747 = vset.pattern.permute.xlu0 0
      %748 = vperm.xlu0 %747, %v740
      %v749 = vpop.permute.xlu0 %748
      %v751 = vmul.f32 %v744, %v281
      %v752 = vmul.f32 %v744, %v285
      %v753 = vmul.f32 %v744, %v289
      %v754 = vmul.f32 %v744, %v293
      %v755 = vmul.f32 %v749, %v281
      %v756 = vmul.f32 %v749, %v285
      %v757 = vmul.f32 %v749, %v289
      %v758 = vmul.f32 %v749, %v293
      %767 = vrot.lane.b32.xlu0 %v751, 124
      %v768 = vpop.permute.xlu0 %767
      %769 = vrot.lane.b32.xlu0 %v752, 124
      %v770 = vpop.permute.xlu0 %769
      %771 = vrot.lane.b32.xlu0 %v753, 124
      %v772 = vpop.permute.xlu0 %771
      %773 = vrot.lane.b32.xlu0 %v754, 124
      %v774 = vpop.permute.xlu0 %773
      %775 = vrot.lane.b32.xlu0 %v755, 124
      %v776 = vpop.permute.xlu0 %775
      %777 = vrot.lane.b32.xlu0 %v756, 124
      %v778 = vpop.permute.xlu0 %777
      %779 = vrot.lane.b32.xlu0 %v757, 124
      %v780 = vpop.permute.xlu0 %779
      %781 = vrot.lane.b32.xlu0 %v758, 124
      %v782 = vpop.permute.xlu0 %781
      %vm783 = vcmask 1014784
      %v784 = vsel %vm783, %v768, %v770
      %v785 = vsel %vm783, %v770, %v772
      %v786 = vsel %vm783, %v772, %v774
      %v787 = vsel %vm783, %v776, %v778
      %v788 = vsel %vm783, %v778, %v780
      %v789 = vsel %vm783, %v780, %v782
      %v798 = vadd.f32 %v674, %v784
      %v799 = vadd.f32 %v675, %v785
      %v800 = vadd.f32 %v676, %v786
      %v801 = vadd.f32 %v677, %v774
      %v802 = vadd.f32 %v678, %v787
      %v803 = vadd.f32 %v679, %v788
      %v804 = vadd.f32 %v680, %v789
      %v805 = vadd.f32 %v681, %v782
      %v806 = vmul.f32 %v744, %v335
      %v807 = vmul.f32 %v744, %v339
      %v808 = vmul.f32 %v744, %v343
      %v809 = vmul.f32 %v744, %v347
      %v810 = vmul.f32 %v749, %v335
      %v811 = vmul.f32 %v749, %v339
      %v812 = vmul.f32 %v749, %v343
      %v813 = vmul.f32 %v749, %v347
      %822 = vrot.lane.b32.xlu0 %v806, 124
      %v823 = vpop.permute.xlu0 %822
      %824 = vrot.lane.b32.xlu0 %v807, 124
      %v825 = vpop.permute.xlu0 %824
      %826 = vrot.lane.b32.xlu0 %v808, 124
      %v827 = vpop.permute.xlu0 %826
      %828 = vrot.lane.b32.xlu0 %v809, 124
      %v829 = vpop.permute.xlu0 %828
      %830 = vrot.lane.b32.xlu0 %v810, 124
      %v831 = vpop.permute.xlu0 %830
      %832 = vrot.lane.b32.xlu0 %v811, 124
      %v833 = vpop.permute.xlu0 %832
      %834 = vrot.lane.b32.xlu0 %v812, 124
      %v835 = vpop.permute.xlu0 %834
      %836 = vrot.lane.b32.xlu0 %v813, 124
      %v837 = vpop.permute.xlu0 %836
      %v838 = vsel %vm783, %v823, %v825
      %v839 = vsel %vm783, %v825, %v827
      %v840 = vsel %vm783, %v827, %v829
      %v841 = vsel %vm783, %v831, %v833
      %v842 = vsel %vm783, %v833, %v835
      %v843 = vsel %vm783, %v835, %v837
      %v852 = vadd.f32 %v728, %v838
      %v853 = vadd.f32 %v729, %v839
      %v854 = vadd.f32 %v730, %v840
      %v855 = vadd.f32 %v731, %v829
      %v856 = vadd.f32 %v732, %v841
      %v857 = vadd.f32 %v733, %v842
      %v858 = vadd.f32 %v734, %v843
      %v859 = vadd.f32 %v735, %v837
      %s860 = scalar_lea.vmem %s2, 40
      %v861 = vld [vmem:[%s860] sm:$0xf]
      %v862 = vld [vmem:[%s860 + $0x4] sm:$0xf]
      %v863 = vunpack.c.l.bf16 %v861
      %v864 = vunpack.c.l.bf16 %v862
      %866 = vset.pattern.permute.xlu0 0
      %867 = vperm.xlu0 %866, %v863
      %v868 = vpop.permute.xlu0 %867
      %871 = vset.pattern.permute.xlu0 0
      %872 = vperm.xlu0 %871, %v864
      %v873 = vpop.permute.xlu0 %872
      %v875 = vmul.f32 %v868, %v335
      %v876 = vmul.f32 %v868, %v339
      %v877 = vmul.f32 %v868, %v343
      %v878 = vmul.f32 %v868, %v347
      %v879 = vmul.f32 %v873, %v335
      %v880 = vmul.f32 %v873, %v339
      %v881 = vmul.f32 %v873, %v343
      %v882 = vmul.f32 %v873, %v347
      %v883 = vadd.f32 %v798, %v875
      %v884 = vadd.f32 %v799, %v876
      %v885 = vadd.f32 %v800, %v877
      %v886 = vadd.f32 %v801, %v878
      %v887 = vadd.f32 %v802, %v879
      %v888 = vadd.f32 %v803, %v880
      %v889 = vadd.f32 %v804, %v881
      %v890 = vadd.f32 %v805, %v882
      %v891 = vmul.f32 %v868, %v281
      %v892 = vmul.f32 %v868, %v285
      %v893 = vmul.f32 %v868, %v289
      %v894 = vmul.f32 %v868, %v293
      %v895 = vmul.f32 %v873, %v281
      %v896 = vmul.f32 %v873, %v285
      %v897 = vmul.f32 %v873, %v289
      %v898 = vmul.f32 %v873, %v293
      %907 = vrot.lane.b32.xlu0 %v891, 96
      %v908 = vpop.permute.xlu0 %907
      %909 = vrot.lane.b32.xlu0 %v892, 96
      %v910 = vpop.permute.xlu0 %909
      %911 = vrot.lane.b32.xlu0 %v893, 96
      %v912 = vpop.permute.xlu0 %911
      %913 = vrot.lane.b32.xlu0 %v894, 96
      %v914 = vpop.permute.xlu0 %913
      %915 = vrot.lane.b32.xlu0 %v895, 96
      %v916 = vpop.permute.xlu0 %915
      %917 = vrot.lane.b32.xlu0 %v896, 96
      %v918 = vpop.permute.xlu0 %917
      %919 = vrot.lane.b32.xlu0 %v897, 96
      %v920 = vpop.permute.xlu0 %919
      %921 = vrot.lane.b32.xlu0 %v898, 96
      %v922 = vpop.permute.xlu0 %921
      %vm923 = vcmask 785408
      %v924 = vsel %vm923, %v908, %v910
      %v925 = vsel %vm923, %v910, %v912
      %v926 = vsel %vm923, %v912, %v914
      %v927 = vsel %vm923, %v916, %v918
      %v928 = vsel %vm923, %v918, %v920
      %v929 = vsel %vm923, %v920, %v922
      %v938 = vadd.f32 %v852, %v924
      %v939 = vadd.f32 %v853, %v925
      %v940 = vadd.f32 %v854, %v926
      %v941 = vadd.f32 %v855, %v914
      %v942 = vadd.f32 %v856, %v927
      %v943 = vadd.f32 %v857, %v928
      %v944 = vadd.f32 %v858, %v929
      %v945 = vadd.f32 %v859, %v922
      %s946 = scalar_lea.vmem %s2, 48
      %v947 = vld [vmem:[%s946] sm:$0xf]
      %v948 = vld [vmem:[%s946 + $0x4] sm:$0xf]
      %v949 = vunpack.c.l.bf16 %v947
      %v950 = vunpack.c.l.bf16 %v948
      %952 = vset.pattern.permute.xlu0 0
      %953 = vperm.xlu0 %952, %v949
      %v954 = vpop.permute.xlu0 %953
      %957 = vset.pattern.permute.xlu0 0
      %958 = vperm.xlu0 %957, %v950
      %v959 = vpop.permute.xlu0 %958
      %v961 = vmul.f32 %v954, %v335
      %v962 = vmul.f32 %v954, %v339
      %v963 = vmul.f32 %v954, %v343
      %v964 = vmul.f32 %v954, %v347
      %v965 = vmul.f32 %v959, %v335
      %v966 = vmul.f32 %v959, %v339
      %v967 = vmul.f32 %v959, %v343
      %v968 = vmul.f32 %v959, %v347
      %977 = vrot.lane.b32.xlu0 %v961, 127
      %v978 = vpop.permute.xlu0 %977
      %979 = vrot.lane.b32.xlu0 %v962, 127
      %v980 = vpop.permute.xlu0 %979
      %981 = vrot.lane.b32.xlu0 %v963, 127
      %v982 = vpop.permute.xlu0 %981
      %983 = vrot.lane.b32.xlu0 %v964, 127
      %v984 = vpop.permute.xlu0 %983
      %985 = vrot.lane.b32.xlu0 %v965, 127
      %v986 = vpop.permute.xlu0 %985
      %987 = vrot.lane.b32.xlu0 %v966, 127
      %v988 = vpop.permute.xlu0 %987
      %989 = vrot.lane.b32.xlu0 %v967, 127
      %v990 = vpop.permute.xlu0 %989
      %991 = vrot.lane.b32.xlu0 %v968, 127
      %v992 = vpop.permute.xlu0 %991
      %v993 = vsel %vm411, %v978, %v980
      %v994 = vsel %vm411, %v980, %v982
      %v995 = vsel %vm411, %v982, %v984
      %v996 = vsel %vm411, %v986, %v988
      %v997 = vsel %vm411, %v988, %v990
      %v998 = vsel %vm411, %v990, %v992
      %v1007 = vadd.f32 %v883, %v993
      %v1008 = vadd.f32 %v884, %v994
      %v1009 = vadd.f32 %v885, %v995
      %v1010 = vadd.f32 %v886, %v984
      %v1011 = vadd.f32 %v887, %v996
      %v1012 = vadd.f32 %v888, %v997
      %v1013 = vadd.f32 %v889, %v998
      %v1014 = vadd.f32 %v890, %v992
      %v1015 = vmul.f32 %v954, %v281
      %v1016 = vmul.f32 %v954, %v285
      %v1017 = vmul.f32 %v954, %v289
      %v1018 = vmul.f32 %v954, %v293
      %v1019 = vmul.f32 %v959, %v281
      %v1020 = vmul.f32 %v959, %v285
      %v1021 = vmul.f32 %v959, %v289
      %v1022 = vmul.f32 %v959, %v293
      %1031 = vrot.lane.b32.xlu0 %v1015, 95
      %v1032 = vpop.permute.xlu0 %1031
      %1033 = vrot.lane.b32.xlu0 %v1016, 95
      %v1034 = vpop.permute.xlu0 %1033
      %1035 = vrot.lane.b32.xlu0 %v1017, 95
      %v1036 = vpop.permute.xlu0 %1035
      %1037 = vrot.lane.b32.xlu0 %v1018, 95
      %v1038 = vpop.permute.xlu0 %1037
      %1039 = vrot.lane.b32.xlu0 %v1019, 95
      %v1040 = vpop.permute.xlu0 %1039
      %1041 = vrot.lane.b32.xlu0 %v1020, 95
      %v1042 = vpop.permute.xlu0 %1041
      %1043 = vrot.lane.b32.xlu0 %v1021, 95
      %v1044 = vpop.permute.xlu0 %1043
      %1045 = vrot.lane.b32.xlu0 %v1022, 95
      %v1046 = vpop.permute.xlu0 %1045
      %vm1047 = vcmask 777216
      %v1048 = vsel %vm1047, %v1032, %v1034
      %v1049 = vsel %vm1047, %v1034, %v1036
      %v1050 = vsel %vm1047, %v1036, %v1038
      %v1051 = vsel %vm1047, %v1040, %v1042
      %v1052 = vsel %vm1047, %v1042, %v1044
      %v1053 = vsel %vm1047, %v1044, %v1046
      %v1062 = vadd.f32 %v938, %v1048
      %v1063 = vadd.f32 %v939, %v1049
      %v1064 = vadd.f32 %v940, %v1050
      %v1065 = vadd.f32 %v941, %v1038
      %v1066 = vadd.f32 %v942, %v1051
      %v1067 = vadd.f32 %v943, %v1052
      %v1068 = vadd.f32 %v944, %v1053
      %v1069 = vadd.f32 %v945, %v1046
      %s1070 = scalar_lea.vmem %s2, 56
      %v1071 = vld [vmem:[%s1070] sm:$0xf]
      %v1072 = vld [vmem:[%s1070 + $0x4] sm:$0xf]
      %v1073 = vunpack.c.l.bf16 %v1071
      %v1074 = vunpack.c.l.bf16 %v1072
      %1076 = vset.pattern.permute.xlu0 0
      %1077 = vperm.xlu0 %1076, %v1073
      %v1078 = vpop.permute.xlu0 %1077
      %1081 = vset.pattern.permute.xlu0 0
      %1082 = vperm.xlu0 %1081, %v1074
      %v1083 = vpop.permute.xlu0 %1082
      %v1085 = vmul.f32 %v1078, %v335
      %v1086 = vmul.f32 %v1078, %v339
      %v1087 = vmul.f32 %v1078, %v343
      %v1088 = vmul.f32 %v1078, %v347
      %v1089 = vmul.f32 %v1083, %v335
      %v1090 = vmul.f32 %v1083, %v339
      %v1091 = vmul.f32 %v1083, %v343
      %v1092 = vmul.f32 %v1083, %v347
      %1101 = vrot.lane.b32.xlu0 %v1085, 126
      %v1102 = vpop.permute.xlu0 %1101
      %1103 = vrot.lane.b32.xlu0 %v1086, 126
      %v1104 = vpop.permute.xlu0 %1103
      %1105 = vrot.lane.b32.xlu0 %v1087, 126
      %v1106 = vpop.permute.xlu0 %1105
      %1107 = vrot.lane.b32.xlu0 %v1088, 126
      %v1108 = vpop.permute.xlu0 %1107
      %1109 = vrot.lane.b32.xlu0 %v1089, 126
      %v1110 = vpop.permute.xlu0 %1109
      %1111 = vrot.lane.b32.xlu0 %v1090, 126
      %v1112 = vpop.permute.xlu0 %1111
      %1113 = vrot.lane.b32.xlu0 %v1091, 126
      %v1114 = vpop.permute.xlu0 %1113
      %1115 = vrot.lane.b32.xlu0 %v1092, 126
      %v1116 = vpop.permute.xlu0 %1115
      %v1117 = vsel %vm535, %v1102, %v1104
      %v1118 = vsel %vm535, %v1104, %v1106
      %v1119 = vsel %vm535, %v1106, %v1108
      %v1120 = vsel %vm535, %v1110, %v1112
      %v1121 = vsel %vm535, %v1112, %v1114
      %v1122 = vsel %vm535, %v1114, %v1116
      %v1131 = vadd.f32 %v1007, %v1117
      %v1132 = vadd.f32 %v1008, %v1118
      %v1133 = vadd.f32 %v1009, %v1119
      %v1134 = vadd.f32 %v1010, %v1108
      %v1135 = vadd.f32 %v1011, %v1120
      %v1136 = vadd.f32 %v1012, %v1121
      %v1137 = vadd.f32 %v1013, %v1122
      %v1138 = vadd.f32 %v1014, %v1116
      %v1139 = vmul.f32 %v1078, %v281
      %v1140 = vmul.f32 %v1078, %v285
      %v1141 = vmul.f32 %v1078, %v289
      %v1142 = vmul.f32 %v1078, %v293
      %v1143 = vmul.f32 %v1083, %v281
      %v1144 = vmul.f32 %v1083, %v285
      %v1145 = vmul.f32 %v1083, %v289
      %v1146 = vmul.f32 %v1083, %v293
      %1155 = vrot.lane.b32.xlu0 %v1139, 94
      %v1156 = vpop.permute.xlu0 %1155
      %1157 = vrot.lane.b32.xlu0 %v1140, 94
      %v1158 = vpop.permute.xlu0 %1157
      %1159 = vrot.lane.b32.xlu0 %v1141, 94
      %v1160 = vpop.permute.xlu0 %1159
      %1161 = vrot.lane.b32.xlu0 %v1142, 94
      %v1162 = vpop.permute.xlu0 %1161
      %1163 = vrot.lane.b32.xlu0 %v1143, 94
      %v1164 = vpop.permute.xlu0 %1163
      %1165 = vrot.lane.b32.xlu0 %v1144, 94
      %v1166 = vpop.permute.xlu0 %1165
      %1167 = vrot.lane.b32.xlu0 %v1145, 94
      %v1168 = vpop.permute.xlu0 %1167
      %1169 = vrot.lane.b32.xlu0 %v1146, 94
      %v1170 = vpop.permute.xlu0 %1169
      %vm1171 = vcmask 769024
      %v1172 = vsel %vm1171, %v1156, %v1158
      %v1173 = vsel %vm1171, %v1158, %v1160
      %v1174 = vsel %vm1171, %v1160, %v1162
      %v1175 = vsel %vm1171, %v1164, %v1166
      %v1176 = vsel %vm1171, %v1166, %v1168
      %v1177 = vsel %vm1171, %v1168, %v1170
      %v1186 = vadd.f32 %v1062, %v1172
      %v1187 = vadd.f32 %v1063, %v1173
      %v1188 = vadd.f32 %v1064, %v1174
      %v1189 = vadd.f32 %v1065, %v1162
      %v1190 = vadd.f32 %v1066, %v1175
      %v1191 = vadd.f32 %v1067, %v1176
      %v1192 = vadd.f32 %v1068, %v1177
      %v1193 = vadd.f32 %v1069, %v1170
      %s1194 = scalar_lea.vmem %s2, 64
      %v1195 = vld [vmem:[%s1194] sm:$0xf]
      %v1196 = vld [vmem:[%s1194 + $0x4] sm:$0xf]
      %v1197 = vunpack.c.l.bf16 %v1195
      %v1198 = vunpack.c.l.bf16 %v1196
      %1200 = vset.pattern.permute.xlu0 0
      %1201 = vperm.xlu0 %1200, %v1197
      %v1202 = vpop.permute.xlu0 %1201
      %1205 = vset.pattern.permute.xlu0 0
      %1206 = vperm.xlu0 %1205, %v1198
      %v1207 = vpop.permute.xlu0 %1206
      %v1209 = vmul.f32 %v1202, %v335
      %v1210 = vmul.f32 %v1202, %v339
      %v1211 = vmul.f32 %v1202, %v343
      %v1212 = vmul.f32 %v1202, %v347
      %v1213 = vmul.f32 %v1207, %v335
      %v1214 = vmul.f32 %v1207, %v339
      %v1215 = vmul.f32 %v1207, %v343
      %v1216 = vmul.f32 %v1207, %v347
      %1225 = vrot.lane.b32.xlu0 %v1209, 125
      %v1226 = vpop.permute.xlu0 %1225
      %1227 = vrot.lane.b32.xlu0 %v1210, 125
      %v1228 = vpop.permute.xlu0 %1227
      %1229 = vrot.lane.b32.xlu0 %v1211, 125
      %v1230 = vpop.permute.xlu0 %1229
      %1231 = vrot.lane.b32.xlu0 %v1212, 125
      %v1232 = vpop.permute.xlu0 %1231
      %1233 = vrot.lane.b32.xlu0 %v1213, 125
      %v1234 = vpop.permute.xlu0 %1233
      %1235 = vrot.lane.b32.xlu0 %v1214, 125
      %v1236 = vpop.permute.xlu0 %1235
      %1237 = vrot.lane.b32.xlu0 %v1215, 125
      %v1238 = vpop.permute.xlu0 %1237
      %1239 = vrot.lane.b32.xlu0 %v1216, 125
      %v1240 = vpop.permute.xlu0 %1239
      %v1241 = vsel %vm659, %v1226, %v1228
      %v1242 = vsel %vm659, %v1228, %v1230
      %v1243 = vsel %vm659, %v1230, %v1232
      %v1244 = vsel %vm659, %v1234, %v1236
      %v1245 = vsel %vm659, %v1236, %v1238
      %v1246 = vsel %vm659, %v1238, %v1240
      %v1255 = vadd.f32 %v1131, %v1241
      %v1256 = vadd.f32 %v1132, %v1242
      %v1257 = vadd.f32 %v1133, %v1243
      %v1258 = vadd.f32 %v1134, %v1232
      %v1259 = vadd.f32 %v1135, %v1244
      %v1260 = vadd.f32 %v1136, %v1245
      %v1261 = vadd.f32 %v1137, %v1246
      %v1262 = vadd.f32 %v1138, %v1240
      %v1263 = vmul.f32 %v1202, %v281
      %v1264 = vmul.f32 %v1202, %v285
      %v1265 = vmul.f32 %v1202, %v289
      %v1266 = vmul.f32 %v1202, %v293
      %v1267 = vmul.f32 %v1207, %v281
      %v1268 = vmul.f32 %v1207, %v285
      %v1269 = vmul.f32 %v1207, %v289
      %v1270 = vmul.f32 %v1207, %v293
      %1279 = vrot.lane.b32.xlu0 %v1263, 93
      %v1280 = vpop.permute.xlu0 %1279
      %1281 = vrot.lane.b32.xlu0 %v1264, 93
      %v1282 = vpop.permute.xlu0 %1281
      %1283 = vrot.lane.b32.xlu0 %v1265, 93
      %v1284 = vpop.permute.xlu0 %1283
      %1285 = vrot.lane.b32.xlu0 %v1266, 93
      %v1286 = vpop.permute.xlu0 %1285
      %1287 = vrot.lane.b32.xlu0 %v1267, 93
      %v1288 = vpop.permute.xlu0 %1287
      %1289 = vrot.lane.b32.xlu0 %v1268, 93
      %v1290 = vpop.permute.xlu0 %1289
      %1291 = vrot.lane.b32.xlu0 %v1269, 93
      %v1292 = vpop.permute.xlu0 %1291
      %1293 = vrot.lane.b32.xlu0 %v1270, 93
      %v1294 = vpop.permute.xlu0 %1293
      %vm1295 = vcmask 760832
      %v1296 = vsel %vm1295, %v1280, %v1282
      %v1297 = vsel %vm1295, %v1282, %v1284
      %v1298 = vsel %vm1295, %v1284, %v1286
      %v1299 = vsel %vm1295, %v1288, %v1290
      %v1300 = vsel %vm1295, %v1290, %v1292
      %v1301 = vsel %vm1295, %v1292, %v1294
      %v1310 = vadd.f32 %v1186, %v1296
      %v1311 = vadd.f32 %v1187, %v1297
      %v1312 = vadd.f32 %v1188, %v1298
      %v1313 = vadd.f32 %v1189, %v1286
      %v1314 = vadd.f32 %v1190, %v1299
      %v1315 = vadd.f32 %v1191, %v1300
      %v1316 = vadd.f32 %v1192, %v1301
      %v1317 = vadd.f32 %v1193, %v1294
      %s1318 = scalar_lea.vmem %s2, 72
      %v1319 = vld [vmem:[%s1318] sm:$0xf]
      %v1320 = vld [vmem:[%s1318 + $0x4] sm:$0xf]
      %v1321 = vunpack.c.l.bf16 %v1319
      %v1322 = vunpack.c.l.bf16 %v1320
      %1324 = vset.pattern.permute.xlu0 0
      %1325 = vperm.xlu0 %1324, %v1321
      %v1326 = vpop.permute.xlu0 %1325
      %1329 = vset.pattern.permute.xlu0 0
      %1330 = vperm.xlu0 %1329, %v1322
      %v1331 = vpop.permute.xlu0 %1330
      %v1333 = vmul.f32 %v1326, %v335
      %v1334 = vmul.f32 %v1326, %v339
      %v1335 = vmul.f32 %v1326, %v343
      %v1336 = vmul.f32 %v1326, %v347
      %v1337 = vmul.f32 %v1331, %v335
      %v1338 = vmul.f32 %v1331, %v339
      %v1339 = vmul.f32 %v1331, %v343
      %v1340 = vmul.f32 %v1331, %v347
      %1349 = vrot.lane.b32.xlu0 %v1333, 124
      %v1350 = vpop.permute.xlu0 %1349
      %1351 = vrot.lane.b32.xlu0 %v1334, 124
      %v1352 = vpop.permute.xlu0 %1351
      %1353 = vrot.lane.b32.xlu0 %v1335, 124
      %v1354 = vpop.permute.xlu0 %1353
      %1355 = vrot.lane.b32.xlu0 %v1336, 124
      %v1356 = vpop.permute.xlu0 %1355
      %1357 = vrot.lane.b32.xlu0 %v1337, 124
      %v1358 = vpop.permute.xlu0 %1357
      %1359 = vrot.lane.b32.xlu0 %v1338, 124
      %v1360 = vpop.permute.xlu0 %1359
      %1361 = vrot.lane.b32.xlu0 %v1339, 124
      %v1362 = vpop.permute.xlu0 %1361
      %1363 = vrot.lane.b32.xlu0 %v1340, 124
      %v1364 = vpop.permute.xlu0 %1363
      %v1365 = vsel %vm783, %v1350, %v1352
      %v1366 = vsel %vm783, %v1352, %v1354
      %v1367 = vsel %vm783, %v1354, %v1356
      %v1368 = vsel %vm783, %v1358, %v1360
      %v1369 = vsel %vm783, %v1360, %v1362
      %v1370 = vsel %vm783, %v1362, %v1364
      %v1379 = vadd.f32 %v1255, %v1365
      %v1380 = vadd.f32 %v1256, %v1366
      %v1381 = vadd.f32 %v1257, %v1367
      %v1382 = vadd.f32 %v1258, %v1356
      %v1383 = vadd.f32 %v1259, %v1368
      %v1384 = vadd.f32 %v1260, %v1369
      %v1385 = vadd.f32 %v1261, %v1370
      %v1386 = vadd.f32 %v1262, %v1364
      %v1387 = vmul.f32 %v1326, %v281
      %v1388 = vmul.f32 %v1326, %v285
      %v1389 = vmul.f32 %v1326, %v289
      %v1390 = vmul.f32 %v1326, %v293
      %v1391 = vmul.f32 %v1331, %v281
      %v1392 = vmul.f32 %v1331, %v285
      %v1393 = vmul.f32 %v1331, %v289
      %v1394 = vmul.f32 %v1331, %v293
      %1403 = vrot.lane.b32.xlu0 %v1387, 92
      %v1404 = vpop.permute.xlu0 %1403
      %1405 = vrot.lane.b32.xlu0 %v1388, 92
      %v1406 = vpop.permute.xlu0 %1405
      %1407 = vrot.lane.b32.xlu0 %v1389, 92
      %v1408 = vpop.permute.xlu0 %1407
      %1409 = vrot.lane.b32.xlu0 %v1390, 92
      %v1410 = vpop.permute.xlu0 %1409
      %1411 = vrot.lane.b32.xlu0 %v1391, 92
      %v1412 = vpop.permute.xlu0 %1411
      %1413 = vrot.lane.b32.xlu0 %v1392, 92
      %v1414 = vpop.permute.xlu0 %1413
      %1415 = vrot.lane.b32.xlu0 %v1393, 92
      %v1416 = vpop.permute.xlu0 %1415
      %1417 = vrot.lane.b32.xlu0 %v1394, 92
      %v1418 = vpop.permute.xlu0 %1417
      %vm1419 = vcmask 752640
      %v1420 = vsel %vm1419, %v1404, %v1406
      %v1421 = vsel %vm1419, %v1406, %v1408
      %v1422 = vsel %vm1419, %v1408, %v1410
      %v1423 = vsel %vm1419, %v1412, %v1414
      %v1424 = vsel %vm1419, %v1414, %v1416
      %v1425 = vsel %vm1419, %v1416, %v1418
      %v1434 = vadd.f32 %v1310, %v1420
      %v1435 = vadd.f32 %v1311, %v1421
      %v1436 = vadd.f32 %v1312, %v1422
      %v1437 = vadd.f32 %v1313, %v1410
      %v1438 = vadd.f32 %v1314, %v1423
      %v1439 = vadd.f32 %v1315, %v1424
      %v1440 = vadd.f32 %v1316, %v1425
      %v1441 = vadd.f32 %v1317, %v1418
      %s1442 = scalar_lea.vmem %s2, 80
      %v1443 = vld [vmem:[%s1442] sm:$0xf]
      %v1444 = vld [vmem:[%s1442 + $0x4] sm:$0xf]
      %v1445 = vunpack.c.l.bf16 %v1443
      %v1446 = vunpack.c.l.bf16 %v1444
      %1448 = vset.pattern.permute.xlu0 0
      %1449 = vperm.xlu0 %1448, %v1445
      %v1450 = vpop.permute.xlu0 %1449
      %1453 = vset.pattern.permute.xlu0 0
      %1454 = vperm.xlu0 %1453, %v1446
      %v1455 = vpop.permute.xlu0 %1454
      %v1457 = vmul.f32 %v1450, %v281
      %v1458 = vmul.f32 %v1450, %v285
      %v1459 = vmul.f32 %v1450, %v289
      %v1460 = vmul.f32 %v1450, %v293
      %v1461 = vmul.f32 %v1455, %v281
      %v1462 = vmul.f32 %v1455, %v285
      %v1463 = vmul.f32 %v1455, %v289
      %v1464 = vmul.f32 %v1455, %v293
      %1473 = vrot.lane.b32.xlu0 %v1457, 96
      %v1474 = vpop.permute.xlu0 %1473
      %1475 = vrot.lane.b32.xlu0 %v1458, 96
      %v1476 = vpop.permute.xlu0 %1475
      %1477 = vrot.lane.b32.xlu0 %v1459, 96
      %v1478 = vpop.permute.xlu0 %1477
      %1479 = vrot.lane.b32.xlu0 %v1460, 96
      %v1480 = vpop.permute.xlu0 %1479
      %1481 = vrot.lane.b32.xlu0 %v1461, 96
      %v1482 = vpop.permute.xlu0 %1481
      %1483 = vrot.lane.b32.xlu0 %v1462, 96
      %v1484 = vpop.permute.xlu0 %1483
      %1485 = vrot.lane.b32.xlu0 %v1463, 96
      %v1486 = vpop.permute.xlu0 %1485
      %1487 = vrot.lane.b32.xlu0 %v1464, 96
      %v1488 = vpop.permute.xlu0 %1487
      %v1489 = vsel %vm923, %v1474, %v1476
      %v1490 = vsel %vm923, %v1476, %v1478
      %v1491 = vsel %vm923, %v1478, %v1480
      %v1492 = vsel %vm923, %v1482, %v1484
      %v1493 = vsel %vm923, %v1484, %v1486
      %v1494 = vsel %vm923, %v1486, %v1488
      %v1503 = vadd.f32 %v1379, %v1489
      %v1504 = vadd.f32 %v1380, %v1490
      %v1505 = vadd.f32 %v1381, %v1491
      %v1506 = vadd.f32 %v1382, %v1480
      %v1507 = vadd.f32 %v1383, %v1492
      %v1508 = vadd.f32 %v1384, %v1493
      %v1509 = vadd.f32 %v1385, %v1494
      %v1510 = vadd.f32 %v1386, %v1488
      %v1511 = vmul.f32 %v1450, %v335
      %v1512 = vmul.f32 %v1450, %v339
      %v1513 = vmul.f32 %v1450, %v343
      %v1514 = vmul.f32 %v1450, %v347
      %v1515 = vmul.f32 %v1455, %v335
      %v1516 = vmul.f32 %v1455, %v339
      %v1517 = vmul.f32 %v1455, %v343
      %v1518 = vmul.f32 %v1455, %v347
      %1527 = vrot.lane.b32.xlu0 %v1511, 96
      %v1528 = vpop.permute.xlu0 %1527
      %1529 = vrot.lane.b32.xlu0 %v1512, 96
      %v1530 = vpop.permute.xlu0 %1529
      %1531 = vrot.lane.b32.xlu0 %v1513, 96
      %v1532 = vpop.permute.xlu0 %1531
      %1533 = vrot.lane.b32.xlu0 %v1514, 96
      %v1534 = vpop.permute.xlu0 %1533
      %1535 = vrot.lane.b32.xlu0 %v1515, 96
      %v1536 = vpop.permute.xlu0 %1535
      %1537 = vrot.lane.b32.xlu0 %v1516, 96
      %v1538 = vpop.permute.xlu0 %1537
      %1539 = vrot.lane.b32.xlu0 %v1517, 96
      %v1540 = vpop.permute.xlu0 %1539
      %1541 = vrot.lane.b32.xlu0 %v1518, 96
      %v1542 = vpop.permute.xlu0 %1541
      %v1543 = vsel %vm923, %v1528, %v1530
      %v1544 = vsel %vm923, %v1530, %v1532
      %v1545 = vsel %vm923, %v1532, %v1534
      %v1546 = vsel %vm923, %v1536, %v1538
      %v1547 = vsel %vm923, %v1538, %v1540
      %v1548 = vsel %vm923, %v1540, %v1542
      %v1557 = vadd.f32 %v1434, %v1543
      %v1558 = vadd.f32 %v1435, %v1544
      %v1559 = vadd.f32 %v1436, %v1545
      %v1560 = vadd.f32 %v1437, %v1534
      %v1561 = vadd.f32 %v1438, %v1546
      %v1562 = vadd.f32 %v1439, %v1547
      %v1563 = vadd.f32 %v1440, %v1548
      %v1564 = vadd.f32 %v1441, %v1542
      %s1565 = scalar_lea.vmem %s2, 88
      %v1566 = vld [vmem:[%s1565] sm:$0xf]
      %v1567 = vld [vmem:[%s1565 + $0x4] sm:$0xf]
      %v1568 = vunpack.c.l.bf16 %v1566
      %v1569 = vunpack.c.l.bf16 %v1567
      %1571 = vset.pattern.permute.xlu0 0
      %1572 = vperm.xlu0 %1571, %v1568
      %v1573 = vpop.permute.xlu0 %1572
      %1576 = vset.pattern.permute.xlu0 0
      %1577 = vperm.xlu0 %1576, %v1569
      %v1578 = vpop.permute.xlu0 %1577
      %v1580 = vmul.f32 %v1573, %v281
      %v1581 = vmul.f32 %v1573, %v285
      %v1582 = vmul.f32 %v1573, %v289
      %v1583 = vmul.f32 %v1573, %v293
      %v1584 = vmul.f32 %v1578, %v281
      %v1585 = vmul.f32 %v1578, %v285
      %v1586 = vmul.f32 %v1578, %v289
      %v1587 = vmul.f32 %v1578, %v293
      %1596 = vrot.lane.b32.xlu0 %v1580, 95
      %v1597 = vpop.permute.xlu0 %1596
      %1598 = vrot.lane.b32.xlu0 %v1581, 95
      %v1599 = vpop.permute.xlu0 %1598
      %1600 = vrot.lane.b32.xlu0 %v1582, 95
      %v1601 = vpop.permute.xlu0 %1600
      %1602 = vrot.lane.b32.xlu0 %v1583, 95
      %v1603 = vpop.permute.xlu0 %1602
      %1604 = vrot.lane.b32.xlu0 %v1584, 95
      %v1605 = vpop.permute.xlu0 %1604
      %1606 = vrot.lane.b32.xlu0 %v1585, 95
      %v1607 = vpop.permute.xlu0 %1606
      %1608 = vrot.lane.b32.xlu0 %v1586, 95
      %v1609 = vpop.permute.xlu0 %1608
      %1610 = vrot.lane.b32.xlu0 %v1587, 95
      %v1611 = vpop.permute.xlu0 %1610
      %v1612 = vsel %vm1047, %v1597, %v1599
      %v1613 = vsel %vm1047, %v1599, %v1601
      %v1614 = vsel %vm1047, %v1601, %v1603
      %v1615 = vsel %vm1047, %v1605, %v1607
      %v1616 = vsel %vm1047, %v1607, %v1609
      %v1617 = vsel %vm1047, %v1609, %v1611
      %v1626 = vadd.f32 %v1503, %v1612
      %v1627 = vadd.f32 %v1504, %v1613
      %v1628 = vadd.f32 %v1505, %v1614
      %v1629 = vadd.f32 %v1506, %v1603
      %v1630 = vadd.f32 %v1507, %v1615
      %v1631 = vadd.f32 %v1508, %v1616
      %v1632 = vadd.f32 %v1509, %v1617
      %v1633 = vadd.f32 %v1510, %v1611
      %v1634 = vmul.f32 %v1573, %v335
      %v1635 = vmul.f32 %v1573, %v339
      %v1636 = vmul.f32 %v1573, %v343
      %v1637 = vmul.f32 %v1573, %v347
      %v1638 = vmul.f32 %v1578, %v335
      %v1639 = vmul.f32 %v1578, %v339
      %v1640 = vmul.f32 %v1578, %v343
      %v1641 = vmul.f32 %v1578, %v347
      %1650 = vrot.lane.b32.xlu0 %v1634, 95
      %v1651 = vpop.permute.xlu0 %1650
      %1652 = vrot.lane.b32.xlu0 %v1635, 95
      %v1653 = vpop.permute.xlu0 %1652
      %1654 = vrot.lane.b32.xlu0 %v1636, 95
      %v1655 = vpop.permute.xlu0 %1654
      %1656 = vrot.lane.b32.xlu0 %v1637, 95
      %v1657 = vpop.permute.xlu0 %1656
      %1658 = vrot.lane.b32.xlu0 %v1638, 95
      %v1659 = vpop.permute.xlu0 %1658
      %1660 = vrot.lane.b32.xlu0 %v1639, 95
      %v1661 = vpop.permute.xlu0 %1660
      %1662 = vrot.lane.b32.xlu0 %v1640, 95
      %v1663 = vpop.permute.xlu0 %1662
      %1664 = vrot.lane.b32.xlu0 %v1641, 95
      %v1665 = vpop.permute.xlu0 %1664
      %v1666 = vsel %vm1047, %v1651, %v1653
      %v1667 = vsel %vm1047, %v1653, %v1655
      %v1668 = vsel %vm1047, %v1655, %v1657
      %v1669 = vsel %vm1047, %v1659, %v1661
      %v1670 = vsel %vm1047, %v1661, %v1663
      %v1671 = vsel %vm1047, %v1663, %v1665
      %v1680 = vadd.f32 %v1557, %v1666
      %v1681 = vadd.f32 %v1558, %v1667
      %v1682 = vadd.f32 %v1559, %v1668
      %v1683 = vadd.f32 %v1560, %v1657
      %v1684 = vadd.f32 %v1561, %v1669
      %v1685 = vadd.f32 %v1562, %v1670
      %v1686 = vadd.f32 %v1563, %v1671
      %v1687 = vadd.f32 %v1564, %v1665
      %s1688 = scalar_lea.vmem %s2, 96
      %v1689 = vld [vmem:[%s1688] sm:$0xf]
      %v1690 = vld [vmem:[%s1688 + $0x4] sm:$0xf]
      %v1691 = vunpack.c.l.bf16 %v1689
      %v1692 = vunpack.c.l.bf16 %v1690
      %1694 = vset.pattern.permute.xlu0 0
      %1695 = vperm.xlu0 %1694, %v1691
      %v1696 = vpop.permute.xlu0 %1695
      %1699 = vset.pattern.permute.xlu0 0
      %1700 = vperm.xlu0 %1699, %v1692
      %v1701 = vpop.permute.xlu0 %1700
      %v1703 = vmul.f32 %v1696, %v281
      %v1704 = vmul.f32 %v1696, %v285
      %v1705 = vmul.f32 %v1696, %v289
      %v1706 = vmul.f32 %v1696, %v293
      %v1707 = vmul.f32 %v1701, %v281
      %v1708 = vmul.f32 %v1701, %v285
      %v1709 = vmul.f32 %v1701, %v289
      %v1710 = vmul.f32 %v1701, %v293
      %1719 = vrot.lane.b32.xlu0 %v1703, 94
      %v1720 = vpop.permute.xlu0 %1719
      %1721 = vrot.lane.b32.xlu0 %v1704, 94
      %v1722 = vpop.permute.xlu0 %1721
      %1723 = vrot.lane.b32.xlu0 %v1705, 94
      %v1724 = vpop.permute.xlu0 %1723
      %1725 = vrot.lane.b32.xlu0 %v1706, 94
      %v1726 = vpop.permute.xlu0 %1725
      %1727 = vrot.lane.b32.xlu0 %v1707, 94
      %v1728 = vpop.permute.xlu0 %1727
      %1729 = vrot.lane.b32.xlu0 %v1708, 94
      %v1730 = vpop.permute.xlu0 %1729
      %1731 = vrot.lane.b32.xlu0 %v1709, 94
      %v1732 = vpop.permute.xlu0 %1731
      %1733 = vrot.lane.b32.xlu0 %v1710, 94
      %v1734 = vpop.permute.xlu0 %1733
      %v1735 = vsel %vm1171, %v1720, %v1722
      %v1736 = vsel %vm1171, %v1722, %v1724
      %v1737 = vsel %vm1171, %v1724, %v1726
      %v1738 = vsel %vm1171, %v1728, %v1730
      %v1739 = vsel %vm1171, %v1730, %v1732
      %v1740 = vsel %vm1171, %v1732, %v1734
      %v1749 = vadd.f32 %v1626, %v1735
      %v1750 = vadd.f32 %v1627, %v1736
      %v1751 = vadd.f32 %v1628, %v1737
      %v1752 = vadd.f32 %v1629, %v1726
      %v1753 = vadd.f32 %v1630, %v1738
      %v1754 = vadd.f32 %v1631, %v1739
      %v1755 = vadd.f32 %v1632, %v1740
      %v1756 = vadd.f32 %v1633, %v1734
      %v1757 = vmul.f32 %v1696, %v335
      %v1758 = vmul.f32 %v1696, %v339
      %v1759 = vmul.f32 %v1696, %v343
      %v1760 = vmul.f32 %v1696, %v347
      %v1761 = vmul.f32 %v1701, %v335
      %v1762 = vmul.f32 %v1701, %v339
      %v1763 = vmul.f32 %v1701, %v343
      %v1764 = vmul.f32 %v1701, %v347
      %1773 = vrot.lane.b32.xlu0 %v1757, 94
      %v1774 = vpop.permute.xlu0 %1773
      %1775 = vrot.lane.b32.xlu0 %v1758, 94
      %v1776 = vpop.permute.xlu0 %1775
      %1777 = vrot.lane.b32.xlu0 %v1759, 94
      %v1778 = vpop.permute.xlu0 %1777
      %1779 = vrot.lane.b32.xlu0 %v1760, 94
      %v1780 = vpop.permute.xlu0 %1779
      %1781 = vrot.lane.b32.xlu0 %v1761, 94
      %v1782 = vpop.permute.xlu0 %1781
      %1783 = vrot.lane.b32.xlu0 %v1762, 94
      %v1784 = vpop.permute.xlu0 %1783
      %1785 = vrot.lane.b32.xlu0 %v1763, 94
      %v1786 = vpop.permute.xlu0 %1785
      %1787 = vrot.lane.b32.xlu0 %v1764, 94
      %v1788 = vpop.permute.xlu0 %1787
      %v1789 = vsel %vm1171, %v1774, %v1776
      %v1790 = vsel %vm1171, %v1776, %v1778
      %v1791 = vsel %vm1171, %v1778, %v1780
      %v1792 = vsel %vm1171, %v1782, %v1784
      %v1793 = vsel %vm1171, %v1784, %v1786
      %v1794 = vsel %vm1171, %v1786, %v1788
      %v1803 = vadd.f32 %v1680, %v1789
      %v1804 = vadd.f32 %v1681, %v1790
      %v1805 = vadd.f32 %v1682, %v1791
      %v1806 = vadd.f32 %v1683, %v1780
      %v1807 = vadd.f32 %v1684, %v1792
      %v1808 = vadd.f32 %v1685, %v1793
      %v1809 = vadd.f32 %v1686, %v1794
      %v1810 = vadd.f32 %v1687, %v1788
      %s1811 = scalar_lea.vmem %s2, 104
      %v1812 = vld [vmem:[%s1811] sm:$0xf]
      %v1813 = vld [vmem:[%s1811 + $0x4] sm:$0xf]
      %v1814 = vunpack.c.l.bf16 %v1812
      %v1815 = vunpack.c.l.bf16 %v1813
      %1817 = vset.pattern.permute.xlu0 0
      %1818 = vperm.xlu0 %1817, %v1814
      %v1819 = vpop.permute.xlu0 %1818
      %1822 = vset.pattern.permute.xlu0 0
      %1823 = vperm.xlu0 %1822, %v1815
      %v1824 = vpop.permute.xlu0 %1823
      %v1826 = vmul.f32 %v1819, %v281
      %v1827 = vmul.f32 %v1819, %v285
      %v1828 = vmul.f32 %v1819, %v289
      %v1829 = vmul.f32 %v1819, %v293
      %v1830 = vmul.f32 %v1824, %v281
      %v1831 = vmul.f32 %v1824, %v285
      %v1832 = vmul.f32 %v1824, %v289
      %v1833 = vmul.f32 %v1824, %v293
      %1842 = vrot.lane.b32.xlu0 %v1826, 93
      %v1843 = vpop.permute.xlu0 %1842
      %1844 = vrot.lane.b32.xlu0 %v1827, 93
      %v1845 = vpop.permute.xlu0 %1844
      %1846 = vrot.lane.b32.xlu0 %v1828, 93
      %v1847 = vpop.permute.xlu0 %1846
      %1848 = vrot.lane.b32.xlu0 %v1829, 93
      %v1849 = vpop.permute.xlu0 %1848
      %1850 = vrot.lane.b32.xlu0 %v1830, 93
      %v1851 = vpop.permute.xlu0 %1850
      %1852 = vrot.lane.b32.xlu0 %v1831, 93
      %v1853 = vpop.permute.xlu0 %1852
      %1854 = vrot.lane.b32.xlu0 %v1832, 93
      %v1855 = vpop.permute.xlu0 %1854
      %1856 = vrot.lane.b32.xlu0 %v1833, 93
      %v1857 = vpop.permute.xlu0 %1856
      %v1858 = vsel %vm1295, %v1843, %v1845
      %v1859 = vsel %vm1295, %v1845, %v1847
      %v1860 = vsel %vm1295, %v1847, %v1849
      %v1861 = vsel %vm1295, %v1851, %v1853
      %v1862 = vsel %vm1295, %v1853, %v1855
      %v1863 = vsel %vm1295, %v1855, %v1857
      %v1872 = vadd.f32 %v1749, %v1858
      %v1873 = vadd.f32 %v1750, %v1859
      %v1874 = vadd.f32 %v1751, %v1860
      %v1875 = vadd.f32 %v1752, %v1849
      %v1876 = vadd.f32 %v1753, %v1861
      %v1877 = vadd.f32 %v1754, %v1862
      %v1878 = vadd.f32 %v1755, %v1863
      %v1879 = vadd.f32 %v1756, %v1857
      %v1880 = vmul.f32 %v1819, %v335
      %v1881 = vmul.f32 %v1819, %v339
      %v1882 = vmul.f32 %v1819, %v343
      %v1883 = vmul.f32 %v1819, %v347
      %v1884 = vmul.f32 %v1824, %v335
      %v1885 = vmul.f32 %v1824, %v339
      %v1886 = vmul.f32 %v1824, %v343
      %v1887 = vmul.f32 %v1824, %v347
      %1896 = vrot.lane.b32.xlu0 %v1880, 93
      %v1897 = vpop.permute.xlu0 %1896
      %1898 = vrot.lane.b32.xlu0 %v1881, 93
      %v1899 = vpop.permute.xlu0 %1898
      %1900 = vrot.lane.b32.xlu0 %v1882, 93
      %v1901 = vpop.permute.xlu0 %1900
      %1902 = vrot.lane.b32.xlu0 %v1883, 93
      %v1903 = vpop.permute.xlu0 %1902
      %1904 = vrot.lane.b32.xlu0 %v1884, 93
      %v1905 = vpop.permute.xlu0 %1904
      %1906 = vrot.lane.b32.xlu0 %v1885, 93
      %v1907 = vpop.permute.xlu0 %1906
      %1908 = vrot.lane.b32.xlu0 %v1886, 93
      %v1909 = vpop.permute.xlu0 %1908
      %1910 = vrot.lane.b32.xlu0 %v1887, 93
      %v1911 = vpop.permute.xlu0 %1910
      %v1912 = vsel %vm1295, %v1897, %v1899
      %v1913 = vsel %vm1295, %v1899, %v1901
      %v1914 = vsel %vm1295, %v1901, %v1903
      %v1915 = vsel %vm1295, %v1905, %v1907
      %v1916 = vsel %vm1295, %v1907, %v1909
      %v1917 = vsel %vm1295, %v1909, %v1911
      %v1926 = vadd.f32 %v1803, %v1912
      %v1927 = vadd.f32 %v1804, %v1913
      %v1928 = vadd.f32 %v1805, %v1914
      %v1929 = vadd.f32 %v1806, %v1903
      %v1930 = vadd.f32 %v1807, %v1915
      %v1931 = vadd.f32 %v1808, %v1916
      %v1932 = vadd.f32 %v1809, %v1917
      %v1933 = vadd.f32 %v1810, %v1911
      %s1934 = scalar_lea.vmem %s2, 112
      %v1935 = vld [vmem:[%s1934] sm:$0xf]
      %v1936 = vld [vmem:[%s1934 + $0x4] sm:$0xf]
      %v1937 = vunpack.c.l.bf16 %v1935
      %v1938 = vunpack.c.l.bf16 %v1936
      %1940 = vset.pattern.permute.xlu0 0
      %1941 = vperm.xlu0 %1940, %v1937
      %v1942 = vpop.permute.xlu0 %1941
      %1945 = vset.pattern.permute.xlu0 0
      %1946 = vperm.xlu0 %1945, %v1938
      %v1947 = vpop.permute.xlu0 %1946
      %v1949 = vmul.f32 %v1942, %v281
      %v1950 = vmul.f32 %v1942, %v285
      %v1951 = vmul.f32 %v1942, %v289
      %v1952 = vmul.f32 %v1942, %v293
      %v1953 = vmul.f32 %v1947, %v281
      %v1954 = vmul.f32 %v1947, %v285
      %v1955 = vmul.f32 %v1947, %v289
      %v1956 = vmul.f32 %v1947, %v293
      %1965 = vrot.lane.b32.xlu0 %v1949, 92
      %v1966 = vpop.permute.xlu0 %1965
      %1967 = vrot.lane.b32.xlu0 %v1950, 92
      %v1968 = vpop.permute.xlu0 %1967
      %1969 = vrot.lane.b32.xlu0 %v1951, 92
      %v1970 = vpop.permute.xlu0 %1969
      %1971 = vrot.lane.b32.xlu0 %v1952, 92
      %v1972 = vpop.permute.xlu0 %1971
      %1973 = vrot.lane.b32.xlu0 %v1953, 92
      %v1974 = vpop.permute.xlu0 %1973
      %1975 = vrot.lane.b32.xlu0 %v1954, 92
      %v1976 = vpop.permute.xlu0 %1975
      %1977 = vrot.lane.b32.xlu0 %v1955, 92
      %v1978 = vpop.permute.xlu0 %1977
      %1979 = vrot.lane.b32.xlu0 %v1956, 92
      %v1980 = vpop.permute.xlu0 %1979
      %v1981 = vsel %vm1419, %v1966, %v1968
      %v1982 = vsel %vm1419, %v1968, %v1970
      %v1983 = vsel %vm1419, %v1970, %v1972
      %v1984 = vsel %vm1419, %v1974, %v1976
      %v1985 = vsel %vm1419, %v1976, %v1978
      %v1986 = vsel %vm1419, %v1978, %v1980
      %v1995 = vadd.f32 %v1872, %v1981
      %v1996 = vadd.f32 %v1873, %v1982
      %v1997 = vadd.f32 %v1874, %v1983
      %v1998 = vadd.f32 %v1875, %v1972
      %v1999 = vadd.f32 %v1876, %v1984
      %v2000 = vadd.f32 %v1877, %v1985
      %v2001 = vadd.f32 %v1878, %v1986
      %v2002 = vadd.f32 %v1879, %v1980
      %v2003 = vmul.f32 %v1942, %v335
      %v2004 = vmul.f32 %v1942, %v339
      %v2005 = vmul.f32 %v1942, %v343
      %v2006 = vmul.f32 %v1942, %v347
      %v2007 = vmul.f32 %v1947, %v335
      %v2008 = vmul.f32 %v1947, %v339
      %v2009 = vmul.f32 %v1947, %v343
      %v2010 = vmul.f32 %v1947, %v347
      %2019 = vrot.lane.b32.xlu0 %v2003, 92
      %v2020 = vpop.permute.xlu0 %2019
      %2021 = vrot.lane.b32.xlu0 %v2004, 92
      %v2022 = vpop.permute.xlu0 %2021
      %2023 = vrot.lane.b32.xlu0 %v2005, 92
      %v2024 = vpop.permute.xlu0 %2023
      %2025 = vrot.lane.b32.xlu0 %v2006, 92
      %v2026 = vpop.permute.xlu0 %2025
      %2027 = vrot.lane.b32.xlu0 %v2007, 92
      %v2028 = vpop.permute.xlu0 %2027
      %2029 = vrot.lane.b32.xlu0 %v2008, 92
      %v2030 = vpop.permute.xlu0 %2029
      %2031 = vrot.lane.b32.xlu0 %v2009, 92
      %v2032 = vpop.permute.xlu0 %2031
      %2033 = vrot.lane.b32.xlu0 %v2010, 92
      %v2034 = vpop.permute.xlu0 %2033
      %v2035 = vsel %vm1419, %v2020, %v2022
      %v2036 = vsel %vm1419, %v2022, %v2024
      %v2037 = vsel %vm1419, %v2024, %v2026
      %v2038 = vsel %vm1419, %v2028, %v2030
      %v2039 = vsel %vm1419, %v2030, %v2032
      %v2040 = vsel %vm1419, %v2032, %v2034
      %v2049 = vadd.f32 %v1926, %v2035
      %v2050 = vadd.f32 %v1927, %v2036
      %v2051 = vadd.f32 %v1928, %v2037
      %v2052 = vadd.f32 %v1929, %v2026
      %v2053 = vadd.f32 %v1930, %v2038
      %v2054 = vadd.f32 %v1931, %v2039
      %v2055 = vadd.f32 %v1932, %v2040
      %v2056 = vadd.f32 %v1933, %v2034
      %s2057 = scalar_lea.vmem %s2, 120
      %v2058 = vld [vmem:[%s2057] sm:$0xf]
      %v2059 = vld [vmem:[%s2057 + $0x4] sm:$0xf]
      %v2060 = vunpack.c.l.bf16 %v2058
      %v2061 = vunpack.c.l.bf16 %v2059
      %2063 = vset.pattern.permute.xlu0 0
      %2064 = vperm.xlu0 %2063, %v2060
      %v2065 = vpop.permute.xlu0 %2064
      %2068 = vset.pattern.permute.xlu0 0
      %2069 = vperm.xlu0 %2068, %v2061
      %v2070 = vpop.permute.xlu0 %2069
      %v2072 = vmul.f32 %v2065, %v335
      %v2073 = vmul.f32 %v2065, %v339
      %v2074 = vmul.f32 %v2065, %v343
      %v2075 = vmul.f32 %v2065, %v347
      %v2076 = vmul.f32 %v2070, %v335
      %v2077 = vmul.f32 %v2070, %v339
      %v2078 = vmul.f32 %v2070, %v343
      %v2079 = vmul.f32 %v2070, %v347
      %2088 = vrot.lane.b32.xlu0 %v2072, 96
      %v2089 = vpop.permute.xlu0 %2088
      %2090 = vrot.lane.b32.xlu0 %v2073, 96
      %v2091 = vpop.permute.xlu0 %2090
      %2092 = vrot.lane.b32.xlu0 %v2074, 96
      %v2093 = vpop.permute.xlu0 %2092
      %2094 = vrot.lane.b32.xlu0 %v2075, 96
      %v2095 = vpop.permute.xlu0 %2094
      %2096 = vrot.lane.b32.xlu0 %v2076, 96
      %v2097 = vpop.permute.xlu0 %2096
      %2098 = vrot.lane.b32.xlu0 %v2077, 96
      %v2099 = vpop.permute.xlu0 %2098
      %2100 = vrot.lane.b32.xlu0 %v2078, 96
      %v2101 = vpop.permute.xlu0 %2100
      %2102 = vrot.lane.b32.xlu0 %v2079, 96
      %v2103 = vpop.permute.xlu0 %2102
      %v2104 = vsel %vm923, %v2089, %v2091
      %v2105 = vsel %vm923, %v2091, %v2093
      %v2106 = vsel %vm923, %v2093, %v2095
      %v2107 = vsel %vm923, %v2097, %v2099
      %v2108 = vsel %vm923, %v2099, %v2101
      %v2109 = vsel %vm923, %v2101, %v2103
      %v2118 = vadd.f32 %v1995, %v2104
      %v2119 = vadd.f32 %v1996, %v2105
      %v2120 = vadd.f32 %v1997, %v2106
      %v2121 = vadd.f32 %v1998, %v2095
      %v2122 = vadd.f32 %v1999, %v2107
      %v2123 = vadd.f32 %v2000, %v2108
      %v2124 = vadd.f32 %v2001, %v2109
      %v2125 = vadd.f32 %v2002, %v2103
      %v2126 = vmul.f32 %v2065, %v281
      %v2127 = vmul.f32 %v2065, %v285
      %v2128 = vmul.f32 %v2065, %v289
      %v2129 = vmul.f32 %v2065, %v293
      %v2130 = vmul.f32 %v2070, %v281
      %v2131 = vmul.f32 %v2070, %v285
      %v2132 = vmul.f32 %v2070, %v289
      %v2133 = vmul.f32 %v2070, %v293
      %2142 = vrot.lane.b32.xlu0 %v2126, 64
      %v2143 = vpop.permute.xlu0 %2142
      %2144 = vrot.lane.b32.xlu0 %v2127, 64
      %v2145 = vpop.permute.xlu0 %2144
      %2146 = vrot.lane.b32.xlu0 %v2128, 64
      %v2147 = vpop.permute.xlu0 %2146
      %2148 = vrot.lane.b32.xlu0 %v2129, 64
      %v2149 = vpop.permute.xlu0 %2148
      %2150 = vrot.lane.b32.xlu0 %v2130, 64
      %v2151 = vpop.permute.xlu0 %2150
      %2152 = vrot.lane.b32.xlu0 %v2131, 64
      %v2153 = vpop.permute.xlu0 %2152
      %2154 = vrot.lane.b32.xlu0 %v2132, 64
      %v2155 = vpop.permute.xlu0 %2154
      %2156 = vrot.lane.b32.xlu0 %v2133, 64
      %v2157 = vpop.permute.xlu0 %2156
      %vm2158 = vcmask 523264
      %v2159 = vsel %vm2158, %v2143, %v2145
      %v2160 = vsel %vm2158, %v2145, %v2147
      %v2161 = vsel %vm2158, %v2147, %v2149
      %v2162 = vsel %vm2158, %v2151, %v2153
      %v2163 = vsel %vm2158, %v2153, %v2155
      %v2164 = vsel %vm2158, %v2155, %v2157
      %v2173 = vadd.f32 %v2049, %v2159
      %v2174 = vadd.f32 %v2050, %v2160
      %v2175 = vadd.f32 %v2051, %v2161
      %v2176 = vadd.f32 %v2052, %v2149
      %v2177 = vadd.f32 %v2053, %v2162
      %v2178 = vadd.f32 %v2054, %v2163
      %v2179 = vadd.f32 %v2055, %v2164
      %v2180 = vadd.f32 %v2056, %v2157
      %s2181 = scalar_lea.vmem %s2, 128
      %v2182 = vld [vmem:[%s2181] sm:$0xf]
      %v2183 = vld [vmem:[%s2181 + $0x4] sm:$0xf]
      %v2184 = vld [vmem:[%s229] sm:$0x1f]
      %v2185 = vunpack.c.l.bf16 %v2182
      %v2186 = vunpack.c.l.bf16 %v2183
      %2188 = vset.pattern.permute.xlu0 0
      %2189 = vperm.xlu0 %2188, %v2185
      %v2190 = vpop.permute.xlu0 %2189
      %2193 = vset.pattern.permute.xlu0 0
      %2194 = vperm.xlu0 %2193, %v2186
      %v2195 = vpop.permute.xlu0 %2194
      %v2197 = vmul.f32 %v2190, %v335
      %v2198 = vmul.f32 %v2190, %v339
      %v2199 = vmul.f32 %v2190, %v343
      %v2200 = vmul.f32 %v2190, %v347
      %v2201 = vmul.f32 %v2195, %v335
      %v2202 = vmul.f32 %v2195, %v339
      %v2203 = vmul.f32 %v2195, %v343
      %v2204 = vmul.f32 %v2195, %v347
      %2213 = vrot.lane.b32.xlu0 %v2197, 95
      %v2214 = vpop.permute.xlu0 %2213
      %2215 = vrot.lane.b32.xlu0 %v2198, 95
      %v2216 = vpop.permute.xlu0 %2215
      %2217 = vrot.lane.b32.xlu0 %v2199, 95
      %v2218 = vpop.permute.xlu0 %2217
      %2219 = vrot.lane.b32.xlu0 %v2200, 95
      %v2220 = vpop.permute.xlu0 %2219
      %2221 = vrot.lane.b32.xlu0 %v2201, 95
      %v2222 = vpop.permute.xlu0 %2221
      %2223 = vrot.lane.b32.xlu0 %v2202, 95
      %v2224 = vpop.permute.xlu0 %2223
      %2225 = vrot.lane.b32.xlu0 %v2203, 95
      %v2226 = vpop.permute.xlu0 %2225
      %2227 = vrot.lane.b32.xlu0 %v2204, 95
      %v2228 = vpop.permute.xlu0 %2227
      %v2229 = vsel %vm1047, %v2214, %v2216
      %v2230 = vsel %vm1047, %v2216, %v2218
      %v2231 = vsel %vm1047, %v2218, %v2220
      %v2232 = vsel %vm1047, %v2222, %v2224
      %v2233 = vsel %vm1047, %v2224, %v2226
      %v2234 = vsel %vm1047, %v2226, %v2228
      %v2243 = vadd.f32 %v2118, %v2229
      %v2244 = vadd.f32 %v2119, %v2230
      %v2245 = vadd.f32 %v2120, %v2231
      %v2246 = vadd.f32 %v2121, %v2220
      %v2247 = vadd.f32 %v2122, %v2232
      %v2248 = vadd.f32 %v2123, %v2233
      %v2249 = vadd.f32 %v2124, %v2234
      %v2250 = vadd.f32 %v2125, %v2228
      %v2251 = vunpack.c.l.bf16 %v2184
      %v2252 = vunpack.c.h.bf16 %v2184
      %v2255 = vlaneseq
      %v2256 = vshrl.u32 %v2255, 7
      %v2257 = vsub.s32 0, %v2256
      %v2258 = vrot.slane %v2251, %v2257
      %v2259 = vlaneseq
      %v2260 = vshrl.u32 %v2259, 7
      %v2261 = vsub.s32 2, %v2260
      %v2262 = vrot.slane %v2251, %v2261
      %v2263 = vlaneseq
      %v2264 = vshrl.u32 %v2263, 7
      %v2265 = vsub.s32 4, %v2264
      %v2266 = vrot.slane %v2251, %v2265
      %v2267 = vlaneseq
      %v2268 = vshrl.u32 %v2267, 7
      %v2269 = vsub.s32 6, %v2268
      %v2270 = vrot.slane %v2251, %v2269
      %v2271 = vlaneseq
      %v2272 = vshrl.u32 %v2271, 7
      %v2273 = vsub.s32 0, %v2272
      %v2274 = vrot.slane %v2252, %v2273
      %v2280 = vlaneseq
      %v2281 = vshrl.u32 %v2280, 7
      %v2282 = vsub.s32 0, %v2281
      %v2283 = vrot.slane %v2258, %v2282
      %v2284 = vlaneseq
      %v2285 = vshrl.u32 %v2284, 7
      %v2286 = vsub.s32 0, %v2285
      %v2287 = vrot.slane %v2262, %v2286
      %v2288 = vlaneseq
      %v2289 = vshrl.u32 %v2288, 7
      %v2290 = vsub.s32 0, %v2289
      %v2291 = vrot.slane %v2266, %v2290
      %v2292 = vlaneseq
      %v2293 = vshrl.u32 %v2292, 7
      %v2294 = vsub.s32 0, %v2293
      %v2295 = vrot.slane %v2270, %v2294
      %v2296 = vlaneseq
      %v2297 = vshrl.u32 %v2296, 7
      %v2298 = vsub.s32 0, %v2297
      %v2299 = vrot.slane %v2274, %v2298
      %v2300 = vmul.f32 %v2190, %v2283
      %v2301 = vmul.f32 %v2190, %v2287
      %v2302 = vmul.f32 %v2190, %v2291
      %v2303 = vmul.f32 %v2190, %v2295
      %v2304 = vmul.f32 %v2190, %v2299
      %v2305 = vmul.f32 %v2195, %v2283
      %v2306 = vmul.f32 %v2195, %v2287
      %v2307 = vmul.f32 %v2195, %v2291
      %v2308 = vmul.f32 %v2195, %v2295
      %v2309 = vmul.f32 %v2195, %v2299
      %2320 = vrot.lane.b32.xlu0 %v2300, 63
      %v2321 = vpop.permute.xlu0 %2320
      %2322 = vrot.lane.b32.xlu0 %v2301, 63
      %v2323 = vpop.permute.xlu0 %2322
      %2324 = vrot.lane.b32.xlu0 %v2302, 63
      %v2325 = vpop.permute.xlu0 %2324
      %2326 = vrot.lane.b32.xlu0 %v2303, 63
      %v2327 = vpop.permute.xlu0 %2326
      %2328 = vrot.lane.b32.xlu0 %v2304, 63
      %v2329 = vpop.permute.xlu0 %2328
      %2330 = vrot.lane.b32.xlu0 %v2305, 63
      %v2331 = vpop.permute.xlu0 %2330
      %2332 = vrot.lane.b32.xlu0 %v2306, 63
      %v2333 = vpop.permute.xlu0 %2332
      %2334 = vrot.lane.b32.xlu0 %v2307, 63
      %v2335 = vpop.permute.xlu0 %2334
      %2336 = vrot.lane.b32.xlu0 %v2308, 63
      %v2337 = vpop.permute.xlu0 %2336
      %2338 = vrot.lane.b32.xlu0 %v2309, 63
      %v2339 = vpop.permute.xlu0 %2338
      %vm2340 = vcmask 515072
      %v2341 = vsel %vm2340, %v2321, %v2323
      %v2342 = vsel %vm2340, %v2323, %v2325
      %v2343 = vsel %vm2340, %v2325, %v2327
      %v2344 = vsel %vm2340, %v2327, %v2329
      %v2345 = vsel %vm2340, %v2331, %v2333
      %v2346 = vsel %vm2340, %v2333, %v2335
      %v2347 = vsel %vm2340, %v2335, %v2337
      %v2348 = vsel %vm2340, %v2337, %v2339
      %v2357 = vadd.f32 %v2173, %v2341
      %v2358 = vadd.f32 %v2174, %v2342
      %v2359 = vadd.f32 %v2175, %v2343
      %v2360 = vadd.f32 %v2176, %v2344
      %v2361 = vadd.f32 %v2177, %v2345
      %v2362 = vadd.f32 %v2178, %v2346
      %v2363 = vadd.f32 %v2179, %v2347
      %v2364 = vadd.f32 %v2180, %v2348
      %s2365 = scalar_lea.vmem %s2, 136
      %v2366 = vld [vmem:[%s2365] sm:$0xf]
      %v2367 = vld [vmem:[%s2365 + $0x4] sm:$0xf]
      %v2368 = vunpack.c.l.bf16 %v2366
      %v2369 = vunpack.c.l.bf16 %v2367
      %2371 = vset.pattern.permute.xlu0 0
      %2372 = vperm.xlu0 %2371, %v2368
      %v2373 = vpop.permute.xlu0 %2372
      %2376 = vset.pattern.permute.xlu0 0
      %2377 = vperm.xlu0 %2376, %v2369
      %v2378 = vpop.permute.xlu0 %2377
      %v2380 = vmul.f32 %v2373, %v335
      %v2381 = vmul.f32 %v2373, %v339
      %v2382 = vmul.f32 %v2373, %v343
      %v2383 = vmul.f32 %v2373, %v347
      %v2384 = vmul.f32 %v2378, %v335
      %v2385 = vmul.f32 %v2378, %v339
      %v2386 = vmul.f32 %v2378, %v343
      %v2387 = vmul.f32 %v2378, %v347
      %2396 = vrot.lane.b32.xlu0 %v2380, 94
      %v2397 = vpop.permute.xlu0 %2396
      %2398 = vrot.lane.b32.xlu0 %v2381, 94
      %v2399 = vpop.permute.xlu0 %2398
      %2400 = vrot.lane.b32.xlu0 %v2382, 94
      %v2401 = vpop.permute.xlu0 %2400
      %2402 = vrot.lane.b32.xlu0 %v2383, 94
      %v2403 = vpop.permute.xlu0 %2402
      %2404 = vrot.lane.b32.xlu0 %v2384, 94
      %v2405 = vpop.permute.xlu0 %2404
      %2406 = vrot.lane.b32.xlu0 %v2385, 94
      %v2407 = vpop.permute.xlu0 %2406
      %2408 = vrot.lane.b32.xlu0 %v2386, 94
      %v2409 = vpop.permute.xlu0 %2408
      %2410 = vrot.lane.b32.xlu0 %v2387, 94
      %v2411 = vpop.permute.xlu0 %2410
      %v2412 = vsel %vm1171, %v2397, %v2399
      %v2413 = vsel %vm1171, %v2399, %v2401
      %v2414 = vsel %vm1171, %v2401, %v2403
      %v2415 = vsel %vm1171, %v2405, %v2407
      %v2416 = vsel %vm1171, %v2407, %v2409
      %v2417 = vsel %vm1171, %v2409, %v2411
      %v2426 = vadd.f32 %v2243, %v2412
      %v2427 = vadd.f32 %v2244, %v2413
      %v2428 = vadd.f32 %v2245, %v2414
      %v2429 = vadd.f32 %v2246, %v2403
      %v2430 = vadd.f32 %v2247, %v2415
      %v2431 = vadd.f32 %v2248, %v2416
      %v2432 = vadd.f32 %v2249, %v2417
      %v2433 = vadd.f32 %v2250, %v2411
      %v2434 = vmul.f32 %v2373, %v2283
      %v2435 = vmul.f32 %v2373, %v2287
      %v2436 = vmul.f32 %v2373, %v2291
      %v2437 = vmul.f32 %v2373, %v2295
      %v2438 = vmul.f32 %v2373, %v2299
      %v2439 = vmul.f32 %v2378, %v2283
      %v2440 = vmul.f32 %v2378, %v2287
      %v2441 = vmul.f32 %v2378, %v2291
      %v2442 = vmul.f32 %v2378, %v2295
      %v2443 = vmul.f32 %v2378, %v2299
      %2454 = vrot.lane.b32.xlu0 %v2434, 62
      %v2455 = vpop.permute.xlu0 %2454
      %2456 = vrot.lane.b32.xlu0 %v2435, 62
      %v2457 = vpop.permute.xlu0 %2456
      %2458 = vrot.lane.b32.xlu0 %v2436, 62
      %v2459 = vpop.permute.xlu0 %2458
      %2460 = vrot.lane.b32.xlu0 %v2437, 62
      %v2461 = vpop.permute.xlu0 %2460
      %2462 = vrot.lane.b32.xlu0 %v2438, 62
      %v2463 = vpop.permute.xlu0 %2462
      %2464 = vrot.lane.b32.xlu0 %v2439, 62
      %v2465 = vpop.permute.xlu0 %2464
      %2466 = vrot.lane.b32.xlu0 %v2440, 62
      %v2467 = vpop.permute.xlu0 %2466
      %2468 = vrot.lane.b32.xlu0 %v2441, 62
      %v2469 = vpop.permute.xlu0 %2468
      %2470 = vrot.lane.b32.xlu0 %v2442, 62
      %v2471 = vpop.permute.xlu0 %2470
      %2472 = vrot.lane.b32.xlu0 %v2443, 62
      %v2473 = vpop.permute.xlu0 %2472
      %vm2474 = vcmask 506880
      %v2475 = vsel %vm2474, %v2455, %v2457
      %v2476 = vsel %vm2474, %v2457, %v2459
      %v2477 = vsel %vm2474, %v2459, %v2461
      %v2478 = vsel %vm2474, %v2461, %v2463
      %v2479 = vsel %vm2474, %v2465, %v2467
      %v2480 = vsel %vm2474, %v2467, %v2469
      %v2481 = vsel %vm2474, %v2469, %v2471
      %v2482 = vsel %vm2474, %v2471, %v2473
      %v2491 = vadd.f32 %v2357, %v2475
      %v2492 = vadd.f32 %v2358, %v2476
      %v2493 = vadd.f32 %v2359, %v2477
      %v2494 = vadd.f32 %v2360, %v2478
      %v2495 = vadd.f32 %v2361, %v2479
      %v2496 = vadd.f32 %v2362, %v2480
      %v2497 = vadd.f32 %v2363, %v2481
      %v2498 = vadd.f32 %v2364, %v2482
      %s2499 = scalar_lea.vmem %s2, 144
      %v2500 = vld [vmem:[%s2499] sm:$0xf]
      %v2501 = vld [vmem:[%s2499 + $0x4] sm:$0xf]
      %v2502 = vunpack.c.l.bf16 %v2500
      %v2503 = vunpack.c.l.bf16 %v2501
      %2505 = vset.pattern.permute.xlu0 0
      %2506 = vperm.xlu0 %2505, %v2502
      %v2507 = vpop.permute.xlu0 %2506
      %2510 = vset.pattern.permute.xlu0 0
      %2511 = vperm.xlu0 %2510, %v2503
      %v2512 = vpop.permute.xlu0 %2511
      %v2514 = vmul.f32 %v2507, %v335
      %v2515 = vmul.f32 %v2507, %v339
      %v2516 = vmul.f32 %v2507, %v343
      %v2517 = vmul.f32 %v2507, %v347
      %v2518 = vmul.f32 %v2512, %v335
      %v2519 = vmul.f32 %v2512, %v339
      %v2520 = vmul.f32 %v2512, %v343
      %v2521 = vmul.f32 %v2512, %v347
      %2530 = vrot.lane.b32.xlu0 %v2514, 93
      %v2531 = vpop.permute.xlu0 %2530
      %2532 = vrot.lane.b32.xlu0 %v2515, 93
      %v2533 = vpop.permute.xlu0 %2532
      %2534 = vrot.lane.b32.xlu0 %v2516, 93
      %v2535 = vpop.permute.xlu0 %2534
      %2536 = vrot.lane.b32.xlu0 %v2517, 93
      %v2537 = vpop.permute.xlu0 %2536
      %2538 = vrot.lane.b32.xlu0 %v2518, 93
      %v2539 = vpop.permute.xlu0 %2538
      %2540 = vrot.lane.b32.xlu0 %v2519, 93
      %v2541 = vpop.permute.xlu0 %2540
      %2542 = vrot.lane.b32.xlu0 %v2520, 93
      %v2543 = vpop.permute.xlu0 %2542
      %2544 = vrot.lane.b32.xlu0 %v2521, 93
      %v2545 = vpop.permute.xlu0 %2544
      %v2546 = vsel %vm1295, %v2531, %v2533
      %v2547 = vsel %vm1295, %v2533, %v2535
      %v2548 = vsel %vm1295, %v2535, %v2537
      %v2549 = vsel %vm1295, %v2539, %v2541
      %v2550 = vsel %vm1295, %v2541, %v2543
      %v2551 = vsel %vm1295, %v2543, %v2545
      %v2560 = vadd.f32 %v2426, %v2546
      %v2561 = vadd.f32 %v2427, %v2547
      %v2562 = vadd.f32 %v2428, %v2548
      %v2563 = vadd.f32 %v2429, %v2537
      %v2564 = vadd.f32 %v2430, %v2549
      %v2565 = vadd.f32 %v2431, %v2550
      %v2566 = vadd.f32 %v2432, %v2551
      %v2567 = vadd.f32 %v2433, %v2545
      %v2568 = vmul.f32 %v2507, %v2283
      %v2569 = vmul.f32 %v2507, %v2287
      %v2570 = vmul.f32 %v2507, %v2291
      %v2571 = vmul.f32 %v2507, %v2295
      %v2572 = vmul.f32 %v2507, %v2299
      %v2573 = vmul.f32 %v2512, %v2283
      %v2574 = vmul.f32 %v2512, %v2287
      %v2575 = vmul.f32 %v2512, %v2291
      %v2576 = vmul.f32 %v2512, %v2295
      %v2577 = vmul.f32 %v2512, %v2299
      %2588 = vrot.lane.b32.xlu0 %v2568, 61
      %v2589 = vpop.permute.xlu0 %2588
      %2590 = vrot.lane.b32.xlu0 %v2569, 61
      %v2591 = vpop.permute.xlu0 %2590
      %2592 = vrot.lane.b32.xlu0 %v2570, 61
      %v2593 = vpop.permute.xlu0 %2592
      %2594 = vrot.lane.b32.xlu0 %v2571, 61
      %v2595 = vpop.permute.xlu0 %2594
      %2596 = vrot.lane.b32.xlu0 %v2572, 61
      %v2597 = vpop.permute.xlu0 %2596
      %2598 = vrot.lane.b32.xlu0 %v2573, 61
      %v2599 = vpop.permute.xlu0 %2598
      %2600 = vrot.lane.b32.xlu0 %v2574, 61
      %v2601 = vpop.permute.xlu0 %2600
      %2602 = vrot.lane.b32.xlu0 %v2575, 61
      %v2603 = vpop.permute.xlu0 %2602
      %2604 = vrot.lane.b32.xlu0 %v2576, 61
      %v2605 = vpop.permute.xlu0 %2604
      %2606 = vrot.lane.b32.xlu0 %v2577, 61
      %v2607 = vpop.permute.xlu0 %2606
      %vm2608 = vcmask 498688
      %v2609 = vsel %vm2608, %v2589, %v2591
      %v2610 = vsel %vm2608, %v2591, %v2593
      %v2611 = vsel %vm2608, %v2593, %v2595
      %v2612 = vsel %vm2608, %v2595, %v2597
      %v2613 = vsel %vm2608, %v2599, %v2601
      %v2614 = vsel %vm2608, %v2601, %v2603
      %v2615 = vsel %vm2608, %v2603, %v2605
      %v2616 = vsel %vm2608, %v2605, %v2607
      %v2625 = vadd.f32 %v2491, %v2609
      %v2626 = vadd.f32 %v2492, %v2610
      %v2627 = vadd.f32 %v2493, %v2611
      %v2628 = vadd.f32 %v2494, %v2612
      %v2629 = vadd.f32 %v2495, %v2613
      %v2630 = vadd.f32 %v2496, %v2614
      %v2631 = vadd.f32 %v2497, %v2615
      %v2632 = vadd.f32 %v2498, %v2616
      %s2633 = scalar_lea.vmem %s2, 152
      %v2634 = vld [vmem:[%s2633] sm:$0xf]
      %v2635 = vld [vmem:[%s2633 + $0x4] sm:$0xf]
      %v2636 = vunpack.c.l.bf16 %v2634
      %v2637 = vunpack.c.l.bf16 %v2635
      %2639 = vset.pattern.permute.xlu0 0
      %2640 = vperm.xlu0 %2639, %v2636
      %v2641 = vpop.permute.xlu0 %2640
      %2644 = vset.pattern.permute.xlu0 0
      %2645 = vperm.xlu0 %2644, %v2637
      %v2646 = vpop.permute.xlu0 %2645
      %v2648 = vmul.f32 %v2641, %v335
      %v2649 = vmul.f32 %v2641, %v339
      %v2650 = vmul.f32 %v2641, %v343
      %v2651 = vmul.f32 %v2641, %v347
      %v2652 = vmul.f32 %v2646, %v335
      %v2653 = vmul.f32 %v2646, %v339
      %v2654 = vmul.f32 %v2646, %v343
      %v2655 = vmul.f32 %v2646, %v347
      %2664 = vrot.lane.b32.xlu0 %v2648, 92
      %v2665 = vpop.permute.xlu0 %2664
      %2666 = vrot.lane.b32.xlu0 %v2649, 92
      %v2667 = vpop.permute.xlu0 %2666
      %2668 = vrot.lane.b32.xlu0 %v2650, 92
      %v2669 = vpop.permute.xlu0 %2668
      %2670 = vrot.lane.b32.xlu0 %v2651, 92
      %v2671 = vpop.permute.xlu0 %2670
      %2672 = vrot.lane.b32.xlu0 %v2652, 92
      %v2673 = vpop.permute.xlu0 %2672
      %2674 = vrot.lane.b32.xlu0 %v2653, 92
      %v2675 = vpop.permute.xlu0 %2674
      %2676 = vrot.lane.b32.xlu0 %v2654, 92
      %v2677 = vpop.permute.xlu0 %2676
      %2678 = vrot.lane.b32.xlu0 %v2655, 92
      %v2679 = vpop.permute.xlu0 %2678
      %v2680 = vsel %vm1419, %v2665, %v2667
      %v2681 = vsel %vm1419, %v2667, %v2669
      %v2682 = vsel %vm1419, %v2669, %v2671
      %v2683 = vsel %vm1419, %v2673, %v2675
      %v2684 = vsel %vm1419, %v2675, %v2677
      %v2685 = vsel %vm1419, %v2677, %v2679
      %v2694 = vadd.f32 %v2560, %v2680
      %v2695 = vadd.f32 %v2561, %v2681
      %v2696 = vadd.f32 %v2562, %v2682
      %v2697 = vadd.f32 %v2563, %v2671
      %v2698 = vadd.f32 %v2564, %v2683
      %v2699 = vadd.f32 %v2565, %v2684
      %v2700 = vadd.f32 %v2566, %v2685
      %v2701 = vadd.f32 %v2567, %v2679
      %v2702 = vmul.f32 %v2641, %v2283
      %v2703 = vmul.f32 %v2641, %v2287
      %v2704 = vmul.f32 %v2641, %v2291
      %v2705 = vmul.f32 %v2641, %v2295
      %v2706 = vmul.f32 %v2641, %v2299
      %v2707 = vmul.f32 %v2646, %v2283
      %v2708 = vmul.f32 %v2646, %v2287
      %v2709 = vmul.f32 %v2646, %v2291
      %v2710 = vmul.f32 %v2646, %v2295
      %v2711 = vmul.f32 %v2646, %v2299
      %2722 = vrot.lane.b32.xlu0 %v2702, 60
      %v2723 = vpop.permute.xlu0 %2722
      %2724 = vrot.lane.b32.xlu0 %v2703, 60
      %v2725 = vpop.permute.xlu0 %2724
      %2726 = vrot.lane.b32.xlu0 %v2704, 60
      %v2727 = vpop.permute.xlu0 %2726
      %2728 = vrot.lane.b32.xlu0 %v2705, 60
      %v2729 = vpop.permute.xlu0 %2728
      %2730 = vrot.lane.b32.xlu0 %v2706, 60
      %v2731 = vpop.permute.xlu0 %2730
      %2732 = vrot.lane.b32.xlu0 %v2707, 60
      %v2733 = vpop.permute.xlu0 %2732
      %2734 = vrot.lane.b32.xlu0 %v2708, 60
      %v2735 = vpop.permute.xlu0 %2734
      %2736 = vrot.lane.b32.xlu0 %v2709, 60
      %v2737 = vpop.permute.xlu0 %2736
      %2738 = vrot.lane.b32.xlu0 %v2710, 60
      %v2739 = vpop.permute.xlu0 %2738
      %2740 = vrot.lane.b32.xlu0 %v2711, 60
      %v2741 = vpop.permute.xlu0 %2740
      %vm2742 = vcmask 490496
      %v2743 = vsel %vm2742, %v2723, %v2725
      %v2744 = vsel %vm2742, %v2725, %v2727
      %v2745 = vsel %vm2742, %v2727, %v2729
      %v2746 = vsel %vm2742, %v2729, %v2731
      %v2747 = vsel %vm2742, %v2733, %v2735
      %v2748 = vsel %vm2742, %v2735, %v2737
      %v2749 = vsel %vm2742, %v2737, %v2739
      %v2750 = vsel %vm2742, %v2739, %v2741
      %v2759 = vadd.f32 %v2625, %v2743
      %v2760 = vadd.f32 %v2626, %v2744
      %v2761 = vadd.f32 %v2627, %v2745
      %v2762 = vadd.f32 %v2628, %v2746
      %v2763 = vadd.f32 %v2629, %v2747
      %v2764 = vadd.f32 %v2630, %v2748
      %v2765 = vadd.f32 %v2631, %v2749
      %v2766 = vadd.f32 %v2632, %v2750
      %s2767 = scalar_lea.vmem %s2, 160
      %v2768 = vld [vmem:[%s2767] sm:$0xf]
      %v2769 = vld [vmem:[%s2767 + $0x4] sm:$0xf]
      %v2770 = vunpack.c.l.bf16 %v2768
      %v2771 = vunpack.c.l.bf16 %v2769
      %2773 = vset.pattern.permute.xlu0 0
      %2774 = vperm.xlu0 %2773, %v2770
      %v2775 = vpop.permute.xlu0 %2774
      %2778 = vset.pattern.permute.xlu0 0
      %2779 = vperm.xlu0 %2778, %v2771
      %v2780 = vpop.permute.xlu0 %2779
      %v2782 = vmul.f32 %v2775, %v281
      %v2783 = vmul.f32 %v2775, %v285
      %v2784 = vmul.f32 %v2775, %v289
      %v2785 = vmul.f32 %v2775, %v293
      %v2786 = vmul.f32 %v2780, %v281
      %v2787 = vmul.f32 %v2780, %v285
      %v2788 = vmul.f32 %v2780, %v289
      %v2789 = vmul.f32 %v2780, %v293
      %2798 = vrot.lane.b32.xlu0 %v2782, 64
      %v2799 = vpop.permute.xlu0 %2798
      %2800 = vrot.lane.b32.xlu0 %v2783, 64
      %v2801 = vpop.permute.xlu0 %2800
      %2802 = vrot.lane.b32.xlu0 %v2784, 64
      %v2803 = vpop.permute.xlu0 %2802
      %2804 = vrot.lane.b32.xlu0 %v2785, 64
      %v2805 = vpop.permute.xlu0 %2804
      %2806 = vrot.lane.b32.xlu0 %v2786, 64
      %v2807 = vpop.permute.xlu0 %2806
      %2808 = vrot.lane.b32.xlu0 %v2787, 64
      %v2809 = vpop.permute.xlu0 %2808
      %2810 = vrot.lane.b32.xlu0 %v2788, 64
      %v2811 = vpop.permute.xlu0 %2810
      %2812 = vrot.lane.b32.xlu0 %v2789, 64
      %v2813 = vpop.permute.xlu0 %2812
      %v2814 = vsel %vm2158, %v2799, %v2801
      %v2815 = vsel %vm2158, %v2801, %v2803
      %v2816 = vsel %vm2158, %v2803, %v2805
      %v2817 = vsel %vm2158, %v2807, %v2809
      %v2818 = vsel %vm2158, %v2809, %v2811
      %v2819 = vsel %vm2158, %v2811, %v2813
      %v2828 = vadd.f32 %v2694, %v2814
      %v2829 = vadd.f32 %v2695, %v2815
      %v2830 = vadd.f32 %v2696, %v2816
      %v2831 = vadd.f32 %v2697, %v2805
      %v2832 = vadd.f32 %v2698, %v2817
      %v2833 = vadd.f32 %v2699, %v2818
      %v2834 = vadd.f32 %v2700, %v2819
      %v2835 = vadd.f32 %v2701, %v2813
      %v2836 = vmul.f32 %v2775, %v335
      %v2837 = vmul.f32 %v2775, %v339
      %v2838 = vmul.f32 %v2775, %v343
      %v2839 = vmul.f32 %v2775, %v347
      %v2840 = vmul.f32 %v2780, %v335
      %v2841 = vmul.f32 %v2780, %v339
      %v2842 = vmul.f32 %v2780, %v343
      %v2843 = vmul.f32 %v2780, %v347
      %2852 = vrot.lane.b32.xlu0 %v2836, 64
      %v2853 = vpop.permute.xlu0 %2852
      %2854 = vrot.lane.b32.xlu0 %v2837, 64
      %v2855 = vpop.permute.xlu0 %2854
      %2856 = vrot.lane.b32.xlu0 %v2838, 64
      %v2857 = vpop.permute.xlu0 %2856
      %2858 = vrot.lane.b32.xlu0 %v2839, 64
      %v2859 = vpop.permute.xlu0 %2858
      %2860 = vrot.lane.b32.xlu0 %v2840, 64
      %v2861 = vpop.permute.xlu0 %2860
      %2862 = vrot.lane.b32.xlu0 %v2841, 64
      %v2863 = vpop.permute.xlu0 %2862
      %2864 = vrot.lane.b32.xlu0 %v2842, 64
      %v2865 = vpop.permute.xlu0 %2864
      %2866 = vrot.lane.b32.xlu0 %v2843, 64
      %v2867 = vpop.permute.xlu0 %2866
      %v2868 = vsel %vm2158, %v2853, %v2855
      %v2869 = vsel %vm2158, %v2855, %v2857
      %v2870 = vsel %vm2158, %v2857, %v2859
      %v2871 = vsel %vm2158, %v2861, %v2863
      %v2872 = vsel %vm2158, %v2863, %v2865
      %v2873 = vsel %vm2158, %v2865, %v2867
      %v2882 = vadd.f32 %v2759, %v2868
      %v2883 = vadd.f32 %v2760, %v2869
      %v2884 = vadd.f32 %v2761, %v2870
      %v2885 = vadd.f32 %v2762, %v2859
      %v2886 = vadd.f32 %v2763, %v2871
      %v2887 = vadd.f32 %v2764, %v2872
      %v2888 = vadd.f32 %v2765, %v2873
      %v2889 = vadd.f32 %v2766, %v2867
      %s2890 = scalar_lea.vmem %s2, 168
      %v2891 = vld [vmem:[%s2890] sm:$0xf]
      %v2892 = vld [vmem:[%s2890 + $0x4] sm:$0xf]
      %v2893 = vld [vmem:[%s233] sm:$0x1f]
      %v2894 = vunpack.c.l.bf16 %v2891
      %v2895 = vunpack.c.l.bf16 %v2892
      %2897 = vset.pattern.permute.xlu0 0
      %2898 = vperm.xlu0 %2897, %v2894
      %v2899 = vpop.permute.xlu0 %2898
      %2902 = vset.pattern.permute.xlu0 0
      %2903 = vperm.xlu0 %2902, %v2895
      %v2904 = vpop.permute.xlu0 %2903
      %v2906 = vmul.f32 %v2899, %v2283
      %v2907 = vmul.f32 %v2899, %v2287
      %v2908 = vmul.f32 %v2899, %v2291
      %v2909 = vmul.f32 %v2899, %v2295
      %v2910 = vmul.f32 %v2899, %v2299
      %v2911 = vmul.f32 %v2904, %v2283
      %v2912 = vmul.f32 %v2904, %v2287
      %v2913 = vmul.f32 %v2904, %v2291
      %v2914 = vmul.f32 %v2904, %v2295
      %v2915 = vmul.f32 %v2904, %v2299
      %2926 = vrot.lane.b32.xlu0 %v2906, 63
      %v2927 = vpop.permute.xlu0 %2926
      %2928 = vrot.lane.b32.xlu0 %v2907, 63
      %v2929 = vpop.permute.xlu0 %2928
      %2930 = vrot.lane.b32.xlu0 %v2908, 63
      %v2931 = vpop.permute.xlu0 %2930
      %2932 = vrot.lane.b32.xlu0 %v2909, 63
      %v2933 = vpop.permute.xlu0 %2932
      %2934 = vrot.lane.b32.xlu0 %v2910, 63
      %v2935 = vpop.permute.xlu0 %2934
      %2936 = vrot.lane.b32.xlu0 %v2911, 63
      %v2937 = vpop.permute.xlu0 %2936
      %2938 = vrot.lane.b32.xlu0 %v2912, 63
      %v2939 = vpop.permute.xlu0 %2938
      %2940 = vrot.lane.b32.xlu0 %v2913, 63
      %v2941 = vpop.permute.xlu0 %2940
      %2942 = vrot.lane.b32.xlu0 %v2914, 63
      %v2943 = vpop.permute.xlu0 %2942
      %2944 = vrot.lane.b32.xlu0 %v2915, 63
      %v2945 = vpop.permute.xlu0 %2944
      %v2946 = vsel %vm2340, %v2927, %v2929
      %v2947 = vsel %vm2340, %v2929, %v2931
      %v2948 = vsel %vm2340, %v2931, %v2933
      %v2949 = vsel %vm2340, %v2933, %v2935
      %v2950 = vsel %vm2340, %v2937, %v2939
      %v2951 = vsel %vm2340, %v2939, %v2941
      %v2952 = vsel %vm2340, %v2941, %v2943
      %v2953 = vsel %vm2340, %v2943, %v2945
      %v2962 = vadd.f32 %v2828, %v2946
      %v2963 = vadd.f32 %v2829, %v2947
      %v2964 = vadd.f32 %v2830, %v2948
      %v2965 = vadd.f32 %v2831, %v2949
      %v2966 = vadd.f32 %v2832, %v2950
      %v2967 = vadd.f32 %v2833, %v2951
      %v2968 = vadd.f32 %v2834, %v2952
      %v2969 = vadd.f32 %v2835, %v2953
      %v2970 = vunpack.c.l.bf16 %v2893
      %v2971 = vunpack.c.h.bf16 %v2893
      %v2974 = vlaneseq
      %v2975 = vshrl.u32 %v2974, 7
      %v2976 = vsub.s32 0, %v2975
      %v2977 = vrot.slane %v2970, %v2976
      %v2978 = vlaneseq
      %v2979 = vshrl.u32 %v2978, 7
      %v2980 = vsub.s32 2, %v2979
      %v2981 = vrot.slane %v2970, %v2980
      %v2982 = vlaneseq
      %v2983 = vshrl.u32 %v2982, 7
      %v2984 = vsub.s32 4, %v2983
      %v2985 = vrot.slane %v2970, %v2984
      %v2986 = vlaneseq
      %v2987 = vshrl.u32 %v2986, 7
      %v2988 = vsub.s32 6, %v2987
      %v2989 = vrot.slane %v2970, %v2988
      %v2990 = vlaneseq
      %v2991 = vshrl.u32 %v2990, 7
      %v2992 = vsub.s32 0, %v2991
      %v2993 = vrot.slane %v2971, %v2992
      %v2999 = vlaneseq
      %v3000 = vshrl.u32 %v2999, 7
      %v3001 = vsub.s32 0, %v3000
      %v3002 = vrot.slane %v2977, %v3001
      %v3003 = vlaneseq
      %v3004 = vshrl.u32 %v3003, 7
      %v3005 = vsub.s32 0, %v3004
      %v3006 = vrot.slane %v2981, %v3005
      %v3007 = vlaneseq
      %v3008 = vshrl.u32 %v3007, 7
      %v3009 = vsub.s32 0, %v3008
      %v3010 = vrot.slane %v2985, %v3009
      %v3011 = vlaneseq
      %v3012 = vshrl.u32 %v3011, 7
      %v3013 = vsub.s32 0, %v3012
      %v3014 = vrot.slane %v2989, %v3013
      %v3015 = vlaneseq
      %v3016 = vshrl.u32 %v3015, 7
      %v3017 = vsub.s32 0, %v3016
      %v3018 = vrot.slane %v2993, %v3017
      %v3019 = vmul.f32 %v2899, %v3002
      %v3020 = vmul.f32 %v2899, %v3006
      %v3021 = vmul.f32 %v2899, %v3010
      %v3022 = vmul.f32 %v2899, %v3014
      %v3023 = vmul.f32 %v2899, %v3018
      %v3024 = vmul.f32 %v2904, %v3002
      %v3025 = vmul.f32 %v2904, %v3006
      %v3026 = vmul.f32 %v2904, %v3010
      %v3027 = vmul.f32 %v2904, %v3014
      %v3028 = vmul.f32 %v2904, %v3018
      %3039 = vrot.lane.b32.xlu0 %v3019, 63
      %v3040 = vpop.permute.xlu0 %3039
      %3041 = vrot.lane.b32.xlu0 %v3020, 63
      %v3042 = vpop.permute.xlu0 %3041
      %3043 = vrot.lane.b32.xlu0 %v3021, 63
      %v3044 = vpop.permute.xlu0 %3043
      %3045 = vrot.lane.b32.xlu0 %v3022, 63
      %v3046 = vpop.permute.xlu0 %3045
      %3047 = vrot.lane.b32.xlu0 %v3023, 63
      %v3048 = vpop.permute.xlu0 %3047
      %3049 = vrot.lane.b32.xlu0 %v3024, 63
      %v3050 = vpop.permute.xlu0 %3049
      %3051 = vrot.lane.b32.xlu0 %v3025, 63
      %v3052 = vpop.permute.xlu0 %3051
      %3053 = vrot.lane.b32.xlu0 %v3026, 63
      %v3054 = vpop.permute.xlu0 %3053
      %3055 = vrot.lane.b32.xlu0 %v3027, 63
      %v3056 = vpop.permute.xlu0 %3055
      %3057 = vrot.lane.b32.xlu0 %v3028, 63
      %v3058 = vpop.permute.xlu0 %3057
      %v3059 = vsel %vm2340, %v3040, %v3042
      %v3060 = vsel %vm2340, %v3042, %v3044
      %v3061 = vsel %vm2340, %v3044, %v3046
      %v3062 = vsel %vm2340, %v3046, %v3048
      %v3063 = vsel %vm2340, %v3050, %v3052
      %v3064 = vsel %vm2340, %v3052, %v3054
      %v3065 = vsel %vm2340, %v3054, %v3056
      %v3066 = vsel %vm2340, %v3056, %v3058
      %v3075 = vadd.f32 %v2882, %v3059
      %v3076 = vadd.f32 %v2883, %v3060
      %v3077 = vadd.f32 %v2884, %v3061
      %v3078 = vadd.f32 %v2885, %v3062
      %v3079 = vadd.f32 %v2886, %v3063
      %v3080 = vadd.f32 %v2887, %v3064
      %v3081 = vadd.f32 %v2888, %v3065
      %v3082 = vadd.f32 %v2889, %v3066
      %s3083 = scalar_lea.vmem %s2, 176
      %v3084 = vld [vmem:[%s3083] sm:$0xf]
      %v3085 = vld [vmem:[%s3083 + $0x4] sm:$0xf]
      %v3086 = vunpack.c.l.bf16 %v3084
      %v3087 = vunpack.c.l.bf16 %v3085
      %3089 = vset.pattern.permute.xlu0 0
      %3090 = vperm.xlu0 %3089, %v3086
      %v3091 = vpop.permute.xlu0 %3090
      %3094 = vset.pattern.permute.xlu0 0
      %3095 = vperm.xlu0 %3094, %v3087
      %v3096 = vpop.permute.xlu0 %3095
      %v3098 = vmul.f32 %v3091, %v2283
      %v3099 = vmul.f32 %v3091, %v2287
      %v3100 = vmul.f32 %v3091, %v2291
      %v3101 = vmul.f32 %v3091, %v2295
      %v3102 = vmul.f32 %v3091, %v2299
      %v3103 = vmul.f32 %v3096, %v2283
      %v3104 = vmul.f32 %v3096, %v2287
      %v3105 = vmul.f32 %v3096, %v2291
      %v3106 = vmul.f32 %v3096, %v2295
      %v3107 = vmul.f32 %v3096, %v2299
      %3118 = vrot.lane.b32.xlu0 %v3098, 62
      %v3119 = vpop.permute.xlu0 %3118
      %3120 = vrot.lane.b32.xlu0 %v3099, 62
      %v3121 = vpop.permute.xlu0 %3120
      %3122 = vrot.lane.b32.xlu0 %v3100, 62
      %v3123 = vpop.permute.xlu0 %3122
      %3124 = vrot.lane.b32.xlu0 %v3101, 62
      %v3125 = vpop.permute.xlu0 %3124
      %3126 = vrot.lane.b32.xlu0 %v3102, 62
      %v3127 = vpop.permute.xlu0 %3126
      %3128 = vrot.lane.b32.xlu0 %v3103, 62
      %v3129 = vpop.permute.xlu0 %3128
      %3130 = vrot.lane.b32.xlu0 %v3104, 62
      %v3131 = vpop.permute.xlu0 %3130
      %3132 = vrot.lane.b32.xlu0 %v3105, 62
      %v3133 = vpop.permute.xlu0 %3132
      %3134 = vrot.lane.b32.xlu0 %v3106, 62
      %v3135 = vpop.permute.xlu0 %3134
      %3136 = vrot.lane.b32.xlu0 %v3107, 62
      %v3137 = vpop.permute.xlu0 %3136
      %v3138 = vsel %vm2474, %v3119, %v3121
      %v3139 = vsel %vm2474, %v3121, %v3123
      %v3140 = vsel %vm2474, %v3123, %v3125
      %v3141 = vsel %vm2474, %v3125, %v3127
      %v3142 = vsel %vm2474, %v3129, %v3131
      %v3143 = vsel %vm2474, %v3131, %v3133
      %v3144 = vsel %vm2474, %v3133, %v3135
      %v3145 = vsel %vm2474, %v3135, %v3137
      %v3154 = vadd.f32 %v2962, %v3138
      %v3155 = vadd.f32 %v2963, %v3139
      %v3156 = vadd.f32 %v2964, %v3140
      %v3157 = vadd.f32 %v2965, %v3141
      %v3158 = vadd.f32 %v2966, %v3142
      %v3159 = vadd.f32 %v2967, %v3143
      %v3160 = vadd.f32 %v2968, %v3144
      %v3161 = vadd.f32 %v2969, %v3145
      %v3162 = vmul.f32 %v3091, %v3002
      %v3163 = vmul.f32 %v3091, %v3006
      %v3164 = vmul.f32 %v3091, %v3010
      %v3165 = vmul.f32 %v3091, %v3014
      %v3166 = vmul.f32 %v3091, %v3018
      %v3167 = vmul.f32 %v3096, %v3002
      %v3168 = vmul.f32 %v3096, %v3006
      %v3169 = vmul.f32 %v3096, %v3010
      %v3170 = vmul.f32 %v3096, %v3014
      %v3171 = vmul.f32 %v3096, %v3018
      %3182 = vrot.lane.b32.xlu0 %v3162, 62
      %v3183 = vpop.permute.xlu0 %3182
      %3184 = vrot.lane.b32.xlu0 %v3163, 62
      %v3185 = vpop.permute.xlu0 %3184
      %3186 = vrot.lane.b32.xlu0 %v3164, 62
      %v3187 = vpop.permute.xlu0 %3186
      %3188 = vrot.lane.b32.xlu0 %v3165, 62
      %v3189 = vpop.permute.xlu0 %3188
      %3190 = vrot.lane.b32.xlu0 %v3166, 62
      %v3191 = vpop.permute.xlu0 %3190
      %3192 = vrot.lane.b32.xlu0 %v3167, 62
      %v3193 = vpop.permute.xlu0 %3192
      %3194 = vrot.lane.b32.xlu0 %v3168, 62
      %v3195 = vpop.permute.xlu0 %3194
      %3196 = vrot.lane.b32.xlu0 %v3169, 62
      %v3197 = vpop.permute.xlu0 %3196
      %3198 = vrot.lane.b32.xlu0 %v3170, 62
      %v3199 = vpop.permute.xlu0 %3198
      %3200 = vrot.lane.b32.xlu0 %v3171, 62
      %v3201 = vpop.permute.xlu0 %3200
      %v3202 = vsel %vm2474, %v3183, %v3185
      %v3203 = vsel %vm2474, %v3185, %v3187
      %v3204 = vsel %vm2474, %v3187, %v3189
      %v3205 = vsel %vm2474, %v3189, %v3191
      %v3206 = vsel %vm2474, %v3193, %v3195
      %v3207 = vsel %vm2474, %v3195, %v3197
      %v3208 = vsel %vm2474, %v3197, %v3199
      %v3209 = vsel %vm2474, %v3199, %v3201
      %v3218 = vadd.f32 %v3075, %v3202
      %v3219 = vadd.f32 %v3076, %v3203
      %v3220 = vadd.f32 %v3077, %v3204
      %v3221 = vadd.f32 %v3078, %v3205
      %v3222 = vadd.f32 %v3079, %v3206
      %v3223 = vadd.f32 %v3080, %v3207
      %v3224 = vadd.f32 %v3081, %v3208
      %v3225 = vadd.f32 %v3082, %v3209
      %s3226 = scalar_lea.vmem %s2, 184
      %v3227 = vld [vmem:[%s3226] sm:$0xf]
      %v3228 = vld [vmem:[%s3226 + $0x4] sm:$0xf]
      %v3229 = vunpack.c.l.bf16 %v3227
      %v3230 = vunpack.c.l.bf16 %v3228
      %3232 = vset.pattern.permute.xlu0 0
      %3233 = vperm.xlu0 %3232, %v3229
      %v3234 = vpop.permute.xlu0 %3233
      %3237 = vset.pattern.permute.xlu0 0
      %3238 = vperm.xlu0 %3237, %v3230
      %v3239 = vpop.permute.xlu0 %3238
      %v3241 = vmul.f32 %v3234, %v2283
      %v3242 = vmul.f32 %v3234, %v2287
      %v3243 = vmul.f32 %v3234, %v2291
      %v3244 = vmul.f32 %v3234, %v2295
      %v3245 = vmul.f32 %v3234, %v2299
      %v3246 = vmul.f32 %v3239, %v2283
      %v3247 = vmul.f32 %v3239, %v2287
      %v3248 = vmul.f32 %v3239, %v2291
      %v3249 = vmul.f32 %v3239, %v2295
      %v3250 = vmul.f32 %v3239, %v2299
      %3261 = vrot.lane.b32.xlu0 %v3241, 61
      %v3262 = vpop.permute.xlu0 %3261
      %3263 = vrot.lane.b32.xlu0 %v3242, 61
      %v3264 = vpop.permute.xlu0 %3263
      %3265 = vrot.lane.b32.xlu0 %v3243, 61
      %v3266 = vpop.permute.xlu0 %3265
      %3267 = vrot.lane.b32.xlu0 %v3244, 61
      %v3268 = vpop.permute.xlu0 %3267
      %3269 = vrot.lane.b32.xlu0 %v3245, 61
      %v3270 = vpop.permute.xlu0 %3269
      %3271 = vrot.lane.b32.xlu0 %v3246, 61
      %v3272 = vpop.permute.xlu0 %3271
      %3273 = vrot.lane.b32.xlu0 %v3247, 61
      %v3274 = vpop.permute.xlu0 %3273
      %3275 = vrot.lane.b32.xlu0 %v3248, 61
      %v3276 = vpop.permute.xlu0 %3275
      %3277 = vrot.lane.b32.xlu0 %v3249, 61
      %v3278 = vpop.permute.xlu0 %3277
      %3279 = vrot.lane.b32.xlu0 %v3250, 61
      %v3280 = vpop.permute.xlu0 %3279
      %v3281 = vsel %vm2608, %v3262, %v3264
      %v3282 = vsel %vm2608, %v3264, %v3266
      %v3283 = vsel %vm2608, %v3266, %v3268
      %v3284 = vsel %vm2608, %v3268, %v3270
      %v3285 = vsel %vm2608, %v3272, %v3274
      %v3286 = vsel %vm2608, %v3274, %v3276
      %v3287 = vsel %vm2608, %v3276, %v3278
      %v3288 = vsel %vm2608, %v3278, %v3280
      %v3297 = vadd.f32 %v3154, %v3281
      %v3298 = vadd.f32 %v3155, %v3282
      %v3299 = vadd.f32 %v3156, %v3283
      %v3300 = vadd.f32 %v3157, %v3284
      %v3301 = vadd.f32 %v3158, %v3285
      %v3302 = vadd.f32 %v3159, %v3286
      %v3303 = vadd.f32 %v3160, %v3287
      %v3304 = vadd.f32 %v3161, %v3288
      %v3305 = vmul.f32 %v3234, %v3002
      %v3306 = vmul.f32 %v3234, %v3006
      %v3307 = vmul.f32 %v3234, %v3010
      %v3308 = vmul.f32 %v3234, %v3014
      %v3309 = vmul.f32 %v3234, %v3018
      %v3310 = vmul.f32 %v3239, %v3002
      %v3311 = vmul.f32 %v3239, %v3006
      %v3312 = vmul.f32 %v3239, %v3010
      %v3313 = vmul.f32 %v3239, %v3014
      %v3314 = vmul.f32 %v3239, %v3018
      %3325 = vrot.lane.b32.xlu0 %v3305, 61
      %v3326 = vpop.permute.xlu0 %3325
      %3327 = vrot.lane.b32.xlu0 %v3306, 61
      %v3328 = vpop.permute.xlu0 %3327
      %3329 = vrot.lane.b32.xlu0 %v3307, 61
      %v3330 = vpop.permute.xlu0 %3329
      %3331 = vrot.lane.b32.xlu0 %v3308, 61
      %v3332 = vpop.permute.xlu0 %3331
      %3333 = vrot.lane.b32.xlu0 %v3309, 61
      %v3334 = vpop.permute.xlu0 %3333
      %3335 = vrot.lane.b32.xlu0 %v3310, 61
      %v3336 = vpop.permute.xlu0 %3335
      %3337 = vrot.lane.b32.xlu0 %v3311, 61
      %v3338 = vpop.permute.xlu0 %3337
      %3339 = vrot.lane.b32.xlu0 %v3312, 61
      %v3340 = vpop.permute.xlu0 %3339
      %3341 = vrot.lane.b32.xlu0 %v3313, 61
      %v3342 = vpop.permute.xlu0 %3341
      %3343 = vrot.lane.b32.xlu0 %v3314, 61
      %v3344 = vpop.permute.xlu0 %3343
      %v3345 = vsel %vm2608, %v3326, %v3328
      %v3346 = vsel %vm2608, %v3328, %v3330
      %v3347 = vsel %vm2608, %v3330, %v3332
      %v3348 = vsel %vm2608, %v3332, %v3334
      %v3349 = vsel %vm2608, %v3336, %v3338
      %v3350 = vsel %vm2608, %v3338, %v3340
      %v3351 = vsel %vm2608, %v3340, %v3342
      %v3352 = vsel %vm2608, %v3342, %v3344
      %v3361 = vadd.f32 %v3218, %v3345
      %v3362 = vadd.f32 %v3219, %v3346
      %v3363 = vadd.f32 %v3220, %v3347
      %v3364 = vadd.f32 %v3221, %v3348
      %v3365 = vadd.f32 %v3222, %v3349
      %v3366 = vadd.f32 %v3223, %v3350
      %v3367 = vadd.f32 %v3224, %v3351
      %v3368 = vadd.f32 %v3225, %v3352
      %s3369 = scalar_lea.vmem %s2, 192
      %v3370 = vld [vmem:[%s3369] sm:$0xf]
      %v3371 = vld [vmem:[%s3369 + $0x4] sm:$0xf]
      %v3372 = vunpack.c.l.bf16 %v3370
      %v3373 = vunpack.c.l.bf16 %v3371
      %3375 = vset.pattern.permute.xlu0 0
      %3376 = vperm.xlu0 %3375, %v3372
      %v3377 = vpop.permute.xlu0 %3376
      %3380 = vset.pattern.permute.xlu0 0
      %3381 = vperm.xlu0 %3380, %v3373
      %v3382 = vpop.permute.xlu0 %3381
      %v3384 = vmul.f32 %v3377, %v2283
      %v3385 = vmul.f32 %v3377, %v2287
      %v3386 = vmul.f32 %v3377, %v2291
      %v3387 = vmul.f32 %v3377, %v2295
      %v3388 = vmul.f32 %v3377, %v2299
      %v3389 = vmul.f32 %v3382, %v2283
      %v3390 = vmul.f32 %v3382, %v2287
      %v3391 = vmul.f32 %v3382, %v2291
      %v3392 = vmul.f32 %v3382, %v2295
      %v3393 = vmul.f32 %v3382, %v2299
      %3404 = vrot.lane.b32.xlu0 %v3384, 60
      %v3405 = vpop.permute.xlu0 %3404
      %3406 = vrot.lane.b32.xlu0 %v3385, 60
      %v3407 = vpop.permute.xlu0 %3406
      %3408 = vrot.lane.b32.xlu0 %v3386, 60
      %v3409 = vpop.permute.xlu0 %3408
      %3410 = vrot.lane.b32.xlu0 %v3387, 60
      %v3411 = vpop.permute.xlu0 %3410
      %3412 = vrot.lane.b32.xlu0 %v3388, 60
      %v3413 = vpop.permute.xlu0 %3412
      %3414 = vrot.lane.b32.xlu0 %v3389, 60
      %v3415 = vpop.permute.xlu0 %3414
      %3416 = vrot.lane.b32.xlu0 %v3390, 60
      %v3417 = vpop.permute.xlu0 %3416
      %3418 = vrot.lane.b32.xlu0 %v3391, 60
      %v3419 = vpop.permute.xlu0 %3418
      %3420 = vrot.lane.b32.xlu0 %v3392, 60
      %v3421 = vpop.permute.xlu0 %3420
      %3422 = vrot.lane.b32.xlu0 %v3393, 60
      %v3423 = vpop.permute.xlu0 %3422
      %v3424 = vsel %vm2742, %v3405, %v3407
      %v3425 = vsel %vm2742, %v3407, %v3409
      %v3426 = vsel %vm2742, %v3409, %v3411
      %v3427 = vsel %vm2742, %v3411, %v3413
      %v3428 = vsel %vm2742, %v3415, %v3417
      %v3429 = vsel %vm2742, %v3417, %v3419
      %v3430 = vsel %vm2742, %v3419, %v3421
      %v3431 = vsel %vm2742, %v3421, %v3423
      %v3440 = vadd.f32 %v3297, %v3424
      %v3441 = vadd.f32 %v3298, %v3425
      %v3442 = vadd.f32 %v3299, %v3426
      %v3443 = vadd.f32 %v3300, %v3427
      %v3444 = vadd.f32 %v3301, %v3428
      %v3445 = vadd.f32 %v3302, %v3429
      %v3446 = vadd.f32 %v3303, %v3430
      %v3447 = vadd.f32 %v3304, %v3431
      %v3448 = vmul.f32 %v3377, %v3002
      %v3449 = vmul.f32 %v3377, %v3006
      %v3450 = vmul.f32 %v3377, %v3010
      %v3451 = vmul.f32 %v3377, %v3014
      %v3452 = vmul.f32 %v3377, %v3018
      %v3453 = vmul.f32 %v3382, %v3002
      %v3454 = vmul.f32 %v3382, %v3006
      %v3455 = vmul.f32 %v3382, %v3010
      %v3456 = vmul.f32 %v3382, %v3014
      %v3457 = vmul.f32 %v3382, %v3018
      %3468 = vrot.lane.b32.xlu0 %v3448, 60
      %v3469 = vpop.permute.xlu0 %3468
      %3470 = vrot.lane.b32.xlu0 %v3449, 60
      %v3471 = vpop.permute.xlu0 %3470
      %3472 = vrot.lane.b32.xlu0 %v3450, 60
      %v3473 = vpop.permute.xlu0 %3472
      %3474 = vrot.lane.b32.xlu0 %v3451, 60
      %v3475 = vpop.permute.xlu0 %3474
      %3476 = vrot.lane.b32.xlu0 %v3452, 60
      %v3477 = vpop.permute.xlu0 %3476
      %3478 = vrot.lane.b32.xlu0 %v3453, 60
      %v3479 = vpop.permute.xlu0 %3478
      %3480 = vrot.lane.b32.xlu0 %v3454, 60
      %v3481 = vpop.permute.xlu0 %3480
      %3482 = vrot.lane.b32.xlu0 %v3455, 60
      %v3483 = vpop.permute.xlu0 %3482
      %3484 = vrot.lane.b32.xlu0 %v3456, 60
      %v3485 = vpop.permute.xlu0 %3484
      %3486 = vrot.lane.b32.xlu0 %v3457, 60
      %v3487 = vpop.permute.xlu0 %3486
      %v3488 = vsel %vm2742, %v3469, %v3471
      %v3489 = vsel %vm2742, %v3471, %v3473
      %v3490 = vsel %vm2742, %v3473, %v3475
      %v3491 = vsel %vm2742, %v3475, %v3477
      %v3492 = vsel %vm2742, %v3479, %v3481
      %v3493 = vsel %vm2742, %v3481, %v3483
      %v3494 = vsel %vm2742, %v3483, %v3485
      %v3495 = vsel %vm2742, %v3485, %v3487
      %v3504 = vadd.f32 %v3361, %v3488
      %v3505 = vadd.f32 %v3362, %v3489
      %v3506 = vadd.f32 %v3363, %v3490
      %v3507 = vadd.f32 %v3364, %v3491
      %v3508 = vadd.f32 %v3365, %v3492
      %v3509 = vadd.f32 %v3366, %v3493
      %v3510 = vadd.f32 %v3367, %v3494
      %v3511 = vadd.f32 %v3368, %v3495
      %v3512 = vld [vmem:[%s3] sm:$0xff]
      %v3513 = vld [vmem:[%s3 + $0x8] sm:$0xff]
      %3515 = vset.pattern.permute.xlu0 0
      %3516 = vperm.xlu0 %3515, %v3512
      %v3517 = vpop.permute.xlu0 %3516
      %3520 = vset.pattern.permute.xlu0 0
      %3521 = vperm.xlu0 %3520, %v3513
      %v3522 = vpop.permute.xlu0 %3521
      %v3524 = vadd.f32 %v3440, %v3517
      %v3525 = vadd.f32 %v3441, %v3517
      %v3526 = vadd.f32 %v3442, %v3517
      %v3527 = vadd.f32 %v3443, %v3517
      %v3528 = vadd.f32 %v3444, %v3522
      %v3529 = vadd.f32 %v3445, %v3522
      %v3530 = vadd.f32 %v3446, %v3522
      %v3531 = vadd.f32 %v3447, %v3522
      %v3532 = vmax.f32 %v3524, 0.0
      %v3533 = vmax.f32 %v3525, 0.0
      %v3534 = vmax.f32 %v3526, 0.0
      %v3535 = vmax.f32 %v3527, 0.0
      %v3536 = vmax.f32 %v3528, 0.0
      %v3537 = vmax.f32 %v3529, 0.0
      %v3538 = vmax.f32 %v3530, 0.0
      %v3539 = vmax.f32 %v3531, 0.0
      %v3540 = vadd.f32 %v3504, %v3517
      %v3541 = vadd.f32 %v3505, %v3517
      %v3542 = vadd.f32 %v3506, %v3517
      %v3543 = vadd.f32 %v3507, %v3517
      %v3544 = vadd.f32 %v3508, %v3522
      %v3545 = vadd.f32 %v3509, %v3522
      %v3546 = vadd.f32 %v3510, %v3522
      %v3547 = vadd.f32 %v3511, %v3522
      %v3548 = vmax.f32 %v3540, 0.0
      %v3549 = vmax.f32 %v3541, 0.0
      %v3550 = vmax.f32 %v3542, 0.0
      %v3551 = vmax.f32 %v3543, 0.0
      %v3552 = vmax.f32 %v3544, 0.0
      %v3553 = vmax.f32 %v3545, 0.0
      %v3554 = vmax.f32 %v3546, 0.0
      %v3555 = vmax.f32 %v3547, 0.0
      %v3556 = vmax.f32 %v3532, %v3548
      %v3557 = vmax.f32 %v3533, %v3549
      %v3558 = vmax.f32 %v3534, %v3550
      %v3559 = vmax.f32 %v3535, %v3551
      %v3560 = vmax.f32 %v3536, %v3552
      %v3561 = vmax.f32 %v3537, %v3553
      %v3562 = vmax.f32 %v3538, %v3554
      %v3563 = vmax.f32 %v3539, %v3555
      %3564 = vst [vmem:[#allocation2] sm:$0xff] %v3556
      %3565 = vst [vmem:[#allocation2 + $0x8] sm:$0xff] %v3557
      %3566 = vst [vmem:[#allocation2 + $0x10] sm:$0xff] %v3558
      %3567 = vst.msk [vmem:[#allocation2 + $0x18] sm:$0xff] %vm2158, %v3559
      %3568 = vst [vmem:[#allocation2 + $0x20] sm:$0xff] %v3560
      %3569 = vst [vmem:[#allocation2 + $0x28] sm:$0xff] %v3561
      %3570 = vst [vmem:[#allocation2 + $0x30] sm:$0xff] %v3562
      %3571 = vst.msk [vmem:[#allocation2 + $0x38] sm:$0xff] %vm2158, %v3563
      %v3572 = vld [vmem:[#allocation2] sm:$0xff]
      %v3573 = vld [vmem:[#allocation2 + $0x8] sm:$0xff]
      %v3574 = vld [vmem:[#allocation2 + $0x10] sm:$0xff]
      %v3575 = vld [vmem:[#allocation2 + $0x18] sm:$0xff]
      %v3576 = vld [vmem:[#allocation2 + $0x20] sm:$0xff]
      %v3577 = vld [vmem:[#allocation2 + $0x28] sm:$0xff]
      %v3578 = vld [vmem:[#allocation2 + $0x30] sm:$0xff]
      %v3579 = vld [vmem:[#allocation2 + $0x38] sm:$0xff]
      %3588 = vrot.lane.b32.xlu0 %v3572, 127
      %v3589 = vpop.permute.xlu0 %3588
      %3590 = vrot.lane.b32.xlu0 %v3573, 127
      %v3591 = vpop.permute.xlu0 %3590
      %3592 = vrot.lane.b32.xlu0 %v3574, 127
      %v3593 = vpop.permute.xlu0 %3592
      %3594 = vrot.lane.b32.xlu0 %v3575, 127
      %v3595 = vpop.permute.xlu0 %3594
      %3596 = vrot.lane.b32.xlu0 %v3576, 127
      %v3597 = vpop.permute.xlu0 %3596
      %3598 = vrot.lane.b32.xlu0 %v3577, 127
      %v3599 = vpop.permute.xlu0 %3598
      %3600 = vrot.lane.b32.xlu0 %v3578, 127
      %v3601 = vpop.permute.xlu0 %3600
      %3602 = vrot.lane.b32.xlu0 %v3579, 127
      %v3603 = vpop.permute.xlu0 %3602
      %v3604 = vsel %vm411, %v3589, %v3591
      %v3605 = vsel %vm411, %v3591, %v3593
      %v3606 = vsel %vm411, %v3593, %v3595
      %v3607 = vsel %vm411, %v3597, %v3599
      %v3608 = vsel %vm411, %v3599, %v3601
      %v3609 = vsel %vm411, %v3601, %v3603
      %v3618 = vmax.f32 %v3572, %v3604
      %v3619 = vmax.f32 %v3573, %v3605
      %v3620 = vmax.f32 %v3574, %v3606
      %v3621 = vmax.f32 %v3575, %v3595
      %v3622 = vmax.f32 %v3576, %v3607
      %v3623 = vmax.f32 %v3577, %v3608
      %v3624 = vmax.f32 %v3578, %v3609
      %v3625 = vmax.f32 %v3579, %v3603
      %v3626 = vpack.c.bf16 %v3622, %v3618
      %v3627 = vpack.c.bf16 %v3623, %v3619
      %v3628 = vpack.c.bf16 %v3624, %v3620
      %v3629 = vpack.c.bf16 %v3625, %v3621
      %v3630 = vld [vmem:[%s4] sm:$0xff]
      %v3631 = vld [vmem:[%s4 + $0x8] sm:$0xff]
      %v3632 = vld [vmem:[%s4 + $0x10] sm:$0xff]
      %v3633 = vld [vmem:[%s4 + $0x18] sm:$0xff]
      %v3634 = vld [vmem:[%s4 + $0x20] sm:$0xff]
      %v3635 = vld [vmem:[%s4 + $0x28] sm:$0xff]
      %v3636 = vld [vmem:[%s4 + $0x30] sm:$0xff]
      %v3637 = vld [vmem:[%s4 + $0x38] sm:$0xff]
      %v3638 = vld [vmem:[%s4 + $0x40] sm:$0xff]
      %v3639 = vld [vmem:[%s4 + $0x48] sm:$0xff]
      %v3640 = vld [vmem:[%s4 + $0x50] sm:$0xff]
      %v3641 = vld [vmem:[%s4 + $0x58] sm:$0xff]
      %v3642 = vld [vmem:[%s4 + $0x60] sm:$0xff]
      %v3643 = vld [vmem:[%s4 + $0x68] sm:$0xff]
      %v3644 = vld [vmem:[%s4 + $0x70] sm:$0xff]
      %v3645 = vld [vmem:[%s4 + $0x78] sm:$0xff]
      %v3646 = vld [vmem:[%s4 + $0x80] sm:$0xff]
      %v3647 = vld [vmem:[%s4 + $0x88] sm:$0xff]
      %v3648 = vld [vmem:[%s4 + $0x90] sm:$0xff]
      %v3649 = vld [vmem:[%s4 + $0x98] sm:$0xff]
      %v3650 = vld [vmem:[%s4 + $0xa0] sm:$0xff]
      %v3651 = vld [vmem:[%s4 + $0xa8] sm:$0xff]
      %v3652 = vld [vmem:[%s4 + $0xb0] sm:$0xff]
      %v3653 = vld [vmem:[%s4 + $0xb8] sm:$0xff]
      %v3654 = vld [vmem:[%s4 + $0xc0] sm:$0xff]
      %v3655 = vld [vmem:[%s4 + $0xc8] sm:$0xff]
      %v3656 = vld [vmem:[%s4 + $0xd0] sm:$0xff]
      %v3657 = vld [vmem:[%s4 + $0xd8] sm:$0xff]
      %v3658 = vld [vmem:[%s4 + $0xe0] sm:$0xff]
      %v3659 = vld [vmem:[%s4 + $0xe8] sm:$0xff]
      %v3660 = vld [vmem:[%s4 + $0xf0] sm:$0xff]
      %v3661 = vld [vmem:[%s4 + $0xf8] sm:$0xff]
      %v3662 = vld [vmem:[%s4 + $0x100] sm:$0xff]
      %v3663 = vld [vmem:[%s4 + $0x108] sm:$0xff]
      %v3664 = vld [vmem:[%s4 + $0x110] sm:$0xff]
      %v3665 = vld [vmem:[%s4 + $0x118] sm:$0xff]
      %v3666 = vld [vmem:[%s4 + $0x120] sm:$0xff]
      %v3667 = vld [vmem:[%s4 + $0x128] sm:$0xff]
      %v3668 = vld [vmem:[%s4 + $0x130] sm:$0xff]
      %v3669 = vld [vmem:[%s4 + $0x138] sm:$0xff]
      %v3670 = vld [vmem:[%s4 + $0x140] sm:$0xff]
      %v3671 = vld [vmem:[%s4 + $0x148] sm:$0xff]
      %v3672 = vld [vmem:[%s4 + $0x150] sm:$0xff]
      %v3673 = vld [vmem:[%s4 + $0x158] sm:$0xff]
      %v3674 = vld [vmem:[%s4 + $0x160] sm:$0xff]
      %v3675 = vld [vmem:[%s4 + $0x168] sm:$0xff]
      %v3676 = vld [vmem:[%s4 + $0x170] sm:$0xff]
      %v3677 = vld [vmem:[%s4 + $0x178] sm:$0xff]
      %v3678 = vld [vmem:[%s4 + $0x180] sm:$0xff]
      %v3679 = vld [vmem:[%s4 + $0x188] sm:$0xff]
      %v3680 = vld [vmem:[%s4 + $0x190] sm:$0xff]
      %v3681 = vld [vmem:[%s4 + $0x198] sm:$0xff]
      %v3682 = vld [vmem:[%s4 + $0x1a0] sm:$0xff]
      %v3683 = vld [vmem:[%s4 + $0x1a8] sm:$0xff]
      %v3684 = vld [vmem:[%s4 + $0x1b0] sm:$0xff]
      %v3685 = vld [vmem:[%s4 + $0x1b8] sm:$0xff]
      %v3742 = vunpack.c.l.b16 %v3630
      %v3743 = vunpack.c.h.b16 %v3630
      %v3744 = vunpack.c.l.b16 %v3631
      %v3745 = vunpack.c.h.b16 %v3631
      %v3746 = vunpack.c.l.b16 %v3632
      %v3747 = vunpack.c.h.b16 %v3632
      %v3748 = vunpack.c.l.b16 %v3633
      %v3749 = vunpack.c.h.b16 %v3633
      %v3750 = vunpack.c.l.b16 %v3634
      %v3751 = vunpack.c.h.b16 %v3634
      %v3752 = vunpack.c.l.b16 %v3635
      %v3753 = vunpack.c.h.b16 %v3635
      %v3754 = vunpack.c.l.b16 %v3636
      %v3755 = vunpack.c.h.b16 %v3636
      %v3756 = vunpack.c.l.b16 %v3637
      %v3757 = vunpack.c.h.b16 %v3637
      %v3758 = vunpack.c.l.b16 %v3638
      %v3759 = vunpack.c.h.b16 %v3638
      %v3760 = vunpack.c.l.b16 %v3639
      %v3761 = vunpack.c.h.b16 %v3639
      %v3762 = vunpack.c.l.b16 %v3640
      %v3763 = vunpack.c.h.b16 %v3640
      %v3764 = vunpack.c.l.b16 %v3641
      %v3765 = vunpack.c.h.b16 %v3641
      %v3766 = vunpack.c.l.b16 %v3642
      %v3767 = vunpack.c.h.b16 %v3642
      %v3768 = vunpack.c.l.b16 %v3643
      %v3769 = vunpack.c.h.b16 %v3643
      %v3770 = vunpack.c.l.b16 %v3644
      %v3771 = vunpack.c.h.b16 %v3644
      %v3772 = vunpack.c.l.b16 %v3645
      %v3773 = vunpack.c.h.b16 %v3645
      %v3774 = vunpack.c.l.b16 %v3646
      %v3775 = vunpack.c.h.b16 %v3646
      %v3776 = vunpack.c.l.b16 %v3647
      %v3777 = vunpack.c.h.b16 %v3647
      %v3778 = vunpack.c.l.b16 %v3648
      %v3779 = vunpack.c.h.b16 %v3648
      %v3780 = vunpack.c.l.b16 %v3649
      %v3781 = vunpack.c.h.b16 %v3649
      %v3782 = vunpack.c.l.b16 %v3650
      %v3783 = vunpack.c.h.b16 %v3650
      %v3784 = vunpack.c.l.b16 %v3651
      %v3785 = vunpack.c.h.b16 %v3651
      %v3786 = vunpack.c.l.b16 %v3652
      %v3787 = vunpack.c.h.b16 %v3652
      %v3788 = vunpack.c.l.b16 %v3653
      %v3789 = vunpack.c.h.b16 %v3653
      %v3790 = vunpack.c.l.b16 %v3654
      %v3791 = vunpack.c.h.b16 %v3654
      %v3792 = vunpack.c.l.b16 %v3655
      %v3793 = vunpack.c.h.b16 %v3655
      %v3794 = vunpack.c.l.b16 %v3656
      %v3795 = vunpack.c.h.b16 %v3656
      %v3796 = vunpack.c.l.b16 %v3657
      %v3797 = vunpack.c.h.b16 %v3657
      %v3798 = vunpack.c.l.b16 %v3658
      %v3799 = vunpack.c.h.b16 %v3658
      %v3800 = vunpack.c.l.b16 %v3659
      %v3801 = vunpack.c.h.b16 %v3659
      %v3802 = vunpack.c.l.b16 %v3660
      %v3803 = vunpack.c.h.b16 %v3660
      %v3804 = vunpack.c.l.b16 %v3661
      %v3805 = vunpack.c.h.b16 %v3661
      %v3806 = vunpack.c.l.b16 %v3662
      %v3807 = vunpack.c.h.b16 %v3662
      %v3808 = vunpack.c.l.b16 %v3663
      %v3809 = vunpack.c.h.b16 %v3663
      %v3810 = vunpack.c.l.b16 %v3664
      %v3811 = vunpack.c.h.b16 %v3664
      %v3812 = vunpack.c.l.b16 %v3665
      %v3813 = vunpack.c.h.b16 %v3665
      %v3814 = vunpack.c.l.b16 %v3666
      %v3815 = vunpack.c.h.b16 %v3666
      %v3816 = vunpack.c.l.b16 %v3667
      %v3817 = vunpack.c.h.b16 %v3667
      %v3818 = vunpack.c.l.b16 %v3668
      %v3819 = vunpack.c.h.b16 %v3668
      %v3820 = vunpack.c.l.b16 %v3669
      %v3821 = vunpack.c.h.b16 %v3669
      %v3822 = vunpack.c.l.b16 %v3670
      %v3823 = vunpack.c.h.b16 %v3670
      %v3824 = vunpack.c.l.b16 %v3671
      %v3825 = vunpack.c.h.b16 %v3671
      %v3826 = vunpack.c.l.b16 %v3672
      %v3827 = vunpack.c.h.b16 %v3672
      %v3828 = vunpack.c.l.b16 %v3673
      %v3829 = vunpack.c.h.b16 %v3673
      %v3830 = vunpack.c.l.b16 %v3674
      %v3831 = vunpack.c.h.b16 %v3674
      %v3832 = vunpack.c.l.b16 %v3675
      %v3833 = vunpack.c.h.b16 %v3675
      %v3834 = vunpack.c.l.b16 %v3676
      %v3835 = vunpack.c.h.b16 %v3676
      %v3836 = vunpack.c.l.b16 %v3677
      %v3837 = vunpack.c.h.b16 %v3677
      %v3838 = vunpack.c.l.b16 %v3678
      %v3839 = vunpack.c.h.b16 %v3678
      %v3840 = vunpack.c.l.b16 %v3679
      %v3841 = vunpack.c.h.b16 %v3679
      %v3842 = vunpack.c.l.b16 %v3680
      %v3843 = vunpack.c.h.b16 %v3680
      %v3844 = vunpack.c.l.b16 %v3681
      %v3845 = vunpack.c.h.b16 %v3681
      %v3846 = vunpack.c.l.b16 %v3682
      %v3847 = vunpack.c.h.b16 %v3682
      %v3848 = vunpack.c.l.b16 %v3683
      %v3849 = vunpack.c.h.b16 %v3683
      %v3850 = vunpack.c.l.b16 %v3684
      %v3851 = vunpack.c.h.b16 %v3684
      %v3852 = vunpack.c.l.b16 %v3685
      %v3853 = vunpack.c.h.b16 %v3685
      %v3854 = vpack.c.b16 %v3744, %v3742
      %v3855 = vpack.c.b16 %v3745, %v3743
      %v3856 = vpack.c.b16 %v3748, %v3746
      %v3857 = vpack.c.b16 %v3749, %v3747
      %v3858 = vpack.c.b16 %v3752, %v3750
      %v3859 = vpack.c.b16 %v3753, %v3751
      %v3860 = vpack.c.b16 %v3756, %v3754
      %v3861 = vpack.c.b16 %v3757, %v3755
      %v3862 = vpack.c.b16 %v3760, %v3758
      %v3863 = vpack.c.b16 %v3761, %v3759
      %v3864 = vpack.c.b16 %v3764, %v3762
      %v3865 = vpack.c.b16 %v3765, %v3763
      %v3866 = vpack.c.b16 %v3768, %v3766
      %v3867 = vpack.c.b16 %v3769, %v3767
      %v3868 = vpack.c.b16 %v3772, %v3770
      %v3869 = vpack.c.b16 %v3773, %v3771
      %v3870 = vpack.c.b16 %v3776, %v3774
      %v3871 = vpack.c.b16 %v3777, %v3775
      %v3872 = vpack.c.b16 %v3780, %v3778
      %v3873 = vpack.c.b16 %v3781, %v3779
      %v3874 = vpack.c.b16 %v3784, %v3782
      %v3875 = vpack.c.b16 %v3785, %v3783
      %v3876 = vpack.c.b16 %v3788, %v3786
      %v3877 = vpack.c.b16 %v3789, %v3787
      %v3878 = vpack.c.b16 %v3792, %v3790
      %v3879 = vpack.c.b16 %v3793, %v3791
      %v3880 = vpack.c.b16 %v3796, %v3794
      %v3881 = vpack.c.b16 %v3797, %v3795
      %v3882 = vpack.c.b16 %v3800, %v3798
      %v3883 = vpack.c.b16 %v3801, %v3799
      %v3884 = vpack.c.b16 %v3804, %v3802
      %v3885 = vpack.c.b16 %v3805, %v3803
      %v3886 = vpack.c.b16 %v3808, %v3806
      %v3887 = vpack.c.b16 %v3809, %v3807
      %v3888 = vpack.c.b16 %v3812, %v3810
      %v3889 = vpack.c.b16 %v3813, %v3811
      %v3890 = vpack.c.b16 %v3816, %v3814
      %v3891 = vpack.c.b16 %v3817, %v3815
      %v3892 = vpack.c.b16 %v3820, %v3818
      %v3893 = vpack.c.b16 %v3821, %v3819
      %v3894 = vpack.c.b16 %v3824, %v3822
      %v3895 = vpack.c.b16 %v3825, %v3823
      %v3896 = vpack.c.b16 %v3828, %v3826
      %v3897 = vpack.c.b16 %v3829, %v3827
      %v3898 = vpack.c.b16 %v3832, %v3830
      %v3899 = vpack.c.b16 %v3833, %v3831
      %v3900 = vpack.c.b16 %v3836, %v3834
      %v3901 = vpack.c.b16 %v3837, %v3835
      %v3902 = vpack.c.b16 %v3840, %v3838
      %v3903 = vpack.c.b16 %v3841, %v3839
      %v3904 = vpack.c.b16 %v3844, %v3842
      %v3905 = vpack.c.b16 %v3845, %v3843
      %v3906 = vpack.c.b16 %v3848, %v3846
      %v3907 = vpack.c.b16 %v3849, %v3847
      %v3908 = vpack.c.b16 %v3852, %v3850
      %v3909 = vpack.c.b16 %v3853, %v3851
      %v3965 = vsel %vm2340, %v3629, 0
      %vm3967 = vcmask 1046528
      %vm3968 = vcmask 1047552
      %v3969 = vsel %vm3967, 4294967295, 65535
      %v3970 = vsel %vm3968, %v3969, 0
      %v3972 = vand.u32 %v3908, %v3970
      %v3975 = vand.u32 %v3909, %v3970
      %3977 = vmatprep.subr.bf16.mxu0 %v3855
      %3978 = vmatpush1.bf16.msra.mxu0 %v3854
      %3979 = vmatprep.subr.bf16.mxu0 %v3857
      %3980 = vmatpush1.bf16.msra.mxu0 %v3856
      %3981 = vmatprep.subr.bf16.mxu0 %v3859
      %3982 = vmatpush1.bf16.msra.mxu0 %v3858
      %3983 = vmatprep.subr.bf16.mxu0 %v3861
      %3984 = vmatpush1.bf16.msra.mxu0 %v3860
      %3985 = vmatprep.subr.bf16.mxu0 %v3863
      %3986 = vmatpush1.bf16.msra.mxu0 %v3862
      %3987 = vmatprep.subr.bf16.mxu0 %v3865
      %3988 = vmatpush1.bf16.msra.mxu0 %v3864
      %3989 = vmatprep.subr.bf16.mxu0 %v3867
      %3990 = vmatpush1.bf16.msra.mxu0 %v3866
      %3991 = vmatprep.subr.bf16.mxu0 %v3869
      %3992 = vmatpush1.bf16.msra.mxu0 %v3868
      %3993 = vmatprep.subr.bf16.mxu0 %v3871
      %3994 = vmatpush1.bf16.msra.mxu0 %v3870
      %3995 = vmatprep.subr.bf16.mxu0 %v3873
      %3996 = vmatpush1.bf16.msra.mxu0 %v3872
      %3997 = vmatprep.subr.bf16.mxu0 %v3875
      %3998 = vmatpush1.bf16.msra.mxu0 %v3874
      %3999 = vmatprep.subr.bf16.mxu0 %v3877
      %4000 = vmatpush1.bf16.msra.mxu0 %v3876
      %4001 = vmatprep.subr.bf16.mxu0 %v3879
      %4002 = vmatpush1.bf16.msra.mxu0 %v3878
      %4003 = vmatprep.subr.bf16.mxu0 %v3881
      %4004 = vmatpush1.bf16.msra.mxu0 %v3880
      %4005 = vmatprep.subr.bf16.mxu0 %v3883
      %4006 = vmatpush1.bf16.msra.mxu0 %v3882
      %4007 = vmatprep.subr.bf16.mxu0 %v3885
      %4008 = vmatpush1.bf16.msra.mxu0 %v3884
      %4009 = vmatprep.mubr.bf16.mxu0 %v3627
      %4010 = vmatmul.mubr.bf16.gmra.mrb[0].mxu0 %v3626
      %v4011 = vpop.f32.mrb[0].mxu0
      %v4012 = vadd.f32 0.0, %v4011
      %v4013 = vpop.f32.mrb[0].mxu0
      %v4014 = vadd.f32 0.0, %v4013
      %v4015 = vpop.f32.mrb[0].mxu0
      %v4016 = vadd.f32 0.0, %v4015
      %v4017 = vpop.f32.mrb[0].mxu0
      %v4018 = vadd.f32 0.0, %v4017
      %4019 = vdwg.mxu0
      %4020 = vmatprep.subr.bf16.mxu0 %v3887
      %4021 = vmatpush1.bf16.msra.mxu0 %v3886
      %4022 = vmatprep.subr.bf16.mxu0 %v3889
      %4023 = vmatpush1.bf16.msra.mxu0 %v3888
      %4024 = vmatprep.subr.bf16.mxu0 %v3891
      %4025 = vmatpush1.bf16.msra.mxu0 %v3890
      %4026 = vmatprep.subr.bf16.mxu0 %v3893
      %4027 = vmatpush1.bf16.msra.mxu0 %v3892
      %4028 = vmatprep.subr.bf16.mxu0 %v3895
      %4029 = vmatpush1.bf16.msra.mxu0 %v3894
      %4030 = vmatprep.subr.bf16.mxu0 %v3897
      %4031 = vmatpush1.bf16.msra.mxu0 %v3896
      %4032 = vmatprep.subr.bf16.mxu0 %v3899
      %4033 = vmatpush1.bf16.msra.mxu0 %v3898
      %4034 = vmatprep.subr.bf16.mxu0 %v3901
      %4035 = vmatpush1.bf16.msra.mxu0 %v3900
      %4036 = vmatprep.subr.bf16.mxu0 %v3903
      %4037 = vmatpush1.bf16.msra.mxu0 %v3902
      %4038 = vmatprep.subr.bf16.mxu0 %v3905
      %4039 = vmatpush1.bf16.msra.mxu0 %v3904
      %4040 = vmatprep.subr.bf16.mxu0 %v3907
      %4041 = vmatpush1.bf16.msra.mxu0 %v3906
      %4042 = vmatprep.subr.bf16.mxu0 %v3975
      %4043 = vmatpush1.bf16.msra.mxu0 %v3972
      %4044 = vmatprep.subr.bf16.mxu0 0
      %4045 = vmatpush1.bf16.msra.mxu0 0
      %4046 = vmatprep.subr.bf16.mxu0 0
      %4047 = vmatpush1.bf16.msra.mxu0 0
      %4048 = vmatprep.subr.bf16.mxu0 0
      %4049 = vmatpush1.bf16.msra.mxu0 0
      %4050 = vmatprep.subr.bf16.mxu0 0
      %4051 = vmatpush1.bf16.msra.mxu0 0
      %4052 = vmatprep.mubr.bf16.mxu0 %v3965
      %4053 = vmatmul.mubr.bf16.gmra.mrb[0].mxu0 %v3628
      %v4054 = vpop.f32.mrb[0].mxu0
      %v4055 = vadd.f32 %v4012, %v4054
      %v4056 = vpop.f32.mrb[0].mxu0
      %v4057 = vadd.f32 %v4014, %v4056
      %v4058 = vpop.f32.mrb[0].mxu0
      %v4059 = vadd.f32 %v4016, %v4058
      %v4060 = vpop.f32.mrb[0].mxu0
      %v4061 = vadd.f32 %v4018, %v4060
      %4062 = vdwg.mxu0
      %v4063 = vpack.c.bf16 %v4059, %v4055
      %v4064 = vpack.c.bf16 %v4061, %v4057
      %v4067 = vunpack.c.l.b16 %v4063
      %v4068 = vunpack.c.l.b16 %v4064
      %v4069 = vunpack.c.h.b16 %v4063
      %v4070 = vunpack.c.h.b16 %v4064
      %v4071 = vpack.c.b16 %v4068, %v4067
      %v4072 = vpack.c.b16 %v4070, %v4069
      %vm4075 = vcmask 1043456
      %vm4076 = vcmask 556036
      %vm4077 = vmor %vm4076, %vm4075
      %4078 = vst.msk [vmem:[%s238] sm:$0xff] %vm4077, %v4071
      %4079 = vst.msk [vmem:[%s238 + $0x8] sm:$0xff] %vm4077, %v4072
      %p4080 = scmp.lt.s32.totalorder %s16, 1
      %s4081 = scalar_select %p4080, %s16, 1
      %s4082 = smul.addr %s4081, 4
      %s4083 = smul.addr %s4082, 4
      %s4084 = scalar_lea.vmem %s5, %s4083
      // Predicated region
      $region41: #{cnn_forward.3} parent=39 // pred_check
        %p4085 = pneg %p149
      $region42: #{cnn_forward.3} parent=39 // pred_check_branch
        %4087 = sbr.rel (%p4085) target = $region44
      $region43: #{cnn_forward.3} parent=39 // pred_region
        _
      $region44: #{cnn_forward.3} parent=39 // pred_fallthru
        _
    $region40: #{cnn_forward.3} parent=5 // pred_fallthru
      _
    %p4088 = scmp.le.s32.totalorder 2, %s11
    // Predicated region
    $region45: #{cnn_forward.3} parent=5 // pred_check
      %p4089 = pneg %p4088
    $region46: #{cnn_forward.3} parent=5 // pred_check_branch
      %4091 = sbr.rel (%p4089) target = $region48
    $region47: #{cnn_forward.3} parent=5 // pred_region
      %s4092 = ssub.s32 %s11, 2
      // Predicated region
      $region49: #{cnn_forward.3} parent=47 // pred_check
        %p4093 = pneg %p155
      $region50: #{cnn_forward.3} parent=47 // pred_check_branch
        %4095 = sbr.rel (%p4093) target = $region52
      $region51: #{cnn_forward.3} parent=47 // pred_region
        %p4096 = scmp.lt.s32.totalorder %s17, 1
        %s4097 = scalar_select %p4096, %s17, 1
        %s4098 = smul.addr %s4097, 4
        %s4099 = smul.addr %s4098, 4
        %s4100 = scalar_lea.vmem %s5, %s4099
      $region52: #{cnn_forward.3} parent=47 // pred_fallthru
        _
    $region48: #{cnn_forward.3} parent=5 // pred_fallthru
      _
  $region6: #{cnn_forward.3} parent=0 // loop_footer
    %s15 = sadd.s32 1, %s11
  $region7: #{cnn_forward.3} parent=0 // loop_footer_branch
    %10 = sbr.rel target = $region3
  $region8: #{cnn_forward.3} parent=0 // loop_exit
    _

// kernel: cnn_forward.5
$region0: #{cnn_forward.5}
  #allocation0 [shape = 'u32[]', space=smem, size = 0x4, offset = 0x4, fixed_abs, tag = 'smem constant byte address 0x4 - core index']
  #allocation1 [shape = 'u32[144,128]{1,0:T(1,128)}', space=vmem, size = 0x12000, scoped, tag = 'internal scratch']
  %s0 = inlined_call_operand.vmem [shape: bf16[2,1568], index: 0, kind: input, shape index: {}]
  %s1 = inlined_call_operand.vmem [shape: bf16[1568,10], index: 1, kind: input, shape index: {}]
  %s2 = inlined_call_operand.vmem [shape: f32[1,10], index: 2, kind: input, shape index: {}]
  %s3 = inlined_call_operand.hbm [shape: f32[2,10], index: 3, kind: output, shape index: {}]
  %s4 = sld [smem:[#allocation0]]
  $region22: #{cnn_forward.5} parent=0
    _
  %s6 = ssub.s32 1, %s4
  %s7 = scalar_select 0, %s6, %s4
  $region1: #{cnn_forward.5} parent=0
    #allocation2 [shape = 'u8[1024]{0}', space=vmem, size = 0x400, scoped, tag = 'output window, operand 0, single buffered']
    #allocation3 [shape = 's32[1]{0}', space=sflag, size = 0x4, scoped, tag = 'scoped memory for cnn_forward.5']
    %8 = vsyncpa [#allocation3], 0
    // Predicated region
    $region2: #{cnn_forward.5} parent=1 // pred_check
      _
    $region3: #{cnn_forward.5} parent=1 // pred_check_branch
      %10 = sbr.rel (0) target = $region5
    $region4: #{cnn_forward.5} parent=1 // pred_region
      _
    $region5: #{cnn_forward.5} parent=1 // pred_fallthru
      _
    // Predicated region
    $region6: #{cnn_forward.5} parent=1 // pred_check
      _
    $region7: #{cnn_forward.5} parent=1 // pred_check_branch
      %12 = sbr.rel (0) target = $region9
    $region8: #{cnn_forward.5} parent=1 // pred_region
      _
    $region9: #{cnn_forward.5} parent=1 // pred_fallthru
      _
    // Predicated region
    $region10: #{cnn_forward.5} parent=1 // pred_check
      _
    $region11: #{cnn_forward.5} parent=1 // pred_check_branch
      %14 = sbr.rel (0) target = $region13
    $region12: #{cnn_forward.5} parent=1 // pred_region
      _
    $region13: #{cnn_forward.5} parent=1 // pred_fallthru
      _
    %v16 = vld [vmem:[%s0] sm:$0xff]
    %v17 = vld [vmem:[%s0 + $0x8] sm:$0x1f]
    %v18 = vld [vmem:[%s1] sm:$0xf]
    %v19 = vld [vmem:[%s1 + $0x4] sm:$0xf]
    %v20 = vld [vmem:[%s1 + $0x8] sm:$0xf]
    %v21 = vld [vmem:[%s1 + $0xc] sm:$0xf]
    %v22 = vld [vmem:[%s1 + $0x10] sm:$0xf]
    %v23 = vld [vmem:[%s1 + $0x14] sm:$0xf]
    %v24 = vld [vmem:[%s1 + $0x18] sm:$0xf]
    %v25 = vld [vmem:[%s1 + $0x1c] sm:$0xf]
    %v26 = vld [vmem:[%s1 + $0x20] sm:$0xf]
    %v27 = vld [vmem:[%s1 + $0x24] sm:$0xf]
    %v28 = vld [vmem:[%s1 + $0x28] sm:$0xf]
    %v29 = vld [vmem:[%s1 + $0x2c] sm:$0xf]
    %v30 = vld [vmem:[%s1 + $0x30] sm:$0xf]
    %v31 = vld [vmem:[%s1 + $0x34] sm:$0xf]
    %v32 = vld [vmem:[%s1 + $0x38] sm:$0xf]
    %v33 = vld [vmem:[%s1 + $0x3c] sm:$0xf]
    %v34 = vld [vmem:[%s1 + $0x40] sm:$0xf]
    %v35 = vld [vmem:[%s1 + $0x44] sm:$0xf]
    %v36 = vld [vmem:[%s1 + $0x48] sm:$0xf]
    %v37 = vld [vmem:[%s1 + $0x4c] sm:$0xf]
    %v38 = vld [vmem:[%s1 + $0x50] sm:$0xf]
    %v39 = vld [vmem:[%s1 + $0x54] sm:$0xf]
    %v40 = vld [vmem:[%s1 + $0x58] sm:$0xf]
    %v41 = vld [vmem:[%s1 + $0x5c] sm:$0xf]
    %v42 = vld [vmem:[%s1 + $0x60] sm:$0xf]
    %v43 = vld [vmem:[%s1 + $0x64] sm:$0xf]
    %v44 = vld [vmem:[%s1 + $0x68] sm:$0xf]
    %v45 = vld [vmem:[%s1 + $0x6c] sm:$0xf]
    %v46 = vld [vmem:[%s1 + $0x70] sm:$0xf]
    %v47 = vld [vmem:[%s1 + $0x74] sm:$0xf]
    %v48 = vld [vmem:[%s1 + $0x78] sm:$0xf]
    %v49 = vld [vmem:[%s1 + $0x7c] sm:$0xf]
    %v50 = vld [vmem:[%s1 + $0x80] sm:$0xf]
    %v51 = vld [vmem:[%s1 + $0x84] sm:$0xf]
    %v52 = vld [vmem:[%s1 + $0x88] sm:$0xf]
    %v53 = vld [vmem:[%s1 + $0x8c] sm:$0xf]
    %v54 = vld [vmem:[%s1 + $0x90] sm:$0xf]
    %v55 = vld [vmem:[%s1 + $0x94] sm:$0xf]
    %v56 = vld [vmem:[%s1 + $0x98] sm:$0xf]
    %v57 = vld [vmem:[%s1 + $0x9c] sm:$0xf]
    %v58 = vld [vmem:[%s1 + $0xa0] sm:$0xf]
    %v59 = vld [vmem:[%s1 + $0xa4] sm:$0xf]
    %v60 = vld [vmem:[%s1 + $0xa8] sm:$0xf]
    %v61 = vld [vmem:[%s1 + $0xac] sm:$0xf]
    %v62 = vld [vmem:[%s1 + $0xb0] sm:$0xf]
    %v63 = vld [vmem:[%s1 + $0xb4] sm:$0xf]
    %v64 = vld [vmem:[%s1 + $0xb8] sm:$0xf]
    %v65 = vld [vmem:[%s1 + $0xbc] sm:$0xf]
    %v66 = vld [vmem:[%s1 + $0xc0] sm:$0xf]
    %v67 = vld [vmem:[%s1 + $0xc4] sm:$0xf]
    %v68 = vld [vmem:[%s1 + $0xc8] sm:$0xf]
    %v69 = vld [vmem:[%s1 + $0xcc] sm:$0xf]
    %v70 = vld [vmem:[%s1 + $0xd0] sm:$0xf]
    %v71 = vld [vmem:[%s1 + $0xd4] sm:$0xf]
    %v72 = vld [vmem:[%s1 + $0xd8] sm:$0xf]
    %v73 = vld [vmem:[%s1 + $0xdc] sm:$0xf]
    %v74 = vld [vmem:[%s1 + $0xe0] sm:$0xf]
    %v75 = vld [vmem:[%s1 + $0xe4] sm:$0xf]
    %v76 = vld [vmem:[%s1 + $0xe8] sm:$0xf]
    %v77 = vld [vmem:[%s1 + $0xec] sm:$0xf]
    %v78 = vld [vmem:[%s1 + $0xf0] sm:$0xf]
    %v79 = vld [vmem:[%s1 + $0xf4] sm:$0xf]
    %v80 = vld [vmem:[%s1 + $0xf8] sm:$0xf]
    %v81 = vld [vmem:[%s1 + $0xfc] sm:$0xf]
    %v82 = vld [vmem:[%s1 + $0x100] sm:$0xf]
    %v83 = vld [vmem:[%s1 + $0x104] sm:$0xf]
    %v84 = vld [vmem:[%s1 + $0x108] sm:$0xf]
    %v85 = vld [vmem:[%s1 + $0x10c] sm:$0xf]
    %v86 = vld [vmem:[%s1 + $0x110] sm:$0xf]
    %v87 = vld [vmem:[%s1 + $0x114] sm:$0xf]
    %v88 = vld [vmem:[%s1 + $0x118] sm:$0xf]
    %v89 = vld [vmem:[%s1 + $0x11c] sm:$0xf]
    %v90 = vld [vmem:[%s1 + $0x120] sm:$0xf]
    %v91 = vld [vmem:[%s1 + $0x124] sm:$0xf]
    %v92 = vld [vmem:[%s1 + $0x128] sm:$0xf]
    %v93 = vld [vmem:[%s1 + $0x12c] sm:$0xf]
    %v94 = vld [vmem:[%s1 + $0x130] sm:$0xf]
    %v95 = vld [vmem:[%s1 + $0x134] sm:$0xf]
    %v96 = vld [vmem:[%s1 + $0x138] sm:$0xf]
    %v97 = vld [vmem:[%s1 + $0x13c] sm:$0xf]
    %v98 = vld [vmem:[%s1 + $0x140] sm:$0xf]
    %v99 = vld [vmem:[%s1 + $0x144] sm:$0xf]
    %v100 = vld [vmem:[%s1 + $0x148] sm:$0xf]
    %v101 = vld [vmem:[%s1 + $0x14c] sm:$0xf]
    %v102 = vld [vmem:[%s1 + $0x150] sm:$0xf]
    %v103 = vld [vmem:[%s1 + $0x154] sm:$0xf]
    %v104 = vld [vmem:[%s1 + $0x158] sm:$0xf]
    %v105 = vld [vmem:[%s1 + $0x15c] sm:$0xf]
    %v106 = vld [vmem:[%s1 + $0x160] sm:$0xf]
    %v107 = vld [vmem:[%s1 + $0x164] sm:$0xf]
    %v108 = vld [vmem:[%s1 + $0x168] sm:$0xf]
    %v109 = vld [vmem:[%s1 + $0x16c] sm:$0xf]
    %v110 = vld [vmem:[%s1 + $0x170] sm:$0xf]
    %v111 = vld [vmem:[%s1 + $0x174] sm:$0xf]
    %v112 = vld [vmem:[%s1 + $0x178] sm:$0xf]
    %v113 = vld [vmem:[%s1 + $0x17c] sm:$0xf]
    %v114 = vld [vmem:[%s1 + $0x180] sm:$0xf]
    %v115 = vld [vmem:[%s1 + $0x184] sm:$0xf]
    %v116 = vld [vmem:[%s1 + $0x188] sm:$0xf]
    %v117 = vld [vmem:[%s1 + $0x18c] sm:$0xf]
    %v118 = vld [vmem:[%s1 + $0x190] sm:$0xf]
    %v119 = vld [vmem:[%s1 + $0x194] sm:$0xf]
    %v120 = vld [vmem:[%s1 + $0x198] sm:$0xf]
    %v121 = vld [vmem:[%s1 + $0x19c] sm:$0xf]
    %v122 = vld [vmem:[%s1 + $0x1a0] sm:$0xf]
    %v123 = vld [vmem:[%s1 + $0x1a4] sm:$0xf]
    %v124 = vld [vmem:[%s1 + $0x1a8] sm:$0xf]
    %v125 = vld [vmem:[%s1 + $0x1ac] sm:$0xf]
    %v126 = vld [vmem:[%s1 + $0x1b0] sm:$0xf]
    %v127 = vld [vmem:[%s1 + $0x1b4] sm:$0xf]
    %v128 = vld [vmem:[%s1 + $0x1b8] sm:$0xf]
    %v129 = vld [vmem:[%s1 + $0x1bc] sm:$0xf]
    %v130 = vld [vmem:[%s1 + $0x1c0] sm:$0xf]
    %v131 = vld [vmem:[%s1 + $0x1c4] sm:$0xf]
    %v132 = vld [vmem:[%s1 + $0x1c8] sm:$0xf]
    %v133 = vld [vmem:[%s1 + $0x1cc] sm:$0xf]
    %v134 = vld [vmem:[%s1 + $0x1d0] sm:$0xf]
    %v135 = vld [vmem:[%s1 + $0x1d4] sm:$0xf]
    %v136 = vld [vmem:[%s1 + $0x1d8] sm:$0xf]
    %v137 = vld [vmem:[%s1 + $0x1dc] sm:$0xf]
    %v138 = vld [vmem:[%s1 + $0x1e0] sm:$0xf]
    %v139 = vld [vmem:[%s1 + $0x1e4] sm:$0xf]
    %v140 = vld [vmem:[%s1 + $0x1e8] sm:$0xf]
    %v141 = vld [vmem:[%s1 + $0x1ec] sm:$0xf]
    %v142 = vld [vmem:[%s1 + $0x1f0] sm:$0xf]
    %v143 = vld [vmem:[%s1 + $0x1f4] sm:$0xf]
    %v144 = vld [vmem:[%s1 + $0x1f8] sm:$0xf]
    %v145 = vld [vmem:[%s1 + $0x1fc] sm:$0xf]
    %v146 = vld [vmem:[%s1 + $0x200] sm:$0xf]
    %v147 = vld [vmem:[%s1 + $0x204] sm:$0xf]
    %v148 = vld [vmem:[%s1 + $0x208] sm:$0xf]
    %v149 = vld [vmem:[%s1 + $0x20c] sm:$0xf]
    %v150 = vld [vmem:[%s1 + $0x210] sm:$0xf]
    %v151 = vld [vmem:[%s1 + $0x214] sm:$0xf]
    %v152 = vld [vmem:[%s1 + $0x218] sm:$0xf]
    %v153 = vld [vmem:[%s1 + $0x21c] sm:$0xf]
    %v154 = vld [vmem:[%s1 + $0x220] sm:$0xf]
    %v155 = vld [vmem:[%s1 + $0x224] sm:$0xf]
    %v156 = vld [vmem:[%s1 + $0x228] sm:$0xf]
    %v157 = vld [vmem:[%s1 + $0x22c] sm:$0xf]
    %v158 = vld [vmem:[%s1 + $0x230] sm:$0xf]
    %v159 = vld [vmem:[%s1 + $0x234] sm:$0xf]
    %v160 = vld [vmem:[%s1 + $0x238] sm:$0xf]
    %v161 = vld [vmem:[%s1 + $0x23c] sm:$0xf]
    %v162 = vld [vmem:[%s1 + $0x240] sm:$0xf]
    %v163 = vld [vmem:[%s1 + $0x244] sm:$0xf]
    %v164 = vld [vmem:[%s1 + $0x248] sm:$0xf]
    %v165 = vld [vmem:[%s1 + $0x24c] sm:$0xf]
    %v166 = vld [vmem:[%s1 + $0x250] sm:$0xf]
    %v167 = vld [vmem:[%s1 + $0x254] sm:$0xf]
    %v168 = vld [vmem:[%s1 + $0x258] sm:$0xf]
    %v169 = vld [vmem:[%s1 + $0x25c] sm:$0xf]
    %v170 = vld [vmem:[%s1 + $0x260] sm:$0xf]
    %v171 = vld [vmem:[%s1 + $0x264] sm:$0xf]
    %v172 = vld [vmem:[%s1 + $0x268] sm:$0xf]
    %v173 = vld [vmem:[%s1 + $0x26c] sm:$0xf]
    %v174 = vld [vmem:[%s1 + $0x270] sm:$0xf]
    %v175 = vld [vmem:[%s1 + $0x274] sm:$0xf]
    %v176 = vld [vmem:[%s1 + $0x278] sm:$0xf]
    %v177 = vld [vmem:[%s1 + $0x27c] sm:$0xf]
    %v178 = vld [vmem:[%s1 + $0x280] sm:$0xf]
    %v179 = vld [vmem:[%s1 + $0x284] sm:$0xf]
    %v180 = vld [vmem:[%s1 + $0x288] sm:$0xf]
    %v181 = vld [vmem:[%s1 + $0x28c] sm:$0xf]
    %v182 = vld [vmem:[%s1 + $0x290] sm:$0xf]
    %v183 = vld [vmem:[%s1 + $0x294] sm:$0xf]
    %v184 = vld [vmem:[%s1 + $0x298] sm:$0xf]
    %v185 = vld [vmem:[%s1 + $0x29c] sm:$0xf]
    %v186 = vld [vmem:[%s1 + $0x2a0] sm:$0xf]
    %v187 = vld [vmem:[%s1 + $0x2a4] sm:$0xf]
    %v188 = vld [vmem:[%s1 + $0x2a8] sm:$0xf]
    %v189 = vld [vmem:[%s1 + $0x2ac] sm:$0xf]
    %v190 = vld [vmem:[%s1 + $0x2b0] sm:$0xf]
    %v191 = vld [vmem:[%s1 + $0x2b4] sm:$0xf]
    %v192 = vld [vmem:[%s1 + $0x2b8] sm:$0xf]
    %v193 = vld [vmem:[%s1 + $0x2bc] sm:$0xf]
    %v194 = vld [vmem:[%s1 + $0x2c0] sm:$0xf]
    %v195 = vld [vmem:[%s1 + $0x2c4] sm:$0xf]
    %v196 = vld [vmem:[%s1 + $0x2c8] sm:$0xf]
    %v197 = vld [vmem:[%s1 + $0x2cc] sm:$0xf]
    %v198 = vld [vmem:[%s1 + $0x2d0] sm:$0xf]
    %v199 = vld [vmem:[%s1 + $0x2d4] sm:$0xf]
    %v200 = vld [vmem:[%s1 + $0x2d8] sm:$0xf]
    %v201 = vld [vmem:[%s1 + $0x2dc] sm:$0xf]
    %v202 = vld [vmem:[%s1 + $0x2e0] sm:$0xf]
    %v203 = vld [vmem:[%s1 + $0x2e4] sm:$0xf]
    %v204 = vld [vmem:[%s1 + $0x2e8] sm:$0xf]
    %v205 = vld [vmem:[%s1 + $0x2ec] sm:$0xf]
    %v206 = vld [vmem:[%s1 + $0x2f0] sm:$0xf]
    %v207 = vld [vmem:[%s1 + $0x2f4] sm:$0xf]
    %v208 = vld [vmem:[%s1 + $0x2f8] sm:$0xf]
    %v209 = vld [vmem:[%s1 + $0x2fc] sm:$0xf]
    %v210 = vld [vmem:[%s1 + $0x300] sm:$0xf]
    %v211 = vld [vmem:[%s1 + $0x304] sm:$0xf]
    %v212 = vld [vmem:[%s1 + $0x308] sm:$0xf]
    %v213 = vld [vmem:[%s1 + $0x30c] sm:$0xf]
    %v214 = vld [vmem:[%s2] sm:$0x1]
    %v216 = vlaneseq
    %v217 = vshrl.u32 %v216, 7
    %v218 = vsub.s32 0, %v217
    %v219 = vrot.slane %v214, %v218
    %v223 = vcombine.high %v16, %v16
    %v225 = vunpack.c.l.s4 1966171168
    %v226 = vunpack.c.0.s8 %v225
    %v227 = vlaneseq
    %v228 = vshrl.u32 %v227, 7
    %v229 = vsub.s32 %v226, %v228
    %v230 = vrot.slane %v16, %v229
    %v232 = vunpack.c.l.s4 1966171168
    %v233 = vunpack.c.0.s8 %v232
    %v234 = vlaneseq
    %v235 = vshrl.u32 %v234, 7
    %v236 = vsub.s32 %v233, %v235
    %v237 = vrot.slane %v223, %v236
    %v238 = vcombine.high %v230, %v230
    %v239 = vcombine.high %v237, %v237
    %v241 = vunpack.c.l.s4 1966171168
    %v242 = vunpack.c.0.s8 %v241
    %v243 = vlaneseq
    %v244 = vshrl.u32 %v243, 7
    %v245 = vsub.s32 %v242, %v244
    %v246 = vrot.slane %v230, %v245
    %v248 = vunpack.c.l.s4 1966171168
    %v249 = vunpack.c.0.s8 %v248
    %v250 = vlaneseq
    %v251 = vshrl.u32 %v250, 7
    %v252 = vsub.s32 %v249, %v251
    %v253 = vrot.slane %v237, %v252
    %v255 = vunpack.c.l.s4 1966171168
    %v256 = vunpack.c.0.s8 %v255
    %v257 = vlaneseq
    %v258 = vshrl.u32 %v257, 7
    %v259 = vsub.s32 %v256, %v258
    %v260 = vrot.slane %v238, %v259
    %v262 = vunpack.c.l.s4 1966171168
    %v263 = vunpack.c.0.s8 %v262
    %v264 = vlaneseq
    %v265 = vshrl.u32 %v264, 7
    %v266 = vsub.s32 %v263, %v265
    %v267 = vrot.slane %v239, %v266
    %v268 = vcombine.high %v246, %v246
    %v269 = vcombine.high %v253, %v253
    %v270 = vcombine.high %v260, %v260
    %v271 = vcombine.high %v267, %v267
    %v272 = vcombine.high %v17, %v17
    %v274 = vunpack.c.l.s4 1966171168
    %v275 = vunpack.c.0.s8 %v274
    %v276 = vlaneseq
    %v277 = vshrl.u32 %v276, 7
    %v278 = vsub.s32 %v275, %v277
    %v279 = vrot.slane %v17, %v278
    %v281 = vunpack.c.l.s4 1966171168
    %v282 = vunpack.c.0.s8 %v281
    %v283 = vlaneseq
    %v284 = vshrl.u32 %v283, 7
    %v285 = vsub.s32 %v282, %v284
    %v286 = vrot.slane %v272, %v285
    %v287 = vcombine.high %v279, %v279
    %v289 = vunpack.c.l.s4 1966171168
    %v290 = vunpack.c.0.s8 %v289
    %v291 = vlaneseq
    %v292 = vshrl.u32 %v291, 7
    %v293 = vsub.s32 %v290, %v292
    %v294 = vrot.slane %v279, %v293
    %v296 = vunpack.c.l.s4 1966171168
    %v297 = vunpack.c.0.s8 %v296
    %v298 = vlaneseq
    %v299 = vshrl.u32 %v298, 7
    %v300 = vsub.s32 %v297, %v299
    %v301 = vrot.slane %v286, %v300
    %v303 = vunpack.c.l.s4 1966171168
    %v304 = vunpack.c.0.s8 %v303
    %v305 = vlaneseq
    %v306 = vshrl.u32 %v305, 7
    %v307 = vsub.s32 %v304, %v306
    %v308 = vrot.slane %v287, %v307
    %v309 = vcombine.high %v294, %v294
    %v310 = vcombine.high %v308, %v308
    %v519 = vunpack.c.l.b16 %v18
    %v520 = vunpack.c.l.b16 %v19
    %v521 = vunpack.c.l.b16 %v20
    %v522 = vunpack.c.l.b16 %v21
    %v523 = vunpack.c.l.b16 %v22
    %v524 = vunpack.c.l.b16 %v23
    %v525 = vunpack.c.l.b16 %v24
    %v526 = vunpack.c.l.b16 %v25
    %v527 = vunpack.c.l.b16 %v26
    %v528 = vunpack.c.l.b16 %v27
    %v529 = vunpack.c.l.b16 %v28
    %v530 = vunpack.c.l.b16 %v29
    %v531 = vunpack.c.l.b16 %v30
    %v532 = vunpack.c.l.b16 %v31
    %v533 = vunpack.c.l.b16 %v32
    %v534 = vunpack.c.l.b16 %v33
    %v535 = vunpack.c.l.b16 %v34
    %v536 = vunpack.c.l.b16 %v35
    %v537 = vunpack.c.l.b16 %v36
    %v538 = vunpack.c.l.b16 %v37
    %v539 = vunpack.c.l.b16 %v38
    %v540 = vunpack.c.l.b16 %v39
    %v541 = vunpack.c.l.b16 %v40
    %v542 = vunpack.c.l.b16 %v41
    %v543 = vunpack.c.l.b16 %v42
    %v544 = vunpack.c.l.b16 %v43
    %v545 = vunpack.c.l.b16 %v44
    %v546 = vunpack.c.l.b16 %v45
    %v547 = vunpack.c.l.b16 %v46
    %v548 = vunpack.c.l.b16 %v47
    %v549 = vunpack.c.l.b16 %v48
    %v550 = vunpack.c.l.b16 %v49
    %v551 = vunpack.c.l.b16 %v50
    %v552 = vunpack.c.l.b16 %v51
    %v553 = vunpack.c.l.b16 %v52
    %v554 = vunpack.c.l.b16 %v53
    %v555 = vunpack.c.l.b16 %v54
    %v556 = vunpack.c.l.b16 %v55
    %v557 = vunpack.c.l.b16 %v56
    %v558 = vunpack.c.l.b16 %v57
    %v559 = vunpack.c.l.b16 %v58
    %v560 = vunpack.c.l.b16 %v59
    %v561 = vunpack.c.l.b16 %v60
    %v562 = vunpack.c.l.b16 %v61
    %v563 = vunpack.c.l.b16 %v62
    %v564 = vunpack.c.l.b16 %v63
    %v565 = vunpack.c.l.b16 %v64
    %v566 = vunpack.c.l.b16 %v65
    %v567 = vunpack.c.l.b16 %v66
    %v568 = vunpack.c.l.b16 %v67
    %v569 = vunpack.c.l.b16 %v68
    %v570 = vunpack.c.l.b16 %v69
    %v571 = vunpack.c.l.b16 %v70
    %v572 = vunpack.c.l.b16 %v71
    %v573 = vunpack.c.l.b16 %v72
    %v574 = vunpack.c.l.b16 %v73
    %v575 = vunpack.c.l.b16 %v74
    %v576 = vunpack.c.l.b16 %v75
    %v577 = vunpack.c.l.b16 %v76
    %v578 = vunpack.c.l.b16 %v77
    %v579 = vunpack.c.l.b16 %v78
    %v580 = vunpack.c.l.b16 %v79
    %v581 = vunpack.c.l.b16 %v80
    %v582 = vunpack.c.l.b16 %v81
    %v583 = vunpack.c.l.b16 %v82
    %v584 = vunpack.c.l.b16 %v83
    %v585 = vunpack.c.l.b16 %v84
    %v586 = vunpack.c.l.b16 %v85
    %v587 = vunpack.c.l.b16 %v86
    %v588 = vunpack.c.l.b16 %v87
    %v589 = vunpack.c.l.b16 %v88
    %v590 = vunpack.c.l.b16 %v89
    %v591 = vunpack.c.l.b16 %v90
    %v592 = vunpack.c.l.b16 %v91
    %v593 = vunpack.c.l.b16 %v92
    %v594 = vunpack.c.l.b16 %v93
    %v595 = vunpack.c.l.b16 %v94
    %v596 = vunpack.c.l.b16 %v95
    %v597 = vunpack.c.l.b16 %v96
    %v598 = vunpack.c.l.b16 %v97
    %v599 = vunpack.c.l.b16 %v98
    %v600 = vunpack.c.l.b16 %v99
    %v601 = vunpack.c.l.b16 %v100
    %v602 = vunpack.c.l.b16 %v101
    %v603 = vunpack.c.l.b16 %v102
    %v604 = vunpack.c.l.b16 %v103
    %v605 = vunpack.c.l.b16 %v104
    %v606 = vunpack.c.l.b16 %v105
    %v607 = vunpack.c.l.b16 %v106
    %v608 = vunpack.c.l.b16 %v107
    %v609 = vunpack.c.l.b16 %v108
    %v610 = vunpack.c.l.b16 %v109
    %v611 = vunpack.c.l.b16 %v110
    %v612 = vunpack.c.l.b16 %v111
    %v613 = vunpack.c.l.b16 %v112
    %v614 = vunpack.c.l.b16 %v113
    %v615 = vunpack.c.l.b16 %v114
    %v616 = vunpack.c.l.b16 %v115
    %v617 = vunpack.c.l.b16 %v116
    %v618 = vunpack.c.l.b16 %v117
    %v619 = vunpack.c.l.b16 %v118
    %v620 = vunpack.c.l.b16 %v119
    %v621 = vunpack.c.l.b16 %v120
    %v622 = vunpack.c.l.b16 %v121
    %v623 = vunpack.c.l.b16 %v122
    %v624 = vunpack.c.l.b16 %v123
    %v625 = vunpack.c.l.b16 %v124
    %v626 = vunpack.c.l.b16 %v125
    %v627 = vunpack.c.l.b16 %v126
    %v628 = vunpack.c.l.b16 %v127
    %v629 = vunpack.c.l.b16 %v128
    %v630 = vunpack.c.l.b16 %v129
    %v631 = vunpack.c.l.b16 %v130
    %v632 = vunpack.c.l.b16 %v131
    %v633 = vunpack.c.l.b16 %v132
    %v634 = vunpack.c.l.b16 %v133
    %v635 = vunpack.c.l.b16 %v134
    %v636 = vunpack.c.l.b16 %v135
    %v637 = vunpack.c.l.b16 %v136
    %v638 = vunpack.c.l.b16 %v137
    %v639 = vunpack.c.l.b16 %v138
    %v640 = vunpack.c.l.b16 %v139
    %v641 = vunpack.c.l.b16 %v140
    %v642 = vunpack.c.l.b16 %v141
    %v643 = vunpack.c.l.b16 %v142
    %v644 = vunpack.c.l.b16 %v143
    %v645 = vunpack.c.l.b16 %v144
    %v646 = vunpack.c.l.b16 %v145
    %v647 = vunpack.c.l.b16 %v146
    %v648 = vunpack.c.l.b16 %v147
    %v649 = vunpack.c.l.b16 %v148
    %v650 = vunpack.c.l.b16 %v149
    %v651 = vunpack.c.l.b16 %v150
    %v652 = vunpack.c.l.b16 %v151
    %v653 = vunpack.c.l.b16 %v152
    %v654 = vunpack.c.l.b16 %v153
    %v655 = vunpack.c.l.b16 %v154
    %v656 = vunpack.c.l.b16 %v155
    %v657 = vunpack.c.l.b16 %v156
    %v658 = vunpack.c.l.b16 %v157
    %v659 = vunpack.c.l.b16 %v158
    %v660 = vunpack.c.l.b16 %v159
    %v661 = vunpack.c.l.b16 %v160
    %v662 = vunpack.c.l.b16 %v161
    %v663 = vunpack.c.l.b16 %v162
    %v664 = vunpack.c.l.b16 %v163
    %v665 = vunpack.c.l.b16 %v164
    %v666 = vunpack.c.l.b16 %v165
    %v667 = vunpack.c.l.b16 %v166
    %v668 = vunpack.c.l.b16 %v167
    %v669 = vunpack.c.l.b16 %v168
    %v670 = vunpack.c.l.b16 %v169
    %v671 = vunpack.c.l.b16 %v170
    %v672 = vunpack.c.l.b16 %v171
    %v673 = vunpack.c.l.b16 %v172
    %v674 = vunpack.c.l.b16 %v173
    %v675 = vunpack.c.l.b16 %v174
    %v676 = vunpack.c.l.b16 %v175
    %v677 = vunpack.c.l.b16 %v176
    %v678 = vunpack.c.l.b16 %v177
    %v679 = vunpack.c.l.b16 %v178
    %v680 = vunpack.c.l.b16 %v179
    %v681 = vunpack.c.l.b16 %v180
    %v682 = vunpack.c.l.b16 %v181
    %v683 = vunpack.c.l.b16 %v182
    %v684 = vunpack.c.l.b16 %v183
    %v685 = vunpack.c.l.b16 %v184
    %v686 = vunpack.c.l.b16 %v185
    %v687 = vunpack.c.l.b16 %v186
    %v688 = vunpack.c.l.b16 %v187
    %v689 = vunpack.c.l.b16 %v188
    %v690 = vunpack.c.l.b16 %v189
    %v691 = vunpack.c.l.b16 %v190
    %v692 = vunpack.c.l.b16 %v191
    %v693 = vunpack.c.l.b16 %v192
    %v694 = vunpack.c.l.b16 %v193
    %v695 = vunpack.c.l.b16 %v194
    %v696 = vunpack.c.l.b16 %v195
    %v697 = vunpack.c.l.b16 %v196
    %v698 = vunpack.c.l.b16 %v197
    %v699 = vunpack.c.l.b16 %v198
    %v700 = vunpack.c.l.b16 %v199
    %v701 = vunpack.c.l.b16 %v200
    %v702 = vunpack.c.l.b16 %v201
    %v703 = vunpack.c.l.b16 %v202
    %v704 = vunpack.c.l.b16 %v203
    %v705 = vunpack.c.l.b16 %v204
    %v706 = vunpack.c.l.b16 %v205
    %v707 = vunpack.c.l.b16 %v206
    %v708 = vunpack.c.l.b16 %v207
    %v709 = vunpack.c.l.b16 %v208
    %v710 = vunpack.c.l.b16 %v209
    %v711 = vunpack.c.l.b16 %v210
    %v712 = vunpack.c.l.b16 %v211
    %v713 = vunpack.c.l.b16 %v212
    %v714 = vunpack.c.l.b16 %v213
    %v715 = vpack.c.b16 %v520, %v519
    %v716 = vpack.c.b16 %v522, %v521
    %v717 = vpack.c.b16 %v524, %v523
    %v718 = vpack.c.b16 %v526, %v525
    %v719 = vpack.c.b16 %v528, %v527
    %v720 = vpack.c.b16 %v530, %v529
    %v721 = vpack.c.b16 %v532, %v531
    %v722 = vpack.c.b16 %v534, %v533
    %v723 = vpack.c.b16 %v536, %v535
    %v724 = vpack.c.b16 %v538, %v537
    %v725 = vpack.c.b16 %v540, %v539
    %v726 = vpack.c.b16 %v542, %v541
    %v727 = vpack.c.b16 %v544, %v543
    %v728 = vpack.c.b16 %v546, %v545
    %v729 = vpack.c.b16 %v548, %v547
    %v730 = vpack.c.b16 %v550, %v549
    %v731 = vpack.c.b16 %v552, %v551
    %v732 = vpack.c.b16 %v554, %v553
    %v733 = vpack.c.b16 %v556, %v555
    %v734 = vpack.c.b16 %v558, %v557
    %v735 = vpack.c.b16 %v560, %v559
    %v736 = vpack.c.b16 %v562, %v561
    %v737 = vpack.c.b16 %v564, %v563
    %v738 = vpack.c.b16 %v566, %v565
    %v739 = vpack.c.b16 %v568, %v567
    %v740 = vpack.c.b16 %v570, %v569
    %v741 = vpack.c.b16 %v572, %v571
    %v742 = vpack.c.b16 %v574, %v573
    %v743 = vpack.c.b16 %v576, %v575
    %v744 = vpack.c.b16 %v578, %v577
    %v745 = vpack.c.b16 %v580, %v579
    %v746 = vpack.c.b16 %v582, %v581
    %v747 = vpack.c.b16 %v584, %v583
    %v748 = vpack.c.b16 %v586, %v585
    %v749 = vpack.c.b16 %v588, %v587
    %v750 = vpack.c.b16 %v590, %v589
    %v751 = vpack.c.b16 %v592, %v591
    %v752 = vpack.c.b16 %v594, %v593
    %v753 = vpack.c.b16 %v596, %v595
    %v754 = vpack.c.b16 %v598, %v597
    %v755 = vpack.c.b16 %v600, %v599
    %v756 = vpack.c.b16 %v602, %v601
    %v757 = vpack.c.b16 %v604, %v603
    %v758 = vpack.c.b16 %v606, %v605
    %v759 = vpack.c.b16 %v608, %v607
    %v760 = vpack.c.b16 %v610, %v609
    %v761 = vpack.c.b16 %v612, %v611
    %v762 = vpack.c.b16 %v614, %v613
    %v763 = vpack.c.b16 %v616, %v615
    %v764 = vpack.c.b16 %v618, %v617
    %v765 = vpack.c.b16 %v620, %v619
    %v766 = vpack.c.b16 %v622, %v621
    %v767 = vpack.c.b16 %v624, %v623
    %v768 = vpack.c.b16 %v626, %v625
    %v769 = vpack.c.b16 %v628, %v627
    %v770 = vpack.c.b16 %v630, %v629
    %v771 = vpack.c.b16 %v632, %v631
    %v772 = vpack.c.b16 %v634, %v633
    %v773 = vpack.c.b16 %v636, %v635
    %v774 = vpack.c.b16 %v638, %v637
    %v775 = vpack.c.b16 %v640, %v639
    %v776 = vpack.c.b16 %v642, %v641
    %v777 = vpack.c.b16 %v644, %v643
    %v778 = vpack.c.b16 %v646, %v645
    %v779 = vpack.c.b16 %v648, %v647
    %v780 = vpack.c.b16 %v650, %v649
    %v781 = vpack.c.b16 %v652, %v651
    %v782 = vpack.c.b16 %v654, %v653
    %v783 = vpack.c.b16 %v656, %v655
    %v784 = vpack.c.b16 %v658, %v657
    %v785 = vpack.c.b16 %v660, %v659
    %v786 = vpack.c.b16 %v662, %v661
    %v787 = vpack.c.b16 %v664, %v663
    %v788 = vpack.c.b16 %v666, %v665
    %v789 = vpack.c.b16 %v668, %v667
    %v790 = vpack.c.b16 %v670, %v669
    %v791 = vpack.c.b16 %v672, %v671
    %v792 = vpack.c.b16 %v674, %v673
    %v793 = vpack.c.b16 %v676, %v675
    %v794 = vpack.c.b16 %v678, %v677
    %v795 = vpack.c.b16 %v680, %v679
    %v796 = vpack.c.b16 %v682, %v681
    %v797 = vpack.c.b16 %v684, %v683
    %v798 = vpack.c.b16 %v686, %v685
    %v799 = vpack.c.b16 %v688, %v687
    %v800 = vpack.c.b16 %v690, %v689
    %v801 = vpack.c.b16 %v692, %v691
    %v802 = vpack.c.b16 %v694, %v693
    %v803 = vpack.c.b16 %v696, %v695
    %v804 = vpack.c.b16 %v698, %v697
    %v805 = vpack.c.b16 %v700, %v699
    %v806 = vpack.c.b16 %v702, %v701
    %v807 = vpack.c.b16 %v704, %v703
    %v808 = vpack.c.b16 %v706, %v705
    %v809 = vpack.c.b16 %v708, %v707
    %v810 = vpack.c.b16 %v710, %v709
    %v811 = vpack.c.b16 %v712, %v711
    %v812 = vpack.c.b16 %v714, %v713
    %vm911 = vcmask 261120
    %v913 = vsel %vm911, %v301, 0
    %915 = vmatprep.subr.bf16.mxu0 0
    %916 = vmatpush1.bf16.msra.mxu0 %v715
    %917 = vmatprep.subr.bf16.mxu0 0
    %918 = vmatpush1.bf16.msra.mxu0 %v716
    %919 = vmatprep.subr.bf16.mxu0 0
    %920 = vmatpush1.bf16.msra.mxu0 %v717
    %921 = vmatprep.subr.bf16.mxu0 0
    %922 = vmatpush1.bf16.msra.mxu0 %v718
    %923 = vmatprep.subr.bf16.mxu0 0
    %924 = vmatpush1.bf16.msra.mxu0 %v719
    %925 = vmatprep.subr.bf16.mxu0 0
    %926 = vmatpush1.bf16.msra.mxu0 %v720
    %927 = vmatprep.subr.bf16.mxu0 0
    %928 = vmatpush1.bf16.msra.mxu0 %v721
    %929 = vmatprep.subr.bf16.mxu0 0
    %930 = vmatpush1.bf16.msra.mxu0 %v722
    %931 = vmatprep.subr.bf16.mxu0 0
    %932 = vmatpush1.bf16.msra.mxu0 %v723
    %933 = vmatprep.subr.bf16.mxu0 0
    %934 = vmatpush1.bf16.msra.mxu0 %v724
    %935 = vmatprep.subr.bf16.mxu0 0
    %936 = vmatpush1.bf16.msra.mxu0 %v725
    %937 = vmatprep.subr.bf16.mxu0 0
    %938 = vmatpush1.bf16.msra.mxu0 %v726
    %939 = vmatprep.subr.bf16.mxu0 0
    %940 = vmatpush1.bf16.msra.mxu0 %v727
    %941 = vmatprep.subr.bf16.mxu0 0
    %942 = vmatpush1.bf16.msra.mxu0 %v728
    %943 = vmatprep.subr.bf16.mxu0 0
    %944 = vmatpush1.bf16.msra.mxu0 %v729
    %945 = vmatprep.subr.bf16.mxu0 0
    %946 = vmatpush1.bf16.msra.mxu0 %v730
    %947 = vmatprep.mubr.bf16.mxu0 %v260
    %948 = vmatmul.mubr.bf16.gmra.mrb[0].mxu0 %v246
    %v949 = vpop.f32.mrb[0].mxu0
    %v950 = vadd.f32 %v219, %v949
    %v951 = vpop.f32.mrb[0].mxu0
    %v952 = vpop.f32.mrb[0].mxu0
    %v953 = vpop.f32.mrb[0].mxu0
    %954 = vdwg.mxu0
    %955 = vmatprep.subr.bf16.mxu0 0
    %956 = vmatpush1.bf16.msra.mxu0 %v731
    %957 = vmatprep.subr.bf16.mxu0 0
    %958 = vmatpush1.bf16.msra.mxu0 %v732
    %959 = vmatprep.subr.bf16.mxu0 0
    %960 = vmatpush1.bf16.msra.mxu0 %v733
    %961 = vmatprep.subr.bf16.mxu0 0
    %962 = vmatpush1.bf16.msra.mxu0 %v734
    %963 = vmatprep.subr.bf16.mxu0 0
    %964 = vmatpush1.bf16.msra.mxu0 %v735
    %965 = vmatprep.subr.bf16.mxu0 0
    %966 = vmatpush1.bf16.msra.mxu0 %v736
    %967 = vmatprep.subr.bf16.mxu0 0
    %968 = vmatpush1.bf16.msra.mxu0 %v737
    %969 = vmatprep.subr.bf16.mxu0 0
    %970 = vmatpush1.bf16.msra.mxu0 %v738
    %971 = vmatprep.subr.bf16.mxu0 0
    %972 = vmatpush1.bf16.msra.mxu0 %v739
    %973 = vmatprep.subr.bf16.mxu0 0
    %974 = vmatpush1.bf16.msra.mxu0 %v740
    %975 = vmatprep.subr.bf16.mxu0 0
    %976 = vmatpush1.bf16.msra.mxu0 %v741
    %977 = vmatprep.subr.bf16.mxu0 0
    %978 = vmatpush1.bf16.msra.mxu0 %v742
    %979 = vmatprep.subr.bf16.mxu0 0
    %980 = vmatpush1.bf16.msra.mxu0 %v743
    %981 = vmatprep.subr.bf16.mxu0 0
    %982 = vmatpush1.bf16.msra.mxu0 %v744
    %983 = vmatprep.subr.bf16.mxu0 0
    %984 = vmatpush1.bf16.msra.mxu0 %v745
    %985 = vmatprep.subr.bf16.mxu0 0
    %986 = vmatpush1.bf16.msra.mxu0 %v746
    %987 = vmatprep.mubr.bf16.mxu0 %v270
    %988 = vmatmul.mubr.bf16.gmra.mrb[0].mxu0 %v268
    %v989 = vpop.f32.mrb[0].mxu0
    %v990 = vadd.f32 %v950, %v989
    %v991 = vpop.f32.mrb[0].mxu0
    %v992 = vpop.f32.mrb[0].mxu0
    %v993 = vpop.f32.mrb[0].mxu0
    %994 = vdwg.mxu0
    %995 = vmatprep.subr.bf16.mxu0 0
    %996 = vmatpush1.bf16.msra.mxu0 %v747
    %997 = vmatprep.subr.bf16.mxu0 0
    %998 = vmatpush1.bf16.msra.mxu0 %v748
    %999 = vmatprep.subr.bf16.mxu0 0
    %1000 = vmatpush1.bf16.msra.mxu0 %v749
    %1001 = vmatprep.subr.bf16.mxu0 0
    %1002 = vmatpush1.bf16.msra.mxu0 %v750
    %1003 = vmatprep.subr.bf16.mxu0 0
    %1004 = vmatpush1.bf16.msra.mxu0 %v751
    %1005 = vmatprep.subr.bf16.mxu0 0
    %1006 = vmatpush1.bf16.msra.mxu0 %v752
    %1007 = vmatprep.subr.bf16.mxu0 0
    %1008 = vmatpush1.bf16.msra.mxu0 %v753
    %1009 = vmatprep.subr.bf16.mxu0 0
    %1010 = vmatpush1.bf16.msra.mxu0 %v754
    %1011 = vmatprep.subr.bf16.mxu0 0
    %1012 = vmatpush1.bf16.msra.mxu0 %v755
    %1013 = vmatprep.subr.bf16.mxu0 0
    %1014 = vmatpush1.bf16.msra.mxu0 %v756
    %1015 = vmatprep.subr.bf16.mxu0 0
    %1016 = vmatpush1.bf16.msra.mxu0 %v757
    %1017 = vmatprep.subr.bf16.mxu0 0
    %1018 = vmatpush1.bf16.msra.mxu0 %v758
    %1019 = vmatprep.subr.bf16.mxu0 0
    %1020 = vmatpush1.bf16.msra.mxu0 %v759
    %1021 = vmatprep.subr.bf16.mxu0 0
    %1022 = vmatpush1.bf16.msra.mxu0 %v760
    %1023 = vmatprep.subr.bf16.mxu0 0
    %1024 = vmatpush1.bf16.msra.mxu0 %v761
    %1025 = vmatprep.subr.bf16.mxu0 0
    %1026 = vmatpush1.bf16.msra.mxu0 %v762
    %1027 = vmatprep.mubr.bf16.mxu0 %v267
    %1028 = vmatmul.mubr.bf16.gmra.mrb[0].mxu0 %v253
    %v1029 = vpop.f32.mrb[0].mxu0
    %v1030 = vadd.f32 %v990, %v1029
    %v1031 = vpop.f32.mrb[0].mxu0
    %v1032 = vpop.f32.mrb[0].mxu0
    %v1033 = vpop.f32.mrb[0].mxu0
    %1034 = vdwg.mxu0
    %1035 = vmatprep.subr.bf16.mxu0 0
    %1036 = vmatpush1.bf16.msra.mxu0 %v763
    %1037 = vmatprep.subr.bf16.mxu0 0
    %1038 = vmatpush1.bf16.msra.mxu0 %v764
    %1039 = vmatprep.subr.bf16.mxu0 0
    %1040 = vmatpush1.bf16.msra.mxu0 %v765
    %1041 = vmatprep.subr.bf16.mxu0 0
    %1042 = vmatpush1.bf16.msra.mxu0 %v766
    %1043 = vmatprep.subr.bf16.mxu0 0
    %1044 = vmatpush1.bf16.msra.mxu0 %v767
    %1045 = vmatprep.subr.bf16.mxu0 0
    %1046 = vmatpush1.bf16.msra.mxu0 %v768
    %1047 = vmatprep.subr.bf16.mxu0 0
    %1048 = vmatpush1.bf16.msra.mxu0 %v769
    %1049 = vmatprep.subr.bf16.mxu0 0
    %1050 = vmatpush1.bf16.msra.mxu0 %v770
    %1051 = vmatprep.subr.bf16.mxu0 0
    %1052 = vmatpush1.bf16.msra.mxu0 %v771
    %1053 = vmatprep.subr.bf16.mxu0 0
    %1054 = vmatpush1.bf16.msra.mxu0 %v772
    %1055 = vmatprep.subr.bf16.mxu0 0
    %1056 = vmatpush1.bf16.msra.mxu0 %v773
    %1057 = vmatprep.subr.bf16.mxu0 0
    %1058 = vmatpush1.bf16.msra.mxu0 %v774
    %1059 = vmatprep.subr.bf16.mxu0 0
    %1060 = vmatpush1.bf16.msra.mxu0 %v775
    %1061 = vmatprep.subr.bf16.mxu0 0
    %1062 = vmatpush1.bf16.msra.mxu0 %v776
    %1063 = vmatprep.subr.bf16.mxu0 0
    %1064 = vmatpush1.bf16.msra.mxu0 %v777
    %1065 = vmatprep.subr.bf16.mxu0 0
    %1066 = vmatpush1.bf16.msra.mxu0 %v778
    %1067 = vmatprep.mubr.bf16.mxu0 %v271
    %1068 = vmatmul.mubr.bf16.gmra.mrb[0].mxu0 %v269
    %v1069 = vpop.f32.mrb[0].mxu0
    %v1070 = vadd.f32 %v1030, %v1069
    %v1071 = vpop.f32.mrb[0].mxu0
    %v1072 = vpop.f32.mrb[0].mxu0
    %v1073 = vpop.f32.mrb[0].mxu0
    %1074 = vdwg.mxu0
    %1075 = vmatprep.subr.bf16.mxu0 0
    %1076 = vmatpush1.bf16.msra.mxu0 %v779
    %1077 = vmatprep.subr.bf16.mxu0 0
    %1078 = vmatpush1.bf16.msra.mxu0 %v780
    %1079 = vmatprep.subr.bf16.mxu0 0
    %1080 = vmatpush1.bf16.msra.mxu0 %v781
    %1081 = vmatprep.subr.bf16.mxu0 0
    %1082 = vmatpush1.bf16.msra.mxu0 %v782
    %1083 = vmatprep.subr.bf16.mxu0 0
    %1084 = vmatpush1.bf16.msra.mxu0 %v783
    %1085 = vmatprep.subr.bf16.mxu0 0
    %1086 = vmatpush1.bf16.msra.mxu0 %v784
    %1087 = vmatprep.subr.bf16.mxu0 0
    %1088 = vmatpush1.bf16.msra.mxu0 %v785
    %1089 = vmatprep.subr.bf16.mxu0 0
    %1090 = vmatpush1.bf16.msra.mxu0 %v786
    %1091 = vmatprep.subr.bf16.mxu0 0
    %1092 = vmatpush1.bf16.msra.mxu0 %v787
    %1093 = vmatprep.subr.bf16.mxu0 0
    %1094 = vmatpush1.bf16.msra.mxu0 %v788
    %1095 = vmatprep.subr.bf16.mxu0 0
    %1096 = vmatpush1.bf16.msra.mxu0 %v789
    %1097 = vmatprep.subr.bf16.mxu0 0
    %1098 = vmatpush1.bf16.msra.mxu0 %v790
    %1099 = vmatprep.subr.bf16.mxu0 0
    %1100 = vmatpush1.bf16.msra.mxu0 %v791
    %1101 = vmatprep.subr.bf16.mxu0 0
    %1102 = vmatpush1.bf16.msra.mxu0 %v792
    %1103 = vmatprep.subr.bf16.mxu0 0
    %1104 = vmatpush1.bf16.msra.mxu0 %v793
    %1105 = vmatprep.subr.bf16.mxu0 0
    %1106 = vmatpush1.bf16.msra.mxu0 %v794
    %1107 = vmatprep.mubr.bf16.mxu0 %v308
    %1108 = vmatmul.mubr.bf16.gmra.mrb[0].mxu0 %v294
    %v1109 = vpop.f32.mrb[0].mxu0
    %v1110 = vadd.f32 %v1070, %v1109
    %v1111 = vpop.f32.mrb[0].mxu0
    %v1112 = vpop.f32.mrb[0].mxu0
    %v1113 = vpop.f32.mrb[0].mxu0
    %1114 = vdwg.mxu0
    %1115 = vmatprep.subr.bf16.mxu0 0
    %1116 = vmatpush1.bf16.msra.mxu0 %v795
    %1117 = vmatprep.subr.bf16.mxu0 0
    %1118 = vmatpush1.bf16.msra.mxu0 %v796
    %1119 = vmatprep.subr.bf16.mxu0 0
    %1120 = vmatpush1.bf16.msra.mxu0 %v797
    %1121 = vmatprep.subr.bf16.mxu0 0
    %1122 = vmatpush1.bf16.msra.mxu0 %v798
    %1123 = vmatprep.subr.bf16.mxu0 0
    %1124 = vmatpush1.bf16.msra.mxu0 %v799
    %1125 = vmatprep.subr.bf16.mxu0 0
    %1126 = vmatpush1.bf16.msra.mxu0 %v800
    %1127 = vmatprep.subr.bf16.mxu0 0
    %1128 = vmatpush1.bf16.msra.mxu0 %v801
    %1129 = vmatprep.subr.bf16.mxu0 0
    %1130 = vmatpush1.bf16.msra.mxu0 %v802
    %1131 = vmatprep.subr.bf16.mxu0 0
    %1132 = vmatpush1.bf16.msra.mxu0 %v803
    %1133 = vmatprep.subr.bf16.mxu0 0
    %1134 = vmatpush1.bf16.msra.mxu0 %v804
    %1135 = vmatprep.subr.bf16.mxu0 0
    %1136 = vmatpush1.bf16.msra.mxu0 %v805
    %1137 = vmatprep.subr.bf16.mxu0 0
    %1138 = vmatpush1.bf16.msra.mxu0 %v806
    %1139 = vmatprep.subr.bf16.mxu0 0
    %1140 = vmatpush1.bf16.msra.mxu0 %v807
    %1141 = vmatprep.subr.bf16.mxu0 0
    %1142 = vmatpush1.bf16.msra.mxu0 %v808
    %1143 = vmatprep.subr.bf16.mxu0 0
    %1144 = vmatpush1.bf16.msra.mxu0 %v809
    %1145 = vmatprep.subr.bf16.mxu0 0
    %1146 = vmatpush1.bf16.msra.mxu0 %v810
    %1147 = vmatprep.mubr.bf16.mxu0 %v310
    %1148 = vmatmul.mubr.bf16.gmra.mrb[0].mxu0 %v309
    %v1149 = vpop.f32.mrb[0].mxu0
    %v1150 = vadd.f32 %v1110, %v1149
    %v1151 = vpop.f32.mrb[0].mxu0
    %v1152 = vpop.f32.mrb[0].mxu0
    %v1153 = vpop.f32.mrb[0].mxu0
    %1154 = vdwg.mxu0
    %1155 = vmatprep.subr.bf16.mxu0 0
    %1156 = vmatpush1.bf16.msra.mxu0 %v811
    %1157 = vmatprep.subr.bf16.mxu0 0
    %1158 = vmatpush1.bf16.msra.mxu0 %v812
    %1159 = vmatprep.subr.bf16.mxu0 0
    %1160 = vmatpush1.bf16.msra.mxu0 0
    %1161 = vmatprep.subr.bf16.mxu0 0
    %1162 = vmatpush1.bf16.msra.mxu0 0
    %1163 = vmatprep.subr.bf16.mxu0 0
    %1164 = vmatpush1.bf16.msra.mxu0 0
    %1165 = vmatprep.subr.bf16.mxu0 0
    %1166 = vmatpush1.bf16.msra.mxu0 0
    %1167 = vmatprep.subr.bf16.mxu0 0
    %1168 = vmatpush1.bf16.msra.mxu0 0
    %1169 = vmatprep.subr.bf16.mxu0 0
    %1170 = vmatpush1.bf16.msra.mxu0 0
    %1171 = vmatprep.subr.bf16.mxu0 0
    %1172 = vmatpush1.bf16.msra.mxu0 0
    %1173 = vmatprep.subr.bf16.mxu0 0
    %1174 = vmatpush1.bf16.msra.mxu0 0
    %1175 = vmatprep.subr.bf16.mxu0 0
    %1176 = vmatpush1.bf16.msra.mxu0 0
    %1177 = vmatprep.subr.bf16.mxu0 0
    %1178 = vmatpush1.bf16.msra.mxu0 0
    %1179 = vmatprep.subr.bf16.mxu0 0
    %1180 = vmatpush1.bf16.msra.mxu0 0
    %1181 = vmatprep.subr.bf16.mxu0 0
    %1182 = vmatpush1.bf16.msra.mxu0 0
    %1183 = vmatprep.subr.bf16.mxu0 0
    %1184 = vmatpush1.bf16.msra.mxu0 0
    %1185 = vmatprep.subr.bf16.mxu0 0
    %1186 = vmatpush1.bf16.msra.mxu0 0
    %1187 = vmatprep.mubr.bf16.mxu0 0
    %1188 = vmatmul.mubr.bf16.gmra.mrb[0].mxu0 %v913
    %v1189 = vpop.f32.mrb[0].mxu0
    %v1190 = vadd.f32 %v1150, %v1189
    %v1191 = vpop.f32.mrb[0].mxu0
    %v1192 = vpop.f32.mrb[0].mxu0
    %v1193 = vpop.f32.mrb[0].mxu0
    %1194 = vdwg.mxu0
    %vm1195 = vcmask 74752
    %1196 = vst.msk [vmem:[#allocation2] sm:$0x3] %vm1195, %v1190
    // Predicated region
    $region14: #{cnn_forward.5} parent=1 // pred_check
      _
    $region15: #{cnn_forward.5} parent=1 // pred_check_branch
      %1198 = sbr.rel (0) target = $region17
    $region16: #{cnn_forward.5} parent=1 // pred_region
      %s1200 = ssub.s32 32, 32
      %1201 = vsyncadd [#allocation3], %s1200
      %s1203 = sshll.u32 [#allocation2], 4
      %s1204 = int_to_ptr.vmem [resolvable:$true] %s1203
      %1206 = dma.vmem_to_hbm [thread:$0]  %s1204, 32, %s3, [#allocation3]
    $region17: #{cnn_forward.5} parent=1 // pred_fallthru
      _
    // Predicated region
    $region18: #{cnn_forward.5} parent=1 // pred_check
      _
    $region19: #{cnn_forward.5} parent=1 // pred_check_branch
      %1208 = sbr.rel (0) target = $region21
    $region20: #{cnn_forward.5} parent=1 // pred_region
      %1209 = dma.done [#allocation3], 32
    $region21: #{cnn_forward.5} parent=1 // pred_fallthru
      _
    %1210 = vsyncpa [#allocation3], 1

// kernel: cnn_forward.4
$region0: #{cnn_forward.4}
  #allocation0 [shape = 'u32[]', space=smem, size = 0x4, offset = 0x4, fixed_abs, tag = 'smem constant byte address 0x4 - core index']
  #allocation1 [shape = 'u32[144,128]{1,0:T(1,128)}', space=vmem, size = 0x12000, scoped, tag = 'internal scratch']
  #allocation2 [shape = 'f32[32,126]{1,0:T(8,128)}', space=vmem, size = 0x4000, scoped, tag = 'scratch operand']
  %s0 = inlined_call_operand.vmem [shape: bf16[2,16,180], index: 0, kind: input, shape index: {}]
  %s1 = inlined_call_operand.vmem [shape: bf16[2,16,180], index: 1, kind: input, shape index: {}]
  %s2 = inlined_call_operand.vmem [shape: bf16[25,32,16], index: 2, kind: input, shape index: {}]
  %s3 = inlined_call_operand.vmem [shape: f32[32,1], index: 3, kind: input, shape index: {}]
  %s4 = inlined_call_operand.vmem [shape: bf16[125,49], index: 4, kind: input, shape index: {}]
  %s5 = inlined_call_operand.vmem [shape: bf16[2,32,49], index: 5, kind: output, shape index: {}]
  %s6 = sld [smem:[#allocation0]]
  $region53: #{cnn_forward.4} parent=0
    _
  %s8 = ssub.s32 1, %s6
  %s9 = scalar_select 0, %s8, %s6
  loop: start=0, step=1, limit=4
  $region2: #{cnn_forward.4} parent=0 // loop_pre_header
    _
  $region3: #{cnn_forward.4} parent=0 // loop_header
    %s11 = sphi 0, %s15
    %p12 = scmp.ge.s32.totalorder %s11, 4
    %s21 = sphi 0, %s23
    %s24 = sphi 0, %s21
    %s25 = sphi 0, %s24
    %s41 = sphi 0, %s25
    %s47 = sphi 0, %s49
    %s50 = sphi 0, %s47
    %s51 = sphi 0, %s50
    %s67 = sphi 0, %s51
    %s71 = sphi 0, %s71
    %s73 = sphi 0, %s71
    %s74 = sphi 0, %s73
    %s88 = sphi 0, %s74
    %s92 = sphi 0, %s92
    %s94 = sphi 0, %s92
    %s95 = sphi 0, %s94
    %s109 = sphi 0, %s95
    %s113 = sphi 0, %s113
    %s115 = sphi 0, %s113
    %s116 = sphi 0, %s115
    %s130 = sphi 0, %s116
    %s136 = sphi 0, %s138
    %s139 = sphi 0, %s136
    %s140 = sphi 0, %s139
    %s156 = sphi 0, %s140
  $region4: #{cnn_forward.4} parent=0 // loop_header_branch
    %14 = sbr.rel (%p12) target = $region8
  $region5: #{cnn_forward.4} parent=0 // loop_body
    %s16 = ssub.s32 %s11, 1
    %s17 = ssub.s32 %s11, 2
    %s18 = sadd.s32 %s11, 1
    %s19 = ssub.s32 %s11, %s18
    %p20 = scmp.eq.s32.totalorder %s19, 0
    %s22 = sadd.s32 %s21, 1
    %s23 = scalar_select %p20, %s21, %s22
    %p26 = pneg %p20
    %p27 = scmp.eq.s32.totalorder %s11, 1
    %p28 = por %p26, %p27
    %p29 = scmp.ne.s32.totalorder %s21, %s24
    %p30 = scmp.eq.s32.totalorder %s11, 0
    %p31 = por %p29, %p30
    %p32 = scmp.ne.s32.totalorder %s21, %s24
    %p33 = scmp.eq.s32.totalorder %s16, 1
    %p34 = por %p32, %p33
    %p35 = scmp.ne.s32.totalorder %s24, %s25
    %p36 = scmp.eq.s32.totalorder %s16, 0
    %p37 = por %p35, %p36
    %p38 = scmp.ne.s32.totalorder %s24, %s25
    %p39 = scmp.eq.s32.totalorder %s17, 1
    %p40 = por %p38, %p39
    %p42 = scmp.ne.s32.totalorder %s25, %s41
    %p43 = scmp.eq.s32.totalorder %s17, 0
    %p44 = por %p42, %p43
    %s45 = ssub.s32 %s11, %s18
    %p46 = scmp.eq.s32.totalorder %s45, 0
    %s48 = sadd.s32 %s47, 1
    %s49 = scalar_select %p46, %s47, %s48
    %p52 = pneg %p46
    %p53 = scmp.eq.s32.totalorder %s11, 1
    %p54 = por %p52, %p53
    %p55 = scmp.ne.s32.totalorder %s47, %s50
    %p56 = scmp.eq.s32.totalorder %s11, 0
    %p57 = por %p55, %p56
    %p58 = scmp.ne.s32.totalorder %s47, %s50
    %p59 = scmp.eq.s32.totalorder %s16, 1
    %p60 = por %p58, %p59
    %p61 = scmp.ne.s32.totalorder %s50, %s51
    %p62 = scmp.eq.s32.totalorder %s16, 0
    %p63 = por %p61, %p62
    %p64 = scmp.ne.s32.totalorder %s50, %s51
    %p65 = scmp.eq.s32.totalorder %s17, 1
    %p66 = por %p64, %p65
    %p68 = scmp.ne.s32.totalorder %s51, %s67
    %p69 = scmp.eq.s32.totalorder %s17, 0
    %p70 = por %p68, %p69
    %s72 = sadd.s32 %s71, 1
    %p75 = scmp.eq.s32.totalorder %s11, 1
    %p76 = scmp.ne.s32.totalorder %s71, %s73
    %p77 = scmp.eq.s32.totalorder %s11, 0
    %p78 = por %p76, %p77
    %p79 = scmp.ne.s32.totalorder %s71, %s73
    %p80 = scmp.eq.s32.totalorder %s16, 1
    %p81 = por %p79, %p80
    %p82 = scmp.ne.s32.totalorder %s73, %s74
    %p83 = scmp.eq.s32.totalorder %s16, 0
    %p84 = por %p82, %p83
    %p85 = scmp.ne.s32.totalorder %s73, %s74
    %p86 = scmp.eq.s32.totalorder %s17, 1
    %p87 = por %p85, %p86
    %p89 = scmp.ne.s32.totalorder %s74, %s88
    %p90 = scmp.eq.s32.totalorder %s17, 0
    %p91 = por %p89, %p90
    %s93 = sadd.s32 %s92, 1
    %p96 = scmp.eq.s32.totalorder %s11, 1
    %p97 = scmp.ne.s32.totalorder %s92, %s94
    %p98 = scmp.eq.s32.totalorder %s11, 0
    %p99 = por %p97, %p98
    %p100 = scmp.ne.s32.totalorder %s92, %s94
    %p101 = scmp.eq.s32.totalorder %s16, 1
    %p102 = por %p100, %p101
    %p103 = scmp.ne.s32.totalorder %s94, %s95
    %p104 = scmp.eq.s32.totalorder %s16, 0
    %p105 = por %p103, %p104
    %p106 = scmp.ne.s32.totalorder %s94, %s95
    %p107 = scmp.eq.s32.totalorder %s17, 1
    %p108 = por %p106, %p107
    %p110 = scmp.ne.s32.totalorder %s95, %s109
    %p111 = scmp.eq.s32.totalorder %s17, 0
    %p112 = por %p110, %p111
    %s114 = sadd.s32 %s113, 1
    %p117 = scmp.eq.s32.totalorder %s11, 1
    %p118 = scmp.ne.s32.totalorder %s113, %s115
    %p119 = scmp.eq.s32.totalorder %s11, 0
    %p120 = por %p118, %p119
    %p121 = scmp.ne.s32.totalorder %s113, %s115
    %p122 = scmp.eq.s32.totalorder %s16, 1
    %p123 = por %p121, %p122
    %p124 = scmp.ne.s32.totalorder %s115, %s116
    %p125 = scmp.eq.s32.totalorder %s16, 0
    %p126 = por %p124, %p125
    %p127 = scmp.ne.s32.totalorder %s115, %s116
    %p128 = scmp.eq.s32.totalorder %s17, 1
    %p129 = por %p127, %p128
    %p131 = scmp.ne.s32.totalorder %s116, %s130
    %p132 = scmp.eq.s32.totalorder %s17, 0
    %p133 = por %p131, %p132
    %s134 = ssub.s32 %s11, %s18
    %p135 = scmp.eq.s32.totalorder %s134, 0
    %s137 = sadd.s32 %s136, 1
    %s138 = scalar_select %p135, %s136, %s137
    %p141 = pneg %p135
    %p142 = scmp.eq.s32.totalorder %s11, 1
    %p143 = por %p141, %p142
    %p144 = scmp.ne.s32.totalorder %s136, %s139
    %p145 = scmp.eq.s32.totalorder %s11, 0
    %p146 = por %p144, %p145
    %p147 = scmp.ne.s32.totalorder %s136, %s139
    %p148 = scmp.eq.s32.totalorder %s16, 1
    %p149 = por %p147, %p148
    %p150 = scmp.ne.s32.totalorder %s139, %s140
    %p151 = scmp.eq.s32.totalorder %s16, 0
    %p152 = por %p150, %p151
    %p153 = scmp.ne.s32.totalorder %s139, %s140
    %p154 = scmp.eq.s32.totalorder %s17, 1
    %p155 = por %p153, %p154
    %p157 = scmp.ne.s32.totalorder %s140, %s156
    %p158 = scmp.eq.s32.totalorder %s17, 0
    %p159 = por %p157, %p158
    %p160 = scmp.le.s32.totalorder 1, %s11
    %p161 = scmp.lt.s32.totalorder %s11, 3
    %p162 = pnand %p160, %p161
    %p163 = pneg %p162
    // Predicated region
    $region9: #{cnn_forward.4} parent=5 // pred_check
      _
    $region10: #{cnn_forward.4} parent=5 // pred_check_branch
      %165 = sbr.rel (%p162) target = $region12
    $region11: #{cnn_forward.4} parent=5 // pred_region
      %s166 = ssub.s32 %s11, 1
      // Predicated region
      $region13: #{cnn_forward.4} parent=11 // pred_check
        %p167 = pneg %p84
      $region14: #{cnn_forward.4} parent=11 // pred_check_branch
        %169 = sbr.rel (%p167) target = $region16
      $region15: #{cnn_forward.4} parent=11 // pred_region
        _
      $region16: #{cnn_forward.4} parent=11 // pred_fallthru
        _
      // Predicated region
      $region17: #{cnn_forward.4} parent=11 // pred_check
        %p170 = pneg %p105
      $region18: #{cnn_forward.4} parent=11 // pred_check_branch
        %172 = sbr.rel (%p170) target = $region20
      $region19: #{cnn_forward.4} parent=11 // pred_region
        _
      $region20: #{cnn_forward.4} parent=11 // pred_fallthru
        _
      // Predicated region
      $region21: #{cnn_forward.4} parent=11 // pred_check
        %p173 = pneg %p126
      $region22: #{cnn_forward.4} parent=11 // pred_check_branch
        %175 = sbr.rel (%p173) target = $region24
      $region23: #{cnn_forward.4} parent=11 // pred_region
        _
      $region24: #{cnn_forward.4} parent=11 // pred_fallthru
        _
    $region12: #{cnn_forward.4} parent=5 // pred_fallthru
      _
    %p176 = scmp.lt.s32.totalorder %s11, 2
    // Predicated region
    $region25: #{cnn_forward.4} parent=5 // pred_check
      %p177 = pneg %p176
    $region26: #{cnn_forward.4} parent=5 // pred_check_branch
      %179 = sbr.rel (%p177) target = $region28
    $region27: #{cnn_forward.4} parent=5 // pred_region
      // Predicated region
      $region29: #{cnn_forward.4} parent=27 // pred_check
        %p180 = pneg %p31
      $region30: #{cnn_forward.4} parent=27 // pred_check_branch
        %182 = sbr.rel (%p180) target = $region32
      $region31: #{cnn_forward.4} parent=27 // pred_region
        %p183 = scmp.lt.s32.totalorder %s11, 1
        %s184 = scalar_select %p183, %s11, 1
        %s185 = smul.addr %s184, 4
        %s186 = smul.addr %s185, 4
        %s187 = scalar_lea.vmem %s0, %s186
      $region32: #{cnn_forward.4} parent=27 // pred_fallthru
        _
      // Predicated region
      $region33: #{cnn_forward.4} parent=27 // pred_check
        %p188 = pneg %p57
      $region34: #{cnn_forward.4} parent=27 // pred_check_branch
        %190 = sbr.rel (%p188) target = $region36
      $region35: #{cnn_forward.4} parent=27 // pred_region
        %p191 = scmp.lt.s32.totalorder %s11, 1
        %s192 = scalar_select %p191, %s11, 1
        %s193 = smul.addr %s192, 4
        %s194 = smul.addr %s193, 4
        %s195 = scalar_lea.vmem %s1, %s194
      $region36: #{cnn_forward.4} parent=27 // pred_fallthru
        _
    $region28: #{cnn_forward.4} parent=5 // pred_fallthru
      _
    %p196 = scmp.le.s32.totalorder 1, %s11
    %p197 = scmp.lt.s32.totalorder %s11, 3
    %p198 = pnand %p196, %p197
    %p199 = pneg %p198
    // Predicated region
    $region37: #{cnn_forward.4} parent=5 // pred_check
      _
    $region38: #{cnn_forward.4} parent=5 // pred_check_branch
      %201 = sbr.rel (%p198) target = $region40
    $region39: #{cnn_forward.4} parent=5 // pred_region
      %s202 = ssub.s32 %s11, 1
      %p203 = scmp.lt.s32.totalorder %s16, 1
      %s204 = scalar_select %p203, %s16, 1
      %s205 = smul.addr %s204, 4
      %s206 = smul.addr %s205, 4
      %s207 = scalar_lea.vmem %s0, %s206
      %p208 = pneg %p37
      %p209 = pneg %p34
      %p210 = scmp.lt.s32.totalorder %s16, 1
      %s211 = scalar_select %p210, %s16, 1
      %s212 = smul.addr %s211, 4
      %s213 = smul.addr %s212, 4
      %s214 = scalar_lea.vmem %s1, %s213
      %p215 = pneg %p63
      %p216 = pneg %p60
      %p217 = pneg %p84
      %p218 = pneg %p81
      %p219 = pneg %p105
      %p220 = pneg %p102
      %p221 = pneg %p126
      %p222 = pneg %p123
      %p223 = pneg %p152
      %p224 = pneg %p149
      %p225 = scmp.lt.s32.totalorder %s16, 1
      %s226 = scalar_select %p225, %s16, 1
      %s227 = smul.addr %s226, 4
      %s228 = smul.addr %s227, 4
      %s229 = scalar_lea.vmem %s5, %s228
      %p230 = scmp.lt.s32.totalorder %s16, 1
      %s231 = scalar_select %p230, %s16, 1
      %s232 = smul.addr %s231, 4
      %s233 = smul.addr %s232, 4
      %s234 = scalar_lea.vmem %s0, %s233
      %p235 = scmp.lt.s32.totalorder %s16, 1
      %s236 = scalar_select %p235, %s16, 1
      %s237 = smul.addr %s236, 4
      %s238 = smul.addr %s237, 4
      %s239 = scalar_lea.vmem %s1, %s238
      %p240 = scmp.lt.s32.totalorder %s16, 1
      %s241 = scalar_select %p240, %s16, 1
      %s242 = smul.addr %s241, 4
      %s243 = smul.addr %s242, 4
      %s244 = scalar_lea.vmem %s5, %s243
      %v246 = vld [vmem:[%s2] sm:$0xf]
      %v247 = vld [vmem:[%s2 + $0x4] sm:$0xf]
      %v248 = vld [vmem:[%s2 + $0x8] sm:$0xf]
      %v249 = vld [vmem:[%s2 + $0xc] sm:$0xf]
      %v250 = vld [vmem:[%s234] sm:$0xf]
      %v251 = vld [vmem:[%s234 + $0x8] sm:$0xf]
      %v252 = vld [vmem:[%s239] sm:$0xf]
      %v253 = vld [vmem:[%s239 + $0x8] sm:$0xf]
      %s254 = scalar_lea.vmem %s2, 16
      %v255 = vld [vmem:[%s254] sm:$0xf]
      %v256 = vld [vmem:[%s254 + $0x4] sm:$0xf]
      %v257 = vld [vmem:[%s254 + $0x8] sm:$0xf]
      %v258 = vld [vmem:[%s254 + $0xc] sm:$0xf]
      %v263 = vunpack.c.l.b16 %v255
      %v264 = vunpack.c.l.b16 %v256
      %v265 = vunpack.c.l.b16 %v257
      %v266 = vunpack.c.l.b16 %v258
      %v267 = vpack.c.b16 %v264, %v263
      %v268 = vpack.c.b16 %v266, %v265
      %v271 = vunpack.c.l.b16 %v250
      %v272 = vunpack.c.l.b16 %v251
      %v273 = vpack.c.b16 %v272, %v271
      %274 = vrot.lane.b32.xlu0 %v273, 127
      %v275 = vpop.permute.xlu0 %274
      %vm277 = vcmask 130048
      %v279 = vsel %vm277, %v267, 0
      %v282 = vsel %vm277, %v268, 0
      %284 = vmatprep.subr.bf16.mxu0 0
      %285 = vmatpush1.bf16.msra.mxu0 %v275
      %286 = vmatprep.subr.bf16.mxu0 0
      %287 = vmatpush1.bf16.msra.mxu0 0
      %288 = vmatprep.subr.bf16.mxu0 0
      %289 = vmatpush1.bf16.msra.mxu0 0
      %290 = vmatprep.subr.bf16.mxu0 0
      %291 = vmatpush1.bf16.msra.mxu0 0
      %292 = vmatprep.subr.bf16.mxu0 0
      %293 = vmatpush1.bf16.msra.mxu0 0
      %294 = vmatprep.subr.bf16.mxu0 0
      %295 = vmatpush1.bf16.msra.mxu0 0
      %296 = vmatprep.subr.bf16.mxu0 0
      %297 = vmatpush1.bf16.msra.mxu0 0
      %298 = vmatprep.subr.bf16.mxu0 0
      %299 = vmatpush1.bf16.msra.mxu0 0
      %300 = vmatprep.subr.bf16.mxu0 0
      %301 = vmatpush1.bf16.msra.mxu0 0
      %302 = vmatprep.subr.bf16.mxu0 0
      %303 = vmatpush1.bf16.msra.mxu0 0
      %304 = vmatprep.subr.bf16.mxu0 0
      %305 = vmatpush1.bf16.msra.mxu0 0
      %306 = vmatprep.subr.bf16.mxu0 0
      %307 = vmatpush1.bf16.msra.mxu0 0
      %308 = vmatprep.subr.bf16.mxu0 0
      %309 = vmatpush1.bf16.msra.mxu0 0
      %310 = vmatprep.subr.bf16.mxu0 0
      %311 = vmatpush1.bf16.msra.mxu0 0
      %312 = vmatprep.subr.bf16.mxu0 0
      %313 = vmatpush1.bf16.msra.mxu0 0
      %314 = vmatprep.subr.bf16.mxu0 0
      %315 = vmatpush1.bf16.msra.mxu0 0
      %316 = vmatprep.mubr.bf16.mxu0 0
      %317 = vmatmul.mubr.bf16.gmra.mrb[0].mxu0 %v279
      %v318 = vpop.f32.mrb[0].mxu0
      %v319 = vadd.f32 0.0, %v318
      %v320 = vpop.f32.mrb[0].mxu0
      %v321 = vpop.f32.mrb[0].mxu0
      %v322 = vadd.f32 0.0, %v321
      %v323 = vpop.f32.mrb[0].mxu0
      %324 = vmatprep.mubr.bf16.mxu0 0
      %325 = vmatmul.mubr.bf16.gmra.mrb[0].mxu0 %v282
      %v326 = vpop.f32.mrb[0].mxu0
      %v327 = vadd.f32 0.0, %v326
      %v328 = vpop.f32.mrb[0].mxu0
      %v329 = vpop.f32.mrb[0].mxu0
      %v330 = vadd.f32 0.0, %v329
      %v331 = vpop.f32.mrb[0].mxu0
      %332 = vdwg.mxu0
      %v337 = vunpack.c.l.b16 %v246
      %v338 = vunpack.c.l.b16 %v247
      %v339 = vunpack.c.l.b16 %v248
      %v340 = vunpack.c.l.b16 %v249
      %v341 = vpack.c.b16 %v338, %v337
      %v342 = vpack.c.b16 %v340, %v339
      %v345 = vsel %vm277, %v341, 0
      %v348 = vsel %vm277, %v342, 0
      %350 = vmatprep.subr.bf16.mxu0 0
      %351 = vmatpush1.bf16.msra.mxu0 %v273
      %352 = vmatprep.subr.bf16.mxu0 0
      %353 = vmatpush1.bf16.msra.mxu0 0
      %354 = vmatprep.subr.bf16.mxu0 0
      %355 = vmatpush1.bf16.msra.mxu0 0
      %356 = vmatprep.subr.bf16.mxu0 0
      %357 = vmatpush1.bf16.msra.mxu0 0
      %358 = vmatprep.subr.bf16.mxu0 0
      %359 = vmatpush1.bf16.msra.mxu0 0
      %360 = vmatprep.subr.bf16.mxu0 0
      %361 = vmatpush1.bf16.msra.mxu0 0
      %362 = vmatprep.subr.bf16.mxu0 0
      %363 = vmatpush1.bf16.msra.mxu0 0
      %364 = vmatprep.subr.bf16.mxu0 0
      %365 = vmatpush1.bf16.msra.mxu0 0
      %366 = vmatprep.subr.bf16.mxu0 0
      %367 = vmatpush1.bf16.msra.mxu0 0
      %368 = vmatprep.subr.bf16.mxu0 0
      %369 = vmatpush1.bf16.msra.mxu0 0
      %370 = vmatprep.subr.bf16.mxu0 0
      %371 = vmatpush1.bf16.msra.mxu0 0
      %372 = vmatprep.subr.bf16.mxu0 0
      %373 = vmatpush1.bf16.msra.mxu0 0
      %374 = vmatprep.subr.bf16.mxu0 0
      %375 = vmatpush1.bf16.msra.mxu0 0
      %376 = vmatprep.subr.bf16.mxu0 0
      %377 = vmatpush1.bf16.msra.mxu0 0
      %378 = vmatprep.subr.bf16.mxu0 0
      %379 = vmatpush1.bf16.msra.mxu0 0
      %380 = vmatprep.subr.bf16.mxu0 0
      %381 = vmatpush1.bf16.msra.mxu0 0
      %382 = vmatprep.mubr.bf16.mxu0 0
      %383 = vmatmul.mubr.bf16.gmra.mrb[0].mxu0 %v345
      %v384 = vpop.f32.mrb[0].mxu0
      %v385 = vadd.f32 %v319, %v384
      %v386 = vpop.f32.mrb[0].mxu0
      %v387 = vpop.f32.mrb[0].mxu0
      %v388 = vadd.f32 %v322, %v387
      %v389 = vpop.f32.mrb[0].mxu0
      %390 = vmatprep.mubr.bf16.mxu0 0
      %391 = vmatmul.mubr.bf16.gmra.mrb[0].mxu0 %v348
      %v392 = vpop.f32.mrb[0].mxu0
      %v393 = vadd.f32 %v327, %v392
      %v394 = vpop.f32.mrb[0].mxu0
      %v395 = vpop.f32.mrb[0].mxu0
      %v396 = vadd.f32 %v330, %v395
      %v397 = vpop.f32.mrb[0].mxu0
      %398 = vdwg.mxu0
      %v401 = vunpack.c.l.b16 %v252
      %v402 = vunpack.c.l.b16 %v253
      %v403 = vpack.c.b16 %v402, %v401
      %404 = vrot.lane.b32.xlu0 %v403, 127
      %v405 = vpop.permute.xlu0 %404
      %407 = vmatprep.subr.bf16.mxu0 0
      %408 = vmatpush1.bf16.msra.mxu0 %v405
      %409 = vmatprep.subr.bf16.mxu0 0
      %410 = vmatpush1.bf16.msra.mxu0 0
      %411 = vmatprep.subr.bf16.mxu0 0
      %412 = vmatpush1.bf16.msra.mxu0 0
      %413 = vmatprep.subr.bf16.mxu0 0
      %414 = vmatpush1.bf16.msra.mxu0 0
      %415 = vmatprep.subr.bf16.mxu0 0
      %416 = vmatpush1.bf16.msra.mxu0 0
      %417 = vmatprep.subr.bf16.mxu0 0
      %418 = vmatpush1.bf16.msra.mxu0 0
      %419 = vmatprep.subr.bf16.mxu0 0
      %420 = vmatpush1.bf16.msra.mxu0 0
      %421 = vmatprep.subr.bf16.mxu0 0
      %422 = vmatpush1.bf16.msra.mxu0 0
      %423 = vmatprep.subr.bf16.mxu0 0
      %424 = vmatpush1.bf16.msra.mxu0 0
      %425 = vmatprep.subr.bf16.mxu0 0
      %426 = vmatpush1.bf16.msra.mxu0 0
      %427 = vmatprep.subr.bf16.mxu0 0
      %428 = vmatpush1.bf16.msra.mxu0 0
      %429 = vmatprep.subr.bf16.mxu0 0
      %430 = vmatpush1.bf16.msra.mxu0 0
      %431 = vmatprep.subr.bf16.mxu0 0
      %432 = vmatpush1.bf16.msra.mxu0 0
      %433 = vmatprep.subr.bf16.mxu0 0
      %434 = vmatpush1.bf16.msra.mxu0 0
      %435 = vmatprep.subr.bf16.mxu0 0
      %436 = vmatpush1.bf16.msra.mxu0 0
      %437 = vmatprep.subr.bf16.mxu0 0
      %438 = vmatpush1.bf16.msra.mxu0 0
      %439 = vmatprep.mubr.bf16.mxu0 0
      %440 = vmatmul.mubr.bf16.gmra.mrb[0].mxu0 %v279
      %v441 = vpop.f32.mrb[0].mxu0
      %v442 = vadd.f32 0.0, %v441
      %v443 = vpop.f32.mrb[0].mxu0
      %v444 = vpop.f32.mrb[0].mxu0
      %v445 = vadd.f32 0.0, %v444
      %v446 = vpop.f32.mrb[0].mxu0
      %447 = vmatprep.mubr.bf16.mxu0 0
      %448 = vmatmul.mubr.bf16.gmra.mrb[0].mxu0 %v282
      %v449 = vpop.f32.mrb[0].mxu0
      %v450 = vadd.f32 0.0, %v449
      %v451 = vpop.f32.mrb[0].mxu0
      %v452 = vpop.f32.mrb[0].mxu0
      %v453 = vadd.f32 0.0, %v452
      %v454 = vpop.f32.mrb[0].mxu0
      %455 = vdwg.mxu0
      %457 = vmatprep.subr.bf16.mxu0 0
      %458 = vmatpush1.bf16.msra.mxu0 %v403
      %459 = vmatprep.subr.bf16.mxu0 0
      %460 = vmatpush1.bf16.msra.mxu0 0
      %461 = vmatprep.subr.bf16.mxu0 0
      %462 = vmatpush1.bf16.msra.mxu0 0
      %463 = vmatprep.subr.bf16.mxu0 0
      %464 = vmatpush1.bf16.msra.mxu0 0
      %465 = vmatprep.subr.bf16.mxu0 0
      %466 = vmatpush1.bf16.msra.mxu0 0
      %467 = vmatprep.subr.bf16.mxu0 0
      %468 = vmatpush1.bf16.msra.mxu0 0
      %469 = vmatprep.subr.bf16.mxu0 0
      %470 = vmatpush1.bf16.msra.mxu0 0
      %471 = vmatprep.subr.bf16.mxu0 0
      %472 = vmatpush1.bf16.msra.mxu0 0
      %473 = vmatprep.subr.bf16.mxu0 0
      %474 = vmatpush1.bf16.msra.mxu0 0
      %475 = vmatprep.subr.bf16.mxu0 0
      %476 = vmatpush1.bf16.msra.mxu0 0
      %477 = vmatprep.subr.bf16.mxu0 0
      %478 = vmatpush1.bf16.msra.mxu0 0
      %479 = vmatprep.subr.bf16.mxu0 0
      %480 = vmatpush1.bf16.msra.mxu0 0
      %481 = vmatprep.subr.bf16.mxu0 0
      %482 = vmatpush1.bf16.msra.mxu0 0
      %483 = vmatprep.subr.bf16.mxu0 0
      %484 = vmatpush1.bf16.msra.mxu0 0
      %485 = vmatprep.subr.bf16.mxu0 0
      %486 = vmatpush1.bf16.msra.mxu0 0
      %487 = vmatprep.subr.bf16.mxu0 0
      %488 = vmatpush1.bf16.msra.mxu0 0
      %489 = vmatprep.mubr.bf16.mxu0 0
      %490 = vmatmul.mubr.bf16.gmra.mrb[0].mxu0 %v345
      %v491 = vpop.f32.mrb[0].mxu0
      %v492 = vadd.f32 %v442, %v491
      %v493 = vpop.f32.mrb[0].mxu0
      %v494 = vpop.f32.mrb[0].mxu0
      %v495 = vadd.f32 %v445, %v494
      %v496 = vpop.f32.mrb[0].mxu0
      %497 = vmatprep.mubr.bf16.mxu0 0
      %498 = vmatmul.mubr.bf16.gmra.mrb[0].mxu0 %v348
      %v499 = vpop.f32.mrb[0].mxu0
      %v500 = vadd.f32 %v450, %v499
      %v501 = vpop.f32.mrb[0].mxu0
      %v502 = vpop.f32.mrb[0].mxu0
      %v503 = vadd.f32 %v453, %v502
      %v504 = vpop.f32.mrb[0].mxu0
      %505 = vdwg.mxu0
      %s506 = scalar_lea.vmem %s2, 32
      %v507 = vld [vmem:[%s506] sm:$0xf]
      %v508 = vld [vmem:[%s506 + $0x4] sm:$0xf]
      %v509 = vld [vmem:[%s506 + $0x8] sm:$0xf]
      %v510 = vld [vmem:[%s506 + $0xc] sm:$0xf]
      %v515 = vunpack.c.l.b16 %v507
      %v516 = vunpack.c.l.b16 %v508
      %v517 = vunpack.c.l.b16 %v509
      %v518 = vunpack.c.l.b16 %v510
      %v519 = vpack.c.b16 %v516, %v515
      %v520 = vpack.c.b16 %v518, %v517
      %521 = vrot.lane.b32.xlu0 %v273, 126
      %v522 = vpop.permute.xlu0 %521
      %v525 = vsel %vm277, %v519, 0
      %v528 = vsel %vm277, %v520, 0
      %530 = vmatprep.subr.bf16.mxu0 0
      %531 = vmatpush1.bf16.msra.mxu0 %v522
      %532 = vmatprep.subr.bf16.mxu0 0
      %533 = vmatpush1.bf16.msra.mxu0 0
      %534 = vmatprep.subr.bf16.mxu0 0
      %535 = vmatpush1.bf16.msra.mxu0 0
      %536 = vmatprep.subr.bf16.mxu0 0
      %537 = vmatpush1.bf16.msra.mxu0 0
      %538 = vmatprep.subr.bf16.mxu0 0
      %539 = vmatpush1.bf16.msra.mxu0 0
      %540 = vmatprep.subr.bf16.mxu0 0
      %541 = vmatpush1.bf16.msra.mxu0 0
      %542 = vmatprep.subr.bf16.mxu0 0
      %543 = vmatpush1.bf16.msra.mxu0 0
      %544 = vmatprep.subr.bf16.mxu0 0
      %545 = vmatpush1.bf16.msra.mxu0 0
      %546 = vmatprep.subr.bf16.mxu0 0
      %547 = vmatpush1.bf16.msra.mxu0 0
      %548 = vmatprep.subr.bf16.mxu0 0
      %549 = vmatpush1.bf16.msra.mxu0 0
      %550 = vmatprep.subr.bf16.mxu0 0
      %551 = vmatpush1.bf16.msra.mxu0 0
      %552 = vmatprep.subr.bf16.mxu0 0
      %553 = vmatpush1.bf16.msra.mxu0 0
      %554 = vmatprep.subr.bf16.mxu0 0
      %555 = vmatpush1.bf16.msra.mxu0 0
      %556 = vmatprep.subr.bf16.mxu0 0
      %557 = vmatpush1.bf16.msra.mxu0 0
      %558 = vmatprep.subr.bf16.mxu0 0
      %559 = vmatpush1.bf16.msra.mxu0 0
      %560 = vmatprep.subr.bf16.mxu0 0
      %561 = vmatpush1.bf16.msra.mxu0 0
      %562 = vmatprep.mubr.bf16.mxu0 0
      %563 = vmatmul.mubr.bf16.gmra.mrb[0].mxu0 %v525
      %v564 = vpop.f32.mrb[0].mxu0
      %v565 = vadd.f32 0.0, %v564
      %v566 = vpop.f32.mrb[0].mxu0
      %v567 = vpop.f32.mrb[0].mxu0
      %v568 = vadd.f32 0.0, %v567
      %v569 = vpop.f32.mrb[0].mxu0
      %570 = vmatprep.mubr.bf16.mxu0 0
      %571 = vmatmul.mubr.bf16.gmra.mrb[0].mxu0 %v528
      %v572 = vpop.f32.mrb[0].mxu0
      %v573 = vadd.f32 0.0, %v572
      %v574 = vpop.f32.mrb[0].mxu0
      %v575 = vpop.f32.mrb[0].mxu0
      %v576 = vadd.f32 0.0, %v575
      %v577 = vpop.f32.mrb[0].mxu0
      %578 = vdwg.mxu0
      %v579 = vadd.f32 %v385, %v565
      %v580 = vadd.f32 %v388, %v568
      %v581 = vadd.f32 %v393, %v573
      %v582 = vadd.f32 %v396, %v576
      %583 = vrot.lane.b32.xlu0 %v403, 126
      %v584 = vpop.permute.xlu0 %583
      %586 = vmatprep.subr.bf16.mxu0 0
      %587 = vmatpush1.bf16.msra.mxu0 %v584
      %588 = vmatprep.subr.bf16.mxu0 0
      %589 = vmatpush1.bf16.msra.mxu0 0
      %590 = vmatprep.subr.bf16.mxu0 0
      %591 = vmatpush1.bf16.msra.mxu0 0
      %592 = vmatprep.subr.bf16.mxu0 0
      %593 = vmatpush1.bf16.msra.mxu0 0
      %594 = vmatprep.subr.bf16.mxu0 0
      %595 = vmatpush1.bf16.msra.mxu0 0
      %596 = vmatprep.subr.bf16.mxu0 0
      %597 = vmatpush1.bf16.msra.mxu0 0
      %598 = vmatprep.subr.bf16.mxu0 0
      %599 = vmatpush1.bf16.msra.mxu0 0
      %600 = vmatprep.subr.bf16.mxu0 0
      %601 = vmatpush1.bf16.msra.mxu0 0
      %602 = vmatprep.subr.bf16.mxu0 0
      %603 = vmatpush1.bf16.msra.mxu0 0
      %604 = vmatprep.subr.bf16.mxu0 0
      %605 = vmatpush1.bf16.msra.mxu0 0
      %606 = vmatprep.subr.bf16.mxu0 0
      %607 = vmatpush1.bf16.msra.mxu0 0
      %608 = vmatprep.subr.bf16.mxu0 0
      %609 = vmatpush1.bf16.msra.mxu0 0
      %610 = vmatprep.subr.bf16.mxu0 0
      %611 = vmatpush1.bf16.msra.mxu0 0
      %612 = vmatprep.subr.bf16.mxu0 0
      %613 = vmatpush1.bf16.msra.mxu0 0
      %614 = vmatprep.subr.bf16.mxu0 0
      %615 = vmatpush1.bf16.msra.mxu0 0
      %616 = vmatprep.subr.bf16.mxu0 0
      %617 = vmatpush1.bf16.msra.mxu0 0
      %618 = vmatprep.mubr.bf16.mxu0 0
      %619 = vmatmul.mubr.bf16.gmra.mrb[0].mxu0 %v525
      %v620 = vpop.f32.mrb[0].mxu0
      %v621 = vadd.f32 0.0, %v620
      %v622 = vpop.f32.mrb[0].mxu0
      %v623 = vpop.f32.mrb[0].mxu0
      %v624 = vadd.f32 0.0, %v623
      %v625 = vpop.f32.mrb[0].mxu0
      %626 = vmatprep.mubr.bf16.mxu0 0
      %627 = vmatmul.mubr.bf16.gmra.mrb[0].mxu0 %v528
      %v628 = vpop.f32.mrb[0].mxu0
      %v629 = vadd.f32 0.0, %v628
      %v630 = vpop.f32.mrb[0].mxu0
      %v631 = vpop.f32.mrb[0].mxu0
      %v632 = vadd.f32 0.0, %v631
      %v633 = vpop.f32.mrb[0].mxu0
      %634 = vdwg.mxu0
      %v635 = vadd.f32 %v492, %v621
      %v636 = vadd.f32 %v495, %v624
      %v637 = vadd.f32 %v500, %v629
      %v638 = vadd.f32 %v503, %v632
      %s639 = scalar_lea.vmem %s2, 48
      %v640 = vld [vmem:[%s639] sm:$0xf]
      %v641 = vld [vmem:[%s639 + $0x4] sm:$0xf]
      %v642 = vld [vmem:[%s639 + $0x8] sm:$0xf]
      %v643 = vld [vmem:[%s639 + $0xc] sm:$0xf]
      %v644 = vld [vmem:[%s234] sm:$0xff]
      %v645 = vld [vmem:[%s234 + $0x8] sm:$0xff]
      %v646 = vld [vmem:[%s239] sm:$0xff]
      %v647 = vld [vmem:[%s239 + $0x8] sm:$0xff]
      %v652 = vunpack.c.l.b16 %v640
      %v653 = vunpack.c.l.b16 %v641
      %v654 = vunpack.c.l.b16 %v642
      %v655 = vunpack.c.l.b16 %v643
      %v656 = vpack.c.b16 %v653, %v652
      %v657 = vpack.c.b16 %v655, %v654
      %v660 = vunpack.c.l.b16 %v644
      %v661 = vunpack.c.h.b16 %v644
      %v662 = vunpack.c.l.b16 %v645
      %v663 = vunpack.c.h.b16 %v645
      %v664 = vpack.c.b16 %v662, %v660
      %v665 = vpack.c.b16 %v663, %v661
      %666 = vrot.lane.b32.xlu0 %v664, 125
      %v667 = vpop.permute.xlu0 %666
      %668 = vrot.lane.b32.xlu0 %v665, 125
      %v669 = vpop.permute.xlu0 %668
      %vm670 = vcmask 1022976
      %v671 = vsel %vm670, %v667, %v669
      %v674 = vsel %vm277, %v656, 0
      %v677 = vsel %vm277, %v657, 0
      %679 = vmatprep.subr.bf16.mxu0 0
      %680 = vmatpush1.bf16.msra.mxu0 %v671
      %681 = vmatprep.subr.bf16.mxu0 0
      %682 = vmatpush1.bf16.msra.mxu0 0
      %683 = vmatprep.subr.bf16.mxu0 0
      %684 = vmatpush1.bf16.msra.mxu0 0
      %685 = vmatprep.subr.bf16.mxu0 0
      %686 = vmatpush1.bf16.msra.mxu0 0
      %687 = vmatprep.subr.bf16.mxu0 0
      %688 = vmatpush1.bf16.msra.mxu0 0
      %689 = vmatprep.subr.bf16.mxu0 0
      %690 = vmatpush1.bf16.msra.mxu0 0
      %691 = vmatprep.subr.bf16.mxu0 0
      %692 = vmatpush1.bf16.msra.mxu0 0
      %693 = vmatprep.subr.bf16.mxu0 0
      %694 = vmatpush1.bf16.msra.mxu0 0
      %695 = vmatprep.subr.bf16.mxu0 0
      %696 = vmatpush1.bf16.msra.mxu0 0
      %697 = vmatprep.subr.bf16.mxu0 0
      %698 = vmatpush1.bf16.msra.mxu0 0
      %699 = vmatprep.subr.bf16.mxu0 0
      %700 = vmatpush1.bf16.msra.mxu0 0
      %701 = vmatprep.subr.bf16.mxu0 0
      %702 = vmatpush1.bf16.msra.mxu0 0
      %703 = vmatprep.subr.bf16.mxu0 0
      %704 = vmatpush1.bf16.msra.mxu0 0
      %705 = vmatprep.subr.bf16.mxu0 0
      %706 = vmatpush1.bf16.msra.mxu0 0
      %707 = vmatprep.subr.bf16.mxu0 0
      %708 = vmatpush1.bf16.msra.mxu0 0
      %709 = vmatprep.subr.bf16.mxu0 0
      %710 = vmatpush1.bf16.msra.mxu0 0
      %711 = vmatprep.mubr.bf16.mxu0 0
      %712 = vmatmul.mubr.bf16.gmra.mrb[0].mxu0 %v674
      %v713 = vpop.f32.mrb[0].mxu0
      %v714 = vadd.f32 0.0, %v713
      %v715 = vpop.f32.mrb[0].mxu0
      %v716 = vpop.f32.mrb[0].mxu0
      %v717 = vadd.f32 0.0, %v716
      %v718 = vpop.f32.mrb[0].mxu0
      %719 = vmatprep.mubr.bf16.mxu0 0
      %720 = vmatmul.mubr.bf16.gmra.mrb[0].mxu0 %v677
      %v721 = vpop.f32.mrb[0].mxu0
      %v722 = vadd.f32 0.0, %v721
      %v723 = vpop.f32.mrb[0].mxu0
      %v724 = vpop.f32.mrb[0].mxu0
      %v725 = vadd.f32 0.0, %v724
      %v726 = vpop.f32.mrb[0].mxu0
      %727 = vdwg.mxu0
      %v728 = vadd.f32 %v579, %v714
      %v729 = vadd.f32 %v580, %v717
      %v730 = vadd.f32 %v581, %v722
      %v731 = vadd.f32 %v582, %v725
      %v734 = vunpack.c.l.b16 %v646
      %v735 = vunpack.c.h.b16 %v646
      %v736 = vunpack.c.l.b16 %v647
      %v737 = vunpack.c.h.b16 %v647
      %v738 = vpack.c.b16 %v736, %v734
      %v739 = vpack.c.b16 %v737, %v735
      %740 = vrot.lane.b32.xlu0 %v738, 125
      %v741 = vpop.permute.xlu0 %740
      %742 = vrot.lane.b32.xlu0 %v739, 125
      %v743 = vpop.permute.xlu0 %742
      %v744 = vsel %vm670, %v741, %v743
      %746 = vmatprep.subr.bf16.mxu0 0
      %747 = vmatpush1.bf16.msra.mxu0 %v744
      %748 = vmatprep.subr.bf16.mxu0 0
      %749 = vmatpush1.bf16.msra.mxu0 0
      %750 = vmatprep.subr.bf16.mxu0 0
      %751 = vmatpush1.bf16.msra.mxu0 0
      %752 = vmatprep.subr.bf16.mxu0 0
      %753 = vmatpush1.bf16.msra.mxu0 0
      %754 = vmatprep.subr.bf16.mxu0 0
      %755 = vmatpush1.bf16.msra.mxu0 0
      %756 = vmatprep.subr.bf16.mxu0 0
      %757 = vmatpush1.bf16.msra.mxu0 0
      %758 = vmatprep.subr.bf16.mxu0 0
      %759 = vmatpush1.bf16.msra.mxu0 0
      %760 = vmatprep.subr.bf16.mxu0 0
      %761 = vmatpush1.bf16.msra.mxu0 0
      %762 = vmatprep.subr.bf16.mxu0 0
      %763 = vmatpush1.bf16.msra.mxu0 0
      %764 = vmatprep.subr.bf16.mxu0 0
      %765 = vmatpush1.bf16.msra.mxu0 0
      %766 = vmatprep.subr.bf16.mxu0 0
      %767 = vmatpush1.bf16.msra.mxu0 0
      %768 = vmatprep.subr.bf16.mxu0 0
      %769 = vmatpush1.bf16.msra.mxu0 0
      %770 = vmatprep.subr.bf16.mxu0 0
      %771 = vmatpush1.bf16.msra.mxu0 0
      %772 = vmatprep.subr.bf16.mxu0 0
      %773 = vmatpush1.bf16.msra.mxu0 0
      %774 = vmatprep.subr.bf16.mxu0 0
      %775 = vmatpush1.bf16.msra.mxu0 0
      %776 = vmatprep.subr.bf16.mxu0 0
      %777 = vmatpush1.bf16.msra.mxu0 0
      %778 = vmatprep.mubr.bf16.mxu0 0
      %779 = vmatmul.mubr.bf16.gmra.mrb[0].mxu0 %v674
      %v780 = vpop.f32.mrb[0].mxu0
      %v781 = vadd.f32 0.0, %v780
      %v782 = vpop.f32.mrb[0].mxu0
      %v783 = vpop.f32.mrb[0].mxu0
      %v784 = vadd.f32 0.0, %v783
      %v785 = vpop.f32.mrb[0].mxu0
      %786 = vmatprep.mubr.bf16.mxu0 0
      %787 = vmatmul.mubr.bf16.gmra.mrb[0].mxu0 %v677
      %v788 = vpop.f32.mrb[0].mxu0
      %v789 = vadd.f32 0.0, %v788
      %v790 = vpop.f32.mrb[0].mxu0
      %v791 = vpop.f32.mrb[0].mxu0
      %v792 = vadd.f32 0.0, %v791
      %v793 = vpop.f32.mrb[0].mxu0
      %794 = vdwg.mxu0
      %v795 = vadd.f32 %v635, %v781
      %v796 = vadd.f32 %v636, %v784
      %v797 = vadd.f32 %v637, %v789
      %v798 = vadd.f32 %v638, %v792
      %s799 = scalar_lea.vmem %s2, 64
      %v800 = vld [vmem:[%s799] sm:$0xf]
      %v801 = vld [vmem:[%s799 + $0x4] sm:$0xf]
      %v802 = vld [vmem:[%s799 + $0x8] sm:$0xf]
      %v803 = vld [vmem:[%s799 + $0xc] sm:$0xf]
      %v808 = vunpack.c.l.b16 %v800
      %v809 = vunpack.c.l.b16 %v801
      %v810 = vunpack.c.l.b16 %v802
      %v811 = vunpack.c.l.b16 %v803
      %v812 = vpack.c.b16 %v809, %v808
      %v813 = vpack.c.b16 %v811, %v810
      %814 = vrot.lane.b32.xlu0 %v664, 124
      %v815 = vpop.permute.xlu0 %814
      %816 = vrot.lane.b32.xlu0 %v665, 124
      %v817 = vpop.permute.xlu0 %816
      %vm818 = vcmask 1014784
      %v819 = vsel %vm818, %v815, %v817
      %v822 = vsel %vm277, %v812, 0
      %v825 = vsel %vm277, %v813, 0
      %827 = vmatprep.subr.bf16.mxu0 0
      %828 = vmatpush1.bf16.msra.mxu0 %v819
      %829 = vmatprep.subr.bf16.mxu0 0
      %830 = vmatpush1.bf16.msra.mxu0 0
      %831 = vmatprep.subr.bf16.mxu0 0
      %832 = vmatpush1.bf16.msra.mxu0 0
      %833 = vmatprep.subr.bf16.mxu0 0
      %834 = vmatpush1.bf16.msra.mxu0 0
      %835 = vmatprep.subr.bf16.mxu0 0
      %836 = vmatpush1.bf16.msra.mxu0 0
      %837 = vmatprep.subr.bf16.mxu0 0
      %838 = vmatpush1.bf16.msra.mxu0 0
      %839 = vmatprep.subr.bf16.mxu0 0
      %840 = vmatpush1.bf16.msra.mxu0 0
      %841 = vmatprep.subr.bf16.mxu0 0
      %842 = vmatpush1.bf16.msra.mxu0 0
      %843 = vmatprep.subr.bf16.mxu0 0
      %844 = vmatpush1.bf16.msra.mxu0 0
      %845 = vmatprep.subr.bf16.mxu0 0
      %846 = vmatpush1.bf16.msra.mxu0 0
      %847 = vmatprep.subr.bf16.mxu0 0
      %848 = vmatpush1.bf16.msra.mxu0 0
      %849 = vmatprep.subr.bf16.mxu0 0
      %850 = vmatpush1.bf16.msra.mxu0 0
      %851 = vmatprep.subr.bf16.mxu0 0
      %852 = vmatpush1.bf16.msra.mxu0 0
      %853 = vmatprep.subr.bf16.mxu0 0
      %854 = vmatpush1.bf16.msra.mxu0 0
      %855 = vmatprep.subr.bf16.mxu0 0
      %856 = vmatpush1.bf16.msra.mxu0 0
      %857 = vmatprep.subr.bf16.mxu0 0
      %858 = vmatpush1.bf16.msra.mxu0 0
      %859 = vmatprep.mubr.bf16.mxu0 0
      %860 = vmatmul.mubr.bf16.gmra.mrb[0].mxu0 %v822
      %v861 = vpop.f32.mrb[0].mxu0
      %v862 = vadd.f32 0.0, %v861
      %v863 = vpop.f32.mrb[0].mxu0
      %v864 = vpop.f32.mrb[0].mxu0
      %v865 = vadd.f32 0.0, %v864
      %v866 = vpop.f32.mrb[0].mxu0
      %867 = vmatprep.mubr.bf16.mxu0 0
      %868 = vmatmul.mubr.bf16.gmra.mrb[0].mxu0 %v825
      %v869 = vpop.f32.mrb[0].mxu0
      %v870 = vadd.f32 0.0, %v869
      %v871 = vpop.f32.mrb[0].mxu0
      %v872 = vpop.f32.mrb[0].mxu0
      %v873 = vadd.f32 0.0, %v872
      %v874 = vpop.f32.mrb[0].mxu0
      %875 = vdwg.mxu0
      %v876 = vadd.f32 %v728, %v862
      %v877 = vadd.f32 %v729, %v865
      %v878 = vadd.f32 %v730, %v870
      %v879 = vadd.f32 %v731, %v873
      %880 = vrot.lane.b32.xlu0 %v738, 124
      %v881 = vpop.permute.xlu0 %880
      %882 = vrot.lane.b32.xlu0 %v739, 124
      %v883 = vpop.permute.xlu0 %882
      %v884 = vsel %vm818, %v881, %v883
      %886 = vmatprep.subr.bf16.mxu0 0
      %887 = vmatpush1.bf16.msra.mxu0 %v884
      %888 = vmatprep.subr.bf16.mxu0 0
      %889 = vmatpush1.bf16.msra.mxu0 0
      %890 = vmatprep.subr.bf16.mxu0 0
      %891 = vmatpush1.bf16.msra.mxu0 0
      %892 = vmatprep.subr.bf16.mxu0 0
      %893 = vmatpush1.bf16.msra.mxu0 0
      %894 = vmatprep.subr.bf16.mxu0 0
      %895 = vmatpush1.bf16.msra.mxu0 0
      %896 = vmatprep.subr.bf16.mxu0 0
      %897 = vmatpush1.bf16.msra.mxu0 0
      %898 = vmatprep.subr.bf16.mxu0 0
      %899 = vmatpush1.bf16.msra.mxu0 0
      %900 = vmatprep.subr.bf16.mxu0 0
      %901 = vmatpush1.bf16.msra.mxu0 0
      %902 = vmatprep.subr.bf16.mxu0 0
      %903 = vmatpush1.bf16.msra.mxu0 0
      %904 = vmatprep.subr.bf16.mxu0 0
      %905 = vmatpush1.bf16.msra.mxu0 0
      %906 = vmatprep.subr.bf16.mxu0 0
      %907 = vmatpush1.bf16.msra.mxu0 0
      %908 = vmatprep.subr.bf16.mxu0 0
      %909 = vmatpush1.bf16.msra.mxu0 0
      %910 = vmatprep.subr.bf16.mxu0 0
      %911 = vmatpush1.bf16.msra.mxu0 0
      %912 = vmatprep.subr.bf16.mxu0 0
      %913 = vmatpush1.bf16.msra.mxu0 0
      %914 = vmatprep.subr.bf16.mxu0 0
      %915 = vmatpush1.bf16.msra.mxu0 0
      %916 = vmatprep.subr.bf16.mxu0 0
      %917 = vmatpush1.bf16.msra.mxu0 0
      %918 = vmatprep.mubr.bf16.mxu0 0
      %919 = vmatmul.mubr.bf16.gmra.mrb[0].mxu0 %v822
      %v920 = vpop.f32.mrb[0].mxu0
      %v921 = vadd.f32 0.0, %v920
      %v922 = vpop.f32.mrb[0].mxu0
      %v923 = vpop.f32.mrb[0].mxu0
      %v924 = vadd.f32 0.0, %v923
      %v925 = vpop.f32.mrb[0].mxu0
      %926 = vmatprep.mubr.bf16.mxu0 0
      %927 = vmatmul.mubr.bf16.gmra.mrb[0].mxu0 %v825
      %v928 = vpop.f32.mrb[0].mxu0
      %v929 = vadd.f32 0.0, %v928
      %v930 = vpop.f32.mrb[0].mxu0
      %v931 = vpop.f32.mrb[0].mxu0
      %v932 = vadd.f32 0.0, %v931
      %v933 = vpop.f32.mrb[0].mxu0
      %934 = vdwg.mxu0
      %v935 = vadd.f32 %v795, %v921
      %v936 = vadd.f32 %v796, %v924
      %v937 = vadd.f32 %v797, %v929
      %v938 = vadd.f32 %v798, %v932
      %s939 = scalar_lea.vmem %s2, 80
      %v940 = vld [vmem:[%s939] sm:$0xf]
      %v941 = vld [vmem:[%s939 + $0x4] sm:$0xf]
      %v942 = vld [vmem:[%s939 + $0x8] sm:$0xf]
      %v943 = vld [vmem:[%s939 + $0xc] sm:$0xf]
      %v948 = vunpack.c.l.b16 %v940
      %v949 = vunpack.c.l.b16 %v941
      %v950 = vunpack.c.l.b16 %v942
      %v951 = vunpack.c.l.b16 %v943
      %v952 = vpack.c.b16 %v949, %v948
      %v953 = vpack.c.b16 %v951, %v950
      %v955 = vsel %vm277, %v952, 0
      %v958 = vsel %vm277, %v953, 0
      %960 = vmatprep.subr.bf16.mxu0 0
      %961 = vmatpush1.bf16.msra.mxu0 %v403
      %962 = vmatprep.subr.bf16.mxu0 0
      %963 = vmatpush1.bf16.msra.mxu0 0
      %964 = vmatprep.subr.bf16.mxu0 0
      %965 = vmatpush1.bf16.msra.mxu0 0
      %966 = vmatprep.subr.bf16.mxu0 0
      %967 = vmatpush1.bf16.msra.mxu0 0
      %968 = vmatprep.subr.bf16.mxu0 0
      %969 = vmatpush1.bf16.msra.mxu0 0
      %970 = vmatprep.subr.bf16.mxu0 0
      %971 = vmatpush1.bf16.msra.mxu0 0
      %972 = vmatprep.subr.bf16.mxu0 0
      %973 = vmatpush1.bf16.msra.mxu0 0
      %974 = vmatprep.subr.bf16.mxu0 0
      %975 = vmatpush1.bf16.msra.mxu0 0
      %976 = vmatprep.subr.bf16.mxu0 0
      %977 = vmatpush1.bf16.msra.mxu0 0
      %978 = vmatprep.subr.bf16.mxu0 0
      %979 = vmatpush1.bf16.msra.mxu0 0
      %980 = vmatprep.subr.bf16.mxu0 0
      %981 = vmatpush1.bf16.msra.mxu0 0
      %982 = vmatprep.subr.bf16.mxu0 0
      %983 = vmatpush1.bf16.msra.mxu0 0
      %984 = vmatprep.subr.bf16.mxu0 0
      %985 = vmatpush1.bf16.msra.mxu0 0
      %986 = vmatprep.subr.bf16.mxu0 0
      %987 = vmatpush1.bf16.msra.mxu0 0
      %988 = vmatprep.subr.bf16.mxu0 0
      %989 = vmatpush1.bf16.msra.mxu0 0
      %990 = vmatprep.subr.bf16.mxu0 0
      %991 = vmatpush1.bf16.msra.mxu0 0
      %992 = vmatprep.mubr.bf16.mxu0 0
      %993 = vmatmul.mubr.bf16.gmra.mrb[0].mxu0 %v955
      %v994 = vpop.f32.mrb[0].mxu0
      %v995 = vadd.f32 0.0, %v994
      %v996 = vpop.f32.mrb[0].mxu0
      %v997 = vpop.f32.mrb[0].mxu0
      %v998 = vadd.f32 0.0, %v997
      %v999 = vpop.f32.mrb[0].mxu0
      %1000 = vmatprep.mubr.bf16.mxu0 0
      %1001 = vmatmul.mubr.bf16.gmra.mrb[0].mxu0 %v958
      %v1002 = vpop.f32.mrb[0].mxu0
      %v1003 = vadd.f32 0.0, %v1002
      %v1004 = vpop.f32.mrb[0].mxu0
      %v1005 = vpop.f32.mrb[0].mxu0
      %v1006 = vadd.f32 0.0, %v1005
      %v1007 = vpop.f32.mrb[0].mxu0
      %1008 = vdwg.mxu0
      %v1009 = vadd.f32 %v876, %v995
      %v1010 = vadd.f32 %v877, %v998
      %v1011 = vadd.f32 %v878, %v1003
      %v1012 = vadd.f32 %v879, %v1006
      %1013 = vrot.lane.b32.xlu0 %v664, 110
      %v1014 = vpop.permute.xlu0 %1013
      %1015 = vrot.lane.b32.xlu0 %v665, 110
      %v1016 = vpop.permute.xlu0 %1015
      %vm1017 = vcmask 900096
      %v1018 = vsel %vm1017, %v1014, %v1016
      %1020 = vmatprep.subr.bf16.mxu0 0
      %1021 = vmatpush1.bf16.msra.mxu0 %v1018
      %1022 = vmatprep.subr.bf16.mxu0 0
      %1023 = vmatpush1.bf16.msra.mxu0 0
      %1024 = vmatprep.subr.bf16.mxu0 0
      %1025 = vmatpush1.bf16.msra.mxu0 0
      %1026 = vmatprep.subr.bf16.mxu0 0
      %1027 = vmatpush1.bf16.msra.mxu0 0
      %1028 = vmatprep.subr.bf16.mxu0 0
      %1029 = vmatpush1.bf16.msra.mxu0 0
      %1030 = vmatprep.subr.bf16.mxu0 0
      %1031 = vmatpush1.bf16.msra.mxu0 0
      %1032 = vmatprep.subr.bf16.mxu0 0
      %1033 = vmatpush1.bf16.msra.mxu0 0
      %1034 = vmatprep.subr.bf16.mxu0 0
      %1035 = vmatpush1.bf16.msra.mxu0 0
      %1036 = vmatprep.subr.bf16.mxu0 0
      %1037 = vmatpush1.bf16.msra.mxu0 0
      %1038 = vmatprep.subr.bf16.mxu0 0
      %1039 = vmatpush1.bf16.msra.mxu0 0
      %1040 = vmatprep.subr.bf16.mxu0 0
      %1041 = vmatpush1.bf16.msra.mxu0 0
      %1042 = vmatprep.subr.bf16.mxu0 0
      %1043 = vmatpush1.bf16.msra.mxu0 0
      %1044 = vmatprep.subr.bf16.mxu0 0
      %1045 = vmatpush1.bf16.msra.mxu0 0
      %1046 = vmatprep.subr.bf16.mxu0 0
      %1047 = vmatpush1.bf16.msra.mxu0 0
      %1048 = vmatprep.subr.bf16.mxu0 0
      %1049 = vmatpush1.bf16.msra.mxu0 0
      %1050 = vmatprep.subr.bf16.mxu0 0
      %1051 = vmatpush1.bf16.msra.mxu0 0
      %1052 = vmatprep.mubr.bf16.mxu0 0
      %1053 = vmatmul.mubr.bf16.gmra.mrb[0].mxu0 %v955
      %v1054 = vpop.f32.mrb[0].mxu0
      %v1055 = vadd.f32 0.0, %v1054
      %v1056 = vpop.f32.mrb[0].mxu0
      %v1057 = vpop.f32.mrb[0].mxu0
      %v1058 = vadd.f32 0.0, %v1057
      %v1059 = vpop.f32.mrb[0].mxu0
      %1060 = vmatprep.mubr.bf16.mxu0 0
      %1061 = vmatmul.mubr.bf16.gmra.mrb[0].mxu0 %v958
      %v1062 = vpop.f32.mrb[0].mxu0
      %v1063 = vadd.f32 0.0, %v1062
      %v1064 = vpop.f32.mrb[0].mxu0
      %v1065 = vpop.f32.mrb[0].mxu0
      %v1066 = vadd.f32 0.0, %v1065
      %v1067 = vpop.f32.mrb[0].mxu0
      %1068 = vdwg.mxu0
      %v1069 = vadd.f32 %v935, %v1055
      %v1070 = vadd.f32 %v936, %v1058
      %v1071 = vadd.f32 %v937, %v1063
      %v1072 = vadd.f32 %v938, %v1066
      %s1073 = scalar_lea.vmem %s2, 96
      %v1074 = vld [vmem:[%s1073] sm:$0xf]
      %v1075 = vld [vmem:[%s1073 + $0x4] sm:$0xf]
      %v1076 = vld [vmem:[%s1073 + $0x8] sm:$0xf]
      %v1077 = vld [vmem:[%s1073 + $0xc] sm:$0xf]
      %v1082 = vunpack.c.l.b16 %v1074
      %v1083 = vunpack.c.l.b16 %v1075
      %v1084 = vunpack.c.l.b16 %v1076
      %v1085 = vunpack.c.l.b16 %v1077
      %v1086 = vpack.c.b16 %v1083, %v1082
      %v1087 = vpack.c.b16 %v1085, %v1084
      %v1089 = vsel %vm277, %v1086, 0
      %v1092 = vsel %vm277, %v1087, 0
      %1094 = vmatprep.subr.bf16.mxu0 0
      %1095 = vmatpush1.bf16.msra.mxu0 %v405
      %1096 = vmatprep.subr.bf16.mxu0 0
      %1097 = vmatpush1.bf16.msra.mxu0 0
      %1098 = vmatprep.subr.bf16.mxu0 0
      %1099 = vmatpush1.bf16.msra.mxu0 0
      %1100 = vmatprep.subr.bf16.mxu0 0
      %1101 = vmatpush1.bf16.msra.mxu0 0
      %1102 = vmatprep.subr.bf16.mxu0 0
      %1103 = vmatpush1.bf16.msra.mxu0 0
      %1104 = vmatprep.subr.bf16.mxu0 0
      %1105 = vmatpush1.bf16.msra.mxu0 0
      %1106 = vmatprep.subr.bf16.mxu0 0
      %1107 = vmatpush1.bf16.msra.mxu0 0
      %1108 = vmatprep.subr.bf16.mxu0 0
      %1109 = vmatpush1.bf16.msra.mxu0 0
      %1110 = vmatprep.subr.bf16.mxu0 0
      %1111 = vmatpush1.bf16.msra.mxu0 0
      %1112 = vmatprep.subr.bf16.mxu0 0
      %1113 = vmatpush1.bf16.msra.mxu0 0
      %1114 = vmatprep.subr.bf16.mxu0 0
      %1115 = vmatpush1.bf16.msra.mxu0 0
      %1116 = vmatprep.subr.bf16.mxu0 0
      %1117 = vmatpush1.bf16.msra.mxu0 0
      %1118 = vmatprep.subr.bf16.mxu0 0
      %1119 = vmatpush1.bf16.msra.mxu0 0
      %1120 = vmatprep.subr.bf16.mxu0 0
      %1121 = vmatpush1.bf16.msra.mxu0 0
      %1122 = vmatprep.subr.bf16.mxu0 0
      %1123 = vmatpush1.bf16.msra.mxu0 0
      %1124 = vmatprep.subr.bf16.mxu0 0
      %1125 = vmatpush1.bf16.msra.mxu0 0
      %1126 = vmatprep.mubr.bf16.mxu0 0
      %1127 = vmatmul.mubr.bf16.gmra.mrb[0].mxu0 %v1089
      %v1128 = vpop.f32.mrb[0].mxu0
      %v1129 = vadd.f32 0.0, %v1128
      %v1130 = vpop.f32.mrb[0].mxu0
      %v1131 = vpop.f32.mrb[0].mxu0
      %v1132 = vadd.f32 0.0, %v1131
      %v1133 = vpop.f32.mrb[0].mxu0
      %1134 = vmatprep.mubr.bf16.mxu0 0
      %1135 = vmatmul.mubr.bf16.gmra.mrb[0].mxu0 %v1092
      %v1136 = vpop.f32.mrb[0].mxu0
      %v1137 = vadd.f32 0.0, %v1136
      %v1138 = vpop.f32.mrb[0].mxu0
      %v1139 = vpop.f32.mrb[0].mxu0
      %v1140 = vadd.f32 0.0, %v1139
      %v1141 = vpop.f32.mrb[0].mxu0
      %1142 = vdwg.mxu0
      %v1143 = vadd.f32 %v1009, %v1129
      %v1144 = vadd.f32 %v1010, %v1132
      %v1145 = vadd.f32 %v1011, %v1137
      %v1146 = vadd.f32 %v1012, %v1140
      %1147 = vrot.lane.b32.xlu0 %v664, 109
      %v1148 = vpop.permute.xlu0 %1147
      %1149 = vrot.lane.b32.xlu0 %v665, 109
      %v1150 = vpop.permute.xlu0 %1149
      %vm1151 = vcmask 891904
      %v1152 = vsel %vm1151, %v1148, %v1150
      %1154 = vmatprep.subr.bf16.mxu0 0
      %1155 = vmatpush1.bf16.msra.mxu0 %v1152
      %1156 = vmatprep.subr.bf16.mxu0 0
      %1157 = vmatpush1.bf16.msra.mxu0 0
      %1158 = vmatprep.subr.bf16.mxu0 0
      %1159 = vmatpush1.bf16.msra.mxu0 0
      %1160 = vmatprep.subr.bf16.mxu0 0
      %1161 = vmatpush1.bf16.msra.mxu0 0
      %1162 = vmatprep.subr.bf16.mxu0 0
      %1163 = vmatpush1.bf16.msra.mxu0 0
      %1164 = vmatprep.subr.bf16.mxu0 0
      %1165 = vmatpush1.bf16.msra.mxu0 0
      %1166 = vmatprep.subr.bf16.mxu0 0
      %1167 = vmatpush1.bf16.msra.mxu0 0
      %1168 = vmatprep.subr.bf16.mxu0 0
      %1169 = vmatpush1.bf16.msra.mxu0 0
      %1170 = vmatprep.subr.bf16.mxu0 0
      %1171 = vmatpush1.bf16.msra.mxu0 0
      %1172 = vmatprep.subr.bf16.mxu0 0
      %1173 = vmatpush1.bf16.msra.mxu0 0
      %1174 = vmatprep.subr.bf16.mxu0 0
      %1175 = vmatpush1.bf16.msra.mxu0 0
      %1176 = vmatprep.subr.bf16.mxu0 0
      %1177 = vmatpush1.bf16.msra.mxu0 0
      %1178 = vmatprep.subr.bf16.mxu0 0
      %1179 = vmatpush1.bf16.msra.mxu0 0
      %1180 = vmatprep.subr.bf16.mxu0 0
      %1181 = vmatpush1.bf16.msra.mxu0 0
      %1182 = vmatprep.subr.bf16.mxu0 0
      %1183 = vmatpush1.bf16.msra.mxu0 0
      %1184 = vmatprep.subr.bf16.mxu0 0
      %1185 = vmatpush1.bf16.msra.mxu0 0
      %1186 = vmatprep.mubr.bf16.mxu0 0
      %1187 = vmatmul.mubr.bf16.gmra.mrb[0].mxu0 %v1089
      %v1188 = vpop.f32.mrb[0].mxu0
      %v1189 = vadd.f32 0.0, %v1188
      %v1190 = vpop.f32.mrb[0].mxu0
      %v1191 = vpop.f32.mrb[0].mxu0
      %v1192 = vadd.f32 0.0, %v1191
      %v1193 = vpop.f32.mrb[0].mxu0
      %1194 = vmatprep.mubr.bf16.mxu0 0
      %1195 = vmatmul.mubr.bf16.gmra.mrb[0].mxu0 %v1092
      %v1196 = vpop.f32.mrb[0].mxu0
      %v1197 = vadd.f32 0.0, %v1196
      %v1198 = vpop.f32.mrb[0].mxu0
      %v1199 = vpop.f32.mrb[0].mxu0
      %v1200 = vadd.f32 0.0, %v1199
      %v1201 = vpop.f32.mrb[0].mxu0
      %1202 = vdwg.mxu0
      %v1203 = vadd.f32 %v1069, %v1189
      %v1204 = vadd.f32 %v1070, %v1192
      %v1205 = vadd.f32 %v1071, %v1197
      %v1206 = vadd.f32 %v1072, %v1200
      %s1207 = scalar_lea.vmem %s2, 112
      %v1208 = vld [vmem:[%s1207] sm:$0xf]
      %v1209 = vld [vmem:[%s1207 + $0x4] sm:$0xf]
      %v1210 = vld [vmem:[%s1207 + $0x8] sm:$0xf]
      %v1211 = vld [vmem:[%s1207 + $0xc] sm:$0xf]
      %v1216 = vunpack.c.l.b16 %v1208
      %v1217 = vunpack.c.l.b16 %v1209
      %v1218 = vunpack.c.l.b16 %v1210
      %v1219 = vunpack.c.l.b16 %v1211
      %v1220 = vpack.c.b16 %v1217, %v1216
      %v1221 = vpack.c.b16 %v1219, %v1218
      %v1223 = vsel %vm277, %v1220, 0
      %v1226 = vsel %vm277, %v1221, 0
      %1228 = vmatprep.subr.bf16.mxu0 0
      %1229 = vmatpush1.bf16.msra.mxu0 %v584
      %1230 = vmatprep.subr.bf16.mxu0 0
      %1231 = vmatpush1.bf16.msra.mxu0 0
      %1232 = vmatprep.subr.bf16.mxu0 0
      %1233 = vmatpush1.bf16.msra.mxu0 0
      %1234 = vmatprep.subr.bf16.mxu0 0
      %1235 = vmatpush1.bf16.msra.mxu0 0
      %1236 = vmatprep.subr.bf16.mxu0 0
      %1237 = vmatpush1.bf16.msra.mxu0 0
      %1238 = vmatprep.subr.bf16.mxu0 0
      %1239 = vmatpush1.bf16.msra.mxu0 0
      %1240 = vmatprep.subr.bf16.mxu0 0
      %1241 = vmatpush1.bf16.msra.mxu0 0
      %1242 = vmatprep.subr.bf16.mxu0 0
      %1243 = vmatpush1.bf16.msra.mxu0 0
      %1244 = vmatprep.subr.bf16.mxu0 0
      %1245 = vmatpush1.bf16.msra.mxu0 0
      %1246 = vmatprep.subr.bf16.mxu0 0
      %1247 = vmatpush1.bf16.msra.mxu0 0
      %1248 = vmatprep.subr.bf16.mxu0 0
      %1249 = vmatpush1.bf16.msra.mxu0 0
      %1250 = vmatprep.subr.bf16.mxu0 0
      %1251 = vmatpush1.bf16.msra.mxu0 0
      %1252 = vmatprep.subr.bf16.mxu0 0
      %1253 = vmatpush1.bf16.msra.mxu0 0
      %1254 = vmatprep.subr.bf16.mxu0 0
      %1255 = vmatpush1.bf16.msra.mxu0 0
      %1256 = vmatprep.subr.bf16.mxu0 0
      %1257 = vmatpush1.bf16.msra.mxu0 0
      %1258 = vmatprep.subr.bf16.mxu0 0
      %1259 = vmatpush1.bf16.msra.mxu0 0
      %1260 = vmatprep.mubr.bf16.mxu0 0
      %1261 = vmatmul.mubr.bf16.gmra.mrb[0].mxu0 %v1223
      %v1262 = vpop.f32.mrb[0].mxu0
      %v1263 = vadd.f32 0.0, %v1262
      %v1264 = vpop.f32.mrb[0].mxu0
      %v1265 = vpop.f32.mrb[0].mxu0
      %v1266 = vadd.f32 0.0, %v1265
      %v1267 = vpop.f32.mrb[0].mxu0
      %1268 = vmatprep.mubr.bf16.mxu0 0
      %1269 = vmatmul.mubr.bf16.gmra.mrb[0].mxu0 %v1226
      %v1270 = vpop.f32.mrb[0].mxu0
      %v1271 = vadd.f32 0.0, %v1270
      %v1272 = vpop.f32.mrb[0].mxu0
      %v1273 = vpop.f32.mrb[0].mxu0
      %v1274 = vadd.f32 0.0, %v1273
      %v1275 = vpop.f32.mrb[0].mxu0
      %1276 = vdwg.mxu0
      %v1277 = vadd.f32 %v1143, %v1263
      %v1278 = vadd.f32 %v1144, %v1266
      %v1279 = vadd.f32 %v1145, %v1271
      %v1280 = vadd.f32 %v1146, %v1274
      %1281 = vrot.lane.b32.xlu0 %v664, 108
      %v1282 = vpop.permute.xlu0 %1281
      %1283 = vrot.lane.b32.xlu0 %v665, 108
      %v1284 = vpop.permute.xlu0 %1283
      %vm1285 = vcmask 883712
      %v1286 = vsel %vm1285, %v1282, %v1284
      %1288 = vmatprep.subr.bf16.mxu0 0
      %1289 = vmatpush1.bf16.msra.mxu0 %v1286
      %1290 = vmatprep.subr.bf16.mxu0 0
      %1291 = vmatpush1.bf16.msra.mxu0 0
      %1292 = vmatprep.subr.bf16.mxu0 0
      %1293 = vmatpush1.bf16.msra.mxu0 0
      %1294 = vmatprep.subr.bf16.mxu0 0
      %1295 = vmatpush1.bf16.msra.mxu0 0
      %1296 = vmatprep.subr.bf16.mxu0 0
      %1297 = vmatpush1.bf16.msra.mxu0 0
      %1298 = vmatprep.subr.bf16.mxu0 0
      %1299 = vmatpush1.bf16.msra.mxu0 0
      %1300 = vmatprep.subr.bf16.mxu0 0
      %1301 = vmatpush1.bf16.msra.mxu0 0
      %1302 = vmatprep.subr.bf16.mxu0 0
      %1303 = vmatpush1.bf16.msra.mxu0 0
      %1304 = vmatprep.subr.bf16.mxu0 0
      %1305 = vmatpush1.bf16.msra.mxu0 0
      %1306 = vmatprep.subr.bf16.mxu0 0
      %1307 = vmatpush1.bf16.msra.mxu0 0
      %1308 = vmatprep.subr.bf16.mxu0 0
      %1309 = vmatpush1.bf16.msra.mxu0 0
      %1310 = vmatprep.subr.bf16.mxu0 0
      %1311 = vmatpush1.bf16.msra.mxu0 0
      %1312 = vmatprep.subr.bf16.mxu0 0
      %1313 = vmatpush1.bf16.msra.mxu0 0
      %1314 = vmatprep.subr.bf16.mxu0 0
      %1315 = vmatpush1.bf16.msra.mxu0 0
      %1316 = vmatprep.subr.bf16.mxu0 0
      %1317 = vmatpush1.bf16.msra.mxu0 0
      %1318 = vmatprep.subr.bf16.mxu0 0
      %1319 = vmatpush1.bf16.msra.mxu0 0
      %1320 = vmatprep.mubr.bf16.mxu0 0
      %1321 = vmatmul.mubr.bf16.gmra.mrb[0].mxu0 %v1223
      %v1322 = vpop.f32.mrb[0].mxu0
      %v1323 = vadd.f32 0.0, %v1322
      %v1324 = vpop.f32.mrb[0].mxu0
      %v1325 = vpop.f32.mrb[0].mxu0
      %v1326 = vadd.f32 0.0, %v1325
      %v1327 = vpop.f32.mrb[0].mxu0
      %1328 = vmatprep.mubr.bf16.mxu0 0
      %1329 = vmatmul.mubr.bf16.gmra.mrb[0].mxu0 %v1226
      %v1330 = vpop.f32.mrb[0].mxu0
      %v1331 = vadd.f32 0.0, %v1330
      %v1332 = vpop.f32.mrb[0].mxu0
      %v1333 = vpop.f32.mrb[0].mxu0
      %v1334 = vadd.f32 0.0, %v1333
      %v1335 = vpop.f32.mrb[0].mxu0
      %1336 = vdwg.mxu0
      %v1337 = vadd.f32 %v1203, %v1323
      %v1338 = vadd.f32 %v1204, %v1326
      %v1339 = vadd.f32 %v1205, %v1331
      %v1340 = vadd.f32 %v1206, %v1334
      %s1341 = scalar_lea.vmem %s2, 128
      %v1342 = vld [vmem:[%s1341] sm:$0xf]
      %v1343 = vld [vmem:[%s1341 + $0x4] sm:$0xf]
      %v1344 = vld [vmem:[%s1341 + $0x8] sm:$0xf]
      %v1345 = vld [vmem:[%s1341 + $0xc] sm:$0xf]
      %v1350 = vunpack.c.l.b16 %v1342
      %v1351 = vunpack.c.l.b16 %v1343
      %v1352 = vunpack.c.l.b16 %v1344
      %v1353 = vunpack.c.l.b16 %v1345
      %v1354 = vpack.c.b16 %v1351, %v1350
      %v1355 = vpack.c.b16 %v1353, %v1352
      %v1357 = vsel %vm277, %v1354, 0
      %v1360 = vsel %vm277, %v1355, 0
      %1362 = vmatprep.subr.bf16.mxu0 0
      %1363 = vmatpush1.bf16.msra.mxu0 %v744
      %1364 = vmatprep.subr.bf16.mxu0 0
      %1365 = vmatpush1.bf16.msra.mxu0 0
      %1366 = vmatprep.subr.bf16.mxu0 0
      %1367 = vmatpush1.bf16.msra.mxu0 0
      %1368 = vmatprep.subr.bf16.mxu0 0
      %1369 = vmatpush1.bf16.msra.mxu0 0
      %1370 = vmatprep.subr.bf16.mxu0 0
      %1371 = vmatpush1.bf16.msra.mxu0 0
      %1372 = vmatprep.subr.bf16.mxu0 0
      %1373 = vmatpush1.bf16.msra.mxu0 0
      %1374 = vmatprep.subr.bf16.mxu0 0
      %1375 = vmatpush1.bf16.msra.mxu0 0
      %1376 = vmatprep.subr.bf16.mxu0 0
      %1377 = vmatpush1.bf16.msra.mxu0 0
      %1378 = vmatprep.subr.bf16.mxu0 0
      %1379 = vmatpush1.bf16.msra.mxu0 0
      %1380 = vmatprep.subr.bf16.mxu0 0
      %1381 = vmatpush1.bf16.msra.mxu0 0
      %1382 = vmatprep.subr.bf16.mxu0 0
      %1383 = vmatpush1.bf16.msra.mxu0 0
      %1384 = vmatprep.subr.bf16.mxu0 0
      %1385 = vmatpush1.bf16.msra.mxu0 0
      %1386 = vmatprep.subr.bf16.mxu0 0
      %1387 = vmatpush1.bf16.msra.mxu0 0
      %1388 = vmatprep.subr.bf16.mxu0 0
      %1389 = vmatpush1.bf16.msra.mxu0 0
      %1390 = vmatprep.subr.bf16.mxu0 0
      %1391 = vmatpush1.bf16.msra.mxu0 0
      %1392 = vmatprep.subr.bf16.mxu0 0
      %1393 = vmatpush1.bf16.msra.mxu0 0
      %1394 = vmatprep.mubr.bf16.mxu0 0
      %1395 = vmatmul.mubr.bf16.gmra.mrb[0].mxu0 %v1357
      %v1396 = vpop.f32.mrb[0].mxu0
      %v1397 = vadd.f32 0.0, %v1396
      %v1398 = vpop.f32.mrb[0].mxu0
      %v1399 = vpop.f32.mrb[0].mxu0
      %v1400 = vadd.f32 0.0, %v1399
      %v1401 = vpop.f32.mrb[0].mxu0
      %1402 = vmatprep.mubr.bf16.mxu0 0
      %1403 = vmatmul.mubr.bf16.gmra.mrb[0].mxu0 %v1360
      %v1404 = vpop.f32.mrb[0].mxu0
      %v1405 = vadd.f32 0.0, %v1404
      %v1406 = vpop.f32.mrb[0].mxu0
      %v1407 = vpop.f32.mrb[0].mxu0
      %v1408 = vadd.f32 0.0, %v1407
      %v1409 = vpop.f32.mrb[0].mxu0
      %1410 = vdwg.mxu0
      %v1411 = vadd.f32 %v1277, %v1397
      %v1412 = vadd.f32 %v1278, %v1400
      %v1413 = vadd.f32 %v1279, %v1405
      %v1414 = vadd.f32 %v1280, %v1408
      %1415 = vrot.lane.b32.xlu0 %v664, 107
      %v1416 = vpop.permute.xlu0 %1415
      %1417 = vrot.lane.b32.xlu0 %v665, 107
      %v1418 = vpop.permute.xlu0 %1417
      %vm1419 = vcmask 875520
      %v1420 = vsel %vm1419, %v1416, %v1418
      %1422 = vmatprep.subr.bf16.mxu0 0
      %1423 = vmatpush1.bf16.msra.mxu0 %v1420
      %1424 = vmatprep.subr.bf16.mxu0 0
      %1425 = vmatpush1.bf16.msra.mxu0 0
      %1426 = vmatprep.subr.bf16.mxu0 0
      %1427 = vmatpush1.bf16.msra.mxu0 0
      %1428 = vmatprep.subr.bf16.mxu0 0
      %1429 = vmatpush1.bf16.msra.mxu0 0
      %1430 = vmatprep.subr.bf16.mxu0 0
      %1431 = vmatpush1.bf16.msra.mxu0 0
      %1432 = vmatprep.subr.bf16.mxu0 0
      %1433 = vmatpush1.bf16.msra.mxu0 0
      %1434 = vmatprep.subr.bf16.mxu0 0
      %1435 = vmatpush1.bf16.msra.mxu0 0
      %1436 = vmatprep.subr.bf16.mxu0 0
      %1437 = vmatpush1.bf16.msra.mxu0 0
      %1438 = vmatprep.subr.bf16.mxu0 0
      %1439 = vmatpush1.bf16.msra.mxu0 0
      %1440 = vmatprep.subr.bf16.mxu0 0
      %1441 = vmatpush1.bf16.msra.mxu0 0
      %1442 = vmatprep.subr.bf16.mxu0 0
      %1443 = vmatpush1.bf16.msra.mxu0 0
      %1444 = vmatprep.subr.bf16.mxu0 0
      %1445 = vmatpush1.bf16.msra.mxu0 0
      %1446 = vmatprep.subr.bf16.mxu0 0
      %1447 = vmatpush1.bf16.msra.mxu0 0
      %1448 = vmatprep.subr.bf16.mxu0 0
      %1449 = vmatpush1.bf16.msra.mxu0 0
      %1450 = vmatprep.subr.bf16.mxu0 0
      %1451 = vmatpush1.bf16.msra.mxu0 0
      %1452 = vmatprep.subr.bf16.mxu0 0
      %1453 = vmatpush1.bf16.msra.mxu0 0
      %1454 = vmatprep.mubr.bf16.mxu0 0
      %1455 = vmatmul.mubr.bf16.gmra.mrb[0].mxu0 %v1357
      %v1456 = vpop.f32.mrb[0].mxu0
      %v1457 = vadd.f32 0.0, %v1456
      %v1458 = vpop.f32.mrb[0].mxu0
      %v1459 = vpop.f32.mrb[0].mxu0
      %v1460 = vadd.f32 0.0, %v1459
      %v1461 = vpop.f32.mrb[0].mxu0
      %1462 = vmatprep.mubr.bf16.mxu0 0
      %1463 = vmatmul.mubr.bf16.gmra.mrb[0].mxu0 %v1360
      %v1464 = vpop.f32.mrb[0].mxu0
      %v1465 = vadd.f32 0.0, %v1464
      %v1466 = vpop.f32.mrb[0].mxu0
      %v1467 = vpop.f32.mrb[0].mxu0
      %v1468 = vadd.f32 0.0, %v1467
      %v1469 = vpop.f32.mrb[0].mxu0
      %1470 = vdwg.mxu0
      %v1471 = vadd.f32 %v1337, %v1457
      %v1472 = vadd.f32 %v1338, %v1460
      %v1473 = vadd.f32 %v1339, %v1465
      %v1474 = vadd.f32 %v1340, %v1468
      %s1475 = scalar_lea.vmem %s2, 144
      %v1476 = vld [vmem:[%s1475] sm:$0xf]
      %v1477 = vld [vmem:[%s1475 + $0x4] sm:$0xf]
      %v1478 = vld [vmem:[%s1475 + $0x8] sm:$0xf]
      %v1479 = vld [vmem:[%s1475 + $0xc] sm:$0xf]
      %v1484 = vunpack.c.l.b16 %v1476
      %v1485 = vunpack.c.l.b16 %v1477
      %v1486 = vunpack.c.l.b16 %v1478
      %v1487 = vunpack.c.l.b16 %v1479
      %v1488 = vpack.c.b16 %v1485, %v1484
      %v1489 = vpack.c.b16 %v1487, %v1486
      %v1491 = vsel %vm277, %v1488, 0
      %v1494 = vsel %vm277, %v1489, 0
      %1496 = vmatprep.subr.bf16.mxu0 0
      %1497 = vmatpush1.bf16.msra.mxu0 %v884
      %1498 = vmatprep.subr.bf16.mxu0 0
      %1499 = vmatpush1.bf16.msra.mxu0 0
      %1500 = vmatprep.subr.bf16.mxu0 0
      %1501 = vmatpush1.bf16.msra.mxu0 0
      %1502 = vmatprep.subr.bf16.mxu0 0
      %1503 = vmatpush1.bf16.msra.mxu0 0
      %1504 = vmatprep.subr.bf16.mxu0 0
      %1505 = vmatpush1.bf16.msra.mxu0 0
      %1506 = vmatprep.subr.bf16.mxu0 0
      %1507 = vmatpush1.bf16.msra.mxu0 0
      %1508 = vmatprep.subr.bf16.mxu0 0
      %1509 = vmatpush1.bf16.msra.mxu0 0
      %1510 = vmatprep.subr.bf16.mxu0 0
      %1511 = vmatpush1.bf16.msra.mxu0 0
      %1512 = vmatprep.subr.bf16.mxu0 0
      %1513 = vmatpush1.bf16.msra.mxu0 0
      %1514 = vmatprep.subr.bf16.mxu0 0
      %1515 = vmatpush1.bf16.msra.mxu0 0
      %1516 = vmatprep.subr.bf16.mxu0 0
      %1517 = vmatpush1.bf16.msra.mxu0 0
      %1518 = vmatprep.subr.bf16.mxu0 0
      %1519 = vmatpush1.bf16.msra.mxu0 0
      %1520 = vmatprep.subr.bf16.mxu0 0
      %1521 = vmatpush1.bf16.msra.mxu0 0
      %1522 = vmatprep.subr.bf16.mxu0 0
      %1523 = vmatpush1.bf16.msra.mxu0 0
      %1524 = vmatprep.subr.bf16.mxu0 0
      %1525 = vmatpush1.bf16.msra.mxu0 0
      %1526 = vmatprep.subr.bf16.mxu0 0
      %1527 = vmatpush1.bf16.msra.mxu0 0
      %1528 = vmatprep.mubr.bf16.mxu0 0
      %1529 = vmatmul.mubr.bf16.gmra.mrb[0].mxu0 %v1491
      %v1530 = vpop.f32.mrb[0].mxu0
      %v1531 = vadd.f32 0.0, %v1530
      %v1532 = vpop.f32.mrb[0].mxu0
      %v1533 = vpop.f32.mrb[0].mxu0
      %v1534 = vadd.f32 0.0, %v1533
      %v1535 = vpop.f32.mrb[0].mxu0
      %1536 = vmatprep.mubr.bf16.mxu0 0
      %1537 = vmatmul.mubr.bf16.gmra.mrb[0].mxu0 %v1494
      %v1538 = vpop.f32.mrb[0].mxu0
      %v1539 = vadd.f32 0.0, %v1538
      %v1540 = vpop.f32.mrb[0].mxu0
      %v1541 = vpop.f32.mrb[0].mxu0
      %v1542 = vadd.f32 0.0, %v1541
      %v1543 = vpop.f32.mrb[0].mxu0
      %1544 = vdwg.mxu0
      %v1545 = vadd.f32 %v1411, %v1531
      %v1546 = vadd.f32 %v1412, %v1534
      %v1547 = vadd.f32 %v1413, %v1539
      %v1548 = vadd.f32 %v1414, %v1542
      %1549 = vrot.lane.b32.xlu0 %v664, 106
      %v1550 = vpop.permute.xlu0 %1549
      %1551 = vrot.lane.b32.xlu0 %v665, 106
      %v1552 = vpop.permute.xlu0 %1551
      %vm1553 = vcmask 867328
      %v1554 = vsel %vm1553, %v1550, %v1552
      %1556 = vmatprep.subr.bf16.mxu0 0
      %1557 = vmatpush1.bf16.msra.mxu0 %v1554
      %1558 = vmatprep.subr.bf16.mxu0 0
      %1559 = vmatpush1.bf16.msra.mxu0 0
      %1560 = vmatprep.subr.bf16.mxu0 0
      %1561 = vmatpush1.bf16.msra.mxu0 0
      %1562 = vmatprep.subr.bf16.mxu0 0
      %1563 = vmatpush1.bf16.msra.mxu0 0
      %1564 = vmatprep.subr.bf16.mxu0 0
      %1565 = vmatpush1.bf16.msra.mxu0 0
      %1566 = vmatprep.subr.bf16.mxu0 0
      %1567 = vmatpush1.bf16.msra.mxu0 0
      %1568 = vmatprep.subr.bf16.mxu0 0
      %1569 = vmatpush1.bf16.msra.mxu0 0
      %1570 = vmatprep.subr.bf16.mxu0 0
      %1571 = vmatpush1.bf16.msra.mxu0 0
      %1572 = vmatprep.subr.bf16.mxu0 0
      %1573 = vmatpush1.bf16.msra.mxu0 0
      %1574 = vmatprep.subr.bf16.mxu0 0
      %1575 = vmatpush1.bf16.msra.mxu0 0
      %1576 = vmatprep.subr.bf16.mxu0 0
      %1577 = vmatpush1.bf16.msra.mxu0 0
      %1578 = vmatprep.subr.bf16.mxu0 0
      %1579 = vmatpush1.bf16.msra.mxu0 0
      %1580 = vmatprep.subr.bf16.mxu0 0
      %1581 = vmatpush1.bf16.msra.mxu0 0
      %1582 = vmatprep.subr.bf16.mxu0 0
      %1583 = vmatpush1.bf16.msra.mxu0 0
      %1584 = vmatprep.subr.bf16.mxu0 0
      %1585 = vmatpush1.bf16.msra.mxu0 0
      %1586 = vmatprep.subr.bf16.mxu0 0
      %1587 = vmatpush1.bf16.msra.mxu0 0
      %1588 = vmatprep.mubr.bf16.mxu0 0
      %1589 = vmatmul.mubr.bf16.gmra.mrb[0].mxu0 %v1491
      %v1590 = vpop.f32.mrb[0].mxu0
      %v1591 = vadd.f32 0.0, %v1590
      %v1592 = vpop.f32.mrb[0].mxu0
      %v1593 = vpop.f32.mrb[0].mxu0
      %v1594 = vadd.f32 0.0, %v1593
      %v1595 = vpop.f32.mrb[0].mxu0
      %1596 = vmatprep.mubr.bf16.mxu0 0
      %1597 = vmatmul.mubr.bf16.gmra.mrb[0].mxu0 %v1494
      %v1598 = vpop.f32.mrb[0].mxu0
      %v1599 = vadd.f32 0.0, %v1598
      %v1600 = vpop.f32.mrb[0].mxu0
      %v1601 = vpop.f32.mrb[0].mxu0
      %v1602 = vadd.f32 0.0, %v1601
      %v1603 = vpop.f32.mrb[0].mxu0
      %1604 = vdwg.mxu0
      %v1605 = vadd.f32 %v1471, %v1591
      %v1606 = vadd.f32 %v1472, %v1594
      %v1607 = vadd.f32 %v1473, %v1599
      %v1608 = vadd.f32 %v1474, %v1602
      %s1609 = scalar_lea.vmem %s2, 160
      %v1610 = vld [vmem:[%s1609] sm:$0xf]
      %v1611 = vld [vmem:[%s1609 + $0x4] sm:$0xf]
      %v1612 = vld [vmem:[%s1609 + $0x8] sm:$0xf]
      %v1613 = vld [vmem:[%s1609 + $0xc] sm:$0xf]
      %v1618 = vunpack.c.l.b16 %v1610
      %v1619 = vunpack.c.l.b16 %v1611
      %v1620 = vunpack.c.l.b16 %v1612
      %v1621 = vunpack.c.l.b16 %v1613
      %v1622 = vpack.c.b16 %v1619, %v1618
      %v1623 = vpack.c.b16 %v1621, %v1620
      %v1625 = vsel %vm277, %v1622, 0
      %v1628 = vsel %vm277, %v1623, 0
      %1630 = vmatprep.subr.bf16.mxu0 0
      %1631 = vmatpush1.bf16.msra.mxu0 %v1018
      %1632 = vmatprep.subr.bf16.mxu0 0
      %1633 = vmatpush1.bf16.msra.mxu0 0
      %1634 = vmatprep.subr.bf16.mxu0 0
      %1635 = vmatpush1.bf16.msra.mxu0 0
      %1636 = vmatprep.subr.bf16.mxu0 0
      %1637 = vmatpush1.bf16.msra.mxu0 0
      %1638 = vmatprep.subr.bf16.mxu0 0
      %1639 = vmatpush1.bf16.msra.mxu0 0
      %1640 = vmatprep.subr.bf16.mxu0 0
      %1641 = vmatpush1.bf16.msra.mxu0 0
      %1642 = vmatprep.subr.bf16.mxu0 0
      %1643 = vmatpush1.bf16.msra.mxu0 0
      %1644 = vmatprep.subr.bf16.mxu0 0
      %1645 = vmatpush1.bf16.msra.mxu0 0
      %1646 = vmatprep.subr.bf16.mxu0 0
      %1647 = vmatpush1.bf16.msra.mxu0 0
      %1648 = vmatprep.subr.bf16.mxu0 0
      %1649 = vmatpush1.bf16.msra.mxu0 0
      %1650 = vmatprep.subr.bf16.mxu0 0
      %1651 = vmatpush1.bf16.msra.mxu0 0
      %1652 = vmatprep.subr.bf16.mxu0 0
      %1653 = vmatpush1.bf16.msra.mxu0 0
      %1654 = vmatprep.subr.bf16.mxu0 0
      %1655 = vmatpush1.bf16.msra.mxu0 0
      %1656 = vmatprep.subr.bf16.mxu0 0
      %1657 = vmatpush1.bf16.msra.mxu0 0
      %1658 = vmatprep.subr.bf16.mxu0 0
      %1659 = vmatpush1.bf16.msra.mxu0 0
      %1660 = vmatprep.subr.bf16.mxu0 0
      %1661 = vmatpush1.bf16.msra.mxu0 0
      %1662 = vmatprep.mubr.bf16.mxu0 0
      %1663 = vmatmul.mubr.bf16.gmra.mrb[0].mxu0 %v1625
      %v1664 = vpop.f32.mrb[0].mxu0
      %v1665 = vadd.f32 0.0, %v1664
      %v1666 = vpop.f32.mrb[0].mxu0
      %v1667 = vpop.f32.mrb[0].mxu0
      %v1668 = vadd.f32 0.0, %v1667
      %v1669 = vpop.f32.mrb[0].mxu0
      %1670 = vmatprep.mubr.bf16.mxu0 0
      %1671 = vmatmul.mubr.bf16.gmra.mrb[0].mxu0 %v1628
      %v1672 = vpop.f32.mrb[0].mxu0
      %v1673 = vadd.f32 0.0, %v1672
      %v1674 = vpop.f32.mrb[0].mxu0
      %v1675 = vpop.f32.mrb[0].mxu0
      %v1676 = vadd.f32 0.0, %v1675
      %v1677 = vpop.f32.mrb[0].mxu0
      %1678 = vdwg.mxu0
      %v1679 = vadd.f32 %v1545, %v1665
      %v1680 = vadd.f32 %v1546, %v1668
      %v1681 = vadd.f32 %v1547, %v1673
      %v1682 = vadd.f32 %v1548, %v1676
      %1683 = vrot.lane.b32.xlu0 %v738, 110
      %v1684 = vpop.permute.xlu0 %1683
      %1685 = vrot.lane.b32.xlu0 %v739, 110
      %v1686 = vpop.permute.xlu0 %1685
      %v1687 = vsel %vm1017, %v1684, %v1686
      %1689 = vmatprep.subr.bf16.mxu0 0
      %1690 = vmatpush1.bf16.msra.mxu0 %v1687
      %1691 = vmatprep.subr.bf16.mxu0 0
      %1692 = vmatpush1.bf16.msra.mxu0 0
      %1693 = vmatprep.subr.bf16.mxu0 0
      %1694 = vmatpush1.bf16.msra.mxu0 0
      %1695 = vmatprep.subr.bf16.mxu0 0
      %1696 = vmatpush1.bf16.msra.mxu0 0
      %1697 = vmatprep.subr.bf16.mxu0 0
      %1698 = vmatpush1.bf16.msra.mxu0 0
      %1699 = vmatprep.subr.bf16.mxu0 0
      %1700 = vmatpush1.bf16.msra.mxu0 0
      %1701 = vmatprep.subr.bf16.mxu0 0
      %1702 = vmatpush1.bf16.msra.mxu0 0
      %1703 = vmatprep.subr.bf16.mxu0 0
      %1704 = vmatpush1.bf16.msra.mxu0 0
      %1705 = vmatprep.subr.bf16.mxu0 0
      %1706 = vmatpush1.bf16.msra.mxu0 0
      %1707 = vmatprep.subr.bf16.mxu0 0
      %1708 = vmatpush1.bf16.msra.mxu0 0
      %1709 = vmatprep.subr.bf16.mxu0 0
      %1710 = vmatpush1.bf16.msra.mxu0 0
      %1711 = vmatprep.subr.bf16.mxu0 0
      %1712 = vmatpush1.bf16.msra.mxu0 0
      %1713 = vmatprep.subr.bf16.mxu0 0
      %1714 = vmatpush1.bf16.msra.mxu0 0
      %1715 = vmatprep.subr.bf16.mxu0 0
      %1716 = vmatpush1.bf16.msra.mxu0 0
      %1717 = vmatprep.subr.bf16.mxu0 0
      %1718 = vmatpush1.bf16.msra.mxu0 0
      %1719 = vmatprep.subr.bf16.mxu0 0
      %1720 = vmatpush1.bf16.msra.mxu0 0
      %1721 = vmatprep.mubr.bf16.mxu0 0
      %1722 = vmatmul.mubr.bf16.gmra.mrb[0].mxu0 %v1625
      %v1723 = vpop.f32.mrb[0].mxu0
      %v1724 = vadd.f32 0.0, %v1723
      %v1725 = vpop.f32.mrb[0].mxu0
      %v1726 = vpop.f32.mrb[0].mxu0
      %v1727 = vadd.f32 0.0, %v1726
      %v1728 = vpop.f32.mrb[0].mxu0
      %1729 = vmatprep.mubr.bf16.mxu0 0
      %1730 = vmatmul.mubr.bf16.gmra.mrb[0].mxu0 %v1628
      %v1731 = vpop.f32.mrb[0].mxu0
      %v1732 = vadd.f32 0.0, %v1731
      %v1733 = vpop.f32.mrb[0].mxu0
      %v1734 = vpop.f32.mrb[0].mxu0
      %v1735 = vadd.f32 0.0, %v1734
      %v1736 = vpop.f32.mrb[0].mxu0
      %1737 = vdwg.mxu0
      %v1738 = vadd.f32 %v1605, %v1724
      %v1739 = vadd.f32 %v1606, %v1727
      %v1740 = vadd.f32 %v1607, %v1732
      %v1741 = vadd.f32 %v1608, %v1735
      %s1742 = scalar_lea.vmem %s2, 176
      %v1743 = vld [vmem:[%s1742] sm:$0xf]
      %v1744 = vld [vmem:[%s1742 + $0x4] sm:$0xf]
      %v1745 = vld [vmem:[%s1742 + $0x8] sm:$0xf]
      %v1746 = vld [vmem:[%s1742 + $0xc] sm:$0xf]
      %v1751 = vunpack.c.l.b16 %v1743
      %v1752 = vunpack.c.l.b16 %v1744
      %v1753 = vunpack.c.l.b16 %v1745
      %v1754 = vunpack.c.l.b16 %v1746
      %v1755 = vpack.c.b16 %v1752, %v1751
      %v1756 = vpack.c.b16 %v1754, %v1753
      %v1758 = vsel %vm277, %v1755, 0
      %v1761 = vsel %vm277, %v1756, 0
      %1763 = vmatprep.subr.bf16.mxu0 0
      %1764 = vmatpush1.bf16.msra.mxu0 %v1152
      %1765 = vmatprep.subr.bf16.mxu0 0
      %1766 = vmatpush1.bf16.msra.mxu0 0
      %1767 = vmatprep.subr.bf16.mxu0 0
      %1768 = vmatpush1.bf16.msra.mxu0 0
      %1769 = vmatprep.subr.bf16.mxu0 0
      %1770 = vmatpush1.bf16.msra.mxu0 0
      %1771 = vmatprep.subr.bf16.mxu0 0
      %1772 = vmatpush1.bf16.msra.mxu0 0
      %1773 = vmatprep.subr.bf16.mxu0 0
      %1774 = vmatpush1.bf16.msra.mxu0 0
      %1775 = vmatprep.subr.bf16.mxu0 0
      %1776 = vmatpush1.bf16.msra.mxu0 0
      %1777 = vmatprep.subr.bf16.mxu0 0
      %1778 = vmatpush1.bf16.msra.mxu0 0
      %1779 = vmatprep.subr.bf16.mxu0 0
      %1780 = vmatpush1.bf16.msra.mxu0 0
      %1781 = vmatprep.subr.bf16.mxu0 0
      %1782 = vmatpush1.bf16.msra.mxu0 0
      %1783 = vmatprep.subr.bf16.mxu0 0
      %1784 = vmatpush1.bf16.msra.mxu0 0
      %1785 = vmatprep.subr.bf16.mxu0 0
      %1786 = vmatpush1.bf16.msra.mxu0 0
      %1787 = vmatprep.subr.bf16.mxu0 0
      %1788 = vmatpush1.bf16.msra.mxu0 0
      %1789 = vmatprep.subr.bf16.mxu0 0
      %1790 = vmatpush1.bf16.msra.mxu0 0
      %1791 = vmatprep.subr.bf16.mxu0 0
      %1792 = vmatpush1.bf16.msra.mxu0 0
      %1793 = vmatprep.subr.bf16.mxu0 0
      %1794 = vmatpush1.bf16.msra.mxu0 0
      %1795 = vmatprep.mubr.bf16.mxu0 0
      %1796 = vmatmul.mubr.bf16.gmra.mrb[0].mxu0 %v1758
      %v1797 = vpop.f32.mrb[0].mxu0
      %v1798 = vadd.f32 0.0, %v1797
      %v1799 = vpop.f32.mrb[0].mxu0
      %v1800 = vpop.f32.mrb[0].mxu0
      %v1801 = vadd.f32 0.0, %v1800
      %v1802 = vpop.f32.mrb[0].mxu0
      %1803 = vmatprep.mubr.bf16.mxu0 0
      %1804 = vmatmul.mubr.bf16.gmra.mrb[0].mxu0 %v1761
      %v1805 = vpop.f32.mrb[0].mxu0
      %v1806 = vadd.f32 0.0, %v1805
      %v1807 = vpop.f32.mrb[0].mxu0
      %v1808 = vpop.f32.mrb[0].mxu0
      %v1809 = vadd.f32 0.0, %v1808
      %v1810 = vpop.f32.mrb[0].mxu0
      %1811 = vdwg.mxu0
      %v1812 = vadd.f32 %v1679, %v1798
      %v1813 = vadd.f32 %v1680, %v1801
      %v1814 = vadd.f32 %v1681, %v1806
      %v1815 = vadd.f32 %v1682, %v1809
      %1816 = vrot.lane.b32.xlu0 %v738, 109
      %v1817 = vpop.permute.xlu0 %1816
      %1818 = vrot.lane.b32.xlu0 %v739, 109
      %v1819 = vpop.permute.xlu0 %1818
      %v1820 = vsel %vm1151, %v1817, %v1819
      %1822 = vmatprep.subr.bf16.mxu0 0
      %1823 = vmatpush1.bf16.msra.mxu0 %v1820
      %1824 = vmatprep.subr.bf16.mxu0 0
      %1825 = vmatpush1.bf16.msra.mxu0 0
      %1826 = vmatprep.subr.bf16.mxu0 0
      %1827 = vmatpush1.bf16.msra.mxu0 0
      %1828 = vmatprep.subr.bf16.mxu0 0
      %1829 = vmatpush1.bf16.msra.mxu0 0
      %1830 = vmatprep.subr.bf16.mxu0 0
      %1831 = vmatpush1.bf16.msra.mxu0 0
      %1832 = vmatprep.subr.bf16.mxu0 0
      %1833 = vmatpush1.bf16.msra.mxu0 0
      %1834 = vmatprep.subr.bf16.mxu0 0
      %1835 = vmatpush1.bf16.msra.mxu0 0
      %1836 = vmatprep.subr.bf16.mxu0 0
      %1837 = vmatpush1.bf16.msra.mxu0 0
      %1838 = vmatprep.subr.bf16.mxu0 0
      %1839 = vmatpush1.bf16.msra.mxu0 0
      %1840 = vmatprep.subr.bf16.mxu0 0
      %1841 = vmatpush1.bf16.msra.mxu0 0
      %1842 = vmatprep.subr.bf16.mxu0 0
      %1843 = vmatpush1.bf16.msra.mxu0 0
      %1844 = vmatprep.subr.bf16.mxu0 0
      %1845 = vmatpush1.bf16.msra.mxu0 0
      %1846 = vmatprep.subr.bf16.mxu0 0
      %1847 = vmatpush1.bf16.msra.mxu0 0
      %1848 = vmatprep.subr.bf16.mxu0 0
      %1849 = vmatpush1.bf16.msra.mxu0 0
      %1850 = vmatprep.subr.bf16.mxu0 0
      %1851 = vmatpush1.bf16.msra.mxu0 0
      %1852 = vmatprep.subr.bf16.mxu0 0
      %1853 = vmatpush1.bf16.msra.mxu0 0
      %1854 = vmatprep.mubr.bf16.mxu0 0
      %1855 = vmatmul.mubr.bf16.gmra.mrb[0].mxu0 %v1758
      %v1856 = vpop.f32.mrb[0].mxu0
      %v1857 = vadd.f32 0.0, %v1856
      %v1858 = vpop.f32.mrb[0].mxu0
      %v1859 = vpop.f32.mrb[0].mxu0
      %v1860 = vadd.f32 0.0, %v1859
      %v1861 = vpop.f32.mrb[0].mxu0
      %1862 = vmatprep.mubr.bf16.mxu0 0
      %1863 = vmatmul.mubr.bf16.gmra.mrb[0].mxu0 %v1761
      %v1864 = vpop.f32.mrb[0].mxu0
      %v1865 = vadd.f32 0.0, %v1864
      %v1866 = vpop.f32.mrb[0].mxu0
      %v1867 = vpop.f32.mrb[0].mxu0
      %v1868 = vadd.f32 0.0, %v1867
      %v1869 = vpop.f32.mrb[0].mxu0
      %1870 = vdwg.mxu0
      %v1871 = vadd.f32 %v1738, %v1857
      %v1872 = vadd.f32 %v1739, %v1860
      %v1873 = vadd.f32 %v1740, %v1865
      %v1874 = vadd.f32 %v1741, %v1868
      %s1875 = scalar_lea.vmem %s2, 192
      %v1876 = vld [vmem:[%s1875] sm:$0xf]
      %v1877 = vld [vmem:[%s1875 + $0x4] sm:$0xf]
      %v1878 = vld [vmem:[%s1875 + $0x8] sm:$0xf]
      %v1879 = vld [vmem:[%s1875 + $0xc] sm:$0xf]
      %v1884 = vunpack.c.l.b16 %v1876
      %v1885 = vunpack.c.l.b16 %v1877
      %v1886 = vunpack.c.l.b16 %v1878
      %v1887 = vunpack.c.l.b16 %v1879
      %v1888 = vpack.c.b16 %v1885, %v1884
      %v1889 = vpack.c.b16 %v1887, %v1886
      %v1891 = vsel %vm277, %v1888, 0
      %v1894 = vsel %vm277, %v1889, 0
      %1896 = vmatprep.subr.bf16.mxu0 0
      %1897 = vmatpush1.bf16.msra.mxu0 %v1286
      %1898 = vmatprep.subr.bf16.mxu0 0
      %1899 = vmatpush1.bf16.msra.mxu0 0
      %1900 = vmatprep.subr.bf16.mxu0 0
      %1901 = vmatpush1.bf16.msra.mxu0 0
      %1902 = vmatprep.subr.bf16.mxu0 0
      %1903 = vmatpush1.bf16.msra.mxu0 0
      %1904 = vmatprep.subr.bf16.mxu0 0
      %1905 = vmatpush1.bf16.msra.mxu0 0
      %1906 = vmatprep.subr.bf16.mxu0 0
      %1907 = vmatpush1.bf16.msra.mxu0 0
      %1908 = vmatprep.subr.bf16.mxu0 0
      %1909 = vmatpush1.bf16.msra.mxu0 0
      %1910 = vmatprep.subr.bf16.mxu0 0
      %1911 = vmatpush1.bf16.msra.mxu0 0
      %1912 = vmatprep.subr.bf16.mxu0 0
      %1913 = vmatpush1.bf16.msra.mxu0 0
      %1914 = vmatprep.subr.bf16.mxu0 0
      %1915 = vmatpush1.bf16.msra.mxu0 0
      %1916 = vmatprep.subr.bf16.mxu0 0
      %1917 = vmatpush1.bf16.msra.mxu0 0
      %1918 = vmatprep.subr.bf16.mxu0 0
      %1919 = vmatpush1.bf16.msra.mxu0 0
      %1920 = vmatprep.subr.bf16.mxu0 0
      %1921 = vmatpush1.bf16.msra.mxu0 0
      %1922 = vmatprep.subr.bf16.mxu0 0
      %1923 = vmatpush1.bf16.msra.mxu0 0
      %1924 = vmatprep.subr.bf16.mxu0 0
      %1925 = vmatpush1.bf16.msra.mxu0 0
      %1926 = vmatprep.subr.bf16.mxu0 0
      %1927 = vmatpush1.bf16.msra.mxu0 0
      %1928 = vmatprep.mubr.bf16.mxu0 0
      %1929 = vmatmul.mubr.bf16.gmra.mrb[0].mxu0 %v1891
      %v1930 = vpop.f32.mrb[0].mxu0
      %v1931 = vadd.f32 0.0, %v1930
      %v1932 = vpop.f32.mrb[0].mxu0
      %v1933 = vpop.f32.mrb[0].mxu0
      %v1934 = vadd.f32 0.0, %v1933
      %v1935 = vpop.f32.mrb[0].mxu0
      %1936 = vmatprep.mubr.bf16.mxu0 0
      %1937 = vmatmul.mubr.bf16.gmra.mrb[0].mxu0 %v1894
      %v1938 = vpop.f32.mrb[0].mxu0
      %v1939 = vadd.f32 0.0, %v1938
      %v1940 = vpop.f32.mrb[0].mxu0
      %v1941 = vpop.f32.mrb[0].mxu0
      %v1942 = vadd.f32 0.0, %v1941
      %v1943 = vpop.f32.mrb[0].mxu0
      %1944 = vdwg.mxu0
      %v1945 = vadd.f32 %v1812, %v1931
      %v1946 = vadd.f32 %v1813, %v1934
      %v1947 = vadd.f32 %v1814, %v1939
      %v1948 = vadd.f32 %v1815, %v1942
      %1949 = vrot.lane.b32.xlu0 %v738, 108
      %v1950 = vpop.permute.xlu0 %1949
      %1951 = vrot.lane.b32.xlu0 %v739, 108
      %v1952 = vpop.permute.xlu0 %1951
      %v1953 = vsel %vm1285, %v1950, %v1952
      %1955 = vmatprep.subr.bf16.mxu0 0
      %1956 = vmatpush1.bf16.msra.mxu0 %v1953
      %1957 = vmatprep.subr.bf16.mxu0 0
      %1958 = vmatpush1.bf16.msra.mxu0 0
      %1959 = vmatprep.subr.bf16.mxu0 0
      %1960 = vmatpush1.bf16.msra.mxu0 0
      %1961 = vmatprep.subr.bf16.mxu0 0
      %1962 = vmatpush1.bf16.msra.mxu0 0
      %1963 = vmatprep.subr.bf16.mxu0 0
      %1964 = vmatpush1.bf16.msra.mxu0 0
      %1965 = vmatprep.subr.bf16.mxu0 0
      %1966 = vmatpush1.bf16.msra.mxu0 0
      %1967 = vmatprep.subr.bf16.mxu0 0
      %1968 = vmatpush1.bf16.msra.mxu0 0
      %1969 = vmatprep.subr.bf16.mxu0 0
      %1970 = vmatpush1.bf16.msra.mxu0 0
      %1971 = vmatprep.subr.bf16.mxu0 0
      %1972 = vmatpush1.bf16.msra.mxu0 0
      %1973 = vmatprep.subr.bf16.mxu0 0
      %1974 = vmatpush1.bf16.msra.mxu0 0
      %1975 = vmatprep.subr.bf16.mxu0 0
      %1976 = vmatpush1.bf16.msra.mxu0 0
      %1977 = vmatprep.subr.bf16.mxu0 0
      %1978 = vmatpush1.bf16.msra.mxu0 0
      %1979 = vmatprep.subr.bf16.mxu0 0
      %1980 = vmatpush1.bf16.msra.mxu0 0
      %1981 = vmatprep.subr.bf16.mxu0 0
      %1982 = vmatpush1.bf16.msra.mxu0 0
      %1983 = vmatprep.subr.bf16.mxu0 0
      %1984 = vmatpush1.bf16.msra.mxu0 0
      %1985 = vmatprep.subr.bf16.mxu0 0
      %1986 = vmatpush1.bf16.msra.mxu0 0
      %1987 = vmatprep.mubr.bf16.mxu0 0
      %1988 = vmatmul.mubr.bf16.gmra.mrb[0].mxu0 %v1891
      %v1989 = vpop.f32.mrb[0].mxu0
      %v1990 = vadd.f32 0.0, %v1989
      %v1991 = vpop.f32.mrb[0].mxu0
      %v1992 = vpop.f32.mrb[0].mxu0
      %v1993 = vadd.f32 0.0, %v1992
      %v1994 = vpop.f32.mrb[0].mxu0
      %1995 = vmatprep.mubr.bf16.mxu0 0
      %1996 = vmatmul.mubr.bf16.gmra.mrb[0].mxu0 %v1894
      %v1997 = vpop.f32.mrb[0].mxu0
      %v1998 = vadd.f32 0.0, %v1997
      %v1999 = vpop.f32.mrb[0].mxu0
      %v2000 = vpop.f32.mrb[0].mxu0
      %v2001 = vadd.f32 0.0, %v2000
      %v2002 = vpop.f32.mrb[0].mxu0
      %2003 = vdwg.mxu0
      %v2004 = vadd.f32 %v1871, %v1990
      %v2005 = vadd.f32 %v1872, %v1993
      %v2006 = vadd.f32 %v1873, %v1998
      %v2007 = vadd.f32 %v1874, %v2001
      %s2008 = scalar_lea.vmem %s2, 208
      %v2009 = vld [vmem:[%s2008] sm:$0xf]
      %v2010 = vld [vmem:[%s2008 + $0x4] sm:$0xf]
      %v2011 = vld [vmem:[%s2008 + $0x8] sm:$0xf]
      %v2012 = vld [vmem:[%s2008 + $0xc] sm:$0xf]
      %v2017 = vunpack.c.l.b16 %v2009
      %v2018 = vunpack.c.l.b16 %v2010
      %v2019 = vunpack.c.l.b16 %v2011
      %v2020 = vunpack.c.l.b16 %v2012
      %v2021 = vpack.c.b16 %v2018, %v2017
      %v2022 = vpack.c.b16 %v2020, %v2019
      %v2024 = vsel %vm277, %v2021, 0
      %v2027 = vsel %vm277, %v2022, 0
      %2029 = vmatprep.subr.bf16.mxu0 0
      %2030 = vmatpush1.bf16.msra.mxu0 %v1420
      %2031 = vmatprep.subr.bf16.mxu0 0
      %2032 = vmatpush1.bf16.msra.mxu0 0
      %2033 = vmatprep.subr.bf16.mxu0 0
      %2034 = vmatpush1.bf16.msra.mxu0 0
      %2035 = vmatprep.subr.bf16.mxu0 0
      %2036 = vmatpush1.bf16.msra.mxu0 0
      %2037 = vmatprep.subr.bf16.mxu0 0
      %2038 = vmatpush1.bf16.msra.mxu0 0
      %2039 = vmatprep.subr.bf16.mxu0 0
      %2040 = vmatpush1.bf16.msra.mxu0 0
      %2041 = vmatprep.subr.bf16.mxu0 0
      %2042 = vmatpush1.bf16.msra.mxu0 0
      %2043 = vmatprep.subr.bf16.mxu0 0
      %2044 = vmatpush1.bf16.msra.mxu0 0
      %2045 = vmatprep.subr.bf16.mxu0 0
      %2046 = vmatpush1.bf16.msra.mxu0 0
      %2047 = vmatprep.subr.bf16.mxu0 0
      %2048 = vmatpush1.bf16.msra.mxu0 0
      %2049 = vmatprep.subr.bf16.mxu0 0
      %2050 = vmatpush1.bf16.msra.mxu0 0
      %2051 = vmatprep.subr.bf16.mxu0 0
      %2052 = vmatpush1.bf16.msra.mxu0 0
      %2053 = vmatprep.subr.bf16.mxu0 0
      %2054 = vmatpush1.bf16.msra.mxu0 0
      %2055 = vmatprep.subr.bf16.mxu0 0
      %2056 = vmatpush1.bf16.msra.mxu0 0
      %2057 = vmatprep.subr.bf16.mxu0 0
      %2058 = vmatpush1.bf16.msra.mxu0 0
      %2059 = vmatprep.subr.bf16.mxu0 0
      %2060 = vmatpush1.bf16.msra.mxu0 0
      %2061 = vmatprep.mubr.bf16.mxu0 0
      %2062 = vmatmul.mubr.bf16.gmra.mrb[0].mxu0 %v2024
      %v2063 = vpop.f32.mrb[0].mxu0
      %v2064 = vadd.f32 0.0, %v2063
      %v2065 = vpop.f32.mrb[0].mxu0
      %v2066 = vpop.f32.mrb[0].mxu0
      %v2067 = vadd.f32 0.0, %v2066
      %v2068 = vpop.f32.mrb[0].mxu0
      %2069 = vmatprep.mubr.bf16.mxu0 0
      %2070 = vmatmul.mubr.bf16.gmra.mrb[0].mxu0 %v2027
      %v2071 = vpop.f32.mrb[0].mxu0
      %v2072 = vadd.f32 0.0, %v2071
      %v2073 = vpop.f32.mrb[0].mxu0
      %v2074 = vpop.f32.mrb[0].mxu0
      %v2075 = vadd.f32 0.0, %v2074
      %v2076 = vpop.f32.mrb[0].mxu0
      %2077 = vdwg.mxu0
      %v2078 = vadd.f32 %v1945, %v2064
      %v2079 = vadd.f32 %v1946, %v2067
      %v2080 = vadd.f32 %v1947, %v2072
      %v2081 = vadd.f32 %v1948, %v2075
      %2082 = vrot.lane.b32.xlu0 %v738, 107
      %v2083 = vpop.permute.xlu0 %2082
      %2084 = vrot.lane.b32.xlu0 %v739, 107
      %v2085 = vpop.permute.xlu0 %2084
      %v2086 = vsel %vm1419, %v2083, %v2085
      %2088 = vmatprep.subr.bf16.mxu0 0
      %2089 = vmatpush1.bf16.msra.mxu0 %v2086
      %2090 = vmatprep.subr.bf16.mxu0 0
      %2091 = vmatpush1.bf16.msra.mxu0 0
      %2092 = vmatprep.subr.bf16.mxu0 0
      %2093 = vmatpush1.bf16.msra.mxu0 0
      %2094 = vmatprep.subr.bf16.mxu0 0
      %2095 = vmatpush1.bf16.msra.mxu0 0
      %2096 = vmatprep.subr.bf16.mxu0 0
      %2097 = vmatpush1.bf16.msra.mxu0 0
      %2098 = vmatprep.subr.bf16.mxu0 0
      %2099 = vmatpush1.bf16.msra.mxu0 0
      %2100 = vmatprep.subr.bf16.mxu0 0
      %2101 = vmatpush1.bf16.msra.mxu0 0
      %2102 = vmatprep.subr.bf16.mxu0 0
      %2103 = vmatpush1.bf16.msra.mxu0 0
      %2104 = vmatprep.subr.bf16.mxu0 0
      %2105 = vmatpush1.bf16.msra.mxu0 0
      %2106 = vmatprep.subr.bf16.mxu0 0
      %2107 = vmatpush1.bf16.msra.mxu0 0
      %2108 = vmatprep.subr.bf16.mxu0 0
      %2109 = vmatpush1.bf16.msra.mxu0 0
      %2110 = vmatprep.subr.bf16.mxu0 0
      %2111 = vmatpush1.bf16.msra.mxu0 0
      %2112 = vmatprep.subr.bf16.mxu0 0
      %2113 = vmatpush1.bf16.msra.mxu0 0
      %2114 = vmatprep.subr.bf16.mxu0 0
      %2115 = vmatpush1.bf16.msra.mxu0 0
      %2116 = vmatprep.subr.bf16.mxu0 0
      %2117 = vmatpush1.bf16.msra.mxu0 0
      %2118 = vmatprep.subr.bf16.mxu0 0
      %2119 = vmatpush1.bf16.msra.mxu0 0
      %2120 = vmatprep.mubr.bf16.mxu0 0
      %2121 = vmatmul.mubr.bf16.gmra.mrb[0].mxu0 %v2024
      %v2122 = vpop.f32.mrb[0].mxu0
      %v2123 = vadd.f32 0.0, %v2122
      %v2124 = vpop.f32.mrb[0].mxu0
      %v2125 = vpop.f32.mrb[0].mxu0
      %v2126 = vadd.f32 0.0, %v2125
      %v2127 = vpop.f32.mrb[0].mxu0
      %2128 = vmatprep.mubr.bf16.mxu0 0
      %2129 = vmatmul.mubr.bf16.gmra.mrb[0].mxu0 %v2027
      %v2130 = vpop.f32.mrb[0].mxu0
      %v2131 = vadd.f32 0.0, %v2130
      %v2132 = vpop.f32.mrb[0].mxu0
      %v2133 = vpop.f32.mrb[0].mxu0
      %v2134 = vadd.f32 0.0, %v2133
      %v2135 = vpop.f32.mrb[0].mxu0
      %2136 = vdwg.mxu0
      %v2137 = vadd.f32 %v2004, %v2123
      %v2138 = vadd.f32 %v2005, %v2126
      %v2139 = vadd.f32 %v2006, %v2131
      %v2140 = vadd.f32 %v2007, %v2134
      %s2141 = scalar_lea.vmem %s2, 224
      %v2142 = vld [vmem:[%s2141] sm:$0xf]
      %v2143 = vld [vmem:[%s2141 + $0x4] sm:$0xf]
      %v2144 = vld [vmem:[%s2141 + $0x8] sm:$0xf]
      %v2145 = vld [vmem:[%s2141 + $0xc] sm:$0xf]
      %v2150 = vunpack.c.l.b16 %v2142
      %v2151 = vunpack.c.l.b16 %v2143
      %v2152 = vunpack.c.l.b16 %v2144
      %v2153 = vunpack.c.l.b16 %v2145
      %v2154 = vpack.c.b16 %v2151, %v2150
      %v2155 = vpack.c.b16 %v2153, %v2152
      %v2157 = vsel %vm277, %v2154, 0
      %v2160 = vsel %vm277, %v2155, 0
      %2162 = vmatprep.subr.bf16.mxu0 0
      %2163 = vmatpush1.bf16.msra.mxu0 %v1554
      %2164 = vmatprep.subr.bf16.mxu0 0
      %2165 = vmatpush1.bf16.msra.mxu0 0
      %2166 = vmatprep.subr.bf16.mxu0 0
      %2167 = vmatpush1.bf16.msra.mxu0 0
      %2168 = vmatprep.subr.bf16.mxu0 0
      %2169 = vmatpush1.bf16.msra.mxu0 0
      %2170 = vmatprep.subr.bf16.mxu0 0
      %2171 = vmatpush1.bf16.msra.mxu0 0
      %2172 = vmatprep.subr.bf16.mxu0 0
      %2173 = vmatpush1.bf16.msra.mxu0 0
      %2174 = vmatprep.subr.bf16.mxu0 0
      %2175 = vmatpush1.bf16.msra.mxu0 0
      %2176 = vmatprep.subr.bf16.mxu0 0
      %2177 = vmatpush1.bf16.msra.mxu0 0
      %2178 = vmatprep.subr.bf16.mxu0 0
      %2179 = vmatpush1.bf16.msra.mxu0 0
      %2180 = vmatprep.subr.bf16.mxu0 0
      %2181 = vmatpush1.bf16.msra.mxu0 0
      %2182 = vmatprep.subr.bf16.mxu0 0
      %2183 = vmatpush1.bf16.msra.mxu0 0
      %2184 = vmatprep.subr.bf16.mxu0 0
      %2185 = vmatpush1.bf16.msra.mxu0 0
      %2186 = vmatprep.subr.bf16.mxu0 0
      %2187 = vmatpush1.bf16.msra.mxu0 0
      %2188 = vmatprep.subr.bf16.mxu0 0
      %2189 = vmatpush1.bf16.msra.mxu0 0
      %2190 = vmatprep.subr.bf16.mxu0 0
      %2191 = vmatpush1.bf16.msra.mxu0 0
      %2192 = vmatprep.subr.bf16.mxu0 0
      %2193 = vmatpush1.bf16.msra.mxu0 0
      %2194 = vmatprep.mubr.bf16.mxu0 0
      %2195 = vmatmul.mubr.bf16.gmra.mrb[0].mxu0 %v2157
      %v2196 = vpop.f32.mrb[0].mxu0
      %v2197 = vadd.f32 0.0, %v2196
      %v2198 = vpop.f32.mrb[0].mxu0
      %v2199 = vpop.f32.mrb[0].mxu0
      %v2200 = vadd.f32 0.0, %v2199
      %v2201 = vpop.f32.mrb[0].mxu0
      %2202 = vmatprep.mubr.bf16.mxu0 0
      %2203 = vmatmul.mubr.bf16.gmra.mrb[0].mxu0 %v2160
      %v2204 = vpop.f32.mrb[0].mxu0
      %v2205 = vadd.f32 0.0, %v2204
      %v2206 = vpop.f32.mrb[0].mxu0
      %v2207 = vpop.f32.mrb[0].mxu0
      %v2208 = vadd.f32 0.0, %v2207
      %v2209 = vpop.f32.mrb[0].mxu0
      %2210 = vdwg.mxu0
      %v2211 = vadd.f32 %v2078, %v2197
      %v2212 = vadd.f32 %v2079, %v2200
      %v2213 = vadd.f32 %v2080, %v2205
      %v2214 = vadd.f32 %v2081, %v2208
      %2215 = vrot.lane.b32.xlu0 %v738, 106
      %v2216 = vpop.permute.xlu0 %2215
      %2217 = vrot.lane.b32.xlu0 %v739, 106
      %v2218 = vpop.permute.xlu0 %2217
      %v2219 = vsel %vm1553, %v2216, %v2218
      %2221 = vmatprep.subr.bf16.mxu0 0
      %2222 = vmatpush1.bf16.msra.mxu0 %v2219
      %2223 = vmatprep.subr.bf16.mxu0 0
      %2224 = vmatpush1.bf16.msra.mxu0 0
      %2225 = vmatprep.subr.bf16.mxu0 0
      %2226 = vmatpush1.bf16.msra.mxu0 0
      %2227 = vmatprep.subr.bf16.mxu0 0
      %2228 = vmatpush1.bf16.msra.mxu0 0
      %2229 = vmatprep.subr.bf16.mxu0 0
      %2230 = vmatpush1.bf16.msra.mxu0 0
      %2231 = vmatprep.subr.bf16.mxu0 0
      %2232 = vmatpush1.bf16.msra.mxu0 0
      %2233 = vmatprep.subr.bf16.mxu0 0
      %2234 = vmatpush1.bf16.msra.mxu0 0
      %2235 = vmatprep.subr.bf16.mxu0 0
      %2236 = vmatpush1.bf16.msra.mxu0 0
      %2237 = vmatprep.subr.bf16.mxu0 0
      %2238 = vmatpush1.bf16.msra.mxu0 0
      %2239 = vmatprep.subr.bf16.mxu0 0
      %2240 = vmatpush1.bf16.msra.mxu0 0
      %2241 = vmatprep.subr.bf16.mxu0 0
      %2242 = vmatpush1.bf16.msra.mxu0 0
      %2243 = vmatprep.subr.bf16.mxu0 0
      %2244 = vmatpush1.bf16.msra.mxu0 0
      %2245 = vmatprep.subr.bf16.mxu0 0
      %2246 = vmatpush1.bf16.msra.mxu0 0
      %2247 = vmatprep.subr.bf16.mxu0 0
      %2248 = vmatpush1.bf16.msra.mxu0 0
      %2249 = vmatprep.subr.bf16.mxu0 0
      %2250 = vmatpush1.bf16.msra.mxu0 0
      %2251 = vmatprep.subr.bf16.mxu0 0
      %2252 = vmatpush1.bf16.msra.mxu0 0
      %2253 = vmatprep.mubr.bf16.mxu0 0
      %2254 = vmatmul.mubr.bf16.gmra.mrb[0].mxu0 %v2157
      %v2255 = vpop.f32.mrb[0].mxu0
      %v2256 = vadd.f32 0.0, %v2255
      %v2257 = vpop.f32.mrb[0].mxu0
      %v2258 = vpop.f32.mrb[0].mxu0
      %v2259 = vadd.f32 0.0, %v2258
      %v2260 = vpop.f32.mrb[0].mxu0
      %2261 = vmatprep.mubr.bf16.mxu0 0
      %2262 = vmatmul.mubr.bf16.gmra.mrb[0].mxu0 %v2160
      %v2263 = vpop.f32.mrb[0].mxu0
      %v2264 = vadd.f32 0.0, %v2263
      %v2265 = vpop.f32.mrb[0].mxu0
      %v2266 = vpop.f32.mrb[0].mxu0
      %v2267 = vadd.f32 0.0, %v2266
      %v2268 = vpop.f32.mrb[0].mxu0
      %2269 = vdwg.mxu0
      %v2270 = vadd.f32 %v2137, %v2256
      %v2271 = vadd.f32 %v2138, %v2259
      %v2272 = vadd.f32 %v2139, %v2264
      %v2273 = vadd.f32 %v2140, %v2267
      %s2274 = scalar_lea.vmem %s2, 240
      %v2275 = vld [vmem:[%s2274] sm:$0xf]
      %v2276 = vld [vmem:[%s2274 + $0x4] sm:$0xf]
      %v2277 = vld [vmem:[%s2274 + $0x8] sm:$0xf]
      %v2278 = vld [vmem:[%s2274 + $0xc] sm:$0xf]
      %v2283 = vunpack.c.l.b16 %v2275
      %v2284 = vunpack.c.l.b16 %v2276
      %v2285 = vunpack.c.l.b16 %v2277
      %v2286 = vunpack.c.l.b16 %v2278
      %v2287 = vpack.c.b16 %v2284, %v2283
      %v2288 = vpack.c.b16 %v2286, %v2285
      %v2290 = vsel %vm277, %v2287, 0
      %v2293 = vsel %vm277, %v2288, 0
      %2295 = vmatprep.subr.bf16.mxu0 0
      %2296 = vmatpush1.bf16.msra.mxu0 %v1687
      %2297 = vmatprep.subr.bf16.mxu0 0
      %2298 = vmatpush1.bf16.msra.mxu0 0
      %2299 = vmatprep.subr.bf16.mxu0 0
      %2300 = vmatpush1.bf16.msra.mxu0 0
      %2301 = vmatprep.subr.bf16.mxu0 0
      %2302 = vmatpush1.bf16.msra.mxu0 0
      %2303 = vmatprep.subr.bf16.mxu0 0
      %2304 = vmatpush1.bf16.msra.mxu0 0
      %2305 = vmatprep.subr.bf16.mxu0 0
      %2306 = vmatpush1.bf16.msra.mxu0 0
      %2307 = vmatprep.subr.bf16.mxu0 0
      %2308 = vmatpush1.bf16.msra.mxu0 0
      %2309 = vmatprep.subr.bf16.mxu0 0
      %2310 = vmatpush1.bf16.msra.mxu0 0
      %2311 = vmatprep.subr.bf16.mxu0 0
      %2312 = vmatpush1.bf16.msra.mxu0 0
      %2313 = vmatprep.subr.bf16.mxu0 0
      %2314 = vmatpush1.bf16.msra.mxu0 0
      %2315 = vmatprep.subr.bf16.mxu0 0
      %2316 = vmatpush1.bf16.msra.mxu0 0
      %2317 = vmatprep.subr.bf16.mxu0 0
      %2318 = vmatpush1.bf16.msra.mxu0 0
      %2319 = vmatprep.subr.bf16.mxu0 0
      %2320 = vmatpush1.bf16.msra.mxu0 0
      %2321 = vmatprep.subr.bf16.mxu0 0
      %2322 = vmatpush1.bf16.msra.mxu0 0
      %2323 = vmatprep.subr.bf16.mxu0 0
      %2324 = vmatpush1.bf16.msra.mxu0 0
      %2325 = vmatprep.subr.bf16.mxu0 0
      %2326 = vmatpush1.bf16.msra.mxu0 0
      %2327 = vmatprep.mubr.bf16.mxu0 0
      %2328 = vmatmul.mubr.bf16.gmra.mrb[0].mxu0 %v2290
      %v2329 = vpop.f32.mrb[0].mxu0
      %v2330 = vadd.f32 0.0, %v2329
      %v2331 = vpop.f32.mrb[0].mxu0
      %v2332 = vpop.f32.mrb[0].mxu0
      %v2333 = vadd.f32 0.0, %v2332
      %v2334 = vpop.f32.mrb[0].mxu0
      %2335 = vmatprep.mubr.bf16.mxu0 0
      %2336 = vmatmul.mubr.bf16.gmra.mrb[0].mxu0 %v2293
      %v2337 = vpop.f32.mrb[0].mxu0
      %v2338 = vadd.f32 0.0, %v2337
      %v2339 = vpop.f32.mrb[0].mxu0
      %v2340 = vpop.f32.mrb[0].mxu0
      %v2341 = vadd.f32 0.0, %v2340
      %v2342 = vpop.f32.mrb[0].mxu0
      %2343 = vdwg.mxu0
      %v2344 = vadd.f32 %v2211, %v2330
      %v2345 = vadd.f32 %v2212, %v2333
      %v2346 = vadd.f32 %v2213, %v2338
      %v2347 = vadd.f32 %v2214, %v2341
      %2348 = vrot.lane.b32.xlu0 %v664, 92
      %v2349 = vpop.permute.xlu0 %2348
      %2350 = vrot.lane.b32.xlu0 %v665, 92
      %v2351 = vpop.permute.xlu0 %2350
      %vm2352 = vcmask 752640
      %v2353 = vsel %vm2352, %v2349, %v2351
      %2355 = vmatprep.subr.bf16.mxu0 0
      %2356 = vmatpush1.bf16.msra.mxu0 %v2353
      %2357 = vmatprep.subr.bf16.mxu0 0
      %2358 = vmatpush1.bf16.msra.mxu0 0
      %2359 = vmatprep.subr.bf16.mxu0 0
      %2360 = vmatpush1.bf16.msra.mxu0 0
      %2361 = vmatprep.subr.bf16.mxu0 0
      %2362 = vmatpush1.bf16.msra.mxu0 0
      %2363 = vmatprep.subr.bf16.mxu0 0
      %2364 = vmatpush1.bf16.msra.mxu0 0
      %2365 = vmatprep.subr.bf16.mxu0 0
      %2366 = vmatpush1.bf16.msra.mxu0 0
      %2367 = vmatprep.subr.bf16.mxu0 0
      %2368 = vmatpush1.bf16.msra.mxu0 0
      %2369 = vmatprep.subr.bf16.mxu0 0
      %2370 = vmatpush1.bf16.msra.mxu0 0
      %2371 = vmatprep.subr.bf16.mxu0 0
      %2372 = vmatpush1.bf16.msra.mxu0 0
      %2373 = vmatprep.subr.bf16.mxu0 0
      %2374 = vmatpush1.bf16.msra.mxu0 0
      %2375 = vmatprep.subr.bf16.mxu0 0
      %2376 = vmatpush1.bf16.msra.mxu0 0
      %2377 = vmatprep.subr.bf16.mxu0 0
      %2378 = vmatpush1.bf16.msra.mxu0 0
      %2379 = vmatprep.subr.bf16.mxu0 0
      %2380 = vmatpush1.bf16.msra.mxu0 0
      %2381 = vmatprep.subr.bf16.mxu0 0
      %2382 = vmatpush1.bf16.msra.mxu0 0
      %2383 = vmatprep.subr.bf16.mxu0 0
      %2384 = vmatpush1.bf16.msra.mxu0 0
      %2385 = vmatprep.subr.bf16.mxu0 0
      %2386 = vmatpush1.bf16.msra.mxu0 0
      %2387 = vmatprep.mubr.bf16.mxu0 0
      %2388 = vmatmul.mubr.bf16.gmra.mrb[0].mxu0 %v2290
      %v2389 = vpop.f32.mrb[0].mxu0
      %v2390 = vadd.f32 0.0, %v2389
      %v2391 = vpop.f32.mrb[0].mxu0
      %v2392 = vpop.f32.mrb[0].mxu0
      %v2393 = vadd.f32 0.0, %v2392
      %v2394 = vpop.f32.mrb[0].mxu0
      %2395 = vmatprep.mubr.bf16.mxu0 0
      %2396 = vmatmul.mubr.bf16.gmra.mrb[0].mxu0 %v2293
      %v2397 = vpop.f32.mrb[0].mxu0
      %v2398 = vadd.f32 0.0, %v2397
      %v2399 = vpop.f32.mrb[0].mxu0
      %v2400 = vpop.f32.mrb[0].mxu0
      %v2401 = vadd.f32 0.0, %v2400
      %v2402 = vpop.f32.mrb[0].mxu0
      %2403 = vdwg.mxu0
      %v2404 = vadd.f32 %v2270, %v2390
      %v2405 = vadd.f32 %v2271, %v2393
      %v2406 = vadd.f32 %v2272, %v2398
      %v2407 = vadd.f32 %v2273, %v2401
      %s2408 = scalar_lea.vmem %s2, 256
      %v2409 = vld [vmem:[%s2408] sm:$0xf]
      %v2410 = vld [vmem:[%s2408 + $0x4] sm:$0xf]
      %v2411 = vld [vmem:[%s2408 + $0x8] sm:$0xf]
      %v2412 = vld [vmem:[%s2408 + $0xc] sm:$0xf]
      %v2417 = vunpack.c.l.b16 %v2409
      %v2418 = vunpack.c.l.b16 %v2410
      %v2419 = vunpack.c.l.b16 %v2411
      %v2420 = vunpack.c.l.b16 %v2412
      %v2421 = vpack.c.b16 %v2418, %v2417
      %v2422 = vpack.c.b16 %v2420, %v2419
      %v2424 = vsel %vm277, %v2421, 0
      %v2427 = vsel %vm277, %v2422, 0
      %2429 = vmatprep.subr.bf16.mxu0 0
      %2430 = vmatpush1.bf16.msra.mxu0 %v1820
      %2431 = vmatprep.subr.bf16.mxu0 0
      %2432 = vmatpush1.bf16.msra.mxu0 0
      %2433 = vmatprep.subr.bf16.mxu0 0
      %2434 = vmatpush1.bf16.msra.mxu0 0
      %2435 = vmatprep.subr.bf16.mxu0 0
      %2436 = vmatpush1.bf16.msra.mxu0 0
      %2437 = vmatprep.subr.bf16.mxu0 0
      %2438 = vmatpush1.bf16.msra.mxu0 0
      %2439 = vmatprep.subr.bf16.mxu0 0
      %2440 = vmatpush1.bf16.msra.mxu0 0
      %2441 = vmatprep.subr.bf16.mxu0 0
      %2442 = vmatpush1.bf16.msra.mxu0 0
      %2443 = vmatprep.subr.bf16.mxu0 0
      %2444 = vmatpush1.bf16.msra.mxu0 0
      %2445 = vmatprep.subr.bf16.mxu0 0
      %2446 = vmatpush1.bf16.msra.mxu0 0
      %2447 = vmatprep.subr.bf16.mxu0 0
      %2448 = vmatpush1.bf16.msra.mxu0 0
      %2449 = vmatprep.subr.bf16.mxu0 0
      %2450 = vmatpush1.bf16.msra.mxu0 0
      %2451 = vmatprep.subr.bf16.mxu0 0
      %2452 = vmatpush1.bf16.msra.mxu0 0
      %2453 = vmatprep.subr.bf16.mxu0 0
      %2454 = vmatpush1.bf16.msra.mxu0 0
      %2455 = vmatprep.subr.bf16.mxu0 0
      %2456 = vmatpush1.bf16.msra.mxu0 0
      %2457 = vmatprep.subr.bf16.mxu0 0
      %2458 = vmatpush1.bf16.msra.mxu0 0
      %2459 = vmatprep.subr.bf16.mxu0 0
      %2460 = vmatpush1.bf16.msra.mxu0 0
      %2461 = vmatprep.mubr.bf16.mxu0 0
      %2462 = vmatmul.mubr.bf16.gmra.mrb[0].mxu0 %v2424
      %v2463 = vpop.f32.mrb[0].mxu0
      %v2464 = vadd.f32 0.0, %v2463
      %v2465 = vpop.f32.mrb[0].mxu0
      %v2466 = vpop.f32.mrb[0].mxu0
      %v2467 = vadd.f32 0.0, %v2466
      %v2468 = vpop.f32.mrb[0].mxu0
      %2469 = vmatprep.mubr.bf16.mxu0 0
      %2470 = vmatmul.mubr.bf16.gmra.mrb[0].mxu0 %v2427
      %v2471 = vpop.f32.mrb[0].mxu0
      %v2472 = vadd.f32 0.0, %v2471
      %v2473 = vpop.f32.mrb[0].mxu0
      %v2474 = vpop.f32.mrb[0].mxu0
      %v2475 = vadd.f32 0.0, %v2474
      %v2476 = vpop.f32.mrb[0].mxu0
      %2477 = vdwg.mxu0
      %v2478 = vadd.f32 %v2344, %v2464
      %v2479 = vadd.f32 %v2345, %v2467
      %v2480 = vadd.f32 %v2346, %v2472
      %v2481 = vadd.f32 %v2347, %v2475
      %2482 = vrot.lane.b32.xlu0 %v664, 91
      %v2483 = vpop.permute.xlu0 %2482
      %2484 = vrot.lane.b32.xlu0 %v665, 91
      %v2485 = vpop.permute.xlu0 %2484
      %vm2486 = vcmask 744448
      %v2487 = vsel %vm2486, %v2483, %v2485
      %2489 = vmatprep.subr.bf16.mxu0 0
      %2490 = vmatpush1.bf16.msra.mxu0 %v2487
      %2491 = vmatprep.subr.bf16.mxu0 0
      %2492 = vmatpush1.bf16.msra.mxu0 0
      %2493 = vmatprep.subr.bf16.mxu0 0
      %2494 = vmatpush1.bf16.msra.mxu0 0
      %2495 = vmatprep.subr.bf16.mxu0 0
      %2496 = vmatpush1.bf16.msra.mxu0 0
      %2497 = vmatprep.subr.bf16.mxu0 0
      %2498 = vmatpush1.bf16.msra.mxu0 0
      %2499 = vmatprep.subr.bf16.mxu0 0
      %2500 = vmatpush1.bf16.msra.mxu0 0
      %2501 = vmatprep.subr.bf16.mxu0 0
      %2502 = vmatpush1.bf16.msra.mxu0 0
      %2503 = vmatprep.subr.bf16.mxu0 0
      %2504 = vmatpush1.bf16.msra.mxu0 0
      %2505 = vmatprep.subr.bf16.mxu0 0
      %2506 = vmatpush1.bf16.msra.mxu0 0
      %2507 = vmatprep.subr.bf16.mxu0 0
      %2508 = vmatpush1.bf16.msra.mxu0 0
      %2509 = vmatprep.subr.bf16.mxu0 0
      %2510 = vmatpush1.bf16.msra.mxu0 0
      %2511 = vmatprep.subr.bf16.mxu0 0
      %2512 = vmatpush1.bf16.msra.mxu0 0
      %2513 = vmatprep.subr.bf16.mxu0 0
      %2514 = vmatpush1.bf16.msra.mxu0 0
      %2515 = vmatprep.subr.bf16.mxu0 0
      %2516 = vmatpush1.bf16.msra.mxu0 0
      %2517 = vmatprep.subr.bf16.mxu0 0
      %2518 = vmatpush1.bf16.msra.mxu0 0
      %2519 = vmatprep.subr.bf16.mxu0 0
      %2520 = vmatpush1.bf16.msra.mxu0 0
      %2521 = vmatprep.mubr.bf16.mxu0 0
      %2522 = vmatmul.mubr.bf16.gmra.mrb[0].mxu0 %v2424
      %v2523 = vpop.f32.mrb[0].mxu0
      %v2524 = vadd.f32 0.0, %v2523
      %v2525 = vpop.f32.mrb[0].mxu0
      %v2526 = vpop.f32.mrb[0].mxu0
      %v2527 = vadd.f32 0.0, %v2526
      %v2528 = vpop.f32.mrb[0].mxu0
      %2529 = vmatprep.mubr.bf16.mxu0 0
      %2530 = vmatmul.mubr.bf16.gmra.mrb[0].mxu0 %v2427
      %v2531 = vpop.f32.mrb[0].mxu0
      %v2532 = vadd.f32 0.0, %v2531
      %v2533 = vpop.f32.mrb[0].mxu0
      %v2534 = vpop.f32.mrb[0].mxu0
      %v2535 = vadd.f32 0.0, %v2534
      %v2536 = vpop.f32.mrb[0].mxu0
      %2537 = vdwg.mxu0
      %v2538 = vadd.f32 %v2404, %v2524
      %v2539 = vadd.f32 %v2405, %v2527
      %v2540 = vadd.f32 %v2406, %v2532
      %v2541 = vadd.f32 %v2407, %v2535
      %s2542 = scalar_lea.vmem %s2, 272
      %v2543 = vld [vmem:[%s2542] sm:$0xf]
      %v2544 = vld [vmem:[%s2542 + $0x4] sm:$0xf]
      %v2545 = vld [vmem:[%s2542 + $0x8] sm:$0xf]
      %v2546 = vld [vmem:[%s2542 + $0xc] sm:$0xf]
      %v2551 = vunpack.c.l.b16 %v2543
      %v2552 = vunpack.c.l.b16 %v2544
      %v2553 = vunpack.c.l.b16 %v2545
      %v2554 = vunpack.c.l.b16 %v2546
      %v2555 = vpack.c.b16 %v2552, %v2551
      %v2556 = vpack.c.b16 %v2554, %v2553
      %v2558 = vsel %vm277, %v2555, 0
      %v2561 = vsel %vm277, %v2556, 0
      %2563 = vmatprep.subr.bf16.mxu0 0
      %2564 = vmatpush1.bf16.msra.mxu0 %v1953
      %2565 = vmatprep.subr.bf16.mxu0 0
      %2566 = vmatpush1.bf16.msra.mxu0 0
      %2567 = vmatprep.subr.bf16.mxu0 0
      %2568 = vmatpush1.bf16.msra.mxu0 0
      %2569 = vmatprep.subr.bf16.mxu0 0
      %2570 = vmatpush1.bf16.msra.mxu0 0
      %2571 = vmatprep.subr.bf16.mxu0 0
      %2572 = vmatpush1.bf16.msra.mxu0 0
      %2573 = vmatprep.subr.bf16.mxu0 0
      %2574 = vmatpush1.bf16.msra.mxu0 0
      %2575 = vmatprep.subr.bf16.mxu0 0
      %2576 = vmatpush1.bf16.msra.mxu0 0
      %2577 = vmatprep.subr.bf16.mxu0 0
      %2578 = vmatpush1.bf16.msra.mxu0 0
      %2579 = vmatprep.subr.bf16.mxu0 0
      %2580 = vmatpush1.bf16.msra.mxu0 0
      %2581 = vmatprep.subr.bf16.mxu0 0
      %2582 = vmatpush1.bf16.msra.mxu0 0
      %2583 = vmatprep.subr.bf16.mxu0 0
      %2584 = vmatpush1.bf16.msra.mxu0 0
      %2585 = vmatprep.subr.bf16.mxu0 0
      %2586 = vmatpush1.bf16.msra.mxu0 0
      %2587 = vmatprep.subr.bf16.mxu0 0
      %2588 = vmatpush1.bf16.msra.mxu0 0
      %2589 = vmatprep.subr.bf16.mxu0 0
      %2590 = vmatpush1.bf16.msra.mxu0 0
      %2591 = vmatprep.subr.bf16.mxu0 0
      %2592 = vmatpush1.bf16.msra.mxu0 0
      %2593 = vmatprep.subr.bf16.mxu0 0
      %2594 = vmatpush1.bf16.msra.mxu0 0
      %2595 = vmatprep.mubr.bf16.mxu0 0
      %2596 = vmatmul.mubr.bf16.gmra.mrb[0].mxu0 %v2558
      %v2597 = vpop.f32.mrb[0].mxu0
      %v2598 = vadd.f32 0.0, %v2597
      %v2599 = vpop.f32.mrb[0].mxu0
      %v2600 = vpop.f32.mrb[0].mxu0
      %v2601 = vadd.f32 0.0, %v2600
      %v2602 = vpop.f32.mrb[0].mxu0
      %2603 = vmatprep.mubr.bf16.mxu0 0
      %2604 = vmatmul.mubr.bf16.gmra.mrb[0].mxu0 %v2561
      %v2605 = vpop.f32.mrb[0].mxu0
      %v2606 = vadd.f32 0.0, %v2605
      %v2607 = vpop.f32.mrb[0].mxu0
      %v2608 = vpop.f32.mrb[0].mxu0
      %v2609 = vadd.f32 0.0, %v2608
      %v2610 = vpop.f32.mrb[0].mxu0
      %2611 = vdwg.mxu0
      %v2612 = vadd.f32 %v2478, %v2598
      %v2613 = vadd.f32 %v2479, %v2601
      %v2614 = vadd.f32 %v2480, %v2606
      %v2615 = vadd.f32 %v2481, %v2609
      %2616 = vrot.lane.b32.xlu0 %v664, 90
      %v2617 = vpop.permute.xlu0 %2616
      %2618 = vrot.lane.b32.xlu0 %v665, 90
      %v2619 = vpop.permute.xlu0 %2618
      %vm2620 = vcmask 736256
      %v2621 = vsel %vm2620, %v2617, %v2619
      %2623 = vmatprep.subr.bf16.mxu0 0
      %2624 = vmatpush1.bf16.msra.mxu0 %v2621
      %2625 = vmatprep.subr.bf16.mxu0 0
      %2626 = vmatpush1.bf16.msra.mxu0 0
      %2627 = vmatprep.subr.bf16.mxu0 0
      %2628 = vmatpush1.bf16.msra.mxu0 0
      %2629 = vmatprep.subr.bf16.mxu0 0
      %2630 = vmatpush1.bf16.msra.mxu0 0
      %2631 = vmatprep.subr.bf16.mxu0 0
      %2632 = vmatpush1.bf16.msra.mxu0 0
      %2633 = vmatprep.subr.bf16.mxu0 0
      %2634 = vmatpush1.bf16.msra.mxu0 0
      %2635 = vmatprep.subr.bf16.mxu0 0
      %2636 = vmatpush1.bf16.msra.mxu0 0
      %2637 = vmatprep.subr.bf16.mxu0 0
      %2638 = vmatpush1.bf16.msra.mxu0 0
      %2639 = vmatprep.subr.bf16.mxu0 0
      %2640 = vmatpush1.bf16.msra.mxu0 0
      %2641 = vmatprep.subr.bf16.mxu0 0
      %2642 = vmatpush1.bf16.msra.mxu0 0
      %2643 = vmatprep.subr.bf16.mxu0 0
      %2644 = vmatpush1.bf16.msra.mxu0 0
      %2645 = vmatprep.subr.bf16.mxu0 0
      %2646 = vmatpush1.bf16.msra.mxu0 0
      %2647 = vmatprep.subr.bf16.mxu0 0
      %2648 = vmatpush1.bf16.msra.mxu0 0
      %2649 = vmatprep.subr.bf16.mxu0 0
      %2650 = vmatpush1.bf16.msra.mxu0 0
      %2651 = vmatprep.subr.bf16.mxu0 0
      %2652 = vmatpush1.bf16.msra.mxu0 0
      %2653 = vmatprep.subr.bf16.mxu0 0
      %2654 = vmatpush1.bf16.msra.mxu0 0
      %2655 = vmatprep.mubr.bf16.mxu0 0
      %2656 = vmatmul.mubr.bf16.gmra.mrb[0].mxu0 %v2558
      %v2657 = vpop.f32.mrb[0].mxu0
      %v2658 = vadd.f32 0.0, %v2657
      %v2659 = vpop.f32.mrb[0].mxu0
      %v2660 = vpop.f32.mrb[0].mxu0
      %v2661 = vadd.f32 0.0, %v2660
      %v2662 = vpop.f32.mrb[0].mxu0
      %2663 = vmatprep.mubr.bf16.mxu0 0
      %2664 = vmatmul.mubr.bf16.gmra.mrb[0].mxu0 %v2561
      %v2665 = vpop.f32.mrb[0].mxu0
      %v2666 = vadd.f32 0.0, %v2665
      %v2667 = vpop.f32.mrb[0].mxu0
      %v2668 = vpop.f32.mrb[0].mxu0
      %v2669 = vadd.f32 0.0, %v2668
      %v2670 = vpop.f32.mrb[0].mxu0
      %2671 = vdwg.mxu0
      %v2672 = vadd.f32 %v2538, %v2658
      %v2673 = vadd.f32 %v2539, %v2661
      %v2674 = vadd.f32 %v2540, %v2666
      %v2675 = vadd.f32 %v2541, %v2669
      %s2676 = scalar_lea.vmem %s2, 288
      %v2677 = vld [vmem:[%s2676] sm:$0xf]
      %v2678 = vld [vmem:[%s2676 + $0x4] sm:$0xf]
      %v2679 = vld [vmem:[%s2676 + $0x8] sm:$0xf]
      %v2680 = vld [vmem:[%s2676 + $0xc] sm:$0xf]
      %v2685 = vunpack.c.l.b16 %v2677
      %v2686 = vunpack.c.l.b16 %v2678
      %v2687 = vunpack.c.l.b16 %v2679
      %v2688 = vunpack.c.l.b16 %v2680
      %v2689 = vpack.c.b16 %v2686, %v2685
      %v2690 = vpack.c.b16 %v2688, %v2687
      %v2692 = vsel %vm277, %v2689, 0
      %v2695 = vsel %vm277, %v2690, 0
      %2697 = vmatprep.subr.bf16.mxu0 0
      %2698 = vmatpush1.bf16.msra.mxu0 %v2086
      %2699 = vmatprep.subr.bf16.mxu0 0
      %2700 = vmatpush1.bf16.msra.mxu0 0
      %2701 = vmatprep.subr.bf16.mxu0 0
      %2702 = vmatpush1.bf16.msra.mxu0 0
      %2703 = vmatprep.subr.bf16.mxu0 0
      %2704 = vmatpush1.bf16.msra.mxu0 0
      %2705 = vmatprep.subr.bf16.mxu0 0
      %2706 = vmatpush1.bf16.msra.mxu0 0
      %2707 = vmatprep.subr.bf16.mxu0 0
      %2708 = vmatpush1.bf16.msra.mxu0 0
      %2709 = vmatprep.subr.bf16.mxu0 0
      %2710 = vmatpush1.bf16.msra.mxu0 0
      %2711 = vmatprep.subr.bf16.mxu0 0
      %2712 = vmatpush1.bf16.msra.mxu0 0
      %2713 = vmatprep.subr.bf16.mxu0 0
      %2714 = vmatpush1.bf16.msra.mxu0 0
      %2715 = vmatprep.subr.bf16.mxu0 0
      %2716 = vmatpush1.bf16.msra.mxu0 0
      %2717 = vmatprep.subr.bf16.mxu0 0
      %2718 = vmatpush1.bf16.msra.mxu0 0
      %2719 = vmatprep.subr.bf16.mxu0 0
      %2720 = vmatpush1.bf16.msra.mxu0 0
      %2721 = vmatprep.subr.bf16.mxu0 0
      %2722 = vmatpush1.bf16.msra.mxu0 0
      %2723 = vmatprep.subr.bf16.mxu0 0
      %2724 = vmatpush1.bf16.msra.mxu0 0
      %2725 = vmatprep.subr.bf16.mxu0 0
      %2726 = vmatpush1.bf16.msra.mxu0 0
      %2727 = vmatprep.subr.bf16.mxu0 0
      %2728 = vmatpush1.bf16.msra.mxu0 0
      %2729 = vmatprep.mubr.bf16.mxu0 0
      %2730 = vmatmul.mubr.bf16.gmra.mrb[0].mxu0 %v2692
      %v2731 = vpop.f32.mrb[0].mxu0
      %v2732 = vadd.f32 0.0, %v2731
      %v2733 = vpop.f32.mrb[0].mxu0
      %v2734 = vpop.f32.mrb[0].mxu0
      %v2735 = vadd.f32 0.0, %v2734
      %v2736 = vpop.f32.mrb[0].mxu0
      %2737 = vmatprep.mubr.bf16.mxu0 0
      %2738 = vmatmul.mubr.bf16.gmra.mrb[0].mxu0 %v2695
      %v2739 = vpop.f32.mrb[0].mxu0
      %v2740 = vadd.f32 0.0, %v2739
      %v2741 = vpop.f32.mrb[0].mxu0
      %v2742 = vpop.f32.mrb[0].mxu0
      %v2743 = vadd.f32 0.0, %v2742
      %v2744 = vpop.f32.mrb[0].mxu0
      %2745 = vdwg.mxu0
      %v2746 = vadd.f32 %v2612, %v2732
      %v2747 = vadd.f32 %v2613, %v2735
      %v2748 = vadd.f32 %v2614, %v2740
      %v2749 = vadd.f32 %v2615, %v2743
      %2750 = vrot.lane.b32.xlu0 %v664, 89
      %v2751 = vpop.permute.xlu0 %2750
      %2752 = vrot.lane.b32.xlu0 %v665, 89
      %v2753 = vpop.permute.xlu0 %2752
      %vm2754 = vcmask 728064
      %v2755 = vsel %vm2754, %v2751, %v2753
      %2757 = vmatprep.subr.bf16.mxu0 0
      %2758 = vmatpush1.bf16.msra.mxu0 %v2755
      %2759 = vmatprep.subr.bf16.mxu0 0
      %2760 = vmatpush1.bf16.msra.mxu0 0
      %2761 = vmatprep.subr.bf16.mxu0 0
      %2762 = vmatpush1.bf16.msra.mxu0 0
      %2763 = vmatprep.subr.bf16.mxu0 0
      %2764 = vmatpush1.bf16.msra.mxu0 0
      %2765 = vmatprep.subr.bf16.mxu0 0
      %2766 = vmatpush1.bf16.msra.mxu0 0
      %2767 = vmatprep.subr.bf16.mxu0 0
      %2768 = vmatpush1.bf16.msra.mxu0 0
      %2769 = vmatprep.subr.bf16.mxu0 0
      %2770 = vmatpush1.bf16.msra.mxu0 0
      %2771 = vmatprep.subr.bf16.mxu0 0
      %2772 = vmatpush1.bf16.msra.mxu0 0
      %2773 = vmatprep.subr.bf16.mxu0 0
      %2774 = vmatpush1.bf16.msra.mxu0 0
      %2775 = vmatprep.subr.bf16.mxu0 0
      %2776 = vmatpush1.bf16.msra.mxu0 0
      %2777 = vmatprep.subr.bf16.mxu0 0
      %2778 = vmatpush1.bf16.msra.mxu0 0
      %2779 = vmatprep.subr.bf16.mxu0 0
      %2780 = vmatpush1.bf16.msra.mxu0 0
      %2781 = vmatprep.subr.bf16.mxu0 0
      %2782 = vmatpush1.bf16.msra.mxu0 0
      %2783 = vmatprep.subr.bf16.mxu0 0
      %2784 = vmatpush1.bf16.msra.mxu0 0
      %2785 = vmatprep.subr.bf16.mxu0 0
      %2786 = vmatpush1.bf16.msra.mxu0 0
      %2787 = vmatprep.subr.bf16.mxu0 0
      %2788 = vmatpush1.bf16.msra.mxu0 0
      %2789 = vmatprep.mubr.bf16.mxu0 0
      %2790 = vmatmul.mubr.bf16.gmra.mrb[0].mxu0 %v2692
      %v2791 = vpop.f32.mrb[0].mxu0
      %v2792 = vadd.f32 0.0, %v2791
      %v2793 = vpop.f32.mrb[0].mxu0
      %v2794 = vpop.f32.mrb[0].mxu0
      %v2795 = vadd.f32 0.0, %v2794
      %v2796 = vpop.f32.mrb[0].mxu0
      %2797 = vmatprep.mubr.bf16.mxu0 0
      %2798 = vmatmul.mubr.bf16.gmra.mrb[0].mxu0 %v2695
      %v2799 = vpop.f32.mrb[0].mxu0
      %v2800 = vadd.f32 0.0, %v2799
      %v2801 = vpop.f32.mrb[0].mxu0
      %v2802 = vpop.f32.mrb[0].mxu0
      %v2803 = vadd.f32 0.0, %v2802
      %v2804 = vpop.f32.mrb[0].mxu0
      %2805 = vdwg.mxu0
      %v2806 = vadd.f32 %v2672, %v2792
      %v2807 = vadd.f32 %v2673, %v2795
      %v2808 = vadd.f32 %v2674, %v2800
      %v2809 = vadd.f32 %v2675, %v2803
      %s2810 = scalar_lea.vmem %s2, 304
      %v2811 = vld [vmem:[%s2810] sm:$0xf]
      %v2812 = vld [vmem:[%s2810 + $0x4] sm:$0xf]
      %v2813 = vld [vmem:[%s2810 + $0x8] sm:$0xf]
      %v2814 = vld [vmem:[%s2810 + $0xc] sm:$0xf]
      %v2819 = vunpack.c.l.b16 %v2811
      %v2820 = vunpack.c.l.b16 %v2812
      %v2821 = vunpack.c.l.b16 %v2813
      %v2822 = vunpack.c.l.b16 %v2814
      %v2823 = vpack.c.b16 %v2820, %v2819
      %v2824 = vpack.c.b16 %v2822, %v2821
      %v2826 = vsel %vm277, %v2823, 0
      %v2829 = vsel %vm277, %v2824, 0
      %2831 = vmatprep.subr.bf16.mxu0 0
      %2832 = vmatpush1.bf16.msra.mxu0 %v2219
      %2833 = vmatprep.subr.bf16.mxu0 0
      %2834 = vmatpush1.bf16.msra.mxu0 0
      %2835 = vmatprep.subr.bf16.mxu0 0
      %2836 = vmatpush1.bf16.msra.mxu0 0
      %2837 = vmatprep.subr.bf16.mxu0 0
      %2838 = vmatpush1.bf16.msra.mxu0 0
      %2839 = vmatprep.subr.bf16.mxu0 0
      %2840 = vmatpush1.bf16.msra.mxu0 0
      %2841 = vmatprep.subr.bf16.mxu0 0
      %2842 = vmatpush1.bf16.msra.mxu0 0
      %2843 = vmatprep.subr.bf16.mxu0 0
      %2844 = vmatpush1.bf16.msra.mxu0 0
      %2845 = vmatprep.subr.bf16.mxu0 0
      %2846 = vmatpush1.bf16.msra.mxu0 0
      %2847 = vmatprep.subr.bf16.mxu0 0
      %2848 = vmatpush1.bf16.msra.mxu0 0
      %2849 = vmatprep.subr.bf16.mxu0 0
      %2850 = vmatpush1.bf16.msra.mxu0 0
      %2851 = vmatprep.subr.bf16.mxu0 0
      %2852 = vmatpush1.bf16.msra.mxu0 0
      %2853 = vmatprep.subr.bf16.mxu0 0
      %2854 = vmatpush1.bf16.msra.mxu0 0
      %2855 = vmatprep.subr.bf16.mxu0 0
      %2856 = vmatpush1.bf16.msra.mxu0 0
      %2857 = vmatprep.subr.bf16.mxu0 0
      %2858 = vmatpush1.bf16.msra.mxu0 0
      %2859 = vmatprep.subr.bf16.mxu0 0
      %2860 = vmatpush1.bf16.msra.mxu0 0
      %2861 = vmatprep.subr.bf16.mxu0 0
      %2862 = vmatpush1.bf16.msra.mxu0 0
      %2863 = vmatprep.mubr.bf16.mxu0 0
      %2864 = vmatmul.mubr.bf16.gmra.mrb[0].mxu0 %v2826
      %v2865 = vpop.f32.mrb[0].mxu0
      %v2866 = vadd.f32 0.0, %v2865
      %v2867 = vpop.f32.mrb[0].mxu0
      %v2868 = vpop.f32.mrb[0].mxu0
      %v2869 = vadd.f32 0.0, %v2868
      %v2870 = vpop.f32.mrb[0].mxu0
      %2871 = vmatprep.mubr.bf16.mxu0 0
      %2872 = vmatmul.mubr.bf16.gmra.mrb[0].mxu0 %v2829
      %v2873 = vpop.f32.mrb[0].mxu0
      %v2874 = vadd.f32 0.0, %v2873
      %v2875 = vpop.f32.mrb[0].mxu0
      %v2876 = vpop.f32.mrb[0].mxu0
      %v2877 = vadd.f32 0.0, %v2876
      %v2878 = vpop.f32.mrb[0].mxu0
      %2879 = vdwg.mxu0
      %v2880 = vadd.f32 %v2746, %v2866
      %v2881 = vadd.f32 %v2747, %v2869
      %v2882 = vadd.f32 %v2748, %v2874
      %v2883 = vadd.f32 %v2749, %v2877
      %2884 = vrot.lane.b32.xlu0 %v664, 88
      %v2885 = vpop.permute.xlu0 %2884
      %2886 = vrot.lane.b32.xlu0 %v665, 88
      %v2887 = vpop.permute.xlu0 %2886
      %vm2888 = vcmask 719872
      %v2889 = vsel %vm2888, %v2885, %v2887
      %2891 = vmatprep.subr.bf16.mxu0 0
      %2892 = vmatpush1.bf16.msra.mxu0 %v2889
      %2893 = vmatprep.subr.bf16.mxu0 0
      %2894 = vmatpush1.bf16.msra.mxu0 0
      %2895 = vmatprep.subr.bf16.mxu0 0
      %2896 = vmatpush1.bf16.msra.mxu0 0
      %2897 = vmatprep.subr.bf16.mxu0 0
      %2898 = vmatpush1.bf16.msra.mxu0 0
      %2899 = vmatprep.subr.bf16.mxu0 0
      %2900 = vmatpush1.bf16.msra.mxu0 0
      %2901 = vmatprep.subr.bf16.mxu0 0
      %2902 = vmatpush1.bf16.msra.mxu0 0
      %2903 = vmatprep.subr.bf16.mxu0 0
      %2904 = vmatpush1.bf16.msra.mxu0 0
      %2905 = vmatprep.subr.bf16.mxu0 0
      %2906 = vmatpush1.bf16.msra.mxu0 0
      %2907 = vmatprep.subr.bf16.mxu0 0
      %2908 = vmatpush1.bf16.msra.mxu0 0
      %2909 = vmatprep.subr.bf16.mxu0 0
      %2910 = vmatpush1.bf16.msra.mxu0 0
      %2911 = vmatprep.subr.bf16.mxu0 0
      %2912 = vmatpush1.bf16.msra.mxu0 0
      %2913 = vmatprep.subr.bf16.mxu0 0
      %2914 = vmatpush1.bf16.msra.mxu0 0
      %2915 = vmatprep.subr.bf16.mxu0 0
      %2916 = vmatpush1.bf16.msra.mxu0 0
      %2917 = vmatprep.subr.bf16.mxu0 0
      %2918 = vmatpush1.bf16.msra.mxu0 0
      %2919 = vmatprep.subr.bf16.mxu0 0
      %2920 = vmatpush1.bf16.msra.mxu0 0
      %2921 = vmatprep.subr.bf16.mxu0 0
      %2922 = vmatpush1.bf16.msra.mxu0 0
      %2923 = vmatprep.mubr.bf16.mxu0 0
      %2924 = vmatmul.mubr.bf16.gmra.mrb[0].mxu0 %v2826
      %v2925 = vpop.f32.mrb[0].mxu0
      %v2926 = vadd.f32 0.0, %v2925
      %v2927 = vpop.f32.mrb[0].mxu0
      %v2928 = vpop.f32.mrb[0].mxu0
      %v2929 = vadd.f32 0.0, %v2928
      %v2930 = vpop.f32.mrb[0].mxu0
      %2931 = vmatprep.mubr.bf16.mxu0 0
      %2932 = vmatmul.mubr.bf16.gmra.mrb[0].mxu0 %v2829
      %v2933 = vpop.f32.mrb[0].mxu0
      %v2934 = vadd.f32 0.0, %v2933
      %v2935 = vpop.f32.mrb[0].mxu0
      %v2936 = vpop.f32.mrb[0].mxu0
      %v2937 = vadd.f32 0.0, %v2936
      %v2938 = vpop.f32.mrb[0].mxu0
      %2939 = vdwg.mxu0
      %v2940 = vadd.f32 %v2806, %v2926
      %v2941 = vadd.f32 %v2807, %v2929
      %v2942 = vadd.f32 %v2808, %v2934
      %v2943 = vadd.f32 %v2809, %v2937
      %s2944 = scalar_lea.vmem %s2, 320
      %v2945 = vld [vmem:[%s2944] sm:$0xf]
      %v2946 = vld [vmem:[%s2944 + $0x4] sm:$0xf]
      %v2947 = vld [vmem:[%s2944 + $0x8] sm:$0xf]
      %v2948 = vld [vmem:[%s2944 + $0xc] sm:$0xf]
      %v2953 = vunpack.c.l.b16 %v2945
      %v2954 = vunpack.c.l.b16 %v2946
      %v2955 = vunpack.c.l.b16 %v2947
      %v2956 = vunpack.c.l.b16 %v2948
      %v2957 = vpack.c.b16 %v2954, %v2953
      %v2958 = vpack.c.b16 %v2956, %v2955
      %v2960 = vsel %vm277, %v2957, 0
      %v2963 = vsel %vm277, %v2958, 0
      %2965 = vmatprep.subr.bf16.mxu0 0
      %2966 = vmatpush1.bf16.msra.mxu0 %v2353
      %2967 = vmatprep.subr.bf16.mxu0 0
      %2968 = vmatpush1.bf16.msra.mxu0 0
      %2969 = vmatprep.subr.bf16.mxu0 0
      %2970 = vmatpush1.bf16.msra.mxu0 0
      %2971 = vmatprep.subr.bf16.mxu0 0
      %2972 = vmatpush1.bf16.msra.mxu0 0
      %2973 = vmatprep.subr.bf16.mxu0 0
      %2974 = vmatpush1.bf16.msra.mxu0 0
      %2975 = vmatprep.subr.bf16.mxu0 0
      %2976 = vmatpush1.bf16.msra.mxu0 0
      %2977 = vmatprep.subr.bf16.mxu0 0
      %2978 = vmatpush1.bf16.msra.mxu0 0
      %2979 = vmatprep.subr.bf16.mxu0 0
      %2980 = vmatpush1.bf16.msra.mxu0 0
      %2981 = vmatprep.subr.bf16.mxu0 0
      %2982 = vmatpush1.bf16.msra.mxu0 0
      %2983 = vmatprep.subr.bf16.mxu0 0
      %2984 = vmatpush1.bf16.msra.mxu0 0
      %2985 = vmatprep.subr.bf16.mxu0 0
      %2986 = vmatpush1.bf16.msra.mxu0 0
      %2987 = vmatprep.subr.bf16.mxu0 0
      %2988 = vmatpush1.bf16.msra.mxu0 0
      %2989 = vmatprep.subr.bf16.mxu0 0
      %2990 = vmatpush1.bf16.msra.mxu0 0
      %2991 = vmatprep.subr.bf16.mxu0 0
      %2992 = vmatpush1.bf16.msra.mxu0 0
      %2993 = vmatprep.subr.bf16.mxu0 0
      %2994 = vmatpush1.bf16.msra.mxu0 0
      %2995 = vmatprep.subr.bf16.mxu0 0
      %2996 = vmatpush1.bf16.msra.mxu0 0
      %2997 = vmatprep.mubr.bf16.mxu0 0
      %2998 = vmatmul.mubr.bf16.gmra.mrb[0].mxu0 %v2960
      %v2999 = vpop.f32.mrb[0].mxu0
      %v3000 = vadd.f32 0.0, %v2999
      %v3001 = vpop.f32.mrb[0].mxu0
      %v3002 = vpop.f32.mrb[0].mxu0
      %v3003 = vadd.f32 0.0, %v3002
      %v3004 = vpop.f32.mrb[0].mxu0
      %3005 = vmatprep.mubr.bf16.mxu0 0
      %3006 = vmatmul.mubr.bf16.gmra.mrb[0].mxu0 %v2963
      %v3007 = vpop.f32.mrb[0].mxu0
      %v3008 = vadd.f32 0.0, %v3007
      %v3009 = vpop.f32.mrb[0].mxu0
      %v3010 = vpop.f32.mrb[0].mxu0
      %v3011 = vadd.f32 0.0, %v3010
      %v3012 = vpop.f32.mrb[0].mxu0
      %3013 = vdwg.mxu0
      %v3014 = vadd.f32 %v2880, %v3000
      %v3015 = vadd.f32 %v2881, %v3003
      %v3016 = vadd.f32 %v2882, %v3008
      %v3017 = vadd.f32 %v2883, %v3011
      %3018 = vrot.lane.b32.xlu0 %v738, 92
      %v3019 = vpop.permute.xlu0 %3018
      %3020 = vrot.lane.b32.xlu0 %v739, 92
      %v3021 = vpop.permute.xlu0 %3020
      %v3022 = vsel %vm2352, %v3019, %v3021
      %3024 = vmatprep.subr.bf16.mxu0 0
      %3025 = vmatpush1.bf16.msra.mxu0 %v3022
      %3026 = vmatprep.subr.bf16.mxu0 0
      %3027 = vmatpush1.bf16.msra.mxu0 0
      %3028 = vmatprep.subr.bf16.mxu0 0
      %3029 = vmatpush1.bf16.msra.mxu0 0
      %3030 = vmatprep.subr.bf16.mxu0 0
      %3031 = vmatpush1.bf16.msra.mxu0 0
      %3032 = vmatprep.subr.bf16.mxu0 0
      %3033 = vmatpush1.bf16.msra.mxu0 0
      %3034 = vmatprep.subr.bf16.mxu0 0
      %3035 = vmatpush1.bf16.msra.mxu0 0
      %3036 = vmatprep.subr.bf16.mxu0 0
      %3037 = vmatpush1.bf16.msra.mxu0 0
      %3038 = vmatprep.subr.bf16.mxu0 0
      %3039 = vmatpush1.bf16.msra.mxu0 0
      %3040 = vmatprep.subr.bf16.mxu0 0
      %3041 = vmatpush1.bf16.msra.mxu0 0
      %3042 = vmatprep.subr.bf16.mxu0 0
      %3043 = vmatpush1.bf16.msra.mxu0 0
      %3044 = vmatprep.subr.bf16.mxu0 0
      %3045 = vmatpush1.bf16.msra.mxu0 0
      %3046 = vmatprep.subr.bf16.mxu0 0
      %3047 = vmatpush1.bf16.msra.mxu0 0
      %3048 = vmatprep.subr.bf16.mxu0 0
      %3049 = vmatpush1.bf16.msra.mxu0 0
      %3050 = vmatprep.subr.bf16.mxu0 0
      %3051 = vmatpush1.bf16.msra.mxu0 0
      %3052 = vmatprep.subr.bf16.mxu0 0
      %3053 = vmatpush1.bf16.msra.mxu0 0
      %3054 = vmatprep.subr.bf16.mxu0 0
      %3055 = vmatpush1.bf16.msra.mxu0 0
      %3056 = vmatprep.mubr.bf16.mxu0 0
      %3057 = vmatmul.mubr.bf16.gmra.mrb[0].mxu0 %v2960
      %v3058 = vpop.f32.mrb[0].mxu0
      %v3059 = vadd.f32 0.0, %v3058
      %v3060 = vpop.f32.mrb[0].mxu0
      %v3061 = vpop.f32.mrb[0].mxu0
      %v3062 = vadd.f32 0.0, %v3061
      %v3063 = vpop.f32.mrb[0].mxu0
      %3064 = vmatprep.mubr.bf16.mxu0 0
      %3065 = vmatmul.mubr.bf16.gmra.mrb[0].mxu0 %v2963
      %v3066 = vpop.f32.mrb[0].mxu0
      %v3067 = vadd.f32 0.0, %v3066
      %v3068 = vpop.f32.mrb[0].mxu0
      %v3069 = vpop.f32.mrb[0].mxu0
      %v3070 = vadd.f32 0.0, %v3069
      %v3071 = vpop.f32.mrb[0].mxu0
      %3072 = vdwg.mxu0
      %v3073 = vadd.f32 %v2940, %v3059
      %v3074 = vadd.f32 %v2941, %v3062
      %v3075 = vadd.f32 %v2942, %v3067
      %v3076 = vadd.f32 %v2943, %v3070
      %s3077 = scalar_lea.vmem %s2, 336
      %v3078 = vld [vmem:[%s3077] sm:$0xf]
      %v3079 = vld [vmem:[%s3077 + $0x4] sm:$0xf]
      %v3080 = vld [vmem:[%s3077 + $0x8] sm:$0xf]
      %v3081 = vld [vmem:[%s3077 + $0xc] sm:$0xf]
      %v3086 = vunpack.c.l.b16 %v3078
      %v3087 = vunpack.c.l.b16 %v3079
      %v3088 = vunpack.c.l.b16 %v3080
      %v3089 = vunpack.c.l.b16 %v3081
      %v3090 = vpack.c.b16 %v3087, %v3086
      %v3091 = vpack.c.b16 %v3089, %v3088
      %v3093 = vsel %vm277, %v3090, 0
      %v3096 = vsel %vm277, %v3091, 0
      %3098 = vmatprep.subr.bf16.mxu0 0
      %3099 = vmatpush1.bf16.msra.mxu0 %v2487
      %3100 = vmatprep.subr.bf16.mxu0 0
      %3101 = vmatpush1.bf16.msra.mxu0 0
      %3102 = vmatprep.subr.bf16.mxu0 0
      %3103 = vmatpush1.bf16.msra.mxu0 0
      %3104 = vmatprep.subr.bf16.mxu0 0
      %3105 = vmatpush1.bf16.msra.mxu0 0
      %3106 = vmatprep.subr.bf16.mxu0 0
      %3107 = vmatpush1.bf16.msra.mxu0 0
      %3108 = vmatprep.subr.bf16.mxu0 0
      %3109 = vmatpush1.bf16.msra.mxu0 0
      %3110 = vmatprep.subr.bf16.mxu0 0
      %3111 = vmatpush1.bf16.msra.mxu0 0
      %3112 = vmatprep.subr.bf16.mxu0 0
      %3113 = vmatpush1.bf16.msra.mxu0 0
      %3114 = vmatprep.subr.bf16.mxu0 0
      %3115 = vmatpush1.bf16.msra.mxu0 0
      %3116 = vmatprep.subr.bf16.mxu0 0
      %3117 = vmatpush1.bf16.msra.mxu0 0
      %3118 = vmatprep.subr.bf16.mxu0 0
      %3119 = vmatpush1.bf16.msra.mxu0 0
      %3120 = vmatprep.subr.bf16.mxu0 0
      %3121 = vmatpush1.bf16.msra.mxu0 0
      %3122 = vmatprep.subr.bf16.mxu0 0
      %3123 = vmatpush1.bf16.msra.mxu0 0
      %3124 = vmatprep.subr.bf16.mxu0 0
      %3125 = vmatpush1.bf16.msra.mxu0 0
      %3126 = vmatprep.subr.bf16.mxu0 0
      %3127 = vmatpush1.bf16.msra.mxu0 0
      %3128 = vmatprep.subr.bf16.mxu0 0
      %3129 = vmatpush1.bf16.msra.mxu0 0
      %3130 = vmatprep.mubr.bf16.mxu0 0
      %3131 = vmatmul.mubr.bf16.gmra.mrb[0].mxu0 %v3093
      %v3132 = vpop.f32.mrb[0].mxu0
      %v3133 = vadd.f32 0.0, %v3132
      %v3134 = vpop.f32.mrb[0].mxu0
      %v3135 = vpop.f32.mrb[0].mxu0
      %v3136 = vadd.f32 0.0, %v3135
      %v3137 = vpop.f32.mrb[0].mxu0
      %3138 = vmatprep.mubr.bf16.mxu0 0
      %3139 = vmatmul.mubr.bf16.gmra.mrb[0].mxu0 %v3096
      %v3140 = vpop.f32.mrb[0].mxu0
      %v3141 = vadd.f32 0.0, %v3140
      %v3142 = vpop.f32.mrb[0].mxu0
      %v3143 = vpop.f32.mrb[0].mxu0
      %v3144 = vadd.f32 0.0, %v3143
      %v3145 = vpop.f32.mrb[0].mxu0
      %3146 = vdwg.mxu0
      %v3147 = vadd.f32 %v3014, %v3133
      %v3148 = vadd.f32 %v3015, %v3136
      %v3149 = vadd.f32 %v3016, %v3141
      %v3150 = vadd.f32 %v3017, %v3144
      %3151 = vrot.lane.b32.xlu0 %v738, 91
      %v3152 = vpop.permute.xlu0 %3151
      %3153 = vrot.lane.b32.xlu0 %v739, 91
      %v3154 = vpop.permute.xlu0 %3153
      %v3155 = vsel %vm2486, %v3152, %v3154
      %3157 = vmatprep.subr.bf16.mxu0 0
      %3158 = vmatpush1.bf16.msra.mxu0 %v3155
      %3159 = vmatprep.subr.bf16.mxu0 0
      %3160 = vmatpush1.bf16.msra.mxu0 0
      %3161 = vmatprep.subr.bf16.mxu0 0
      %3162 = vmatpush1.bf16.msra.mxu0 0
      %3163 = vmatprep.subr.bf16.mxu0 0
      %3164 = vmatpush1.bf16.msra.mxu0 0
      %3165 = vmatprep.subr.bf16.mxu0 0
      %3166 = vmatpush1.bf16.msra.mxu0 0
      %3167 = vmatprep.subr.bf16.mxu0 0
      %3168 = vmatpush1.bf16.msra.mxu0 0
      %3169 = vmatprep.subr.bf16.mxu0 0
      %3170 = vmatpush1.bf16.msra.mxu0 0
      %3171 = vmatprep.subr.bf16.mxu0 0
      %3172 = vmatpush1.bf16.msra.mxu0 0
      %3173 = vmatprep.subr.bf16.mxu0 0
      %3174 = vmatpush1.bf16.msra.mxu0 0
      %3175 = vmatprep.subr.bf16.mxu0 0
      %3176 = vmatpush1.bf16.msra.mxu0 0
      %3177 = vmatprep.subr.bf16.mxu0 0
      %3178 = vmatpush1.bf16.msra.mxu0 0
      %3179 = vmatprep.subr.bf16.mxu0 0
      %3180 = vmatpush1.bf16.msra.mxu0 0
      %3181 = vmatprep.subr.bf16.mxu0 0
      %3182 = vmatpush1.bf16.msra.mxu0 0
      %3183 = vmatprep.subr.bf16.mxu0 0
      %3184 = vmatpush1.bf16.msra.mxu0 0
      %3185 = vmatprep.subr.bf16.mxu0 0
      %3186 = vmatpush1.bf16.msra.mxu0 0
      %3187 = vmatprep.subr.bf16.mxu0 0
      %3188 = vmatpush1.bf16.msra.mxu0 0
      %3189 = vmatprep.mubr.bf16.mxu0 0
      %3190 = vmatmul.mubr.bf16.gmra.mrb[0].mxu0 %v3093
      %v3191 = vpop.f32.mrb[0].mxu0
      %v3192 = vadd.f32 0.0, %v3191
      %v3193 = vpop.f32.mrb[0].mxu0
      %v3194 = vpop.f32.mrb[0].mxu0
      %v3195 = vadd.f32 0.0, %v3194
      %v3196 = vpop.f32.mrb[0].mxu0
      %3197 = vmatprep.mubr.bf16.mxu0 0
      %3198 = vmatmul.mubr.bf16.gmra.mrb[0].mxu0 %v3096
      %v3199 = vpop.f32.mrb[0].mxu0
      %v3200 = vadd.f32 0.0, %v3199
      %v3201 = vpop.f32.mrb[0].mxu0
      %v3202 = vpop.f32.mrb[0].mxu0
      %v3203 = vadd.f32 0.0, %v3202
      %v3204 = vpop.f32.mrb[0].mxu0
      %3205 = vdwg.mxu0
      %v3206 = vadd.f32 %v3073, %v3192
      %v3207 = vadd.f32 %v3074, %v3195
      %v3208 = vadd.f32 %v3075, %v3200
      %v3209 = vadd.f32 %v3076, %v3203
      %s3210 = scalar_lea.vmem %s2, 352
      %v3211 = vld [vmem:[%s3210] sm:$0xf]
      %v3212 = vld [vmem:[%s3210 + $0x4] sm:$0xf]
      %v3213 = vld [vmem:[%s3210 + $0x8] sm:$0xf]
      %v3214 = vld [vmem:[%s3210 + $0xc] sm:$0xf]
      %v3219 = vunpack.c.l.b16 %v3211
      %v3220 = vunpack.c.l.b16 %v3212
      %v3221 = vunpack.c.l.b16 %v3213
      %v3222 = vunpack.c.l.b16 %v3214
      %v3223 = vpack.c.b16 %v3220, %v3219
      %v3224 = vpack.c.b16 %v3222, %v3221
      %v3226 = vsel %vm277, %v3223, 0
      %v3229 = vsel %vm277, %v3224, 0
      %3231 = vmatprep.subr.bf16.mxu0 0
      %3232 = vmatpush1.bf16.msra.mxu0 %v2621
      %3233 = vmatprep.subr.bf16.mxu0 0
      %3234 = vmatpush1.bf16.msra.mxu0 0
      %3235 = vmatprep.subr.bf16.mxu0 0
      %3236 = vmatpush1.bf16.msra.mxu0 0
      %3237 = vmatprep.subr.bf16.mxu0 0
      %3238 = vmatpush1.bf16.msra.mxu0 0
      %3239 = vmatprep.subr.bf16.mxu0 0
      %3240 = vmatpush1.bf16.msra.mxu0 0
      %3241 = vmatprep.subr.bf16.mxu0 0
      %3242 = vmatpush1.bf16.msra.mxu0 0
      %3243 = vmatprep.subr.bf16.mxu0 0
      %3244 = vmatpush1.bf16.msra.mxu0 0
      %3245 = vmatprep.subr.bf16.mxu0 0
      %3246 = vmatpush1.bf16.msra.mxu0 0
      %3247 = vmatprep.subr.bf16.mxu0 0
      %3248 = vmatpush1.bf16.msra.mxu0 0
      %3249 = vmatprep.subr.bf16.mxu0 0
      %3250 = vmatpush1.bf16.msra.mxu0 0
      %3251 = vmatprep.subr.bf16.mxu0 0
      %3252 = vmatpush1.bf16.msra.mxu0 0
      %3253 = vmatprep.subr.bf16.mxu0 0
      %3254 = vmatpush1.bf16.msra.mxu0 0
      %3255 = vmatprep.subr.bf16.mxu0 0
      %3256 = vmatpush1.bf16.msra.mxu0 0
      %3257 = vmatprep.subr.bf16.mxu0 0
      %3258 = vmatpush1.bf16.msra.mxu0 0
      %3259 = vmatprep.subr.bf16.mxu0 0
      %3260 = vmatpush1.bf16.msra.mxu0 0
      %3261 = vmatprep.subr.bf16.mxu0 0
      %3262 = vmatpush1.bf16.msra.mxu0 0
      %3263 = vmatprep.mubr.bf16.mxu0 0
      %3264 = vmatmul.mubr.bf16.gmra.mrb[0].mxu0 %v3226
      %v3265 = vpop.f32.mrb[0].mxu0
      %v3266 = vadd.f32 0.0, %v3265
      %v3267 = vpop.f32.mrb[0].mxu0
      %v3268 = vpop.f32.mrb[0].mxu0
      %v3269 = vadd.f32 0.0, %v3268
      %v3270 = vpop.f32.mrb[0].mxu0
      %3271 = vmatprep.mubr.bf16.mxu0 0
      %3272 = vmatmul.mubr.bf16.gmra.mrb[0].mxu0 %v3229
      %v3273 = vpop.f32.mrb[0].mxu0
      %v3274 = vadd.f32 0.0, %v3273
      %v3275 = vpop.f32.mrb[0].mxu0
      %v3276 = vpop.f32.mrb[0].mxu0
      %v3277 = vadd.f32 0.0, %v3276
      %v3278 = vpop.f32.mrb[0].mxu0
      %3279 = vdwg.mxu0
      %v3280 = vadd.f32 %v3147, %v3266
      %v3281 = vadd.f32 %v3148, %v3269
      %v3282 = vadd.f32 %v3149, %v3274
      %v3283 = vadd.f32 %v3150, %v3277
      %3284 = vrot.lane.b32.xlu0 %v738, 90
      %v3285 = vpop.permute.xlu0 %3284
      %3286 = vrot.lane.b32.xlu0 %v739, 90
      %v3287 = vpop.permute.xlu0 %3286
      %v3288 = vsel %vm2620, %v3285, %v3287
      %3290 = vmatprep.subr.bf16.mxu0 0
      %3291 = vmatpush1.bf16.msra.mxu0 %v3288
      %3292 = vmatprep.subr.bf16.mxu0 0
      %3293 = vmatpush1.bf16.msra.mxu0 0
      %3294 = vmatprep.subr.bf16.mxu0 0
      %3295 = vmatpush1.bf16.msra.mxu0 0
      %3296 = vmatprep.subr.bf16.mxu0 0
      %3297 = vmatpush1.bf16.msra.mxu0 0
      %3298 = vmatprep.subr.bf16.mxu0 0
      %3299 = vmatpush1.bf16.msra.mxu0 0
      %3300 = vmatprep.subr.bf16.mxu0 0
      %3301 = vmatpush1.bf16.msra.mxu0 0
      %3302 = vmatprep.subr.bf16.mxu0 0
      %3303 = vmatpush1.bf16.msra.mxu0 0
      %3304 = vmatprep.subr.bf16.mxu0 0
      %3305 = vmatpush1.bf16.msra.mxu0 0
      %3306 = vmatprep.subr.bf16.mxu0 0
      %3307 = vmatpush1.bf16.msra.mxu0 0
      %3308 = vmatprep.subr.bf16.mxu0 0
      %3309 = vmatpush1.bf16.msra.mxu0 0
      %3310 = vmatprep.subr.bf16.mxu0 0
      %3311 = vmatpush1.bf16.msra.mxu0 0
      %3312 = vmatprep.subr.bf16.mxu0 0
      %3313 = vmatpush1.bf16.msra.mxu0 0
      %3314 = vmatprep.subr.bf16.mxu0 0
      %3315 = vmatpush1.bf16.msra.mxu0 0
      %3316 = vmatprep.subr.bf16.mxu0 0
      %3317 = vmatpush1.bf16.msra.mxu0 0
      %3318 = vmatprep.subr.bf16.mxu0 0
      %3319 = vmatpush1.bf16.msra.mxu0 0
      %3320 = vmatprep.subr.bf16.mxu0 0
      %3321 = vmatpush1.bf16.msra.mxu0 0
      %3322 = vmatprep.mubr.bf16.mxu0 0
      %3323 = vmatmul.mubr.bf16.gmra.mrb[0].mxu0 %v3226
      %v3324 = vpop.f32.mrb[0].mxu0
      %v3325 = vadd.f32 0.0, %v3324
      %v3326 = vpop.f32.mrb[0].mxu0
      %v3327 = vpop.f32.mrb[0].mxu0
      %v3328 = vadd.f32 0.0, %v3327
      %v3329 = vpop.f32.mrb[0].mxu0
      %3330 = vmatprep.mubr.bf16.mxu0 0
      %3331 = vmatmul.mubr.bf16.gmra.mrb[0].mxu0 %v3229
      %v3332 = vpop.f32.mrb[0].mxu0
      %v3333 = vadd.f32 0.0, %v3332
      %v3334 = vpop.f32.mrb[0].mxu0
      %v3335 = vpop.f32.mrb[0].mxu0
      %v3336 = vadd.f32 0.0, %v3335
      %v3337 = vpop.f32.mrb[0].mxu0
      %3338 = vdwg.mxu0
      %v3339 = vadd.f32 %v3206, %v3325
      %v3340 = vadd.f32 %v3207, %v3328
      %v3341 = vadd.f32 %v3208, %v3333
      %v3342 = vadd.f32 %v3209, %v3336
      %s3343 = scalar_lea.vmem %s2, 368
      %v3344 = vld [vmem:[%s3343] sm:$0xf]
      %v3345 = vld [vmem:[%s3343 + $0x4] sm:$0xf]
      %v3346 = vld [vmem:[%s3343 + $0x8] sm:$0xf]
      %v3347 = vld [vmem:[%s3343 + $0xc] sm:$0xf]
      %v3352 = vunpack.c.l.b16 %v3344
      %v3353 = vunpack.c.l.b16 %v3345
      %v3354 = vunpack.c.l.b16 %v3346
      %v3355 = vunpack.c.l.b16 %v3347
      %v3356 = vpack.c.b16 %v3353, %v3352
      %v3357 = vpack.c.b16 %v3355, %v3354
      %v3359 = vsel %vm277, %v3356, 0
      %v3362 = vsel %vm277, %v3357, 0
      %3364 = vmatprep.subr.bf16.mxu0 0
      %3365 = vmatpush1.bf16.msra.mxu0 %v2755
      %3366 = vmatprep.subr.bf16.mxu0 0
      %3367 = vmatpush1.bf16.msra.mxu0 0
      %3368 = vmatprep.subr.bf16.mxu0 0
      %3369 = vmatpush1.bf16.msra.mxu0 0
      %3370 = vmatprep.subr.bf16.mxu0 0
      %3371 = vmatpush1.bf16.msra.mxu0 0
      %3372 = vmatprep.subr.bf16.mxu0 0
      %3373 = vmatpush1.bf16.msra.mxu0 0
      %3374 = vmatprep.subr.bf16.mxu0 0
      %3375 = vmatpush1.bf16.msra.mxu0 0
      %3376 = vmatprep.subr.bf16.mxu0 0
      %3377 = vmatpush1.bf16.msra.mxu0 0
      %3378 = vmatprep.subr.bf16.mxu0 0
      %3379 = vmatpush1.bf16.msra.mxu0 0
      %3380 = vmatprep.subr.bf16.mxu0 0
      %3381 = vmatpush1.bf16.msra.mxu0 0
      %3382 = vmatprep.subr.bf16.mxu0 0
      %3383 = vmatpush1.bf16.msra.mxu0 0
      %3384 = vmatprep.subr.bf16.mxu0 0
      %3385 = vmatpush1.bf16.msra.mxu0 0
      %3386 = vmatprep.subr.bf16.mxu0 0
      %3387 = vmatpush1.bf16.msra.mxu0 0
      %3388 = vmatprep.subr.bf16.mxu0 0
      %3389 = vmatpush1.bf16.msra.mxu0 0
      %3390 = vmatprep.subr.bf16.mxu0 0
      %3391 = vmatpush1.bf16.msra.mxu0 0
      %3392 = vmatprep.subr.bf16.mxu0 0
      %3393 = vmatpush1.bf16.msra.mxu0 0
      %3394 = vmatprep.subr.bf16.mxu0 0
      %3395 = vmatpush1.bf16.msra.mxu0 0
      %3396 = vmatprep.mubr.bf16.mxu0 0
      %3397 = vmatmul.mubr.bf16.gmra.mrb[0].mxu0 %v3359
      %v3398 = vpop.f32.mrb[0].mxu0
      %v3399 = vadd.f32 0.0, %v3398
      %v3400 = vpop.f32.mrb[0].mxu0
      %v3401 = vpop.f32.mrb[0].mxu0
      %v3402 = vadd.f32 0.0, %v3401
      %v3403 = vpop.f32.mrb[0].mxu0
      %3404 = vmatprep.mubr.bf16.mxu0 0
      %3405 = vmatmul.mubr.bf16.gmra.mrb[0].mxu0 %v3362
      %v3406 = vpop.f32.mrb[0].mxu0
      %v3407 = vadd.f32 0.0, %v3406
      %v3408 = vpop.f32.mrb[0].mxu0
      %v3409 = vpop.f32.mrb[0].mxu0
      %v3410 = vadd.f32 0.0, %v3409
      %v3411 = vpop.f32.mrb[0].mxu0
      %3412 = vdwg.mxu0
      %v3413 = vadd.f32 %v3280, %v3399
      %v3414 = vadd.f32 %v3281, %v3402
      %v3415 = vadd.f32 %v3282, %v3407
      %v3416 = vadd.f32 %v3283, %v3410
      %3417 = vrot.lane.b32.xlu0 %v738, 89
      %v3418 = vpop.permute.xlu0 %3417
      %3419 = vrot.lane.b32.xlu0 %v739, 89
      %v3420 = vpop.permute.xlu0 %3419
      %v3421 = vsel %vm2754, %v3418, %v3420
      %3423 = vmatprep.subr.bf16.mxu0 0
      %3424 = vmatpush1.bf16.msra.mxu0 %v3421
      %3425 = vmatprep.subr.bf16.mxu0 0
      %3426 = vmatpush1.bf16.msra.mxu0 0
      %3427 = vmatprep.subr.bf16.mxu0 0
      %3428 = vmatpush1.bf16.msra.mxu0 0
      %3429 = vmatprep.subr.bf16.mxu0 0
      %3430 = vmatpush1.bf16.msra.mxu0 0
      %3431 = vmatprep.subr.bf16.mxu0 0
      %3432 = vmatpush1.bf16.msra.mxu0 0
      %3433 = vmatprep.subr.bf16.mxu0 0
      %3434 = vmatpush1.bf16.msra.mxu0 0
      %3435 = vmatprep.subr.bf16.mxu0 0
      %3436 = vmatpush1.bf16.msra.mxu0 0
      %3437 = vmatprep.subr.bf16.mxu0 0
      %3438 = vmatpush1.bf16.msra.mxu0 0
      %3439 = vmatprep.subr.bf16.mxu0 0
      %3440 = vmatpush1.bf16.msra.mxu0 0
      %3441 = vmatprep.subr.bf16.mxu0 0
      %3442 = vmatpush1.bf16.msra.mxu0 0
      %3443 = vmatprep.subr.bf16.mxu0 0
      %3444 = vmatpush1.bf16.msra.mxu0 0
      %3445 = vmatprep.subr.bf16.mxu0 0
      %3446 = vmatpush1.bf16.msra.mxu0 0
      %3447 = vmatprep.subr.bf16.mxu0 0
      %3448 = vmatpush1.bf16.msra.mxu0 0
      %3449 = vmatprep.subr.bf16.mxu0 0
      %3450 = vmatpush1.bf16.msra.mxu0 0
      %3451 = vmatprep.subr.bf16.mxu0 0
      %3452 = vmatpush1.bf16.msra.mxu0 0
      %3453 = vmatprep.subr.bf16.mxu0 0
      %3454 = vmatpush1.bf16.msra.mxu0 0
      %3455 = vmatprep.mubr.bf16.mxu0 0
      %3456 = vmatmul.mubr.bf16.gmra.mrb[0].mxu0 %v3359
      %v3457 = vpop.f32.mrb[0].mxu0
      %v3458 = vadd.f32 0.0, %v3457
      %v3459 = vpop.f32.mrb[0].mxu0
      %v3460 = vpop.f32.mrb[0].mxu0
      %v3461 = vadd.f32 0.0, %v3460
      %v3462 = vpop.f32.mrb[0].mxu0
      %3463 = vmatprep.mubr.bf16.mxu0 0
      %3464 = vmatmul.mubr.bf16.gmra.mrb[0].mxu0 %v3362
      %v3465 = vpop.f32.mrb[0].mxu0
      %v3466 = vadd.f32 0.0, %v3465
      %v3467 = vpop.f32.mrb[0].mxu0
      %v3468 = vpop.f32.mrb[0].mxu0
      %v3469 = vadd.f32 0.0, %v3468
      %v3470 = vpop.f32.mrb[0].mxu0
      %3471 = vdwg.mxu0
      %v3472 = vadd.f32 %v3339, %v3458
      %v3473 = vadd.f32 %v3340, %v3461
      %v3474 = vadd.f32 %v3341, %v3466
      %v3475 = vadd.f32 %v3342, %v3469
      %s3476 = scalar_lea.vmem %s2, 384
      %v3477 = vld [vmem:[%s3476] sm:$0xf]
      %v3478 = vld [vmem:[%s3476 + $0x4] sm:$0xf]
      %v3479 = vld [vmem:[%s3476 + $0x8] sm:$0xf]
      %v3480 = vld [vmem:[%s3476 + $0xc] sm:$0xf]
      %v3485 = vunpack.c.l.b16 %v3477
      %v3486 = vunpack.c.l.b16 %v3478
      %v3487 = vunpack.c.l.b16 %v3479
      %v3488 = vunpack.c.l.b16 %v3480
      %v3489 = vpack.c.b16 %v3486, %v3485
      %v3490 = vpack.c.b16 %v3488, %v3487
      %v3492 = vsel %vm277, %v3489, 0
      %v3495 = vsel %vm277, %v3490, 0
      %3497 = vmatprep.subr.bf16.mxu0 0
      %3498 = vmatpush1.bf16.msra.mxu0 %v2889
      %3499 = vmatprep.subr.bf16.mxu0 0
      %3500 = vmatpush1.bf16.msra.mxu0 0
      %3501 = vmatprep.subr.bf16.mxu0 0
      %3502 = vmatpush1.bf16.msra.mxu0 0
      %3503 = vmatprep.subr.bf16.mxu0 0
      %3504 = vmatpush1.bf16.msra.mxu0 0
      %3505 = vmatprep.subr.bf16.mxu0 0
      %3506 = vmatpush1.bf16.msra.mxu0 0
      %3507 = vmatprep.subr.bf16.mxu0 0
      %3508 = vmatpush1.bf16.msra.mxu0 0
      %3509 = vmatprep.subr.bf16.mxu0 0
      %3510 = vmatpush1.bf16.msra.mxu0 0
      %3511 = vmatprep.subr.bf16.mxu0 0
      %3512 = vmatpush1.bf16.msra.mxu0 0
      %3513 = vmatprep.subr.bf16.mxu0 0
      %3514 = vmatpush1.bf16.msra.mxu0 0
      %3515 = vmatprep.subr.bf16.mxu0 0
      %3516 = vmatpush1.bf16.msra.mxu0 0
      %3517 = vmatprep.subr.bf16.mxu0 0
      %3518 = vmatpush1.bf16.msra.mxu0 0
      %3519 = vmatprep.subr.bf16.mxu0 0
      %3520 = vmatpush1.bf16.msra.mxu0 0
      %3521 = vmatprep.subr.bf16.mxu0 0
      %3522 = vmatpush1.bf16.msra.mxu0 0
      %3523 = vmatprep.subr.bf16.mxu0 0
      %3524 = vmatpush1.bf16.msra.mxu0 0
      %3525 = vmatprep.subr.bf16.mxu0 0
      %3526 = vmatpush1.bf16.msra.mxu0 0
      %3527 = vmatprep.subr.bf16.mxu0 0
      %3528 = vmatpush1.bf16.msra.mxu0 0
      %3529 = vmatprep.mubr.bf16.mxu0 0
      %3530 = vmatmul.mubr.bf16.gmra.mrb[0].mxu0 %v3492
      %v3531 = vpop.f32.mrb[0].mxu0
      %v3532 = vadd.f32 0.0, %v3531
      %v3533 = vpop.f32.mrb[0].mxu0
      %v3534 = vpop.f32.mrb[0].mxu0
      %v3535 = vadd.f32 0.0, %v3534
      %v3536 = vpop.f32.mrb[0].mxu0
      %3537 = vmatprep.mubr.bf16.mxu0 0
      %3538 = vmatmul.mubr.bf16.gmra.mrb[0].mxu0 %v3495
      %v3539 = vpop.f32.mrb[0].mxu0
      %v3540 = vadd.f32 0.0, %v3539
      %v3541 = vpop.f32.mrb[0].mxu0
      %v3542 = vpop.f32.mrb[0].mxu0
      %v3543 = vadd.f32 0.0, %v3542
      %v3544 = vpop.f32.mrb[0].mxu0
      %3545 = vdwg.mxu0
      %v3546 = vadd.f32 %v3413, %v3532
      %v3547 = vadd.f32 %v3414, %v3535
      %v3548 = vadd.f32 %v3415, %v3540
      %v3549 = vadd.f32 %v3416, %v3543
      %3550 = vrot.lane.b32.xlu0 %v738, 88
      %v3551 = vpop.permute.xlu0 %3550
      %3552 = vrot.lane.b32.xlu0 %v739, 88
      %v3553 = vpop.permute.xlu0 %3552
      %v3554 = vsel %vm2888, %v3551, %v3553
      %3556 = vmatprep.subr.bf16.mxu0 0
      %3557 = vmatpush1.bf16.msra.mxu0 %v3554
      %3558 = vmatprep.subr.bf16.mxu0 0
      %3559 = vmatpush1.bf16.msra.mxu0 0
      %3560 = vmatprep.subr.bf16.mxu0 0
      %3561 = vmatpush1.bf16.msra.mxu0 0
      %3562 = vmatprep.subr.bf16.mxu0 0
      %3563 = vmatpush1.bf16.msra.mxu0 0
      %3564 = vmatprep.subr.bf16.mxu0 0
      %3565 = vmatpush1.bf16.msra.mxu0 0
      %3566 = vmatprep.subr.bf16.mxu0 0
      %3567 = vmatpush1.bf16.msra.mxu0 0
      %3568 = vmatprep.subr.bf16.mxu0 0
      %3569 = vmatpush1.bf16.msra.mxu0 0
      %3570 = vmatprep.subr.bf16.mxu0 0
      %3571 = vmatpush1.bf16.msra.mxu0 0
      %3572 = vmatprep.subr.bf16.mxu0 0
      %3573 = vmatpush1.bf16.msra.mxu0 0
      %3574 = vmatprep.subr.bf16.mxu0 0
      %3575 = vmatpush1.bf16.msra.mxu0 0
      %3576 = vmatprep.subr.bf16.mxu0 0
      %3577 = vmatpush1.bf16.msra.mxu0 0
      %3578 = vmatprep.subr.bf16.mxu0 0
      %3579 = vmatpush1.bf16.msra.mxu0 0
      %3580 = vmatprep.subr.bf16.mxu0 0
      %3581 = vmatpush1.bf16.msra.mxu0 0
      %3582 = vmatprep.subr.bf16.mxu0 0
      %3583 = vmatpush1.bf16.msra.mxu0 0
      %3584 = vmatprep.subr.bf16.mxu0 0
      %3585 = vmatpush1.bf16.msra.mxu0 0
      %3586 = vmatprep.subr.bf16.mxu0 0
      %3587 = vmatpush1.bf16.msra.mxu0 0
      %3588 = vmatprep.mubr.bf16.mxu0 0
      %3589 = vmatmul.mubr.bf16.gmra.mrb[0].mxu0 %v3492
      %v3590 = vpop.f32.mrb[0].mxu0
      %v3591 = vadd.f32 0.0, %v3590
      %v3592 = vpop.f32.mrb[0].mxu0
      %v3593 = vpop.f32.mrb[0].mxu0
      %v3594 = vadd.f32 0.0, %v3593
      %v3595 = vpop.f32.mrb[0].mxu0
      %3596 = vmatprep.mubr.bf16.mxu0 0
      %3597 = vmatmul.mubr.bf16.gmra.mrb[0].mxu0 %v3495
      %v3598 = vpop.f32.mrb[0].mxu0
      %v3599 = vadd.f32 0.0, %v3598
      %v3600 = vpop.f32.mrb[0].mxu0
      %v3601 = vpop.f32.mrb[0].mxu0
      %v3602 = vadd.f32 0.0, %v3601
      %v3603 = vpop.f32.mrb[0].mxu0
      %3604 = vdwg.mxu0
      %v3605 = vadd.f32 %v3472, %v3591
      %v3606 = vadd.f32 %v3473, %v3594
      %v3607 = vadd.f32 %v3474, %v3599
      %v3608 = vadd.f32 %v3475, %v3602
      %v3609 = vld [vmem:[%s3] sm:$0xff]
      %v3610 = vld [vmem:[%s3 + $0x8] sm:$0xff]
      %v3611 = vld [vmem:[%s3 + $0x10] sm:$0xff]
      %v3612 = vld [vmem:[%s3 + $0x18] sm:$0xff]
      %3614 = vset.pattern.permute.xlu0 0
      %3615 = vperm.xlu0 %3614, %v3609
      %v3616 = vpop.permute.xlu0 %3615
      %3619 = vset.pattern.permute.xlu0 0
      %3620 = vperm.xlu0 %3619, %v3610
      %v3621 = vpop.permute.xlu0 %3620
      %3624 = vset.pattern.permute.xlu0 0
      %3625 = vperm.xlu0 %3624, %v3611
      %v3626 = vpop.permute.xlu0 %3625
      %3629 = vset.pattern.permute.xlu0 0
      %3630 = vperm.xlu0 %3629, %v3612
      %v3631 = vpop.permute.xlu0 %3630
      %v3633 = vadd.f32 %v3546, %v3616
      %v3634 = vadd.f32 %v3547, %v3621
      %v3635 = vadd.f32 %v3548, %v3626
      %v3636 = vadd.f32 %v3549, %v3631
      %v3637 = vmax.f32 %v3633, 0.0
      %v3638 = vmax.f32 %v3634, 0.0
      %v3639 = vmax.f32 %v3635, 0.0
      %v3640 = vmax.f32 %v3636, 0.0
      %v3641 = vadd.f32 %v3605, %v3616
      %v3642 = vadd.f32 %v3606, %v3621
      %v3643 = vadd.f32 %v3607, %v3626
      %v3644 = vadd.f32 %v3608, %v3631
      %v3645 = vmax.f32 %v3641, 0.0
      %v3646 = vmax.f32 %v3642, 0.0
      %v3647 = vmax.f32 %v3643, 0.0
      %v3648 = vmax.f32 %v3644, 0.0
      %v3649 = vmax.f32 %v3637, %v3645
      %v3650 = vmax.f32 %v3638, %v3646
      %v3651 = vmax.f32 %v3639, %v3647
      %v3652 = vmax.f32 %v3640, %v3648
      %vm3653 = vcmask 1031168
      %3654 = vst.msk [vmem:[#allocation2] sm:$0xff] %vm3653, %v3649
      %3655 = vst.msk [vmem:[#allocation2 + $0x8] sm:$0xff] %vm3653, %v3650
      %3656 = vst.msk [vmem:[#allocation2 + $0x10] sm:$0xff] %vm3653, %v3651
      %3657 = vst.msk [vmem:[#allocation2 + $0x18] sm:$0xff] %vm3653, %v3652
      %v3658 = vld [vmem:[#allocation2] sm:$0xff]
      %v3659 = vld [vmem:[#allocation2 + $0x8] sm:$0xff]
      %v3660 = vld [vmem:[#allocation2 + $0x10] sm:$0xff]
      %v3661 = vld [vmem:[#allocation2 + $0x18] sm:$0xff]
      %3666 = vrot.lane.b32.xlu0 %v3658, 127
      %v3667 = vpop.permute.xlu0 %3666
      %3668 = vrot.lane.b32.xlu0 %v3659, 127
      %v3669 = vpop.permute.xlu0 %3668
      %3670 = vrot.lane.b32.xlu0 %v3660, 127
      %v3671 = vpop.permute.xlu0 %3670
      %3672 = vrot.lane.b32.xlu0 %v3661, 127
      %v3673 = vpop.permute.xlu0 %3672
      %v3678 = vmax.f32 %v3658, %v3667
      %v3679 = vmax.f32 %v3659, %v3669
      %v3680 = vmax.f32 %v3660, %v3671
      %v3681 = vmax.f32 %v3661, %v3673
      %v3682 = vpack.c.bf16 %v3679, %v3678
      %v3683 = vpack.c.bf16 %v3681, %v3680
      %v3684 = vld [vmem:[%s4] sm:$0xf]
      %v3685 = vld [vmem:[%s4 + $0x4] sm:$0xf]
      %v3686 = vld [vmem:[%s4 + $0x8] sm:$0xf]
      %v3687 = vld [vmem:[%s4 + $0xc] sm:$0xf]
      %v3688 = vld [vmem:[%s4 + $0x10] sm:$0xf]
      %v3689 = vld [vmem:[%s4 + $0x14] sm:$0xf]
      %v3690 = vld [vmem:[%s4 + $0x18] sm:$0xf]
      %v3691 = vld [vmem:[%s4 + $0x1c] sm:$0xf]
      %v3692 = vld [vmem:[%s4 + $0x20] sm:$0xf]
      %v3693 = vld [vmem:[%s4 + $0x24] sm:$0xf]
      %v3694 = vld [vmem:[%s4 + $0x28] sm:$0xf]
      %v3695 = vld [vmem:[%s4 + $0x2c] sm:$0xf]
      %v3696 = vld [vmem:[%s4 + $0x30] sm:$0xf]
      %v3697 = vld [vmem:[%s4 + $0x34] sm:$0xf]
      %v3698 = vld [vmem:[%s4 + $0x38] sm:$0xf]
      %v3699 = vld [vmem:[%s4 + $0x3c] sm:$0x7]
      %v3716 = vunpack.c.l.b16 %v3684
      %v3717 = vunpack.c.l.b16 %v3685
      %v3718 = vunpack.c.l.b16 %v3686
      %v3719 = vunpack.c.l.b16 %v3687
      %v3720 = vunpack.c.l.b16 %v3688
      %v3721 = vunpack.c.l.b16 %v3689
      %v3722 = vunpack.c.l.b16 %v3690
      %v3723 = vunpack.c.l.b16 %v3691
      %v3724 = vunpack.c.l.b16 %v3692
      %v3725 = vunpack.c.l.b16 %v3693
      %v3726 = vunpack.c.l.b16 %v3694
      %v3727 = vunpack.c.l.b16 %v3695
      %v3728 = vunpack.c.l.b16 %v3696
      %v3729 = vunpack.c.l.b16 %v3697
      %v3730 = vunpack.c.l.b16 %v3698
      %v3731 = vunpack.c.l.b16 %v3699
      %v3732 = vpack.c.b16 %v3717, %v3716
      %v3733 = vpack.c.b16 %v3719, %v3718
      %v3734 = vpack.c.b16 %v3721, %v3720
      %v3735 = vpack.c.b16 %v3723, %v3722
      %v3736 = vpack.c.b16 %v3725, %v3724
      %v3737 = vpack.c.b16 %v3727, %v3726
      %v3738 = vpack.c.b16 %v3729, %v3728
      %v3739 = vpack.c.b16 %v3731, %v3730
      %vm3747 = vcmask 1022976
      %v3749 = vsel %vm3747, %v3682, 0
      %v3752 = vsel %vm3747, %v3683, 0
      %vm3754 = vcmask 1045504
      %vm3755 = vcmask 1046528
      %v3756 = vsel %vm3754, 4294967295, 65535
      %v3757 = vsel %vm3755, %v3756, 0
      %v3759 = vand.u32 %v3739, %v3757
      %3761 = vmatprep.subr.bf16.mxu0 0
      %3762 = vmatpush1.bf16.msra.mxu0 %v3732
      %3763 = vmatprep.subr.bf16.mxu0 0
      %3764 = vmatpush1.bf16.msra.mxu0 %v3733
      %3765 = vmatprep.subr.bf16.mxu0 0
      %3766 = vmatpush1.bf16.msra.mxu0 %v3734
      %3767 = vmatprep.subr.bf16.mxu0 0
      %3768 = vmatpush1.bf16.msra.mxu0 %v3735
      %3769 = vmatprep.subr.bf16.mxu0 0
      %3770 = vmatpush1.bf16.msra.mxu0 %v3736
      %3771 = vmatprep.subr.bf16.mxu0 0
      %3772 = vmatpush1.bf16.msra.mxu0 %v3737
      %3773 = vmatprep.subr.bf16.mxu0 0
      %3774 = vmatpush1.bf16.msra.mxu0 %v3738
      %3775 = vmatprep.subr.bf16.mxu0 0
      %3776 = vmatpush1.bf16.msra.mxu0 %v3759
      %3777 = vmatprep.subr.bf16.mxu0 0
      %3778 = vmatpush1.bf16.msra.mxu0 0
      %3779 = vmatprep.subr.bf16.mxu0 0
      %3780 = vmatpush1.bf16.msra.mxu0 0
      %3781 = vmatprep.subr.bf16.mxu0 0
      %3782 = vmatpush1.bf16.msra.mxu0 0
      %3783 = vmatprep.subr.bf16.mxu0 0
      %3784 = vmatpush1.bf16.msra.mxu0 0
      %3785 = vmatprep.subr.bf16.mxu0 0
      %3786 = vmatpush1.bf16.msra.mxu0 0
      %3787 = vmatprep.subr.bf16.mxu0 0
      %3788 = vmatpush1.bf16.msra.mxu0 0
      %3789 = vmatprep.subr.bf16.mxu0 0
      %3790 = vmatpush1.bf16.msra.mxu0 0
      %3791 = vmatprep.subr.bf16.mxu0 0
      %3792 = vmatpush1.bf16.msra.mxu0 0
      %3793 = vmatprep.mubr.bf16.mxu0 0
      %3794 = vmatmul.mubr.bf16.gmra.mrb[0].mxu0 %v3749
      %v3795 = vpop.f32.mrb[0].mxu0
      %v3796 = vadd.f32 0.0, %v3795
      %v3797 = vpop.f32.mrb[0].mxu0
      %v3798 = vpop.f32.mrb[0].mxu0
      %v3799 = vadd.f32 0.0, %v3798
      %v3800 = vpop.f32.mrb[0].mxu0
      %3801 = vmatprep.mubr.bf16.mxu0 0
      %3802 = vmatmul.mubr.bf16.gmra.mrb[0].mxu0 %v3752
      %v3803 = vpop.f32.mrb[0].mxu0
      %v3804 = vadd.f32 0.0, %v3803
      %v3805 = vpop.f32.mrb[0].mxu0
      %v3806 = vpop.f32.mrb[0].mxu0
      %v3807 = vadd.f32 0.0, %v3806
      %v3808 = vpop.f32.mrb[0].mxu0
      %3809 = vdwg.mxu0
      %v3810 = vpack.c.bf16 %v3799, %v3796
      %v3811 = vpack.c.bf16 %v3807, %v3804
      %v3814 = vunpack.c.l.b16 %v3810
      %v3815 = vunpack.c.h.b16 %v3810
      %v3816 = vunpack.c.l.b16 %v3811
      %v3817 = vunpack.c.h.b16 %v3811
      %v3818 = vpack.c.b16 %v3814, %v3814
      %v3819 = vpack.c.b16 %v3815, %v3815
      %v3820 = vpack.c.b16 %v3816, %v3816
      %v3821 = vpack.c.b16 %v3817, %v3817
      %vm3826 = vcmask 396288
      %3827 = vst.msk [vmem:[%s244] sm:$0xf] %vm3826, %v3818
      %3828 = vst.msk [vmem:[%s244 + $0x4] sm:$0xf] %vm3826, %v3819
      %3829 = vst.msk [vmem:[%s244 + $0x8] sm:$0xf] %vm3826, %v3820
      %3830 = vst.msk [vmem:[%s244 + $0xc] sm:$0xf] %vm3826, %v3821
      %p3831 = scmp.lt.s32.totalorder %s16, 1
      %s3832 = scalar_select %p3831, %s16, 1
      %s3833 = smul.addr %s3832, 4
      %s3834 = smul.addr %s3833, 4
      %s3835 = scalar_lea.vmem %s5, %s3834
      // Predicated region
      $region41: #{cnn_forward.4} parent=39 // pred_check
        %p3836 = pneg %p149
      $region42: #{cnn_forward.4} parent=39 // pred_check_branch
        %3838 = sbr.rel (%p3836) target = $region44
      $region43: #{cnn_forward.4} parent=39 // pred_region
        _
      $region44: #{cnn_forward.4} parent=39 // pred_fallthru
        _
    $region40: #{cnn_forward.4} parent=5 // pred_fallthru
      _
    %p3839 = scmp.le.s32.totalorder 2, %s11
    // Predicated region
    $region45: #{cnn_forward.4} parent=5 // pred_check
      %p3840 = pneg %p3839
    $region46: #{cnn_forward.4} parent=5 // pred_check_branch
      %3842 = sbr.rel (%p3840) target = $region48
    $region47: #{cnn_forward.4} parent=5 // pred_region
      %s3843 = ssub.s32 %s11, 2
      // Predicated region
      $region49: #{cnn_forward.4} parent=47 // pred_check
        %p3844 = pneg %p155
      $region50: #{cnn_forward.4} parent=47 // pred_check_branch
        %3846 = sbr.rel (%p3844) target = $region52
      $region51: #{cnn_forward.4} parent=47 // pred_region
        %p3847 = scmp.lt.s32.totalorder %s17, 1
        %s3848 = scalar_select %p3847, %s17, 1
        %s3849 = smul.addr %s3848, 4
        %s3850 = smul.addr %s3849, 4
        %s3851 = scalar_lea.vmem %s5, %s3850
      $region52: #{cnn_forward.4} parent=47 // pred_fallthru
        _
    $region48: #{cnn_forward.4} parent=5 // pred_fallthru
      _
  $region6: #{cnn_forward.4} parent=0 // loop_footer
    %s15 = sadd.s32 1, %s11
  $region7: #{cnn_forward.4} parent=0 // loop_footer_branch
    %10 = sbr.rel target = $region3
  $region8: #{cnn_forward.4} parent=0 // loop_exit
    _

</llo_original>
